<compile_context>
chip_gen: v7x
topology: tpu7x:2x2x1
jax: 0.10.0
libtpu: 0.0.40
codegen_flags: <defaults>
</compile_context>

<pallas_src>
import math
import jax
import jax.numpy as jnp
from jax import lax
from jax.experimental import pallas as pl
from jax.experimental.pallas import tpu as pltpu

# ----------------------------- configuration (small test shapes) -----------------------------
BS = 2            # batch
B_CH = 32         # in_channels  (ConvTasNet "B")
H_CH = 128        # conv_channels (ConvTasNet "H")
P_K = 3           # depthwise kernel size (ConvTasNet "P")
T_LEN = 128       # time steps (multiple of 128 -> lane-dense loads/stores)
DILATIONS = (1, 2, 4, 8)                    # one TCN repeat: dilation = 2**i per block
NUM_BLOCKS = len(DILATIONS)
PAD_MAX = max(d * (P_K - 1) // 2 for d in DILATIONS)
GLN_EPS = 1e-5

# Packed per-channel parameter rows, stored lane-dense as [NUM_BLOCKS * NPARAM, H].
NPARAM = 16
IDX_B1, IDX_G1, IDX_BE1, IDX_BD, IDX_G2, IDX_BE2 = 0, 1, 2, 3, 4, 5
IDX_WD = 6                      # rows 6 .. 6+P_K-1 : depthwise taps
IDX_SB = 6 + P_K                # sconv bias (first B_CH lanes used)
IDX_A1 = 7 + P_K                # PReLU1 alpha (scalar, broadcast across H -> identical math)
IDX_A2 = 8 + P_K                # PReLU2 alpha


# ----------------------------- fused Conv1DBlock-stack kernel -----------------------------
def _make_stack_kernel(num_blocks, dilations, bc, h, t, p_k, pad_max):
    inv_ht = 1.0 / float(h * t)

    def kernel(x_ref, w1_ref, ws_ref, pv_ref, o_ref, ypad_ref):
        # Zero only the depthwise halo columns; the centre is fully overwritten every block.
        ypad_ref[:, 0:pad_max] = jnp.zeros((h, pad_max), jnp.float32)
        ypad_ref[:, pad_max + t:pad_max + t + pad_max] = jnp.zeros((h, pad_max), jnp.float32)

        # Per-channel params arrive lane-dense as rows [nb*NPARAM, H]; one MXU matmul against
        # the identity (NT contraction, q@k^T style) yields sublane-major columns [H, nb*NPARAM].
        eye_h = (lax.broadcasted_iota(jnp.int32, (h, h), 0) ==
                 lax.broadcasted_iota(jnp.int32, (h, h), 1)).astype(jnp.float32)
        cols = lax.dot_general(eye_h, pv_ref[...],
                               dimension_numbers=(((1,), (1,)), ((), ())),
                               preferred_element_type=jnp.float32)        # [H, nb*NPARAM]

        ones_h = jnp.ones((1, h), jnp.float32)                            # for MXU-side gLN sums

        def gln(y, g, be):
            # One-pass stats on the MXU (ones @ y, ones @ y*y) + tiny lane reduce, then the
            # whole normalization folded into a single per-element scale/shift FMA.
            s1 = jnp.dot(ones_h, y, preferred_element_type=jnp.float32)          # [1, T]
            s2 = jnp.dot(ones_h, y * y, preferred_element_type=jnp.float32)      # [1, T]
            m = jnp.sum(s1, axis=1, keepdims=True) * inv_ht                      # [1, 1]
            ms = jnp.sum(s2, axis=1, keepdims=True) * inv_ht
            scale = g * lax.rsqrt(ms - m * m + GLN_EPS)                          # [H, 1]
            shift = be - m * scale
            return y * scale + shift

        x = x_ref[0]                                                      # [B, T]
        for i in range(num_blocks):                                       # unrolled stack
            d = dilations[i]
            pad = d * (p_k - 1) // 2
            base = i * NPARAM
            b1 = cols[:, base + IDX_B1:base + IDX_B1 + 1]
            g1 = cols[:, base + IDX_G1:base + IDX_G1 + 1]
            be1 = cols[:, base + IDX_BE1:base + IDX_BE1 + 1]
            bd = cols[:, base + IDX_BD:base + IDX_BD + 1]
            g2 = cols[:, base + IDX_G2:base + IDX_G2 + 1]
            be2 = cols[:, base + IDX_BE2:base + IDX_BE2 + 1]
            wd = cols[:, base + IDX_WD:base + IDX_WD + p_k]               # [H, P]
            sb = cols[:bc, base + IDX_SB:base + IDX_SB + 1]               # [B, 1]
            a1 = cols[:, base + IDX_A1:base + IDX_A1 + 1]
            a2 = cols[:, base + IDX_A2:base + IDX_A2 + 1]

            # conv1x1 (B -> H) + PReLU + gLN
            y = jnp.dot(w1_ref[i], x, preferred_element_type=jnp.float32) + b1
            y = jnp.where(y >= 0, y, a1 * y)
            y = gln(y, g1, be1)

            # depthwise dilated conv ('same', non-causal) via zero-padded scratch:
            # tap k reads ypad[:, pad_max - pad + k*d : ... + T]  -> no masks, no wrap.
            ypad_ref[:, pad_max:pad_max + t] = y
            acc = bd
            for k in range(p_k):
                off = pad_max - pad + k * d                               # static offset
                acc = acc + wd[:, k:k + 1] * ypad_ref[:, off:off + t]
            y = acc

            # PReLU + gLN
            y = jnp.where(y >= 0, y, a2 * y)
            y = gln(y, g2, be2)

            # sconv (H -> B) + residual
            x = x + jnp.dot(ws_ref[i], y, preferred_element_type=jnp.float32) + sb

        o_ref[0] = x

    return kernel


def conv1d_block_stack(x, params, dilations=DILATIONS):
    """Fused stack of Conv1DBlocks on [batch, B, T] input; one pallas_call, grid over batch."""
    bs, bc, t = x.shape
    nb, h, _ = params['W1'].shape
    assert t % 128 == 0, "keep the time axis lane-dense (multiple of 128)"
    kernel = _make_stack_kernel(nb, dilations, bc, h, t, P_K, PAD_MAX)

    flops_per_sample = nb * (2 * h * bc * t          # conv1x1
                             + 2 * bc * h * t        # sconv
                             + 2 * h * P_K * t       # depthwise taps
                             + 4 * 2 * h * t         # gLN sums on MXU
                             + 12 * h * t)           # elementwise
    flops = bs * (flops_per_sample + 2 * h * h * nb * NPARAM)
    bytes_accessed = 4 * (2 * bs * bc * t + nb * (h * bc + bc * h + NPARAM * h))

    return pl.pallas_call(
        kernel,
        out_shape=jax.ShapeDtypeStruct((bs, bc, t), jnp.float32),
        grid=(bs,),
        in_specs=[
            pl.BlockSpec((1, bc, t), lambda b: (b, 0, 0)),       # activation (per-sample tile)
            pl.BlockSpec((nb, h, bc), lambda b: (0, 0, 0)),      # conv1x1 weights (resident)
            pl.BlockSpec((nb, bc, h), lambda b: (0, 0, 0)),      # sconv weights (resident)
            pl.BlockSpec((nb * NPARAM, h), lambda b: (0, 0)),    # packed per-channel params
        ],
        out_specs=pl.BlockSpec((1, bc, t), lambda b: (b, 0, 0)),
        scratch_shapes=[pltpu.VMEM((h, t + 2 * PAD_MAX), jnp.float32)],   # depthwise halo buffer
        compiler_params=pltpu.CompilerParams(
            dimension_semantics=("parallel",),
            vmem_limit_bytes=32 * 1024 * 1024),
        cost_estimate=pl.CostEstimate(flops=flops, transcendentals=2 * nb * bs,
                                      bytes_accessed=bytes_accessed),
    )(x, params['W1'], params['WS'], params['PV'])


# ----------------------------- parameters -----------------------------
def init_params(key, nb=NUM_BLOCKS, bc=B_CH, h=H_CH, p=P_K):
    k = jax.random.split(key, 12)
    w1 = jax.random.normal(k[0], (nb, h, bc), jnp.float32) / math.sqrt(bc)
    ws = jax.random.normal(k[1], (nb, bc, h), jnp.float32) / math.sqrt(h)
    wd = jax.random.normal(k[2], (nb, p, h), jnp.float32) / math.sqrt(p)
    b1 = 0.1 * jax.random.normal(k[3], (nb, h), jnp.float32)
    g1 = 1.0 + 0.1 * jax.random.normal(k[4], (nb, h), jnp.float32)
    be1 = 0.1 * jax.random.normal(k[5], (nb, h), jnp.float32)
    bd = 0.1 * jax.random.normal(k[6], (nb, h), jnp.float32)
    g2 = 1.0 + 0.1 * jax.random.normal(k[7], (nb, h), jnp.float32)
    be2 = 0.1 * jax.random.normal(k[8], (nb, h), jnp.float32)
    sb = 0.1 * jax.random.normal(k[9], (nb, bc), jnp.float32)
    a1 = 0.1 + 0.3 * jax.random.uniform(k[10], (nb,), jnp.float32)   # scalar PReLU alphas
    a2 = 0.1 + 0.3 * jax.random.uniform(k[11], (nb,), jnp.float32)

    pv = jnp.zeros((nb, NPARAM, h), jnp.float32)
    pv = pv.at[:, IDX_B1].set(b1).at[:, IDX_G1].set(g1).at[:, IDX_BE1].set(be1)
    pv = pv.at[:, IDX_BD].set(bd).at[:, IDX_G2].set(g2).at[:, IDX_BE2].set(be2)
    pv = pv.at[:, IDX_WD:IDX_WD + p].set(wd)
    pv = pv.at[:, IDX_SB, :bc].set(sb)
    pv = pv.at[:, IDX_A1].set(jnp.broadcast_to(a1[:, None], (nb, h)))
    pv = pv.at[:, IDX_A2].set(jnp.broadcast_to(a2[:, None], (nb, h)))
    return dict(W1=w1, WS=ws, PV=pv.reshape(nb * NPARAM, h))


# ----------------------------- plain-JAX reference (PyTorch semantics) -----------------------------
def reference_stack(params, x, dilations=DILATIONS):
    nb = len(dilations)
    h, bc = params['W1'].shape[1], params['W1'].shape[2]
    pv = params['PV'].reshape(nb, NPARAM, h)
    hp = lax.Precision.HIGHEST

    def gln(y, g, be):
        m = jnp.mean(y, axis=(1, 2), keepdims=True)
        v = jnp.mean((y - m) ** 2, axis=(1, 2), keepdims=True)
        return g * (y - m) / jnp.sqrt(v + GLN_EPS) + be

    for i, d in enumerate(dilations):
        b1, g1, be1 = pv[i, IDX_B1][:, None], pv[i, IDX_G1][:, None], pv[i, IDX_BE1][:, None]
        bd, g2, be2 = pv[i, IDX_BD][:, None], pv[i, IDX_G2][:, None], pv[i, IDX_BE2][:, None]
        wd = pv[i, IDX_WD:IDX_WD + P_K]                       # [P, H]
        sb = pv[i, IDX_SB, :bc][:, None]
        a1, a2 = pv[i, IDX_A1, 0], pv[i, IDX_A2, 0]

        y = jnp.einsum('hb,nbt->nht', params['W1'][i], x, precision=hp) + b1
        y = jnp.where(y >= 0, y, a1 * y)
        y = gln(y, g1, be1)
        pad = d * (P_K - 1) // 2
        rhs = jnp.transpose(wd)[:, None, :]                   # [H, 1, P]
        dn = lax.conv_dimension_numbers(y.shape, rhs.shape, ('NCH', 'OIH', 'NCH'))
        y = lax.conv_general_dilated(y, rhs, window_strides=(1,), padding=[(pad, pad)],
                                     rhs_dilation=(d,), dimension_numbers=dn,
                                     feature_group_count=h, precision=hp) + bd
        y = jnp.where(y >= 0, y, a2 * y)
        y = gln(y, g2, be2)
        x = x + jnp.einsum('bh,nht->nbt', params['WS'][i], y, precision=hp) + sb
    return x


# ----------------------------- main -----------------------------
if __name__ == "__main__":
    key = jax.random.PRNGKey(0)
    kx, kp = jax.random.split(key)
    x = jax.random.normal(kx, (BS, B_CH, T_LEN), jnp.float32)
    params = init_params(kp)

    fwd = jax.jit(conv1d_block_stack)
    out = fwd(x, params)
    jax.block_until_ready(out)
    assert out.shape == (BS, B_CH, T_LEN)

    ref = jax.jit(reference_stack)(params, x)
    jax.block_until_ready(ref)
    err = float(jnp.max(jnp.abs(out - ref)))
    scale = float(jnp.max(jnp.abs(ref))) + 1e-6
    assert err / scale < 3e-2, f"mismatch vs reference: max|diff|={err:.3e}, max|ref|={scale:.3e}"

    print("KERNEL_OK")
</pallas_src>

<mosaic_0001>
module attributes {stable_mosaic.version = 11 : i64} {
  func.func @kernel(%arg0: i32, %arg1: memref<1x32x128xf32, #tpu.memory_space<vmem>>, %arg2: memref<4x128x32xf32, #tpu.memory_space<vmem>>, %arg3: memref<4x32x128xf32, #tpu.memory_space<vmem>>, %arg4: memref<64x128xf32, #tpu.memory_space<vmem>>, %arg5: memref<1x32x128xf32, #tpu.memory_space<vmem>>, %arg6: memref<128x144xf32, #tpu.memory_space<vmem>>) attributes {dimension_semantics = [#tpu.dimension_semantics<parallel>], iteration_bounds = array<i64: 2>, scalar_prefetch = 0 : i64, scratch_operands = 1 : i64, tpu.core_type = #tpu.core_type<tc>, window_params = [{transform_indices = @transform_0, window_bounds = array<i64: 1, 32, 128>}, {pipeline_mode = #tpu.pipeline_mode<synchronous>, transform_indices = @transform_1, window_bounds = array<i64: 4, 128, 32>}, {pipeline_mode = #tpu.pipeline_mode<synchronous>, transform_indices = @transform_2, window_bounds = array<i64: 4, 32, 128>}, {pipeline_mode = #tpu.pipeline_mode<synchronous>, transform_indices = @transform_3, window_bounds = array<i64: 64, 128>}, {transform_indices = @transform_4, window_bounds = array<i64: 1, 32, 128>}]} {
    %cst = arith.constant 0.000000e+00 : f32
    %0 = vector.broadcast %cst : f32 to vector<128x8xf32>
    %c0 = arith.constant 0 : index
    %c0_0 = arith.constant 0 : index
    %1 = vector.load %arg6[%c0, %c0_0] : memref<128x144xf32, #tpu.memory_space<vmem>>, vector<128x8xf32>
    tpu.vector_store %arg6[%c0, %c0_0], %0 {strides = array<i32>} : memref<128x144xf32, #tpu.memory_space<vmem>>, vector<128x8xf32>,
    %cst_1 = arith.constant 0.000000e+00 : f32
    %2 = vector.broadcast %cst_1 : f32 to vector<128x8xf32>
    %c0_2 = arith.constant 0 : index
    %c136 = arith.constant 136 : index
    %3 = vector.load %arg6[%c0_2, %c136] : memref<128x144xf32, #tpu.memory_space<vmem>>, vector<128x8xf32>
    tpu.vector_store %arg6[%c0_2, %c136], %2 {strides = array<i32>} : memref<128x144xf32, #tpu.memory_space<vmem>>, vector<128x8xf32>,
    %4 = tpu.iota {dimensions = array<i32: 0>} : vector<128x128xi32>
    %5 = tpu.iota {dimensions = array<i32: 1>} : vector<128x128xi32>
    %6 = arith.cmpi eq, %4, %5 : vector<128x128xi32>
    %7 = arith.extui %6 : vector<128x128xi1> to vector<128x128xi32>
    %8 = arith.sitofp %7 : vector<128x128xi32> to vector<128x128xf32>
    %c0_3 = arith.constant 0 : index
    %c0_4 = arith.constant 0 : index
    %9 = vector.load %arg4[%c0_3, %c0_4] : memref<64x128xf32, #tpu.memory_space<vmem>>, vector<64x128xf32>
    %cst_5 = arith.constant dense<0.000000e+00> : vector<128x64xf32>
    %10 = tpu.matmul %8, %9, %cst_5 {dimension_numbers = #tpu.dot_dimension_numbers<[1], [1], [0], [0], [0, 0, 1, 0], [], []>} : vector<128x128xf32>, vector<64x128xf32>, vector<128x64xf32> -> vector<128x64xf32>
    %cst_6 = arith.constant 1.000000e+00 : f32
    %11 = vector.broadcast %cst_6 : f32 to vector<1x128xf32>
    %c0_7 = arith.constant 0 : index
    %c0_8 = arith.constant 0 : index
    %c0_9 = arith.constant 0 : index
    %12 = vector.load %arg1[%c0_7, %c0_8, %c0_9] : memref<1x32x128xf32, #tpu.memory_space<vmem>>, vector<1x32x128xf32>
    %13 = vector.shape_cast %12 : vector<1x32x128xf32> to vector<32x128xf32>
    %14 = vector.extract_strided_slice %10 {offsets = [0, 0], sizes = [128, 1], strides = [1, 1]} : vector<128x64xf32> to vector<128x1xf32>
    %15 = vector.extract_strided_slice %10 {offsets = [0, 1], sizes = [128, 1], strides = [1, 1]} : vector<128x64xf32> to vector<128x1xf32>
    %16 = vector.extract_strided_slice %10 {offsets = [0, 2], sizes = [128, 1], strides = [1, 1]} : vector<128x64xf32> to vector<128x1xf32>
    %17 = vector.extract_strided_slice %10 {offsets = [0, 3], sizes = [128, 1], strides = [1, 1]} : vector<128x64xf32> to vector<128x1xf32>
    %18 = vector.extract_strided_slice %10 {offsets = [0, 4], sizes = [128, 1], strides = [1, 1]} : vector<128x64xf32> to vector<128x1xf32>
    %19 = vector.extract_strided_slice %10 {offsets = [0, 5], sizes = [128, 1], strides = [1, 1]} : vector<128x64xf32> to vector<128x1xf32>
    %20 = vector.extract_strided_slice %10 {offsets = [0, 6], sizes = [128, 3], strides = [1, 1]} : vector<128x64xf32> to vector<128x3xf32>
    %21 = vector.extract_strided_slice %10 {offsets = [0, 9], sizes = [32, 1], strides = [1, 1]} : vector<128x64xf32> to vector<32x1xf32>
    %22 = vector.extract_strided_slice %10 {offsets = [0, 10], sizes = [128, 1], strides = [1, 1]} : vector<128x64xf32> to vector<128x1xf32>
    %23 = vector.extract_strided_slice %10 {offsets = [0, 11], sizes = [128, 1], strides = [1, 1]} : vector<128x64xf32> to vector<128x1xf32>
    %c0_10 = arith.constant 0 : index
    %c0_11 = arith.constant 0 : index
    %c0_12 = arith.constant 0 : index
    %24 = vector.load %arg2[%c0_10, %c0_11, %c0_12] : memref<4x128x32xf32, #tpu.memory_space<vmem>>, vector<1x128x32xf32>
    %25 = vector.shape_cast %24 : vector<1x128x32xf32> to vector<128x32xf32>
    %cst_13 = arith.constant dense<0.000000e+00> : vector<128x128xf32>
    %26 = tpu.matmul %25, %13, %cst_13 {dimension_numbers = #tpu.dot_dimension_numbers<[1], [0], [0], [1], [0, 0, 1, 1], [], []>} : vector<128x32xf32>, vector<32x128xf32>, vector<128x128xf32> -> vector<128x128xf32>
    %27 = vector.broadcast %14 : vector<128x1xf32> to vector<128x128xf32>
    %28 = arith.addf %26, %27 : vector<128x128xf32>
    %cst_14 = arith.constant 0.000000e+00 : f32
    %29 = vector.broadcast %cst_14 : f32 to vector<128x128xf32>
    %30 = arith.cmpf oge, %28, %29 : vector<128x128xf32>
    %31 = vector.broadcast %22 : vector<128x1xf32> to vector<128x128xf32>
    %32 = arith.mulf %31, %28 : vector<128x128xf32>
    %33 = arith.select %30, %28, %32 : vector<128x128xi1>, vector<128x128xf32>
    %cst_15 = arith.constant dense<0.000000e+00> : vector<1x128xf32>
    %34 = tpu.matmul %11, %33, %cst_15 {dimension_numbers = #tpu.dot_dimension_numbers<[1], [0], [0], [1], [0, 0, 1, 1], [], []>} : vector<1x128xf32>, vector<128x128xf32>, vector<1x128xf32> -> vector<1x128xf32>
    %35 = arith.mulf %33, %33 : vector<128x128xf32>
    %cst_16 = arith.constant dense<0.000000e+00> : vector<1x128xf32>
    %36 = tpu.matmul %11, %35, %cst_16 {dimension_numbers = #tpu.dot_dimension_numbers<[1], [0], [0], [1], [0, 0, 1, 1], [], []>} : vector<1x128xf32>, vector<128x128xf32>, vector<1x128xf32> -> vector<1x128xf32>
    %cst_17 = arith.constant dense<0.000000e+00> : vector<1xf32>
    %37 = vector.multi_reduction <add>, %34, %cst_17 [1] : vector<1x128xf32> to vector<1xf32>
    %38 = vector.shape_cast %37 : vector<1xf32> to vector<1x1xf32>
    %cst_18 = arith.constant 6.10351563E-5 : f32
    %39 = vector.broadcast %cst_18 : f32 to vector<1x1xf32>
    %40 = arith.mulf %38, %39 : vector<1x1xf32>
    %cst_19 = arith.constant dense<0.000000e+00> : vector<1xf32>
    %41 = vector.multi_reduction <add>, %36, %cst_19 [1] : vector<1x128xf32> to vector<1xf32>
    %42 = vector.shape_cast %41 : vector<1xf32> to vector<1x1xf32>
    %cst_20 = arith.constant 6.10351563E-5 : f32
    %43 = vector.broadcast %cst_20 : f32 to vector<1x1xf32>
    %44 = arith.mulf %42, %43 : vector<1x1xf32>
    %45 = arith.mulf %40, %40 : vector<1x1xf32>
    %46 = arith.subf %44, %45 : vector<1x1xf32>
    %cst_21 = arith.constant 9.99999974E-6 : f32
    %47 = vector.broadcast %cst_21 : f32 to vector<1x1xf32>
    %48 = arith.addf %46, %47 : vector<1x1xf32>
    %49 = math.rsqrt %48 : vector<1x1xf32>
    %50 = vector.broadcast %49 : vector<1x1xf32> to vector<128x1xf32>
    %51 = arith.mulf %15, %50 : vector<128x1xf32>
    %52 = vector.broadcast %40 : vector<1x1xf32> to vector<128x1xf32>
    %53 = arith.mulf %52, %51 : vector<128x1xf32>
    %54 = arith.subf %16, %53 : vector<128x1xf32>
    %55 = vector.broadcast %51 : vector<128x1xf32> to vector<128x128xf32>
    %56 = arith.mulf %33, %55 : vector<128x128xf32>
    %57 = vector.broadcast %54 : vector<128x1xf32> to vector<128x128xf32>
    %58 = arith.addf %56, %57 : vector<128x128xf32>
    %c0_22 = arith.constant 0 : index
    %c8 = arith.constant 8 : index
    %59 = vector.load %arg6[%c0_22, %c8] : memref<128x144xf32, #tpu.memory_space<vmem>>, vector<128x128xf32>
    tpu.vector_store %arg6[%c0_22, %c8], %58 {strides = array<i32>} : memref<128x144xf32, #tpu.memory_space<vmem>>, vector<128x128xf32>,
    %60 = vector.extract_strided_slice %20 {offsets = [0, 0], sizes = [128, 1], strides = [1, 1]} : vector<128x3xf32> to vector<128x1xf32>
    %c0_23 = arith.constant 0 : index
    %c7 = arith.constant 7 : index
    %61 = vector.load %arg6[%c0_23, %c7] : memref<128x144xf32, #tpu.memory_space<vmem>>, vector<128x128xf32>
    %62 = vector.broadcast %60 : vector<128x1xf32> to vector<128x128xf32>
    %63 = arith.mulf %62, %61 : vector<128x128xf32>
    %64 = vector.broadcast %17 : vector<128x1xf32> to vector<128x128xf32>
    %65 = arith.addf %64, %63 : vector<128x128xf32>
    %66 = vector.extract_strided_slice %20 {offsets = [0, 1], sizes = [128, 1], strides = [1, 1]} : vector<128x3xf32> to vector<128x1xf32>
    %c0_24 = arith.constant 0 : index
    %c8_25 = arith.constant 8 : index
    %67 = vector.load %arg6[%c0_24, %c8_25] : memref<128x144xf32, #tpu.memory_space<vmem>>, vector<128x128xf32>
    %68 = vector.broadcast %66 : vector<128x1xf32> to vector<128x128xf32>
    %69 = arith.mulf %68, %67 : vector<128x128xf32>
    %70 = arith.addf %65, %69 : vector<128x128xf32>
    %71 = vector.extract_strided_slice %20 {offsets = [0, 2], sizes = [128, 1], strides = [1, 1]} : vector<128x3xf32> to vector<128x1xf32>
    %c0_26 = arith.constant 0 : index
    %c9 = arith.constant 9 : index
    %72 = vector.load %arg6[%c0_26, %c9] : memref<128x144xf32, #tpu.memory_space<vmem>>, vector<128x128xf32>
    %73 = vector.broadcast %71 : vector<128x1xf32> to vector<128x128xf32>
    %74 = arith.mulf %73, %72 : vector<128x128xf32>
    %75 = arith.addf %70, %74 : vector<128x128xf32>
    %cst_27 = arith.constant 0.000000e+00 : f32
    %76 = vector.broadcast %cst_27 : f32 to vector<128x128xf32>
    %77 = arith.cmpf oge, %75, %76 : vector<128x128xf32>
    %78 = vector.broadcast %23 : vector<128x1xf32> to vector<128x128xf32>
    %79 = arith.mulf %78, %75 : vector<128x128xf32>
    %80 = arith.select %77, %75, %79 : vector<128x128xi1>, vector<128x128xf32>
    %cst_28 = arith.constant dense<0.000000e+00> : vector<1x128xf32>
    %81 = tpu.matmul %11, %80, %cst_28 {dimension_numbers = #tpu.dot_dimension_numbers<[1], [0], [0], [1], [0, 0, 1, 1], [], []>} : vector<1x128xf32>, vector<128x128xf32>, vector<1x128xf32> -> vector<1x128xf32>
    %82 = arith.mulf %80, %80 : vector<128x128xf32>
    %cst_29 = arith.constant dense<0.000000e+00> : vector<1x128xf32>
    %83 = tpu.matmul %11, %82, %cst_29 {dimension_numbers = #tpu.dot_dimension_numbers<[1], [0], [0], [1], [0, 0, 1, 1], [], []>} : vector<1x128xf32>, vector<128x128xf32>, vector<1x128xf32> -> vector<1x128xf32>
    %cst_30 = arith.constant dense<0.000000e+00> : vector<1xf32>
    %84 = vector.multi_reduction <add>, %81, %cst_30 [1] : vector<1x128xf32> to vector<1xf32>
    %85 = vector.shape_cast %84 : vector<1xf32> to vector<1x1xf32>
    %cst_31 = arith.constant 6.10351563E-5 : f32
    %86 = vector.broadcast %cst_31 : f32 to vector<1x1xf32>
    %87 = arith.mulf %85, %86 : vector<1x1xf32>
    %cst_32 = arith.constant dense<0.000000e+00> : vector<1xf32>
    %88 = vector.multi_reduction <add>, %83, %cst_32 [1] : vector<1x128xf32> to vector<1xf32>
    %89 = vector.shape_cast %88 : vector<1xf32> to vector<1x1xf32>
    %cst_33 = arith.constant 6.10351563E-5 : f32
    %90 = vector.broadcast %cst_33 : f32 to vector<1x1xf32>
    %91 = arith.mulf %89, %90 : vector<1x1xf32>
    %92 = arith.mulf %87, %87 : vector<1x1xf32>
    %93 = arith.subf %91, %92 : vector<1x1xf32>
    %cst_34 = arith.constant 9.99999974E-6 : f32
    %94 = vector.broadcast %cst_34 : f32 to vector<1x1xf32>
    %95 = arith.addf %93, %94 : vector<1x1xf32>
    %96 = math.rsqrt %95 : vector<1x1xf32>
    %97 = vector.broadcast %96 : vector<1x1xf32> to vector<128x1xf32>
    %98 = arith.mulf %18, %97 : vector<128x1xf32>
    %99 = vector.broadcast %87 : vector<1x1xf32> to vector<128x1xf32>
    %100 = arith.mulf %99, %98 : vector<128x1xf32>
    %101 = arith.subf %19, %100 : vector<128x1xf32>
    %102 = vector.broadcast %98 : vector<128x1xf32> to vector<128x128xf32>
    %103 = arith.mulf %80, %102 : vector<128x128xf32>
    %104 = vector.broadcast %101 : vector<128x1xf32> to vector<128x128xf32>
    %105 = arith.addf %103, %104 : vector<128x128xf32>
    %c0_35 = arith.constant 0 : index
    %c0_36 = arith.constant 0 : index
    %c0_37 = arith.constant 0 : index
    %106 = vector.load %arg3[%c0_35, %c0_36, %c0_37] : memref<4x32x128xf32, #tpu.memory_space<vmem>>, vector<1x32x128xf32>
    %107 = vector.shape_cast %106 : vector<1x32x128xf32> to vector<32x128xf32>
    %cst_38 = arith.constant dense<0.000000e+00> : vector<32x128xf32>
    %108 = tpu.matmul %107, %105, %cst_38 {dimension_numbers = #tpu.dot_dimension_numbers<[1], [0], [0], [1], [0, 0, 1, 1], [], []>} : vector<32x128xf32>, vector<128x128xf32>, vector<32x128xf32> -> vector<32x128xf32>
    %109 = arith.addf %13, %108 : vector<32x128xf32>
    %110 = vector.broadcast %21 : vector<32x1xf32> to vector<32x128xf32>
    %111 = arith.addf %109, %110 : vector<32x128xf32>
    %112 = vector.extract_strided_slice %10 {offsets = [0, 16], sizes = [128, 1], strides = [1, 1]} : vector<128x64xf32> to vector<128x1xf32>
    %113 = vector.extract_strided_slice %10 {offsets = [0, 17], sizes = [128, 1], strides = [1, 1]} : vector<128x64xf32> to vector<128x1xf32>
    %114 = vector.extract_strided_slice %10 {offsets = [0, 18], sizes = [128, 1], strides = [1, 1]} : vector<128x64xf32> to vector<128x1xf32>
    %115 = vector.extract_strided_slice %10 {offsets = [0, 19], sizes = [128, 1], strides = [1, 1]} : vector<128x64xf32> to vector<128x1xf32>
    %116 = vector.extract_strided_slice %10 {offsets = [0, 20], sizes = [128, 1], strides = [1, 1]} : vector<128x64xf32> to vector<128x1xf32>
    %117 = vector.extract_strided_slice %10 {offsets = [0, 21], sizes = [128, 1], strides = [1, 1]} : vector<128x64xf32> to vector<128x1xf32>
    %118 = vector.extract_strided_slice %10 {offsets = [0, 22], sizes = [128, 3], strides = [1, 1]} : vector<128x64xf32> to vector<128x3xf32>
    %119 = vector.extract_strided_slice %10 {offsets = [0, 25], sizes = [32, 1], strides = [1, 1]} : vector<128x64xf32> to vector<32x1xf32>
    %120 = vector.extract_strided_slice %10 {offsets = [0, 26], sizes = [128, 1], strides = [1, 1]} : vector<128x64xf32> to vector<128x1xf32>
    %121 = vector.extract_strided_slice %10 {offsets = [0, 27], sizes = [128, 1], strides = [1, 1]} : vector<128x64xf32> to vector<128x1xf32>
    %c1 = arith.constant 1 : index
    %c0_39 = arith.constant 0 : index
    %c0_40 = arith.constant 0 : index
    %122 = vector.load %arg2[%c1, %c0_39, %c0_40] : memref<4x128x32xf32, #tpu.memory_space<vmem>>, vector<1x128x32xf32>
    %123 = vector.shape_cast %122 : vector<1x128x32xf32> to vector<128x32xf32>
    %cst_41 = arith.constant dense<0.000000e+00> : vector<128x128xf32>
    %124 = tpu.matmul %123, %111, %cst_41 {dimension_numbers = #tpu.dot_dimension_numbers<[1], [0], [0], [1], [0, 0, 1, 1], [], []>} : vector<128x32xf32>, vector<32x128xf32>, vector<128x128xf32> -> vector<128x128xf32>
    %125 = vector.broadcast %112 : vector<128x1xf32> to vector<128x128xf32>
    %126 = arith.addf %124, %125 : vector<128x128xf32>
    %cst_42 = arith.constant 0.000000e+00 : f32
    %127 = vector.broadcast %cst_42 : f32 to vector<128x128xf32>
    %128 = arith.cmpf oge, %126, %127 : vector<128x128xf32>
    %129 = vector.broadcast %120 : vector<128x1xf32> to vector<128x128xf32>
    %130 = arith.mulf %129, %126 : vector<128x128xf32>
    %131 = arith.select %128, %126, %130 : vector<128x128xi1>, vector<128x128xf32>
    %cst_43 = arith.constant dense<0.000000e+00> : vector<1x128xf32>
    %132 = tpu.matmul %11, %131, %cst_43 {dimension_numbers = #tpu.dot_dimension_numbers<[1], [0], [0], [1], [0, 0, 1, 1], [], []>} : vector<1x128xf32>, vector<128x128xf32>, vector<1x128xf32> -> vector<1x128xf32>
    %133 = arith.mulf %131, %131 : vector<128x128xf32>
    %cst_44 = arith.constant dense<0.000000e+00> : vector<1x128xf32>
    %134 = tpu.matmul %11, %133, %cst_44 {dimension_numbers = #tpu.dot_dimension_numbers<[1], [0], [0], [1], [0, 0, 1, 1], [], []>} : vector<1x128xf32>, vector<128x128xf32>, vector<1x128xf32> -> vector<1x128xf32>
    %cst_45 = arith.constant dense<0.000000e+00> : vector<1xf32>
    %135 = vector.multi_reduction <add>, %132, %cst_45 [1] : vector<1x128xf32> to vector<1xf32>
    %136 = vector.shape_cast %135 : vector<1xf32> to vector<1x1xf32>
    %cst_46 = arith.constant 6.10351563E-5 : f32
    %137 = vector.broadcast %cst_46 : f32 to vector<1x1xf32>
    %138 = arith.mulf %136, %137 : vector<1x1xf32>
    %cst_47 = arith.constant dense<0.000000e+00> : vector<1xf32>
    %139 = vector.multi_reduction <add>, %134, %cst_47 [1] : vector<1x128xf32> to vector<1xf32>
    %140 = vector.shape_cast %139 : vector<1xf32> to vector<1x1xf32>
    %cst_48 = arith.constant 6.10351563E-5 : f32
    %141 = vector.broadcast %cst_48 : f32 to vector<1x1xf32>
    %142 = arith.mulf %140, %141 : vector<1x1xf32>
    %143 = arith.mulf %138, %138 : vector<1x1xf32>
    %144 = arith.subf %142, %143 : vector<1x1xf32>
    %cst_49 = arith.constant 9.99999974E-6 : f32
    %145 = vector.broadcast %cst_49 : f32 to vector<1x1xf32>
    %146 = arith.addf %144, %145 : vector<1x1xf32>
    %147 = math.rsqrt %146 : vector<1x1xf32>
    %148 = vector.broadcast %147 : vector<1x1xf32> to vector<128x1xf32>
    %149 = arith.mulf %113, %148 : vector<128x1xf32>
    %150 = vector.broadcast %138 : vector<1x1xf32> to vector<128x1xf32>
    %151 = arith.mulf %150, %149 : vector<128x1xf32>
    %152 = arith.subf %114, %151 : vector<128x1xf32>
    %153 = vector.broadcast %149 : vector<128x1xf32> to vector<128x128xf32>
    %154 = arith.mulf %131, %153 : vector<128x128xf32>
    %155 = vector.broadcast %152 : vector<128x1xf32> to vector<128x128xf32>
    %156 = arith.addf %154, %155 : vector<128x128xf32>
    %c0_50 = arith.constant 0 : index
    %c8_51 = arith.constant 8 : index
    %157 = vector.load %arg6[%c0_50, %c8_51] : memref<128x144xf32, #tpu.memory_space<vmem>>, vector<128x128xf32>
    tpu.vector_store %arg6[%c0_50, %c8_51], %156 {strides = array<i32>} : memref<128x144xf32, #tpu.memory_space<vmem>>, vector<128x128xf32>,
    %158 = vector.extract_strided_slice %118 {offsets = [0, 0], sizes = [128, 1], strides = [1, 1]} : vector<128x3xf32> to vector<128x1xf32>
    %c0_52 = arith.constant 0 : index
    %c6 = arith.constant 6 : index
    %159 = vector.load %arg6[%c0_52, %c6] : memref<128x144xf32, #tpu.memory_space<vmem>>, vector<128x128xf32>
    %160 = vector.broadcast %158 : vector<128x1xf32> to vector<128x128xf32>
    %161 = arith.mulf %160, %159 : vector<128x128xf32>
    %162 = vector.broadcast %115 : vector<128x1xf32> to vector<128x128xf32>
    %163 = arith.addf %162, %161 : vector<128x128xf32>
    %164 = vector.extract_strided_slice %118 {offsets = [0, 1], sizes = [128, 1], strides = [1, 1]} : vector<128x3xf32> to vector<128x1xf32>
    %c0_53 = arith.constant 0 : index
    %c8_54 = arith.constant 8 : index
    %165 = vector.load %arg6[%c0_53, %c8_54] : memref<128x144xf32, #tpu.memory_space<vmem>>, vector<128x128xf32>
    %166 = vector.broadcast %164 : vector<128x1xf32> to vector<128x128xf32>
    %167 = arith.mulf %166, %165 : vector<128x128xf32>
    %168 = arith.addf %163, %167 : vector<128x128xf32>
    %169 = vector.extract_strided_slice %118 {offsets = [0, 2], sizes = [128, 1], strides = [1, 1]} : vector<128x3xf32> to vector<128x1xf32>
    %c0_55 = arith.constant 0 : index
    %c10 = arith.constant 10 : index
    %170 = vector.load %arg6[%c0_55, %c10] : memref<128x144xf32, #tpu.memory_space<vmem>>, vector<128x128xf32>
    %171 = vector.broadcast %169 : vector<128x1xf32> to vector<128x128xf32>
    %172 = arith.mulf %171, %170 : vector<128x128xf32>
    %173 = arith.addf %168, %172 : vector<128x128xf32>
    %cst_56 = arith.constant 0.000000e+00 : f32
    %174 = vector.broadcast %cst_56 : f32 to vector<128x128xf32>
    %175 = arith.cmpf oge, %173, %174 : vector<128x128xf32>
    %176 = vector.broadcast %121 : vector<128x1xf32> to vector<128x128xf32>
    %177 = arith.mulf %176, %173 : vector<128x128xf32>
    %178 = arith.select %175, %173, %177 : vector<128x128xi1>, vector<128x128xf32>
    %cst_57 = arith.constant dense<0.000000e+00> : vector<1x128xf32>
    %179 = tpu.matmul %11, %178, %cst_57 {dimension_numbers = #tpu.dot_dimension_numbers<[1], [0], [0], [1], [0, 0, 1, 1], [], []>} : vector<1x128xf32>, vector<128x128xf32>, vector<1x128xf32> -> vector<1x128xf32>
    %180 = arith.mulf %178, %178 : vector<128x128xf32>
    %cst_58 = arith.constant dense<0.000000e+00> : vector<1x128xf32>
    %181 = tpu.matmul %11, %180, %cst_58 {dimension_numbers = #tpu.dot_dimension_numbers<[1], [0], [0], [1], [0, 0, 1, 1], [], []>} : vector<1x128xf32>, vector<128x128xf32>, vector<1x128xf32> -> vector<1x128xf32>
    %cst_59 = arith.constant dense<0.000000e+00> : vector<1xf32>
    %182 = vector.multi_reduction <add>, %179, %cst_59 [1] : vector<1x128xf32> to vector<1xf32>
    %183 = vector.shape_cast %182 : vector<1xf32> to vector<1x1xf32>
    %cst_60 = arith.constant 6.10351563E-5 : f32
    %184 = vector.broadcast %cst_60 : f32 to vector<1x1xf32>
    %185 = arith.mulf %183, %184 : vector<1x1xf32>
    %cst_61 = arith.constant dense<0.000000e+00> : vector<1xf32>
    %186 = vector.multi_reduction <add>, %181, %cst_61 [1] : vector<1x128xf32> to vector<1xf32>
    %187 = vector.shape_cast %186 : vector<1xf32> to vector<1x1xf32>
    %cst_62 = arith.constant 6.10351563E-5 : f32
    %188 = vector.broadcast %cst_62 : f32 to vector<1x1xf32>
    %189 = arith.mulf %187, %188 : vector<1x1xf32>
    %190 = arith.mulf %185, %185 : vector<1x1xf32>
    %191 = arith.subf %189, %190 : vector<1x1xf32>
    %cst_63 = arith.constant 9.99999974E-6 : f32
    %192 = vector.broadcast %cst_63 : f32 to vector<1x1xf32>
    %193 = arith.addf %191, %192 : vector<1x1xf32>
    %194 = math.rsqrt %193 : vector<1x1xf32>
    %195 = vector.broadcast %194 : vector<1x1xf32> to vector<128x1xf32>
    %196 = arith.mulf %116, %195 : vector<128x1xf32>
    %197 = vector.broadcast %185 : vector<1x1xf32> to vector<128x1xf32>
    %198 = arith.mulf %197, %196 : vector<128x1xf32>
    %199 = arith.subf %117, %198 : vector<128x1xf32>
    %200 = vector.broadcast %196 : vector<128x1xf32> to vector<128x128xf32>
    %201 = arith.mulf %178, %200 : vector<128x128xf32>
    %202 = vector.broadcast %199 : vector<128x1xf32> to vector<128x128xf32>
    %203 = arith.addf %201, %202 : vector<128x128xf32>
    %c1_64 = arith.constant 1 : index
    %c0_65 = arith.constant 0 : index
    %c0_66 = arith.constant 0 : index
    %204 = vector.load %arg3[%c1_64, %c0_65, %c0_66] : memref<4x32x128xf32, #tpu.memory_space<vmem>>, vector<1x32x128xf32>
    %205 = vector.shape_cast %204 : vector<1x32x128xf32> to vector<32x128xf32>
    %cst_67 = arith.constant dense<0.000000e+00> : vector<32x128xf32>
    %206 = tpu.matmul %205, %203, %cst_67 {dimension_numbers = #tpu.dot_dimension_numbers<[1], [0], [0], [1], [0, 0, 1, 1], [], []>} : vector<32x128xf32>, vector<128x128xf32>, vector<32x128xf32> -> vector<32x128xf32>
    %207 = arith.addf %111, %206 : vector<32x128xf32>
    %208 = vector.broadcast %119 : vector<32x1xf32> to vector<32x128xf32>
    %209 = arith.addf %207, %208 : vector<32x128xf32>
    %210 = vector.extract_strided_slice %10 {offsets = [0, 32], sizes = [128, 1], strides = [1, 1]} : vector<128x64xf32> to vector<128x1xf32>
    %211 = vector.extract_strided_slice %10 {offsets = [0, 33], sizes = [128, 1], strides = [1, 1]} : vector<128x64xf32> to vector<128x1xf32>
    %212 = vector.extract_strided_slice %10 {offsets = [0, 34], sizes = [128, 1], strides = [1, 1]} : vector<128x64xf32> to vector<128x1xf32>
    %213 = vector.extract_strided_slice %10 {offsets = [0, 35], sizes = [128, 1], strides = [1, 1]} : vector<128x64xf32> to vector<128x1xf32>
    %214 = vector.extract_strided_slice %10 {offsets = [0, 36], sizes = [128, 1], strides = [1, 1]} : vector<128x64xf32> to vector<128x1xf32>
    %215 = vector.extract_strided_slice %10 {offsets = [0, 37], sizes = [128, 1], strides = [1, 1]} : vector<128x64xf32> to vector<128x1xf32>
    %216 = vector.extract_strided_slice %10 {offsets = [0, 38], sizes = [128, 3], strides = [1, 1]} : vector<128x64xf32> to vector<128x3xf32>
    %217 = vector.extract_strided_slice %10 {offsets = [0, 41], sizes = [32, 1], strides = [1, 1]} : vector<128x64xf32> to vector<32x1xf32>
    %218 = vector.extract_strided_slice %10 {offsets = [0, 42], sizes = [128, 1], strides = [1, 1]} : vector<128x64xf32> to vector<128x1xf32>
    %219 = vector.extract_strided_slice %10 {offsets = [0, 43], sizes = [128, 1], strides = [1, 1]} : vector<128x64xf32> to vector<128x1xf32>
    %c2 = arith.constant 2 : index
    %c0_68 = arith.constant 0 : index
    %c0_69 = arith.constant 0 : index
    %220 = vector.load %arg2[%c2, %c0_68, %c0_69] : memref<4x128x32xf32, #tpu.memory_space<vmem>>, vector<1x128x32xf32>
    %221 = vector.shape_cast %220 : vector<1x128x32xf32> to vector<128x32xf32>
    %cst_70 = arith.constant dense<0.000000e+00> : vector<128x128xf32>
    %222 = tpu.matmul %221, %209, %cst_70 {dimension_numbers = #tpu.dot_dimension_numbers<[1], [0], [0], [1], [0, 0, 1, 1], [], []>} : vector<128x32xf32>, vector<32x128xf32>, vector<128x128xf32> -> vector<128x128xf32>
    %223 = vector.broadcast %210 : vector<128x1xf32> to vector<128x128xf32>
    %224 = arith.addf %222, %223 : vector<128x128xf32>
    %cst_71 = arith.constant 0.000000e+00 : f32
    %225 = vector.broadcast %cst_71 : f32 to vector<128x128xf32>
    %226 = arith.cmpf oge, %224, %225 : vector<128x128xf32>
    %227 = vector.broadcast %218 : vector<128x1xf32> to vector<128x128xf32>
    %228 = arith.mulf %227, %224 : vector<128x128xf32>
    %229 = arith.select %226, %224, %228 : vector<128x128xi1>, vector<128x128xf32>
    %cst_72 = arith.constant dense<0.000000e+00> : vector<1x128xf32>
    %230 = tpu.matmul %11, %229, %cst_72 {dimension_numbers = #tpu.dot_dimension_numbers<[1], [0], [0], [1], [0, 0, 1, 1], [], []>} : vector<1x128xf32>, vector<128x128xf32>, vector<1x128xf32> -> vector<1x128xf32>
    %231 = arith.mulf %229, %229 : vector<128x128xf32>
    %cst_73 = arith.constant dense<0.000000e+00> : vector<1x128xf32>
    %232 = tpu.matmul %11, %231, %cst_73 {dimension_numbers = #tpu.dot_dimension_numbers<[1], [0], [0], [1], [0, 0, 1, 1], [], []>} : vector<1x128xf32>, vector<128x128xf32>, vector<1x128xf32> -> vector<1x128xf32>
    %cst_74 = arith.constant dense<0.000000e+00> : vector<1xf32>
    %233 = vector.multi_reduction <add>, %230, %cst_74 [1] : vector<1x128xf32> to vector<1xf32>
    %234 = vector.shape_cast %233 : vector<1xf32> to vector<1x1xf32>
    %cst_75 = arith.constant 6.10351563E-5 : f32
    %235 = vector.broadcast %cst_75 : f32 to vector<1x1xf32>
    %236 = arith.mulf %234, %235 : vector<1x1xf32>
    %cst_76 = arith.constant dense<0.000000e+00> : vector<1xf32>
    %237 = vector.multi_reduction <add>, %232, %cst_76 [1] : vector<1x128xf32> to vector<1xf32>
    %238 = vector.shape_cast %237 : vector<1xf32> to vector<1x1xf32>
    %cst_77 = arith.constant 6.10351563E-5 : f32
    %239 = vector.broadcast %cst_77 : f32 to vector<1x1xf32>
    %240 = arith.mulf %238, %239 : vector<1x1xf32>
    %241 = arith.mulf %236, %236 : vector<1x1xf32>
    %242 = arith.subf %240, %241 : vector<1x1xf32>
    %cst_78 = arith.constant 9.99999974E-6 : f32
    %243 = vector.broadcast %cst_78 : f32 to vector<1x1xf32>
    %244 = arith.addf %242, %243 : vector<1x1xf32>
    %245 = math.rsqrt %244 : vector<1x1xf32>
    %246 = vector.broadcast %245 : vector<1x1xf32> to vector<128x1xf32>
    %247 = arith.mulf %211, %246 : vector<128x1xf32>
    %248 = vector.broadcast %236 : vector<1x1xf32> to vector<128x1xf32>
    %249 = arith.mulf %248, %247 : vector<128x1xf32>
    %250 = arith.subf %212, %249 : vector<128x1xf32>
    %251 = vector.broadcast %247 : vector<128x1xf32> to vector<128x128xf32>
    %252 = arith.mulf %229, %251 : vector<128x128xf32>
    %253 = vector.broadcast %250 : vector<128x1xf32> to vector<128x128xf32>
    %254 = arith.addf %252, %253 : vector<128x128xf32>
    %c0_79 = arith.constant 0 : index
    %c8_80 = arith.constant 8 : index
    %255 = vector.load %arg6[%c0_79, %c8_80] : memref<128x144xf32, #tpu.memory_space<vmem>>, vector<128x128xf32>
    tpu.vector_store %arg6[%c0_79, %c8_80], %254 {strides = array<i32>} : memref<128x144xf32, #tpu.memory_space<vmem>>, vector<128x128xf32>,
    %256 = vector.extract_strided_slice %216 {offsets = [0, 0], sizes = [128, 1], strides = [1, 1]} : vector<128x3xf32> to vector<128x1xf32>
    %c0_81 = arith.constant 0 : index
    %c4 = arith.constant 4 : index
    %257 = vector.load %arg6[%c0_81, %c4] : memref<128x144xf32, #tpu.memory_space<vmem>>, vector<128x128xf32>
    %258 = vector.broadcast %256 : vector<128x1xf32> to vector<128x128xf32>
    %259 = arith.mulf %258, %257 : vector<128x128xf32>
    %260 = vector.broadcast %213 : vector<128x1xf32> to vector<128x128xf32>
    %261 = arith.addf %260, %259 : vector<128x128xf32>
    %262 = vector.extract_strided_slice %216 {offsets = [0, 1], sizes = [128, 1], strides = [1, 1]} : vector<128x3xf32> to vector<128x1xf32>
    %c0_82 = arith.constant 0 : index
    %c8_83 = arith.constant 8 : index
    %263 = vector.load %arg6[%c0_82, %c8_83] : memref<128x144xf32, #tpu.memory_space<vmem>>, vector<128x128xf32>
    %264 = vector.broadcast %262 : vector<128x1xf32> to vector<128x128xf32>
    %265 = arith.mulf %264, %263 : vector<128x128xf32>
    %266 = arith.addf %261, %265 : vector<128x128xf32>
    %267 = vector.extract_strided_slice %216 {offsets = [0, 2], sizes = [128, 1], strides = [1, 1]} : vector<128x3xf32> to vector<128x1xf32>
    %c0_84 = arith.constant 0 : index
    %c12 = arith.constant 12 : index
    %268 = vector.load %arg6[%c0_84, %c12] : memref<128x144xf32, #tpu.memory_space<vmem>>, vector<128x128xf32>
    %269 = vector.broadcast %267 : vector<128x1xf32> to vector<128x128xf32>
    %270 = arith.mulf %269, %268 : vector<128x128xf32>
    %271 = arith.addf %266, %270 : vector<128x128xf32>
    %cst_85 = arith.constant 0.000000e+00 : f32
    %272 = vector.broadcast %cst_85 : f32 to vector<128x128xf32>
    %273 = arith.cmpf oge, %271, %272 : vector<128x128xf32>
    %274 = vector.broadcast %219 : vector<128x1xf32> to vector<128x128xf32>
    %275 = arith.mulf %274, %271 : vector<128x128xf32>
    %276 = arith.select %273, %271, %275 : vector<128x128xi1>, vector<128x128xf32>
    %cst_86 = arith.constant dense<0.000000e+00> : vector<1x128xf32>
    %277 = tpu.matmul %11, %276, %cst_86 {dimension_numbers = #tpu.dot_dimension_numbers<[1], [0], [0], [1], [0, 0, 1, 1], [], []>} : vector<1x128xf32>, vector<128x128xf32>, vector<1x128xf32> -> vector<1x128xf32>
    %278 = arith.mulf %276, %276 : vector<128x128xf32>
    %cst_87 = arith.constant dense<0.000000e+00> : vector<1x128xf32>
    %279 = tpu.matmul %11, %278, %cst_87 {dimension_numbers = #tpu.dot_dimension_numbers<[1], [0], [0], [1], [0, 0, 1, 1], [], []>} : vector<1x128xf32>, vector<128x128xf32>, vector<1x128xf32> -> vector<1x128xf32>
    %cst_88 = arith.constant dense<0.000000e+00> : vector<1xf32>
    %280 = vector.multi_reduction <add>, %277, %cst_88 [1] : vector<1x128xf32> to vector<1xf32>
    %281 = vector.shape_cast %280 : vector<1xf32> to vector<1x1xf32>
    %cst_89 = arith.constant 6.10351563E-5 : f32
    %282 = vector.broadcast %cst_89 : f32 to vector<1x1xf32>
    %283 = arith.mulf %281, %282 : vector<1x1xf32>
    %cst_90 = arith.constant dense<0.000000e+00> : vector<1xf32>
    %284 = vector.multi_reduction <add>, %279, %cst_90 [1] : vector<1x128xf32> to vector<1xf32>
    %285 = vector.shape_cast %284 : vector<1xf32> to vector<1x1xf32>
    %cst_91 = arith.constant 6.10351563E-5 : f32
    %286 = vector.broadcast %cst_91 : f32 to vector<1x1xf32>
    %287 = arith.mulf %285, %286 : vector<1x1xf32>
    %288 = arith.mulf %283, %283 : vector<1x1xf32>
    %289 = arith.subf %287, %288 : vector<1x1xf32>
    %cst_92 = arith.constant 9.99999974E-6 : f32
    %290 = vector.broadcast %cst_92 : f32 to vector<1x1xf32>
    %291 = arith.addf %289, %290 : vector<1x1xf32>
    %292 = math.rsqrt %291 : vector<1x1xf32>
    %293 = vector.broadcast %292 : vector<1x1xf32> to vector<128x1xf32>
    %294 = arith.mulf %214, %293 : vector<128x1xf32>
    %295 = vector.broadcast %283 : vector<1x1xf32> to vector<128x1xf32>
    %296 = arith.mulf %295, %294 : vector<128x1xf32>
    %297 = arith.subf %215, %296 : vector<128x1xf32>
    %298 = vector.broadcast %294 : vector<128x1xf32> to vector<128x128xf32>
    %299 = arith.mulf %276, %298 : vector<128x128xf32>
    %300 = vector.broadcast %297 : vector<128x1xf32> to vector<128x128xf32>
    %301 = arith.addf %299, %300 : vector<128x128xf32>
    %c2_93 = arith.constant 2 : index
    %c0_94 = arith.constant 0 : index
    %c0_95 = arith.constant 0 : index
    %302 = vector.load %arg3[%c2_93, %c0_94, %c0_95] : memref<4x32x128xf32, #tpu.memory_space<vmem>>, vector<1x32x128xf32>
    %303 = vector.shape_cast %302 : vector<1x32x128xf32> to vector<32x128xf32>
    %cst_96 = arith.constant dense<0.000000e+00> : vector<32x128xf32>
    %304 = tpu.matmul %303, %301, %cst_96 {dimension_numbers = #tpu.dot_dimension_numbers<[1], [0], [0], [1], [0, 0, 1, 1], [], []>} : vector<32x128xf32>, vector<128x128xf32>, vector<32x128xf32> -> vector<32x128xf32>
    %305 = arith.addf %209, %304 : vector<32x128xf32>
    %306 = vector.broadcast %217 : vector<32x1xf32> to vector<32x128xf32>
    %307 = arith.addf %305, %306 : vector<32x128xf32>
    %308 = vector.extract_strided_slice %10 {offsets = [0, 48], sizes = [128, 1], strides = [1, 1]} : vector<128x64xf32> to vector<128x1xf32>
    %309 = vector.extract_strided_slice %10 {offsets = [0, 49], sizes = [128, 1], strides = [1, 1]} : vector<128x64xf32> to vector<128x1xf32>
    %310 = vector.extract_strided_slice %10 {offsets = [0, 50], sizes = [128, 1], strides = [1, 1]} : vector<128x64xf32> to vector<128x1xf32>
    %311 = vector.extract_strided_slice %10 {offsets = [0, 51], sizes = [128, 1], strides = [1, 1]} : vector<128x64xf32> to vector<128x1xf32>
    %312 = vector.extract_strided_slice %10 {offsets = [0, 52], sizes = [128, 1], strides = [1, 1]} : vector<128x64xf32> to vector<128x1xf32>
    %313 = vector.extract_strided_slice %10 {offsets = [0, 53], sizes = [128, 1], strides = [1, 1]} : vector<128x64xf32> to vector<128x1xf32>
    %314 = vector.extract_strided_slice %10 {offsets = [0, 54], sizes = [128, 3], strides = [1, 1]} : vector<128x64xf32> to vector<128x3xf32>
    %315 = vector.extract_strided_slice %10 {offsets = [0, 57], sizes = [32, 1], strides = [1, 1]} : vector<128x64xf32> to vector<32x1xf32>
    %316 = vector.extract_strided_slice %10 {offsets = [0, 58], sizes = [128, 1], strides = [1, 1]} : vector<128x64xf32> to vector<128x1xf32>
    %317 = vector.extract_strided_slice %10 {offsets = [0, 59], sizes = [128, 1], strides = [1, 1]} : vector<128x64xf32> to vector<128x1xf32>
    %c3 = arith.constant 3 : index
    %c0_97 = arith.constant 0 : index
    %c0_98 = arith.constant 0 : index
    %318 = vector.load %arg2[%c3, %c0_97, %c0_98] : memref<4x128x32xf32, #tpu.memory_space<vmem>>, vector<1x128x32xf32>
    %319 = vector.shape_cast %318 : vector<1x128x32xf32> to vector<128x32xf32>
    %cst_99 = arith.constant dense<0.000000e+00> : vector<128x128xf32>
    %320 = tpu.matmul %319, %307, %cst_99 {dimension_numbers = #tpu.dot_dimension_numbers<[1], [0], [0], [1], [0, 0, 1, 1], [], []>} : vector<128x32xf32>, vector<32x128xf32>, vector<128x128xf32> -> vector<128x128xf32>
    %321 = vector.broadcast %308 : vector<128x1xf32> to vector<128x128xf32>
    %322 = arith.addf %320, %321 : vector<128x128xf32>
    %cst_100 = arith.constant 0.000000e+00 : f32
    %323 = vector.broadcast %cst_100 : f32 to vector<128x128xf32>
    %324 = arith.cmpf oge, %322, %323 : vector<128x128xf32>
    %325 = vector.broadcast %316 : vector<128x1xf32> to vector<128x128xf32>
    %326 = arith.mulf %325, %322 : vector<128x128xf32>
    %327 = arith.select %324, %322, %326 : vector<128x128xi1>, vector<128x128xf32>
    %cst_101 = arith.constant dense<0.000000e+00> : vector<1x128xf32>
    %328 = tpu.matmul %11, %327, %cst_101 {dimension_numbers = #tpu.dot_dimension_numbers<[1], [0], [0], [1], [0, 0, 1, 1], [], []>} : vector<1x128xf32>, vector<128x128xf32>, vector<1x128xf32> -> vector<1x128xf32>
    %329 = arith.mulf %327, %327 : vector<128x128xf32>
    %cst_102 = arith.constant dense<0.000000e+00> : vector<1x128xf32>
    %330 = tpu.matmul %11, %329, %cst_102 {dimension_numbers = #tpu.dot_dimension_numbers<[1], [0], [0], [1], [0, 0, 1, 1], [], []>} : vector<1x128xf32>, vector<128x128xf32>, vector<1x128xf32> -> vector<1x128xf32>
    %cst_103 = arith.constant dense<0.000000e+00> : vector<1xf32>
    %331 = vector.multi_reduction <add>, %328, %cst_103 [1] : vector<1x128xf32> to vector<1xf32>
    %332 = vector.shape_cast %331 : vector<1xf32> to vector<1x1xf32>
    %cst_104 = arith.constant 6.10351563E-5 : f32
    %333 = vector.broadcast %cst_104 : f32 to vector<1x1xf32>
    %334 = arith.mulf %332, %333 : vector<1x1xf32>
    %cst_105 = arith.constant dense<0.000000e+00> : vector<1xf32>
    %335 = vector.multi_reduction <add>, %330, %cst_105 [1] : vector<1x128xf32> to vector<1xf32>
    %336 = vector.shape_cast %335 : vector<1xf32> to vector<1x1xf32>
    %cst_106 = arith.constant 6.10351563E-5 : f32
    %337 = vector.broadcast %cst_106 : f32 to vector<1x1xf32>
    %338 = arith.mulf %336, %337 : vector<1x1xf32>
    %339 = arith.mulf %334, %334 : vector<1x1xf32>
    %340 = arith.subf %338, %339 : vector<1x1xf32>
    %cst_107 = arith.constant 9.99999974E-6 : f32
    %341 = vector.broadcast %cst_107 : f32 to vector<1x1xf32>
    %342 = arith.addf %340, %341 : vector<1x1xf32>
    %343 = math.rsqrt %342 : vector<1x1xf32>
    %344 = vector.broadcast %343 : vector<1x1xf32> to vector<128x1xf32>
    %345 = arith.mulf %309, %344 : vector<128x1xf32>
    %346 = vector.broadcast %334 : vector<1x1xf32> to vector<128x1xf32>
    %347 = arith.mulf %346, %345 : vector<128x1xf32>
    %348 = arith.subf %310, %347 : vector<128x1xf32>
    %349 = vector.broadcast %345 : vector<128x1xf32> to vector<128x128xf32>
    %350 = arith.mulf %327, %349 : vector<128x128xf32>
    %351 = vector.broadcast %348 : vector<128x1xf32> to vector<128x128xf32>
    %352 = arith.addf %350, %351 : vector<128x128xf32>
    %c0_108 = arith.constant 0 : index
    %c8_109 = arith.constant 8 : index
    %353 = vector.load %arg6[%c0_108, %c8_109] : memref<128x144xf32, #tpu.memory_space<vmem>>, vector<128x128xf32>
    tpu.vector_store %arg6[%c0_108, %c8_109], %352 {strides = array<i32>} : memref<128x144xf32, #tpu.memory_space<vmem>>, vector<128x128xf32>,
    %354 = vector.extract_strided_slice %314 {offsets = [0, 0], sizes = [128, 1], strides = [1, 1]} : vector<128x3xf32> to vector<128x1xf32>
    %c0_110 = arith.constant 0 : index
    %c0_111 = arith.constant 0 : index
    %355 = vector.load %arg6[%c0_110, %c0_111] : memref<128x144xf32, #tpu.memory_space<vmem>>, vector<128x128xf32>
    %356 = vector.broadcast %354 : vector<128x1xf32> to vector<128x128xf32>
    %357 = arith.mulf %356, %355 : vector<128x128xf32>
    %358 = vector.broadcast %311 : vector<128x1xf32> to vector<128x128xf32>
    %359 = arith.addf %358, %357 : vector<128x128xf32>
    %360 = vector.extract_strided_slice %314 {offsets = [0, 1], sizes = [128, 1], strides = [1, 1]} : vector<128x3xf32> to vector<128x1xf32>
    %c0_112 = arith.constant 0 : index
    %c8_113 = arith.constant 8 : index
    %361 = vector.load %arg6[%c0_112, %c8_113] : memref<128x144xf32, #tpu.memory_space<vmem>>, vector<128x128xf32>
    %362 = vector.broadcast %360 : vector<128x1xf32> to vector<128x128xf32>
    %363 = arith.mulf %362, %361 : vector<128x128xf32>
    %364 = arith.addf %359, %363 : vector<128x128xf32>
    %365 = vector.extract_strided_slice %314 {offsets = [0, 2], sizes = [128, 1], strides = [1, 1]} : vector<128x3xf32> to vector<128x1xf32>
    %c0_114 = arith.constant 0 : index
    %c16 = arith.constant 16 : index
    %366 = vector.load %arg6[%c0_114, %c16] : memref<128x144xf32, #tpu.memory_space<vmem>>, vector<128x128xf32>
    %367 = vector.broadcast %365 : vector<128x1xf32> to vector<128x128xf32>
    %368 = arith.mulf %367, %366 : vector<128x128xf32>
    %369 = arith.addf %364, %368 : vector<128x128xf32>
    %cst_115 = arith.constant 0.000000e+00 : f32
    %370 = vector.broadcast %cst_115 : f32 to vector<128x128xf32>
    %371 = arith.cmpf oge, %369, %370 : vector<128x128xf32>
    %372 = vector.broadcast %317 : vector<128x1xf32> to vector<128x128xf32>
    %373 = arith.mulf %372, %369 : vector<128x128xf32>
    %374 = arith.select %371, %369, %373 : vector<128x128xi1>, vector<128x128xf32>
    %cst_116 = arith.constant dense<0.000000e+00> : vector<1x128xf32>
    %375 = tpu.matmul %11, %374, %cst_116 {dimension_numbers = #tpu.dot_dimension_numbers<[1], [0], [0], [1], [0, 0, 1, 1], [], []>} : vector<1x128xf32>, vector<128x128xf32>, vector<1x128xf32> -> vector<1x128xf32>
    %376 = arith.mulf %374, %374 : vector<128x128xf32>
    %cst_117 = arith.constant dense<0.000000e+00> : vector<1x128xf32>
    %377 = tpu.matmul %11, %376, %cst_117 {dimension_numbers = #tpu.dot_dimension_numbers<[1], [0], [0], [1], [0, 0, 1, 1], [], []>} : vector<1x128xf32>, vector<128x128xf32>, vector<1x128xf32> -> vector<1x128xf32>
    %cst_118 = arith.constant dense<0.000000e+00> : vector<1xf32>
    %378 = vector.multi_reduction <add>, %375, %cst_118 [1] : vector<1x128xf32> to vector<1xf32>
    %379 = vector.shape_cast %378 : vector<1xf32> to vector<1x1xf32>
    %cst_119 = arith.constant 6.10351563E-5 : f32
    %380 = vector.broadcast %cst_119 : f32 to vector<1x1xf32>
    %381 = arith.mulf %379, %380 : vector<1x1xf32>
    %cst_120 = arith.constant dense<0.000000e+00> : vector<1xf32>
    %382 = vector.multi_reduction <add>, %377, %cst_120 [1] : vector<1x128xf32> to vector<1xf32>
    %383 = vector.shape_cast %382 : vector<1xf32> to vector<1x1xf32>
    %cst_121 = arith.constant 6.10351563E-5 : f32
    %384 = vector.broadcast %cst_121 : f32 to vector<1x1xf32>
    %385 = arith.mulf %383, %384 : vector<1x1xf32>
    %386 = arith.mulf %381, %381 : vector<1x1xf32>
    %387 = arith.subf %385, %386 : vector<1x1xf32>
    %cst_122 = arith.constant 9.99999974E-6 : f32
    %388 = vector.broadcast %cst_122 : f32 to vector<1x1xf32>
    %389 = arith.addf %387, %388 : vector<1x1xf32>
    %390 = math.rsqrt %389 : vector<1x1xf32>
    %391 = vector.broadcast %390 : vector<1x1xf32> to vector<128x1xf32>
    %392 = arith.mulf %312, %391 : vector<128x1xf32>
    %393 = vector.broadcast %381 : vector<1x1xf32> to vector<128x1xf32>
    %394 = arith.mulf %393, %392 : vector<128x1xf32>
    %395 = arith.subf %313, %394 : vector<128x1xf32>
    %396 = vector.broadcast %392 : vector<128x1xf32> to vector<128x128xf32>
    %397 = arith.mulf %374, %396 : vector<128x128xf32>
    %398 = vector.broadcast %395 : vector<128x1xf32> to vector<128x128xf32>
    %399 = arith.addf %397, %398 : vector<128x128xf32>
    %c3_123 = arith.constant 3 : index
    %c0_124 = arith.constant 0 : index
    %c0_125 = arith.constant 0 : index
    %400 = vector.load %arg3[%c3_123, %c0_124, %c0_125] : memref<4x32x128xf32, #tpu.memory_space<vmem>>, vector<1x32x128xf32>
    %401 = vector.shape_cast %400 : vector<1x32x128xf32> to vector<32x128xf32>
    %cst_126 = arith.constant dense<0.000000e+00> : vector<32x128xf32>
    %402 = tpu.matmul %401, %399, %cst_126 {dimension_numbers = #tpu.dot_dimension_numbers<[1], [0], [0], [1], [0, 0, 1, 1], [], []>} : vector<32x128xf32>, vector<128x128xf32>, vector<32x128xf32> -> vector<32x128xf32>
    %403 = arith.addf %307, %402 : vector<32x128xf32>
    %404 = vector.broadcast %315 : vector<32x1xf32> to vector<32x128xf32>
    %405 = arith.addf %403, %404 : vector<32x128xf32>
    %c0_127 = arith.constant 0 : index
    %c0_128 = arith.constant 0 : index
    %c0_129 = arith.constant 0 : index
    %406 = vector.load %arg5[%c0_127, %c0_128, %c0_129] : memref<1x32x128xf32, #tpu.memory_space<vmem>>, vector<1x32x128xf32>
    %407 = vector.shape_cast %406 : vector<1x32x128xf32> to vector<32x128xf32>
    %408 = vector.shape_cast %405 : vector<32x128xf32> to vector<1x32x128xf32>
    tpu.vector_store %arg5[%c0_127, %c0_128, %c0_129], %408 {strides = array<i32>} : memref<1x32x128xf32, #tpu.memory_space<vmem>>, vector<1x32x128xf32>,
    return
  }
  func.func @transform_0(%arg0: i32) -> (i32, i32, i32) {
    %c0_i32 = arith.constant 0 : i32
    %c0_i32_0 = arith.constant 0 : i32
    %c0_i32_1 = arith.constant 0 : i32
    return %arg0, %c0_i32, %c0_i32_0 : i32, i32, i32
  }
  func.func @transform_1(%arg0: i32) -> (i32, i32, i32) {
    %c0_i32 = arith.constant 0 : i32
    %c0_i32_0 = arith.constant 0 : i32
    %c0_i32_1 = arith.constant 0 : i32
    %c0_i32_2 = arith.constant 0 : i32
    return %c0_i32, %c0_i32_0, %c0_i32_1 : i32, i32, i32
  }
  func.func @transform_2(%arg0: i32) -> (i32, i32, i32) {
    %c0_i32 = arith.constant 0 : i32
    %c0_i32_0 = arith.constant 0 : i32
    %c0_i32_1 = arith.constant 0 : i32
    %c0_i32_2 = arith.constant 0 : i32
    return %c0_i32, %c0_i32_0, %c0_i32_1 : i32, i32, i32
  }
  func.func @transform_3(%arg0: i32) -> (i32, i32) {
    %c0_i32 = arith.constant 0 : i32
    %c0_i32_0 = arith.constant 0 : i32
    %c0_i32_1 = arith.constant 0 : i32
    return %c0_i32, %c0_i32_0 : i32, i32
  }
  func.func @transform_4(%arg0: i32) -> (i32, i32, i32) {
    %c0_i32 = arith.constant 0 : i32
    %c0_i32_0 = arith.constant 0 : i32
    %c0_i32_1 = arith.constant 0 : i32
    return %arg0, %c0_i32, %c0_i32_0 : i32, i32, i32
  }
}

</mosaic_0001>

<llo_original>
// kernel: conv1d_block_stack.1
$region0: #{conv1d_block_stack.1}
  #allocation0 [shape = 'u32[]', space=smem, size = 0x4, offset = 0x4, fixed_abs, tag = 'smem constant byte address 0x4 - core index']
  #allocation1 [shape = 'u32[144,128]{1,0:T(1,128)}', space=vmem, size = 0x12000, scoped, tag = 'internal scratch']
  #allocation2 [shape = 'f32[128,144]{1,0:T(8,128)}', space=vmem, size = 0x20000, scoped, tag = 'scratch operand']
  %s0 = inlined_call_operand.vmem [shape: f32[2,32,128], index: 0, kind: input, shape index: {}]
  %s1 = inlined_call_operand.vmem [shape: f32[4,128,32], index: 1, kind: input, shape index: {}]
  %s2 = inlined_call_operand.vmem [shape: f32[4,32,128], index: 2, kind: input, shape index: {}]
  %s3 = inlined_call_operand.vmem [shape: f32[64,128], index: 3, kind: input, shape index: {}]
  %s4 = inlined_call_operand.hbm [shape: f32[2,32,128], index: 4, kind: output, shape index: {}]
  %s5 = sld [smem:[#allocation0]]
  $region49: #{conv1d_block_stack.1} parent=0
    _
  %s7 = ssub.s32 1, %s5
  %s8 = scalar_select 0, %s7, %s5
  $region1: #{conv1d_block_stack.1} parent=0
    #allocation3 [shape = 'u8[32768]{0}', space=vmem, size = 0x8000, scoped, tag = 'output window, operand 0']
    #allocation4 [shape = 's32[2]{0}', space=sflag, size = 0x8, scoped, tag = 'scoped memory for conv1d_block_stack.1']
    %9 = vsyncpa [#allocation4], 0
    %s10 = scalar_lea.sflag [#allocation4], 1
    %11 = vsyncpa %s10, 0
    loop: start=0, step=1, limit=4
    $region2: #{conv1d_block_stack.1} parent=1 // loop_pre_header
      _
    $region3: #{conv1d_block_stack.1} parent=1 // loop_header
      %s13 = sphi 0, %s17
      %p14 = scmp.ge.s32.totalorder %s13, 4
      %s23 = sphi 0, %s25
      %s26 = sphi 0, %s23
      %s27 = sphi 0, %s26
      %s43 = sphi 0, %s27
      %s47 = sphi 0, %s47
      %s49 = sphi 0, %s47
      %s50 = sphi 0, %s49
      %s64 = sphi 0, %s50
      %s68 = sphi 0, %s68
      %s70 = sphi 0, %s68
      %s71 = sphi 0, %s70
      %s85 = sphi 0, %s71
      %s89 = sphi 0, %s89
      %s91 = sphi 0, %s89
      %s92 = sphi 0, %s91
      %s106 = sphi 0, %s92
      %s112 = sphi 0, %s114
      %s115 = sphi 0, %s112
      %s116 = sphi 0, %s115
      %s132 = sphi 0, %s116
    $region4: #{conv1d_block_stack.1} parent=1 // loop_header_branch
      %16 = sbr.rel (%p14) target = $region8
    $region5: #{conv1d_block_stack.1} parent=1 // loop_body
      %s18 = ssub.s32 %s13, 1
      %s19 = ssub.s32 %s13, 2
      %s20 = sadd.s32 %s13, 1
      %s21 = ssub.s32 %s13, %s20
      %p22 = scmp.eq.s32.totalorder %s21, 0
      %s24 = sadd.s32 %s23, 1
      %s25 = scalar_select %p22, %s23, %s24
      %p28 = pneg %p22
      %p29 = scmp.eq.s32.totalorder %s13, 1
      %p30 = por %p28, %p29
      %p31 = scmp.ne.s32.totalorder %s23, %s26
      %p32 = scmp.eq.s32.totalorder %s13, 0
      %p33 = por %p31, %p32
      %p34 = scmp.ne.s32.totalorder %s23, %s26
      %p35 = scmp.eq.s32.totalorder %s18, 1
      %p36 = por %p34, %p35
      %p37 = scmp.ne.s32.totalorder %s26, %s27
      %p38 = scmp.eq.s32.totalorder %s18, 0
      %p39 = por %p37, %p38
      %p40 = scmp.ne.s32.totalorder %s26, %s27
      %p41 = scmp.eq.s32.totalorder %s19, 1
      %p42 = por %p40, %p41
      %p44 = scmp.ne.s32.totalorder %s27, %s43
      %p45 = scmp.eq.s32.totalorder %s19, 0
      %p46 = por %p44, %p45
      %s48 = sadd.s32 %s47, 1
      %p51 = scmp.eq.s32.totalorder %s13, 1
      %p52 = scmp.ne.s32.totalorder %s47, %s49
      %p53 = scmp.eq.s32.totalorder %s13, 0
      %p54 = por %p52, %p53
      %p55 = scmp.ne.s32.totalorder %s47, %s49
      %p56 = scmp.eq.s32.totalorder %s18, 1
      %p57 = por %p55, %p56
      %p58 = scmp.ne.s32.totalorder %s49, %s50
      %p59 = scmp.eq.s32.totalorder %s18, 0
      %p60 = por %p58, %p59
      %p61 = scmp.ne.s32.totalorder %s49, %s50
      %p62 = scmp.eq.s32.totalorder %s19, 1
      %p63 = por %p61, %p62
      %p65 = scmp.ne.s32.totalorder %s50, %s64
      %p66 = scmp.eq.s32.totalorder %s19, 0
      %p67 = por %p65, %p66
      %s69 = sadd.s32 %s68, 1
      %p72 = scmp.eq.s32.totalorder %s13, 1
      %p73 = scmp.ne.s32.totalorder %s68, %s70
      %p74 = scmp.eq.s32.totalorder %s13, 0
      %p75 = por %p73, %p74
      %p76 = scmp.ne.s32.totalorder %s68, %s70
      %p77 = scmp.eq.s32.totalorder %s18, 1
      %p78 = por %p76, %p77
      %p79 = scmp.ne.s32.totalorder %s70, %s71
      %p80 = scmp.eq.s32.totalorder %s18, 0
      %p81 = por %p79, %p80
      %p82 = scmp.ne.s32.totalorder %s70, %s71
      %p83 = scmp.eq.s32.totalorder %s19, 1
      %p84 = por %p82, %p83
      %p86 = scmp.ne.s32.totalorder %s71, %s85
      %p87 = scmp.eq.s32.totalorder %s19, 0
      %p88 = por %p86, %p87
      %s90 = sadd.s32 %s89, 1
      %p93 = scmp.eq.s32.totalorder %s13, 1
      %p94 = scmp.ne.s32.totalorder %s89, %s91
      %p95 = scmp.eq.s32.totalorder %s13, 0
      %p96 = por %p94, %p95
      %p97 = scmp.ne.s32.totalorder %s89, %s91
      %p98 = scmp.eq.s32.totalorder %s18, 1
      %p99 = por %p97, %p98
      %p100 = scmp.ne.s32.totalorder %s91, %s92
      %p101 = scmp.eq.s32.totalorder %s18, 0
      %p102 = por %p100, %p101
      %p103 = scmp.ne.s32.totalorder %s91, %s92
      %p104 = scmp.eq.s32.totalorder %s19, 1
      %p105 = por %p103, %p104
      %p107 = scmp.ne.s32.totalorder %s92, %s106
      %p108 = scmp.eq.s32.totalorder %s19, 0
      %p109 = por %p107, %p108
      %s110 = ssub.s32 %s13, %s20
      %p111 = scmp.eq.s32.totalorder %s110, 0
      %s113 = sadd.s32 %s112, 1
      %s114 = scalar_select %p111, %s112, %s113
      %p117 = pneg %p111
      %p118 = scmp.eq.s32.totalorder %s13, 1
      %p119 = por %p117, %p118
      %p120 = scmp.ne.s32.totalorder %s112, %s115
      %p121 = scmp.eq.s32.totalorder %s13, 0
      %p122 = por %p120, %p121
      %p123 = scmp.ne.s32.totalorder %s112, %s115
      %p124 = scmp.eq.s32.totalorder %s18, 1
      %p125 = por %p123, %p124
      %p126 = scmp.ne.s32.totalorder %s115, %s116
      %p127 = scmp.eq.s32.totalorder %s18, 0
      %p128 = por %p126, %p127
      %p129 = scmp.ne.s32.totalorder %s115, %s116
      %p130 = scmp.eq.s32.totalorder %s19, 1
      %p131 = por %p129, %p130
      %p133 = scmp.ne.s32.totalorder %s116, %s132
      %p134 = scmp.eq.s32.totalorder %s19, 0
      %p135 = por %p133, %p134
      %p136 = scmp.le.s32.totalorder 1, %s13
      %p137 = scmp.lt.s32.totalorder %s13, 3
      %p138 = pnand %p136, %p137
      %p139 = pneg %p138
      // Predicated region
      $region9: #{conv1d_block_stack.1} parent=5 // pred_check
        _
      $region10: #{conv1d_block_stack.1} parent=5 // pred_check_branch
        %141 = sbr.rel (%p138) target = $region12
      $region11: #{conv1d_block_stack.1} parent=5 // pred_region
        %s142 = ssub.s32 %s13, 1
        // Predicated region
        $region13: #{conv1d_block_stack.1} parent=11 // pred_check
          %p143 = pneg %p60
        $region14: #{conv1d_block_stack.1} parent=11 // pred_check_branch
          %145 = sbr.rel (%p143) target = $region16
        $region15: #{conv1d_block_stack.1} parent=11 // pred_region
          _
        $region16: #{conv1d_block_stack.1} parent=11 // pred_fallthru
          _
        // Predicated region
        $region17: #{conv1d_block_stack.1} parent=11 // pred_check
          %p146 = pneg %p81
        $region18: #{conv1d_block_stack.1} parent=11 // pred_check_branch
          %148 = sbr.rel (%p146) target = $region20
        $region19: #{conv1d_block_stack.1} parent=11 // pred_region
          _
        $region20: #{conv1d_block_stack.1} parent=11 // pred_fallthru
          _
        // Predicated region
        $region21: #{conv1d_block_stack.1} parent=11 // pred_check
          %p149 = pneg %p102
        $region22: #{conv1d_block_stack.1} parent=11 // pred_check_branch
          %151 = sbr.rel (%p149) target = $region24
        $region23: #{conv1d_block_stack.1} parent=11 // pred_region
          _
        $region24: #{conv1d_block_stack.1} parent=11 // pred_fallthru
          _
      $region12: #{conv1d_block_stack.1} parent=5 // pred_fallthru
        _
      %p152 = scmp.lt.s32.totalorder %s13, 2
      // Predicated region
      $region25: #{conv1d_block_stack.1} parent=5 // pred_check
        %p153 = pneg %p152
      $region26: #{conv1d_block_stack.1} parent=5 // pred_check_branch
        %155 = sbr.rel (%p153) target = $region28
      $region27: #{conv1d_block_stack.1} parent=5 // pred_region
        // Predicated region
        $region29: #{conv1d_block_stack.1} parent=27 // pred_check
          %p156 = pneg %p33
        $region30: #{conv1d_block_stack.1} parent=27 // pred_check_branch
          %158 = sbr.rel (%p156) target = $region32
        $region31: #{conv1d_block_stack.1} parent=27 // pred_region
          %p159 = scmp.lt.s32.totalorder %s13, 1
          %s160 = scalar_select %p159, %s13, 1
          %s161 = smul.addr %s160, 4
          %s162 = smul.addr %s161, 8
          %s163 = scalar_lea.vmem %s0, %s162
        $region32: #{conv1d_block_stack.1} parent=27 // pred_fallthru
          _
      $region28: #{conv1d_block_stack.1} parent=5 // pred_fallthru
        _
      %p164 = scmp.le.s32.totalorder 1, %s13
      %p165 = scmp.lt.s32.totalorder %s13, 3
      %p166 = pnand %p164, %p165
      %p167 = pneg %p166
      // Predicated region
      $region33: #{conv1d_block_stack.1} parent=5 // pred_check
        _
      $region34: #{conv1d_block_stack.1} parent=5 // pred_check_branch
        %169 = sbr.rel (%p166) target = $region36
      $region35: #{conv1d_block_stack.1} parent=5 // pred_region
        %s170 = ssub.s32 %s13, 1
        %p171 = scmp.lt.s32.totalorder %s18, 1
        %s172 = scalar_select %p171, %s18, 1
        %s173 = smul.addr %s172, 4
        %s174 = smul.addr %s173, 8
        %s175 = scalar_lea.vmem %s0, %s174
        %p176 = pneg %p39
        %p177 = pneg %p36
        %p178 = pneg %p60
        %p179 = pneg %p57
        %p180 = pneg %p81
        %p181 = pneg %p78
        %p182 = pneg %p102
        %p183 = pneg %p99
        %p184 = pneg %p128
        %p185 = pneg %p125
        %s186 = sand.u32 %s115, 1
        %s187 = scalar_lea.sflag [#allocation4], %s186
        %s188 = sand.u32 %s115, 1
        %s189 = smul.addr %s188, 32
        %s190 = scalar_lea.vmem [#allocation3], %s189
        %p191 = scmp.lt.s32.totalorder %s18, 1
        %s192 = scalar_select %p191, %s18, 1
        %s193 = smul.addr %s192, 4
        %s194 = smul.addr %s193, 8
        %s195 = scalar_lea.vmem %s0, %s194
        %vm196 = vcmask 64512
        %197 = vst.msk [vmem:[#allocation2] sm:$0xff] %vm196, 0.0
        %198 = vst.msk [vmem:[#allocation2 + $0x10] sm:$0xff] %vm196, 0.0
        %199 = vst.msk [vmem:[#allocation2 + $0x20] sm:$0xff] %vm196, 0.0
        %200 = vst.msk [vmem:[#allocation2 + $0x30] sm:$0xff] %vm196, 0.0
        %201 = vst.msk [vmem:[#allocation2 + $0x40] sm:$0xff] %vm196, 0.0
        %202 = vst.msk [vmem:[#allocation2 + $0x50] sm:$0xff] %vm196, 0.0
        %203 = vst.msk [vmem:[#allocation2 + $0x60] sm:$0xff] %vm196, 0.0
        %204 = vst.msk [vmem:[#allocation2 + $0x70] sm:$0xff] %vm196, 0.0
        %205 = vst.msk [vmem:[#allocation2 + $0x80] sm:$0xff] %vm196, 0.0
        %206 = vst.msk [vmem:[#allocation2 + $0x90] sm:$0xff] %vm196, 0.0
        %207 = vst.msk [vmem:[#allocation2 + $0xa0] sm:$0xff] %vm196, 0.0
        %208 = vst.msk [vmem:[#allocation2 + $0xb0] sm:$0xff] %vm196, 0.0
        %209 = vst.msk [vmem:[#allocation2 + $0xc0] sm:$0xff] %vm196, 0.0
        %210 = vst.msk [vmem:[#allocation2 + $0xd0] sm:$0xff] %vm196, 0.0
        %211 = vst.msk [vmem:[#allocation2 + $0xe0] sm:$0xff] %vm196, 0.0
        %212 = vst.msk [vmem:[#allocation2 + $0xf0] sm:$0xff] %vm196, 0.0
        %vm213 = vcmask 130112
        %214 = vst.msk [vmem:[#allocation2 + $0x8] sm:$0xff] %vm213, 0.0
        %215 = vst.msk [vmem:[#allocation2 + $0x18] sm:$0xff] %vm213, 0.0
        %216 = vst.msk [vmem:[#allocation2 + $0x28] sm:$0xff] %vm213, 0.0
        %217 = vst.msk [vmem:[#allocation2 + $0x38] sm:$0xff] %vm213, 0.0
        %218 = vst.msk [vmem:[#allocation2 + $0x48] sm:$0xff] %vm213, 0.0
        %219 = vst.msk [vmem:[#allocation2 + $0x58] sm:$0xff] %vm213, 0.0
        %220 = vst.msk [vmem:[#allocation2 + $0x68] sm:$0xff] %vm213, 0.0
        %221 = vst.msk [vmem:[#allocation2 + $0x78] sm:$0xff] %vm213, 0.0
        %222 = vst.msk [vmem:[#allocation2 + $0x88] sm:$0xff] %vm213, 0.0
        %223 = vst.msk [vmem:[#allocation2 + $0x98] sm:$0xff] %vm213, 0.0
        %224 = vst.msk [vmem:[#allocation2 + $0xa8] sm:$0xff] %vm213, 0.0
        %225 = vst.msk [vmem:[#allocation2 + $0xb8] sm:$0xff] %vm213, 0.0
        %226 = vst.msk [vmem:[#allocation2 + $0xc8] sm:$0xff] %vm213, 0.0
        %227 = vst.msk [vmem:[#allocation2 + $0xd8] sm:$0xff] %vm213, 0.0
        %228 = vst.msk [vmem:[#allocation2 + $0xe8] sm:$0xff] %vm213, 0.0
        %229 = vst.msk [vmem:[#allocation2 + $0xf8] sm:$0xff] %vm213, 0.0
        %v230 = vlaneseq
        %v231 = vshrl.u32 %v230, 7
        %v232 = vadd.s32 %v231, 8
        %v233 = vadd.s32 %v231, 16
        %v234 = vadd.s32 %v231, 24
        %v235 = vadd.s32 %v231, 32
        %v236 = vadd.s32 %v231, 40
        %v237 = vadd.s32 %v231, 48
        %v238 = vadd.s32 %v231, 56
        %v239 = vadd.s32 %v231, 64
        %v240 = vadd.s32 %v231, 72
        %v241 = vadd.s32 %v231, 80
        %v242 = vadd.s32 %v231, 88
        %v243 = vadd.s32 %v231, 96
        %v244 = vadd.s32 %v231, 104
        %v245 = vadd.s32 %v231, 112
        %v246 = vadd.s32 %v231, 120
        %v247 = vlaneseq
        %v248 = vand.u32 %v247, 127
        %vm249 = vcmp.eq.s32.totalorder %v231, %v248
        %vm250 = vcmp.eq.s32.totalorder %v232, %v248
        %vm251 = vcmp.eq.s32.totalorder %v233, %v248
        %vm252 = vcmp.eq.s32.totalorder %v234, %v248
        %vm253 = vcmp.eq.s32.totalorder %v235, %v248
        %vm254 = vcmp.eq.s32.totalorder %v236, %v248
        %vm255 = vcmp.eq.s32.totalorder %v237, %v248
        %vm256 = vcmp.eq.s32.totalorder %v238, %v248
        %vm257 = vcmp.eq.s32.totalorder %v239, %v248
        %vm258 = vcmp.eq.s32.totalorder %v240, %v248
        %vm259 = vcmp.eq.s32.totalorder %v241, %v248
        %vm260 = vcmp.eq.s32.totalorder %v242, %v248
        %vm261 = vcmp.eq.s32.totalorder %v243, %v248
        %vm262 = vcmp.eq.s32.totalorder %v244, %v248
        %vm263 = vcmp.eq.s32.totalorder %v245, %v248
        %vm264 = vcmp.eq.s32.totalorder %v246, %v248
        %v265 = vsel %vm249, 1, 0
        %v266 = vsel %vm250, 1, 0
        %v267 = vsel %vm251, 1, 0
        %v268 = vsel %vm252, 1, 0
        %v269 = vsel %vm253, 1, 0
        %v270 = vsel %vm254, 1, 0
        %v271 = vsel %vm255, 1, 0
        %v272 = vsel %vm256, 1, 0
        %v273 = vsel %vm257, 1, 0
        %v274 = vsel %vm258, 1, 0
        %v275 = vsel %vm259, 1, 0
        %v276 = vsel %vm260, 1, 0
        %v277 = vsel %vm261, 1, 0
        %v278 = vsel %vm262, 1, 0
        %v279 = vsel %vm263, 1, 0
        %v280 = vsel %vm264, 1, 0
        %v281 = vcvt.s32.f32 %v265
        %v282 = vcvt.s32.f32 %v266
        %v283 = vcvt.s32.f32 %v267
        %v284 = vcvt.s32.f32 %v268
        %v285 = vcvt.s32.f32 %v269
        %v286 = vcvt.s32.f32 %v270
        %v287 = vcvt.s32.f32 %v271
        %v288 = vcvt.s32.f32 %v272
        %v289 = vcvt.s32.f32 %v273
        %v290 = vcvt.s32.f32 %v274
        %v291 = vcvt.s32.f32 %v275
        %v292 = vcvt.s32.f32 %v276
        %v293 = vcvt.s32.f32 %v277
        %v294 = vcvt.s32.f32 %v278
        %v295 = vcvt.s32.f32 %v279
        %v296 = vcvt.s32.f32 %v280
        %v297 = vld [vmem:[%s3] sm:$0xff]
        %v298 = vld [vmem:[%s3 + $0x8] sm:$0xff]
        %v299 = vld [vmem:[%s3 + $0x10] sm:$0xff]
        %v300 = vld [vmem:[%s3 + $0x18] sm:$0xff]
        %v301 = vld [vmem:[%s3 + $0x20] sm:$0xff]
        %v302 = vld [vmem:[%s3 + $0x28] sm:$0xff]
        %v303 = vld [vmem:[%s3 + $0x30] sm:$0xff]
        %v304 = vld [vmem:[%s3 + $0x38] sm:$0xff]
        %305 = vmatprep.subr.mxu0 0.0
        %306 = vmatpush1.xpose.msra.mxu0 %v297
        %307 = vmatprep.subr.mxu0 0.0
        %308 = vmatpush1.xpose.msra.mxu0 %v298
        %309 = vmatprep.subr.mxu0 0.0
        %310 = vmatpush1.xpose.msra.mxu0 %v299
        %311 = vmatprep.subr.mxu0 0.0
        %312 = vmatpush1.xpose.msra.mxu0 %v300
        %313 = vmatprep.subr.mxu0 0.0
        %314 = vmatpush1.xpose.msra.mxu0 %v301
        %315 = vmatprep.subr.mxu0 0.0
        %316 = vmatpush1.xpose.msra.mxu0 %v302
        %317 = vmatprep.subr.mxu0 0.0
        %318 = vmatpush1.xpose.msra.mxu0 %v303
        %319 = vmatprep.subr.mxu0 0.0
        %320 = vmatpush1.xpose.msra.mxu0 %v304
        %321 = vmatprep.subr.mxu0 0.0
        %322 = vmatpush1.xpose.msra.mxu0 0.0
        %323 = vmatprep.subr.mxu0 0.0
        %324 = vmatpush1.xpose.msra.mxu0 0.0
        %325 = vmatprep.subr.mxu0 0.0
        %326 = vmatpush1.xpose.msra.mxu0 0.0
        %327 = vmatprep.subr.mxu0 0.0
        %328 = vmatpush1.xpose.msra.mxu0 0.0
        %329 = vmatprep.subr.mxu0 0.0
        %330 = vmatpush1.xpose.msra.mxu0 0.0
        %331 = vmatprep.subr.mxu0 0.0
        %332 = vmatpush1.xpose.msra.mxu0 0.0
        %333 = vmatprep.subr.mxu0 0.0
        %334 = vmatpush1.xpose.msra.mxu0 0.0
        %335 = vmatprep.subr.mxu0 0.0
        %336 = vmatpush1.xpose.msra.mxu0 0.0
        %337 = vmatprep.subr.mxu0 0.0
        %338 = vmatpush1.xpose.msra.mxu0 0.0
        %339 = vmatprep.subr.mxu0 0.0
        %340 = vmatpush1.xpose.msra.mxu0 0.0
        %341 = vmatprep.subr.mxu0 0.0
        %342 = vmatpush1.xpose.msra.mxu0 0.0
        %343 = vmatprep.subr.mxu0 0.0
        %344 = vmatpush1.xpose.msra.mxu0 0.0
        %345 = vmatprep.subr.mxu0 0.0
        %346 = vmatpush1.xpose.msra.mxu0 0.0
        %347 = vmatprep.subr.mxu0 0.0
        %348 = vmatpush1.xpose.msra.mxu0 0.0
        %349 = vmatprep.subr.mxu0 0.0
        %350 = vmatpush1.xpose.msra.mxu0 0.0
        %351 = vmatprep.subr.mxu0 0.0
        %352 = vmatpush1.xpose.msra.mxu0 0.0
        %353 = vmatprep.subr.mxu0 0.0
        %354 = vmatpush1.xpose.msra.mxu0 0.0
        %355 = vmatprep.subr.mxu0 0.0
        %356 = vmatpush1.xpose.msra.mxu0 0.0
        %357 = vmatprep.subr.mxu0 0.0
        %358 = vmatpush1.xpose.msra.mxu0 0.0
        %359 = vmatprep.subr.mxu0 0.0
        %360 = vmatpush1.xpose.msra.mxu0 0.0
        %361 = vmatprep.subr.mxu0 0.0
        %362 = vmatpush1.xpose.msra.mxu0 0.0
        %363 = vmatprep.subr.mxu0 0.0
        %364 = vmatpush1.xpose.msra.mxu0 0.0
        %365 = vmatprep.subr.mxu0 0.0
        %366 = vmatpush1.xpose.msra.mxu0 0.0
        %367 = vmatprep.subr.mxu0 0.0
        %368 = vmatpush1.xpose.msra.mxu0 0.0
        %369 = vmatprep.mubr.f32.mxu0 0.0
        %370 = vmatmul.mubr.f32.gmra.mrb[0].mxu0 %v281
        %v371 = vpop.f32.mrb[0].mxu0
        %v372 = vadd.f32 0.0, %v371
        %v373 = vpop.f32.mrb[0].mxu0
        %374 = vmatprep.mubr.f32.mxu0 0.0
        %375 = vmatmul.mubr.f32.gmra.mrb[0].mxu0 %v282
        %v376 = vpop.f32.mrb[0].mxu0
        %v377 = vadd.f32 0.0, %v376
        %v378 = vpop.f32.mrb[0].mxu0
        %379 = vmatprep.mubr.f32.mxu0 0.0
        %380 = vmatmul.mubr.f32.gmra.mrb[0].mxu0 %v283
        %v381 = vpop.f32.mrb[0].mxu0
        %v382 = vadd.f32 0.0, %v381
        %v383 = vpop.f32.mrb[0].mxu0
        %384 = vmatprep.mubr.f32.mxu0 0.0
        %385 = vmatmul.mubr.f32.gmra.mrb[0].mxu0 %v284
        %v386 = vpop.f32.mrb[0].mxu0
        %v387 = vadd.f32 0.0, %v386
        %v388 = vpop.f32.mrb[0].mxu0
        %389 = vmatprep.mubr.f32.mxu0 0.0
        %390 = vmatmul.mubr.f32.gmra.mrb[0].mxu0 %v285
        %v391 = vpop.f32.mrb[0].mxu0
        %v392 = vadd.f32 0.0, %v391
        %v393 = vpop.f32.mrb[0].mxu0
        %394 = vmatprep.mubr.f32.mxu0 0.0
        %395 = vmatmul.mubr.f32.gmra.mrb[0].mxu0 %v286
        %v396 = vpop.f32.mrb[0].mxu0
        %v397 = vadd.f32 0.0, %v396
        %v398 = vpop.f32.mrb[0].mxu0
        %399 = vmatprep.mubr.f32.mxu0 0.0
        %400 = vmatmul.mubr.f32.gmra.mrb[0].mxu0 %v287
        %v401 = vpop.f32.mrb[0].mxu0
        %v402 = vadd.f32 0.0, %v401
        %v403 = vpop.f32.mrb[0].mxu0
        %404 = vmatprep.mubr.f32.mxu0 0.0
        %405 = vmatmul.mubr.f32.gmra.mrb[0].mxu0 %v288
        %v406 = vpop.f32.mrb[0].mxu0
        %v407 = vadd.f32 0.0, %v406
        %v408 = vpop.f32.mrb[0].mxu0
        %409 = vmatprep.mubr.f32.mxu0 0.0
        %410 = vmatmul.mubr.f32.gmra.mrb[0].mxu0 %v289
        %v411 = vpop.f32.mrb[0].mxu0
        %v412 = vadd.f32 0.0, %v411
        %v413 = vpop.f32.mrb[0].mxu0
        %414 = vmatprep.mubr.f32.mxu0 0.0
        %415 = vmatmul.mubr.f32.gmra.mrb[0].mxu0 %v290
        %v416 = vpop.f32.mrb[0].mxu0
        %v417 = vadd.f32 0.0, %v416
        %v418 = vpop.f32.mrb[0].mxu0
        %419 = vmatprep.mubr.f32.mxu0 0.0
        %420 = vmatmul.mubr.f32.gmra.mrb[0].mxu0 %v291
        %v421 = vpop.f32.mrb[0].mxu0
        %v422 = vadd.f32 0.0, %v421
        %v423 = vpop.f32.mrb[0].mxu0
        %424 = vmatprep.mubr.f32.mxu0 0.0
        %425 = vmatmul.mubr.f32.gmra.mrb[0].mxu0 %v292
        %v426 = vpop.f32.mrb[0].mxu0
        %v427 = vadd.f32 0.0, %v426
        %v428 = vpop.f32.mrb[0].mxu0
        %429 = vmatprep.mubr.f32.mxu0 0.0
        %430 = vmatmul.mubr.f32.gmra.mrb[0].mxu0 %v293
        %v431 = vpop.f32.mrb[0].mxu0
        %v432 = vadd.f32 0.0, %v431
        %v433 = vpop.f32.mrb[0].mxu0
        %434 = vmatprep.mubr.f32.mxu0 0.0
        %435 = vmatmul.mubr.f32.gmra.mrb[0].mxu0 %v294
        %v436 = vpop.f32.mrb[0].mxu0
        %v437 = vadd.f32 0.0, %v436
        %v438 = vpop.f32.mrb[0].mxu0
        %439 = vmatprep.mubr.f32.mxu0 0.0
        %440 = vmatmul.mubr.f32.gmra.mrb[0].mxu0 %v295
        %v441 = vpop.f32.mrb[0].mxu0
        %v442 = vadd.f32 0.0, %v441
        %v443 = vpop.f32.mrb[0].mxu0
        %444 = vmatprep.mubr.f32.mxu0 0.0
        %445 = vmatmul.mubr.f32.gmra.mrb[0].mxu0 %v296
        %v446 = vpop.f32.mrb[0].mxu0
        %v447 = vadd.f32 0.0, %v446
        %v448 = vpop.f32.mrb[0].mxu0
        %449 = vdwg.mxu0
        %v450 = vld [vmem:[%s195] sm:$0xff]
        %v451 = vld [vmem:[%s195 + $0x8] sm:$0xff]
        %v452 = vld [vmem:[%s195 + $0x10] sm:$0xff]
        %v453 = vld [vmem:[%s195 + $0x18] sm:$0xff]
        %v454 = vld [vmem:[%s1] sm:$0xff]
        %v455 = vld [vmem:[%s1 + $0x8] sm:$0xff]
        %v456 = vld [vmem:[%s1 + $0x10] sm:$0xff]
        %v457 = vld [vmem:[%s1 + $0x18] sm:$0xff]
        %v458 = vld [vmem:[%s1 + $0x20] sm:$0xff]
        %v459 = vld [vmem:[%s1 + $0x28] sm:$0xff]
        %v460 = vld [vmem:[%s1 + $0x30] sm:$0xff]
        %v461 = vld [vmem:[%s1 + $0x38] sm:$0xff]
        %v462 = vld [vmem:[%s1 + $0x40] sm:$0xff]
        %v463 = vld [vmem:[%s1 + $0x48] sm:$0xff]
        %v464 = vld [vmem:[%s1 + $0x50] sm:$0xff]
        %v465 = vld [vmem:[%s1 + $0x58] sm:$0xff]
        %v466 = vld [vmem:[%s1 + $0x60] sm:$0xff]
        %v467 = vld [vmem:[%s1 + $0x68] sm:$0xff]
        %v468 = vld [vmem:[%s1 + $0x70] sm:$0xff]
        %v469 = vld [vmem:[%s1 + $0x78] sm:$0xff]
        %471 = vset.pattern.permute.xlu0 0
        %472 = vperm.xlu0 %471, %v372
        %v473 = vpop.permute.xlu0 %472
        %476 = vset.pattern.permute.xlu0 0
        %477 = vperm.xlu0 %476, %v377
        %v478 = vpop.permute.xlu0 %477
        %481 = vset.pattern.permute.xlu0 0
        %482 = vperm.xlu0 %481, %v382
        %v483 = vpop.permute.xlu0 %482
        %486 = vset.pattern.permute.xlu0 0
        %487 = vperm.xlu0 %486, %v387
        %v488 = vpop.permute.xlu0 %487
        %491 = vset.pattern.permute.xlu0 0
        %492 = vperm.xlu0 %491, %v392
        %v493 = vpop.permute.xlu0 %492
        %496 = vset.pattern.permute.xlu0 0
        %497 = vperm.xlu0 %496, %v397
        %v498 = vpop.permute.xlu0 %497
        %501 = vset.pattern.permute.xlu0 0
        %502 = vperm.xlu0 %501, %v402
        %v503 = vpop.permute.xlu0 %502
        %506 = vset.pattern.permute.xlu0 0
        %507 = vperm.xlu0 %506, %v407
        %v508 = vpop.permute.xlu0 %507
        %511 = vset.pattern.permute.xlu0 0
        %512 = vperm.xlu0 %511, %v412
        %v513 = vpop.permute.xlu0 %512
        %516 = vset.pattern.permute.xlu0 0
        %517 = vperm.xlu0 %516, %v417
        %v518 = vpop.permute.xlu0 %517
        %521 = vset.pattern.permute.xlu0 0
        %522 = vperm.xlu0 %521, %v422
        %v523 = vpop.permute.xlu0 %522
        %526 = vset.pattern.permute.xlu0 0
        %527 = vperm.xlu0 %526, %v427
        %v528 = vpop.permute.xlu0 %527
        %531 = vset.pattern.permute.xlu0 0
        %532 = vperm.xlu0 %531, %v432
        %v533 = vpop.permute.xlu0 %532
        %536 = vset.pattern.permute.xlu0 0
        %537 = vperm.xlu0 %536, %v437
        %v538 = vpop.permute.xlu0 %537
        %541 = vset.pattern.permute.xlu0 0
        %542 = vperm.xlu0 %541, %v442
        %v543 = vpop.permute.xlu0 %542
        %546 = vset.pattern.permute.xlu0 0
        %547 = vperm.xlu0 %546, %v447
        %v548 = vpop.permute.xlu0 %547
        %vm550 = vcmask 261120
        %v552 = vsel %vm550, %v454, 0
        %v555 = vsel %vm550, %v455, 0
        %v558 = vsel %vm550, %v456, 0
        %v561 = vsel %vm550, %v457, 0
        %v564 = vsel %vm550, %v458, 0
        %v567 = vsel %vm550, %v459, 0
        %v570 = vsel %vm550, %v460, 0
        %v573 = vsel %vm550, %v461, 0
        %v576 = vsel %vm550, %v462, 0
        %v579 = vsel %vm550, %v463, 0
        %v582 = vsel %vm550, %v464, 0
        %v585 = vsel %vm550, %v465, 0
        %v588 = vsel %vm550, %v466, 0
        %v591 = vsel %vm550, %v467, 0
        %v594 = vsel %vm550, %v468, 0
        %v597 = vsel %vm550, %v469, 0
        %599 = vmatprep.subr.mxu0 0.0
        %600 = vmatpush1.msra.mxu0 %v450
        %601 = vmatprep.subr.mxu0 0.0
        %602 = vmatpush1.msra.mxu0 %v451
        %603 = vmatprep.subr.mxu0 0.0
        %604 = vmatpush1.msra.mxu0 %v452
        %605 = vmatprep.subr.mxu0 0.0
        %606 = vmatpush1.msra.mxu0 %v453
        %607 = vmatprep.subr.mxu0 0.0
        %608 = vmatpush1.msra.mxu0 0.0
        %609 = vmatprep.subr.mxu0 0.0
        %610 = vmatpush1.msra.mxu0 0.0
        %611 = vmatprep.subr.mxu0 0.0
        %612 = vmatpush1.msra.mxu0 0.0
        %613 = vmatprep.subr.mxu0 0.0
        %614 = vmatpush1.msra.mxu0 0.0
        %615 = vmatprep.subr.mxu0 0.0
        %616 = vmatpush1.msra.mxu0 0.0
        %617 = vmatprep.subr.mxu0 0.0
        %618 = vmatpush1.msra.mxu0 0.0
        %619 = vmatprep.subr.mxu0 0.0
        %620 = vmatpush1.msra.mxu0 0.0
        %621 = vmatprep.subr.mxu0 0.0
        %622 = vmatpush1.msra.mxu0 0.0
        %623 = vmatprep.subr.mxu0 0.0
        %624 = vmatpush1.msra.mxu0 0.0
        %625 = vmatprep.subr.mxu0 0.0
        %626 = vmatpush1.msra.mxu0 0.0
        %627 = vmatprep.subr.mxu0 0.0
        %628 = vmatpush1.msra.mxu0 0.0
        %629 = vmatprep.subr.mxu0 0.0
        %630 = vmatpush1.msra.mxu0 0.0
        %631 = vmatprep.subr.mxu0 0.0
        %632 = vmatpush1.msra.mxu0 0.0
        %633 = vmatprep.subr.mxu0 0.0
        %634 = vmatpush1.msra.mxu0 0.0
        %635 = vmatprep.subr.mxu0 0.0
        %636 = vmatpush1.msra.mxu0 0.0
        %637 = vmatprep.subr.mxu0 0.0
        %638 = vmatpush1.msra.mxu0 0.0
        %639 = vmatprep.subr.mxu0 0.0
        %640 = vmatpush1.msra.mxu0 0.0
        %641 = vmatprep.subr.mxu0 0.0
        %642 = vmatpush1.msra.mxu0 0.0
        %643 = vmatprep.subr.mxu0 0.0
        %644 = vmatpush1.msra.mxu0 0.0
        %645 = vmatprep.subr.mxu0 0.0
        %646 = vmatpush1.msra.mxu0 0.0
        %647 = vmatprep.subr.mxu0 0.0
        %648 = vmatpush1.msra.mxu0 0.0
        %649 = vmatprep.subr.mxu0 0.0
        %650 = vmatpush1.msra.mxu0 0.0
        %651 = vmatprep.subr.mxu0 0.0
        %652 = vmatpush1.msra.mxu0 0.0
        %653 = vmatprep.subr.mxu0 0.0
        %654 = vmatpush1.msra.mxu0 0.0
        %655 = vmatprep.subr.mxu0 0.0
        %656 = vmatpush1.msra.mxu0 0.0
        %657 = vmatprep.subr.mxu0 0.0
        %658 = vmatpush1.msra.mxu0 0.0
        %659 = vmatprep.subr.mxu0 0.0
        %660 = vmatpush1.msra.mxu0 0.0
        %661 = vmatprep.subr.mxu0 0.0
        %662 = vmatpush1.msra.mxu0 0.0
        %663 = vmatprep.mubr.f32.mxu0 0.0
        %664 = vmatmul.mubr.f32.gmra.mrb[0].mxu0 %v552
        %v665 = vpop.f32.mrb[0].mxu0
        %v666 = vadd.f32 %v473, %v665
        %v667 = vpop.f32.mrb[0].mxu0
        %668 = vmatprep.mubr.f32.mxu0 0.0
        %669 = vmatmul.mubr.f32.gmra.mrb[0].mxu0 %v555
        %v670 = vpop.f32.mrb[0].mxu0
        %v671 = vadd.f32 %v478, %v670
        %v672 = vpop.f32.mrb[0].mxu0
        %673 = vmatprep.mubr.f32.mxu0 0.0
        %674 = vmatmul.mubr.f32.gmra.mrb[0].mxu0 %v558
        %v675 = vpop.f32.mrb[0].mxu0
        %v676 = vadd.f32 %v483, %v675
        %v677 = vpop.f32.mrb[0].mxu0
        %678 = vmatprep.mubr.f32.mxu0 0.0
        %679 = vmatmul.mubr.f32.gmra.mrb[0].mxu0 %v561
        %v680 = vpop.f32.mrb[0].mxu0
        %v681 = vadd.f32 %v488, %v680
        %v682 = vpop.f32.mrb[0].mxu0
        %683 = vmatprep.mubr.f32.mxu0 0.0
        %684 = vmatmul.mubr.f32.gmra.mrb[0].mxu0 %v564
        %v685 = vpop.f32.mrb[0].mxu0
        %v686 = vadd.f32 %v493, %v685
        %v687 = vpop.f32.mrb[0].mxu0
        %688 = vmatprep.mubr.f32.mxu0 0.0
        %689 = vmatmul.mubr.f32.gmra.mrb[0].mxu0 %v567
        %v690 = vpop.f32.mrb[0].mxu0
        %v691 = vadd.f32 %v498, %v690
        %v692 = vpop.f32.mrb[0].mxu0
        %693 = vmatprep.mubr.f32.mxu0 0.0
        %694 = vmatmul.mubr.f32.gmra.mrb[0].mxu0 %v570
        %v695 = vpop.f32.mrb[0].mxu0
        %v696 = vadd.f32 %v503, %v695
        %v697 = vpop.f32.mrb[0].mxu0
        %698 = vmatprep.mubr.f32.mxu0 0.0
        %699 = vmatmul.mubr.f32.gmra.mrb[0].mxu0 %v573
        %v700 = vpop.f32.mrb[0].mxu0
        %v701 = vadd.f32 %v508, %v700
        %v702 = vpop.f32.mrb[0].mxu0
        %703 = vmatprep.mubr.f32.mxu0 0.0
        %704 = vmatmul.mubr.f32.gmra.mrb[0].mxu0 %v576
        %v705 = vpop.f32.mrb[0].mxu0
        %v706 = vadd.f32 %v513, %v705
        %v707 = vpop.f32.mrb[0].mxu0
        %708 = vmatprep.mubr.f32.mxu0 0.0
        %709 = vmatmul.mubr.f32.gmra.mrb[0].mxu0 %v579
        %v710 = vpop.f32.mrb[0].mxu0
        %v711 = vadd.f32 %v518, %v710
        %v712 = vpop.f32.mrb[0].mxu0
        %713 = vmatprep.mubr.f32.mxu0 0.0
        %714 = vmatmul.mubr.f32.gmra.mrb[0].mxu0 %v582
        %v715 = vpop.f32.mrb[0].mxu0
        %v716 = vadd.f32 %v523, %v715
        %v717 = vpop.f32.mrb[0].mxu0
        %718 = vmatprep.mubr.f32.mxu0 0.0
        %719 = vmatmul.mubr.f32.gmra.mrb[0].mxu0 %v585
        %v720 = vpop.f32.mrb[0].mxu0
        %v721 = vadd.f32 %v528, %v720
        %v722 = vpop.f32.mrb[0].mxu0
        %723 = vmatprep.mubr.f32.mxu0 0.0
        %724 = vmatmul.mubr.f32.gmra.mrb[0].mxu0 %v588
        %v725 = vpop.f32.mrb[0].mxu0
        %v726 = vadd.f32 %v533, %v725
        %v727 = vpop.f32.mrb[0].mxu0
        %728 = vmatprep.mubr.f32.mxu0 0.0
        %729 = vmatmul.mubr.f32.gmra.mrb[0].mxu0 %v591
        %v730 = vpop.f32.mrb[0].mxu0
        %v731 = vadd.f32 %v538, %v730
        %v732 = vpop.f32.mrb[0].mxu0
        %733 = vmatprep.mubr.f32.mxu0 0.0
        %734 = vmatmul.mubr.f32.gmra.mrb[0].mxu0 %v594
        %v735 = vpop.f32.mrb[0].mxu0
        %v736 = vadd.f32 %v543, %v735
        %v737 = vpop.f32.mrb[0].mxu0
        %738 = vmatprep.mubr.f32.mxu0 0.0
        %739 = vmatmul.mubr.f32.gmra.mrb[0].mxu0 %v597
        %v740 = vpop.f32.mrb[0].mxu0
        %v741 = vadd.f32 %v548, %v740
        %v742 = vpop.f32.mrb[0].mxu0
        %743 = vdwg.mxu0
        %vm744 = vcmp.ge.f32.partialorder %v666, 0.0
        %vm745 = vcmp.ge.f32.partialorder %v671, 0.0
        %vm746 = vcmp.ge.f32.partialorder %v676, 0.0
        %vm747 = vcmp.ge.f32.partialorder %v681, 0.0
        %vm748 = vcmp.ge.f32.partialorder %v686, 0.0
        %vm749 = vcmp.ge.f32.partialorder %v691, 0.0
        %vm750 = vcmp.ge.f32.partialorder %v696, 0.0
        %vm751 = vcmp.ge.f32.partialorder %v701, 0.0
        %vm752 = vcmp.ge.f32.partialorder %v706, 0.0
        %vm753 = vcmp.ge.f32.partialorder %v711, 0.0
        %vm754 = vcmp.ge.f32.partialorder %v716, 0.0
        %vm755 = vcmp.ge.f32.partialorder %v721, 0.0
        %vm756 = vcmp.ge.f32.partialorder %v726, 0.0
        %vm757 = vcmp.ge.f32.partialorder %v731, 0.0
        %vm758 = vcmp.ge.f32.partialorder %v736, 0.0
        %vm759 = vcmp.ge.f32.partialorder %v741, 0.0
        %760 = vset.pattern.permute.xlu0 10
        %761 = vperm.xlu0 %760, %v372
        %v762 = vpop.permute.xlu0 %761
        %764 = vset.pattern.permute.xlu0 10
        %765 = vperm.xlu0 %764, %v377
        %v766 = vpop.permute.xlu0 %765
        %768 = vset.pattern.permute.xlu0 10
        %769 = vperm.xlu0 %768, %v382
        %v770 = vpop.permute.xlu0 %769
        %772 = vset.pattern.permute.xlu0 10
        %773 = vperm.xlu0 %772, %v387
        %v774 = vpop.permute.xlu0 %773
        %776 = vset.pattern.permute.xlu0 10
        %777 = vperm.xlu0 %776, %v392
        %v778 = vpop.permute.xlu0 %777
        %780 = vset.pattern.permute.xlu0 10
        %781 = vperm.xlu0 %780, %v397
        %v782 = vpop.permute.xlu0 %781
        %784 = vset.pattern.permute.xlu0 10
        %785 = vperm.xlu0 %784, %v402
        %v786 = vpop.permute.xlu0 %785
        %788 = vset.pattern.permute.xlu0 10
        %789 = vperm.xlu0 %788, %v407
        %v790 = vpop.permute.xlu0 %789
        %792 = vset.pattern.permute.xlu0 10
        %793 = vperm.xlu0 %792, %v412
        %v794 = vpop.permute.xlu0 %793
        %796 = vset.pattern.permute.xlu0 10
        %797 = vperm.xlu0 %796, %v417
        %v798 = vpop.permute.xlu0 %797
        %800 = vset.pattern.permute.xlu0 10
        %801 = vperm.xlu0 %800, %v422
        %v802 = vpop.permute.xlu0 %801
        %804 = vset.pattern.permute.xlu0 10
        %805 = vperm.xlu0 %804, %v427
        %v806 = vpop.permute.xlu0 %805
        %808 = vset.pattern.permute.xlu0 10
        %809 = vperm.xlu0 %808, %v432
        %v810 = vpop.permute.xlu0 %809
        %812 = vset.pattern.permute.xlu0 10
        %813 = vperm.xlu0 %812, %v437
        %v814 = vpop.permute.xlu0 %813
        %816 = vset.pattern.permute.xlu0 10
        %817 = vperm.xlu0 %816, %v442
        %v818 = vpop.permute.xlu0 %817
        %820 = vset.pattern.permute.xlu0 10
        %821 = vperm.xlu0 %820, %v447
        %v822 = vpop.permute.xlu0 %821
        %v824 = vmul.f32 %v762, %v666
        %v825 = vmul.f32 %v766, %v671
        %v826 = vmul.f32 %v770, %v676
        %v827 = vmul.f32 %v774, %v681
        %v828 = vmul.f32 %v778, %v686
        %v829 = vmul.f32 %v782, %v691
        %v830 = vmul.f32 %v786, %v696
        %v831 = vmul.f32 %v790, %v701
        %v832 = vmul.f32 %v794, %v706
        %v833 = vmul.f32 %v798, %v711
        %v834 = vmul.f32 %v802, %v716
        %v835 = vmul.f32 %v806, %v721
        %v836 = vmul.f32 %v810, %v726
        %v837 = vmul.f32 %v814, %v731
        %v838 = vmul.f32 %v818, %v736
        %v839 = vmul.f32 %v822, %v741
        %v840 = vsel %vm744, %v666, %v824
        %v841 = vsel %vm745, %v671, %v825
        %v842 = vsel %vm746, %v676, %v826
        %v843 = vsel %vm747, %v681, %v827
        %v844 = vsel %vm748, %v686, %v828
        %v845 = vsel %vm749, %v691, %v829
        %v846 = vsel %vm750, %v696, %v830
        %v847 = vsel %vm751, %v701, %v831
        %v848 = vsel %vm752, %v706, %v832
        %v849 = vsel %vm753, %v711, %v833
        %v850 = vsel %vm754, %v716, %v834
        %v851 = vsel %vm755, %v721, %v835
        %v852 = vsel %vm756, %v726, %v836
        %v853 = vsel %vm757, %v731, %v837
        %v854 = vsel %vm758, %v736, %v838
        %v855 = vsel %vm759, %v741, %v839
        %856 = vmatprep.subr.mxu0 0.0
        %857 = vmatpush1.msra.mxu0 %v840
        %858 = vmatprep.subr.mxu0 0.0
        %859 = vmatpush1.msra.mxu0 %v841
        %860 = vmatprep.subr.mxu0 0.0
        %861 = vmatpush1.msra.mxu0 %v842
        %862 = vmatprep.subr.mxu0 0.0
        %863 = vmatpush1.msra.mxu0 %v843
        %864 = vmatprep.subr.mxu0 0.0
        %865 = vmatpush1.msra.mxu0 %v844
        %866 = vmatprep.subr.mxu0 0.0
        %867 = vmatpush1.msra.mxu0 %v845
        %868 = vmatprep.subr.mxu0 0.0
        %869 = vmatpush1.msra.mxu0 %v846
        %870 = vmatprep.subr.mxu0 0.0
        %871 = vmatpush1.msra.mxu0 %v847
        %872 = vmatprep.subr.mxu0 0.0
        %873 = vmatpush1.msra.mxu0 %v848
        %874 = vmatprep.subr.mxu0 0.0
        %875 = vmatpush1.msra.mxu0 %v849
        %876 = vmatprep.subr.mxu0 0.0
        %877 = vmatpush1.msra.mxu0 %v850
        %878 = vmatprep.subr.mxu0 0.0
        %879 = vmatpush1.msra.mxu0 %v851
        %880 = vmatprep.subr.mxu0 0.0
        %881 = vmatpush1.msra.mxu0 %v852
        %882 = vmatprep.subr.mxu0 0.0
        %883 = vmatpush1.msra.mxu0 %v853
        %884 = vmatprep.subr.mxu0 0.0
        %885 = vmatpush1.msra.mxu0 %v854
        %886 = vmatprep.subr.mxu0 0.0
        %887 = vmatpush1.msra.mxu0 %v855
        %888 = vmatprep.subr.mxu0 0.0
        %889 = vmatpush1.msra.mxu0 0.0
        %890 = vmatprep.subr.mxu0 0.0
        %891 = vmatpush1.msra.mxu0 0.0
        %892 = vmatprep.subr.mxu0 0.0
        %893 = vmatpush1.msra.mxu0 0.0
        %894 = vmatprep.subr.mxu0 0.0
        %895 = vmatpush1.msra.mxu0 0.0
        %896 = vmatprep.subr.mxu0 0.0
        %897 = vmatpush1.msra.mxu0 0.0
        %898 = vmatprep.subr.mxu0 0.0
        %899 = vmatpush1.msra.mxu0 0.0
        %900 = vmatprep.subr.mxu0 0.0
        %901 = vmatpush1.msra.mxu0 0.0
        %902 = vmatprep.subr.mxu0 0.0
        %903 = vmatpush1.msra.mxu0 0.0
        %904 = vmatprep.subr.mxu0 0.0
        %905 = vmatpush1.msra.mxu0 0.0
        %906 = vmatprep.subr.mxu0 0.0
        %907 = vmatpush1.msra.mxu0 0.0
        %908 = vmatprep.subr.mxu0 0.0
        %909 = vmatpush1.msra.mxu0 0.0
        %910 = vmatprep.subr.mxu0 0.0
        %911 = vmatpush1.msra.mxu0 0.0
        %912 = vmatprep.subr.mxu0 0.0
        %913 = vmatpush1.msra.mxu0 0.0
        %914 = vmatprep.subr.mxu0 0.0
        %915 = vmatpush1.msra.mxu0 0.0
        %916 = vmatprep.subr.mxu0 0.0
        %917 = vmatpush1.msra.mxu0 0.0
        %918 = vmatprep.subr.mxu0 0.0
        %919 = vmatpush1.msra.mxu0 0.0
        %920 = vmatprep.mubr.f32.mxu0 0.0
        %921 = vmatmul.mubr.f32.gmra.mrb[0].mxu0 1.0
        %v922 = vpop.f32.mrb[0].mxu0
        %v923 = vadd.f32 0.0, %v922
        %v924 = vpop.f32.mrb[0].mxu0
        %925 = vdwg.mxu0
        %v926 = vmul.f32 %v840, %v840
        %v927 = vmul.f32 %v841, %v841
        %v928 = vmul.f32 %v842, %v842
        %v929 = vmul.f32 %v843, %v843
        %v930 = vmul.f32 %v844, %v844
        %v931 = vmul.f32 %v845, %v845
        %v932 = vmul.f32 %v846, %v846
        %v933 = vmul.f32 %v847, %v847
        %v934 = vmul.f32 %v848, %v848
        %v935 = vmul.f32 %v849, %v849
        %v936 = vmul.f32 %v850, %v850
        %v937 = vmul.f32 %v851, %v851
        %v938 = vmul.f32 %v852, %v852
        %v939 = vmul.f32 %v853, %v853
        %v940 = vmul.f32 %v854, %v854
        %v941 = vmul.f32 %v855, %v855
        %942 = vmatprep.subr.mxu0 0.0
        %943 = vmatpush1.msra.mxu0 %v926
        %944 = vmatprep.subr.mxu0 0.0
        %945 = vmatpush1.msra.mxu0 %v927
        %946 = vmatprep.subr.mxu0 0.0
        %947 = vmatpush1.msra.mxu0 %v928
        %948 = vmatprep.subr.mxu0 0.0
        %949 = vmatpush1.msra.mxu0 %v929
        %950 = vmatprep.subr.mxu0 0.0
        %951 = vmatpush1.msra.mxu0 %v930
        %952 = vmatprep.subr.mxu0 0.0
        %953 = vmatpush1.msra.mxu0 %v931
        %954 = vmatprep.subr.mxu0 0.0
        %955 = vmatpush1.msra.mxu0 %v932
        %956 = vmatprep.subr.mxu0 0.0
        %957 = vmatpush1.msra.mxu0 %v933
        %958 = vmatprep.subr.mxu0 0.0
        %959 = vmatpush1.msra.mxu0 %v934
        %960 = vmatprep.subr.mxu0 0.0
        %961 = vmatpush1.msra.mxu0 %v935
        %962 = vmatprep.subr.mxu0 0.0
        %963 = vmatpush1.msra.mxu0 %v936
        %964 = vmatprep.subr.mxu0 0.0
        %965 = vmatpush1.msra.mxu0 %v937
        %966 = vmatprep.subr.mxu0 0.0
        %967 = vmatpush1.msra.mxu0 %v938
        %968 = vmatprep.subr.mxu0 0.0
        %969 = vmatpush1.msra.mxu0 %v939
        %970 = vmatprep.subr.mxu0 0.0
        %971 = vmatpush1.msra.mxu0 %v940
        %972 = vmatprep.subr.mxu0 0.0
        %973 = vmatpush1.msra.mxu0 %v941
        %974 = vmatprep.subr.mxu0 0.0
        %975 = vmatpush1.msra.mxu0 0.0
        %976 = vmatprep.subr.mxu0 0.0
        %977 = vmatpush1.msra.mxu0 0.0
        %978 = vmatprep.subr.mxu0 0.0
        %979 = vmatpush1.msra.mxu0 0.0
        %980 = vmatprep.subr.mxu0 0.0
        %981 = vmatpush1.msra.mxu0 0.0
        %982 = vmatprep.subr.mxu0 0.0
        %983 = vmatpush1.msra.mxu0 0.0
        %984 = vmatprep.subr.mxu0 0.0
        %985 = vmatpush1.msra.mxu0 0.0
        %986 = vmatprep.subr.mxu0 0.0
        %987 = vmatpush1.msra.mxu0 0.0
        %988 = vmatprep.subr.mxu0 0.0
        %989 = vmatpush1.msra.mxu0 0.0
        %990 = vmatprep.subr.mxu0 0.0
        %991 = vmatpush1.msra.mxu0 0.0
        %992 = vmatprep.subr.mxu0 0.0
        %993 = vmatpush1.msra.mxu0 0.0
        %994 = vmatprep.subr.mxu0 0.0
        %995 = vmatpush1.msra.mxu0 0.0
        %996 = vmatprep.subr.mxu0 0.0
        %997 = vmatpush1.msra.mxu0 0.0
        %998 = vmatprep.subr.mxu0 0.0
        %999 = vmatpush1.msra.mxu0 0.0
        %1000 = vmatprep.subr.mxu0 0.0
        %1001 = vmatpush1.msra.mxu0 0.0
        %1002 = vmatprep.subr.mxu0 0.0
        %1003 = vmatpush1.msra.mxu0 0.0
        %1004 = vmatprep.subr.mxu0 0.0
        %1005 = vmatpush1.msra.mxu0 0.0
        %1006 = vmatprep.mubr.f32.mxu0 0.0
        %1007 = vmatmul.mubr.f32.gmra.mrb[0].mxu0 1.0
        %v1008 = vpop.f32.mrb[0].mxu0
        %v1009 = vadd.f32 0.0, %v1008
        %v1010 = vpop.f32.mrb[0].mxu0
        %1011 = vdwg.mxu0
        %vm1012 = vcmask 1040384
        %v1013 = vsel %vm1012, %v923, 0.0
        %1014 = vadd.xlane.f32.xlu0 %v1013
        %v1015 = vpop.xlane.xlu0 %1014
        %v1016 = vmul.f32 %v1015, 6.1035156e-05
        %v1017 = vsel %vm1012, %v1009, 0.0
        %1018 = vadd.xlane.f32.xlu0 %v1017
        %v1019 = vpop.xlane.xlu0 %1018
        %v1020 = vmul.f32 %v1019, 6.1035156e-05
        %v1021 = vmul.f32 %v1016, %v1016
        %v1022 = vsub.f32 %v1020, %v1021
        %v1023 = vadd.f32 %v1022, 1e-05
        %v1024 = vrsqrt.pop %v1023
        %v1025 = vlaneseq
        %v1026 = vshrl.u32 %v1025, 7
        %v1027 = vsub.s32 0, %v1026
        %v1028 = vrot.slane %v1024, %v1027
        %v1029 = vmul.f32 %v372, %v1028
        %v1030 = vmul.f32 %v377, %v1028
        %v1031 = vmul.f32 %v382, %v1028
        %v1032 = vmul.f32 %v387, %v1028
        %v1033 = vmul.f32 %v392, %v1028
        %v1034 = vmul.f32 %v397, %v1028
        %v1035 = vmul.f32 %v402, %v1028
        %v1036 = vmul.f32 %v407, %v1028
        %v1037 = vmul.f32 %v412, %v1028
        %v1038 = vmul.f32 %v417, %v1028
        %v1039 = vmul.f32 %v422, %v1028
        %v1040 = vmul.f32 %v427, %v1028
        %v1041 = vmul.f32 %v432, %v1028
        %v1042 = vmul.f32 %v437, %v1028
        %v1043 = vmul.f32 %v442, %v1028
        %v1044 = vmul.f32 %v447, %v1028
        %v1045 = vlaneseq
        %v1046 = vshrl.u32 %v1045, 7
        %v1047 = vsub.s32 0, %v1046
        %v1048 = vrot.slane %v1016, %v1047
        %v1049 = vmul.f32 %v1048, %v1029
        %v1050 = vmul.f32 %v1048, %v1030
        %v1051 = vmul.f32 %v1048, %v1031
        %v1052 = vmul.f32 %v1048, %v1032
        %v1053 = vmul.f32 %v1048, %v1033
        %v1054 = vmul.f32 %v1048, %v1034
        %v1055 = vmul.f32 %v1048, %v1035
        %v1056 = vmul.f32 %v1048, %v1036
        %v1057 = vmul.f32 %v1048, %v1037
        %v1058 = vmul.f32 %v1048, %v1038
        %v1059 = vmul.f32 %v1048, %v1039
        %v1060 = vmul.f32 %v1048, %v1040
        %v1061 = vmul.f32 %v1048, %v1041
        %v1062 = vmul.f32 %v1048, %v1042
        %v1063 = vmul.f32 %v1048, %v1043
        %v1064 = vmul.f32 %v1048, %v1044
        %1081 = vrot.lane.b32.xlu0 %v1049, 1
        %v1082 = vpop.permute.xlu0 %1081
        %1083 = vrot.lane.b32.xlu0 %v1050, 1
        %v1084 = vpop.permute.xlu0 %1083
        %1085 = vrot.lane.b32.xlu0 %v1051, 1
        %v1086 = vpop.permute.xlu0 %1085
        %1087 = vrot.lane.b32.xlu0 %v1052, 1
        %v1088 = vpop.permute.xlu0 %1087
        %1089 = vrot.lane.b32.xlu0 %v1053, 1
        %v1090 = vpop.permute.xlu0 %1089
        %1091 = vrot.lane.b32.xlu0 %v1054, 1
        %v1092 = vpop.permute.xlu0 %1091
        %1093 = vrot.lane.b32.xlu0 %v1055, 1
        %v1094 = vpop.permute.xlu0 %1093
        %1095 = vrot.lane.b32.xlu0 %v1056, 1
        %v1096 = vpop.permute.xlu0 %1095
        %1097 = vrot.lane.b32.xlu0 %v1057, 1
        %v1098 = vpop.permute.xlu0 %1097
        %1099 = vrot.lane.b32.xlu0 %v1058, 1
        %v1100 = vpop.permute.xlu0 %1099
        %1101 = vrot.lane.b32.xlu0 %v1059, 1
        %v1102 = vpop.permute.xlu0 %1101
        %1103 = vrot.lane.b32.xlu0 %v1060, 1
        %v1104 = vpop.permute.xlu0 %1103
        %1105 = vrot.lane.b32.xlu0 %v1061, 1
        %v1106 = vpop.permute.xlu0 %1105
        %1107 = vrot.lane.b32.xlu0 %v1062, 1
        %v1108 = vpop.permute.xlu0 %1107
        %1109 = vrot.lane.b32.xlu0 %v1063, 1
        %v1110 = vpop.permute.xlu0 %1109
        %1111 = vrot.lane.b32.xlu0 %v1064, 1
        %v1112 = vpop.permute.xlu0 %1111
        %v1129 = vsub.f32 %v372, %v1082
        %v1130 = vsub.f32 %v377, %v1084
        %v1131 = vsub.f32 %v382, %v1086
        %v1132 = vsub.f32 %v387, %v1088
        %v1133 = vsub.f32 %v392, %v1090
        %v1134 = vsub.f32 %v397, %v1092
        %v1135 = vsub.f32 %v402, %v1094
        %v1136 = vsub.f32 %v407, %v1096
        %v1137 = vsub.f32 %v412, %v1098
        %v1138 = vsub.f32 %v417, %v1100
        %v1139 = vsub.f32 %v422, %v1102
        %v1140 = vsub.f32 %v427, %v1104
        %v1141 = vsub.f32 %v432, %v1106
        %v1142 = vsub.f32 %v437, %v1108
        %v1143 = vsub.f32 %v442, %v1110
        %v1144 = vsub.f32 %v447, %v1112
        %1146 = vset.pattern.permute.xlu0 1
        %1147 = vperm.xlu0 %1146, %v1029
        %v1148 = vpop.permute.xlu0 %1147
        %1151 = vset.pattern.permute.xlu0 1
        %1152 = vperm.xlu0 %1151, %v1030
        %v1153 = vpop.permute.xlu0 %1152
        %1156 = vset.pattern.permute.xlu0 1
        %1157 = vperm.xlu0 %1156, %v1031
        %v1158 = vpop.permute.xlu0 %1157
        %1161 = vset.pattern.permute.xlu0 1
        %1162 = vperm.xlu0 %1161, %v1032
        %v1163 = vpop.permute.xlu0 %1162
        %1166 = vset.pattern.permute.xlu0 1
        %1167 = vperm.xlu0 %1166, %v1033
        %v1168 = vpop.permute.xlu0 %1167
        %1171 = vset.pattern.permute.xlu0 1
        %1172 = vperm.xlu0 %1171, %v1034
        %v1173 = vpop.permute.xlu0 %1172
        %1176 = vset.pattern.permute.xlu0 1
        %1177 = vperm.xlu0 %1176, %v1035
        %v1178 = vpop.permute.xlu0 %1177
        %1181 = vset.pattern.permute.xlu0 1
        %1182 = vperm.xlu0 %1181, %v1036
        %v1183 = vpop.permute.xlu0 %1182
        %1186 = vset.pattern.permute.xlu0 1
        %1187 = vperm.xlu0 %1186, %v1037
        %v1188 = vpop.permute.xlu0 %1187
        %1191 = vset.pattern.permute.xlu0 1
        %1192 = vperm.xlu0 %1191, %v1038
        %v1193 = vpop.permute.xlu0 %1192
        %1196 = vset.pattern.permute.xlu0 1
        %1197 = vperm.xlu0 %1196, %v1039
        %v1198 = vpop.permute.xlu0 %1197
        %1201 = vset.pattern.permute.xlu0 1
        %1202 = vperm.xlu0 %1201, %v1040
        %v1203 = vpop.permute.xlu0 %1202
        %1206 = vset.pattern.permute.xlu0 1
        %1207 = vperm.xlu0 %1206, %v1041
        %v1208 = vpop.permute.xlu0 %1207
        %1211 = vset.pattern.permute.xlu0 1
        %1212 = vperm.xlu0 %1211, %v1042
        %v1213 = vpop.permute.xlu0 %1212
        %1216 = vset.pattern.permute.xlu0 1
        %1217 = vperm.xlu0 %1216, %v1043
        %v1218 = vpop.permute.xlu0 %1217
        %1221 = vset.pattern.permute.xlu0 1
        %1222 = vperm.xlu0 %1221, %v1044
        %v1223 = vpop.permute.xlu0 %1222
        %v1225 = vmul.f32 %v840, %v1148
        %v1226 = vmul.f32 %v841, %v1153
        %v1227 = vmul.f32 %v842, %v1158
        %v1228 = vmul.f32 %v843, %v1163
        %v1229 = vmul.f32 %v844, %v1168
        %v1230 = vmul.f32 %v845, %v1173
        %v1231 = vmul.f32 %v846, %v1178
        %v1232 = vmul.f32 %v847, %v1183
        %v1233 = vmul.f32 %v848, %v1188
        %v1234 = vmul.f32 %v849, %v1193
        %v1235 = vmul.f32 %v850, %v1198
        %v1236 = vmul.f32 %v851, %v1203
        %v1237 = vmul.f32 %v852, %v1208
        %v1238 = vmul.f32 %v853, %v1213
        %v1239 = vmul.f32 %v854, %v1218
        %v1240 = vmul.f32 %v855, %v1223
        %1242 = vset.pattern.permute.xlu0 2
        %1243 = vperm.xlu0 %1242, %v1129
        %v1244 = vpop.permute.xlu0 %1243
        %1247 = vset.pattern.permute.xlu0 2
        %1248 = vperm.xlu0 %1247, %v1130
        %v1249 = vpop.permute.xlu0 %1248
        %1252 = vset.pattern.permute.xlu0 2
        %1253 = vperm.xlu0 %1252, %v1131
        %v1254 = vpop.permute.xlu0 %1253
        %1257 = vset.pattern.permute.xlu0 2
        %1258 = vperm.xlu0 %1257, %v1132
        %v1259 = vpop.permute.xlu0 %1258
        %1262 = vset.pattern.permute.xlu0 2
        %1263 = vperm.xlu0 %1262, %v1133
        %v1264 = vpop.permute.xlu0 %1263
        %1267 = vset.pattern.permute.xlu0 2
        %1268 = vperm.xlu0 %1267, %v1134
        %v1269 = vpop.permute.xlu0 %1268
        %1272 = vset.pattern.permute.xlu0 2
        %1273 = vperm.xlu0 %1272, %v1135
        %v1274 = vpop.permute.xlu0 %1273
        %1277 = vset.pattern.permute.xlu0 2
        %1278 = vperm.xlu0 %1277, %v1136
        %v1279 = vpop.permute.xlu0 %1278
        %1282 = vset.pattern.permute.xlu0 2
        %1283 = vperm.xlu0 %1282, %v1137
        %v1284 = vpop.permute.xlu0 %1283
        %1287 = vset.pattern.permute.xlu0 2
        %1288 = vperm.xlu0 %1287, %v1138
        %v1289 = vpop.permute.xlu0 %1288
        %1292 = vset.pattern.permute.xlu0 2
        %1293 = vperm.xlu0 %1292, %v1139
        %v1294 = vpop.permute.xlu0 %1293
        %1297 = vset.pattern.permute.xlu0 2
        %1298 = vperm.xlu0 %1297, %v1140
        %v1299 = vpop.permute.xlu0 %1298
        %1302 = vset.pattern.permute.xlu0 2
        %1303 = vperm.xlu0 %1302, %v1141
        %v1304 = vpop.permute.xlu0 %1303
        %1307 = vset.pattern.permute.xlu0 2
        %1308 = vperm.xlu0 %1307, %v1142
        %v1309 = vpop.permute.xlu0 %1308
        %1312 = vset.pattern.permute.xlu0 2
        %1313 = vperm.xlu0 %1312, %v1143
        %v1314 = vpop.permute.xlu0 %1313
        %1317 = vset.pattern.permute.xlu0 2
        %1318 = vperm.xlu0 %1317, %v1144
        %v1319 = vpop.permute.xlu0 %1318
        %v1321 = vadd.f32 %v1225, %v1244
        %v1322 = vadd.f32 %v1226, %v1249
        %v1323 = vadd.f32 %v1227, %v1254
        %v1324 = vadd.f32 %v1228, %v1259
        %v1325 = vadd.f32 %v1229, %v1264
        %v1326 = vadd.f32 %v1230, %v1269
        %v1327 = vadd.f32 %v1231, %v1274
        %v1328 = vadd.f32 %v1232, %v1279
        %v1329 = vadd.f32 %v1233, %v1284
        %v1330 = vadd.f32 %v1234, %v1289
        %v1331 = vadd.f32 %v1235, %v1294
        %v1332 = vadd.f32 %v1236, %v1299
        %v1333 = vadd.f32 %v1237, %v1304
        %v1334 = vadd.f32 %v1238, %v1309
        %v1335 = vadd.f32 %v1239, %v1314
        %v1336 = vadd.f32 %v1240, %v1319
        %1353 = vrot.lane.b32.xlu0 %v1321, 8
        %v1354 = vpop.permute.xlu0 %1353
        %1355 = vrot.lane.b32.xlu0 %v1322, 8
        %v1356 = vpop.permute.xlu0 %1355
        %1357 = vrot.lane.b32.xlu0 %v1323, 8
        %v1358 = vpop.permute.xlu0 %1357
        %1359 = vrot.lane.b32.xlu0 %v1324, 8
        %v1360 = vpop.permute.xlu0 %1359
        %1361 = vrot.lane.b32.xlu0 %v1325, 8
        %v1362 = vpop.permute.xlu0 %1361
        %1363 = vrot.lane.b32.xlu0 %v1326, 8
        %v1364 = vpop.permute.xlu0 %1363
        %1365 = vrot.lane.b32.xlu0 %v1327, 8
        %v1366 = vpop.permute.xlu0 %1365
        %1367 = vrot.lane.b32.xlu0 %v1328, 8
        %v1368 = vpop.permute.xlu0 %1367
        %1369 = vrot.lane.b32.xlu0 %v1329, 8
        %v1370 = vpop.permute.xlu0 %1369
        %1371 = vrot.lane.b32.xlu0 %v1330, 8
        %v1372 = vpop.permute.xlu0 %1371
        %1373 = vrot.lane.b32.xlu0 %v1331, 8
        %v1374 = vpop.permute.xlu0 %1373
        %1375 = vrot.lane.b32.xlu0 %v1332, 8
        %v1376 = vpop.permute.xlu0 %1375
        %1377 = vrot.lane.b32.xlu0 %v1333, 8
        %v1378 = vpop.permute.xlu0 %1377
        %1379 = vrot.lane.b32.xlu0 %v1334, 8
        %v1380 = vpop.permute.xlu0 %1379
        %1381 = vrot.lane.b32.xlu0 %v1335, 8
        %v1382 = vpop.permute.xlu0 %1381
        %1383 = vrot.lane.b32.xlu0 %v1336, 8
        %v1384 = vpop.permute.xlu0 %1383
        %vm1401 = vcmask 1047616
        %1402 = vst.msk [vmem:[#allocation2] sm:$0xff] %vm1401, %v1354
        %1403 = vst.msk [vmem:[#allocation2 + $0x8] sm:$0xff] %vm196, %v1354
        %1404 = vst.msk [vmem:[#allocation2 + $0x10] sm:$0xff] %vm1401, %v1356
        %1405 = vst.msk [vmem:[#allocation2 + $0x18] sm:$0xff] %vm196, %v1356
        %1406 = vst.msk [vmem:[#allocation2 + $0x20] sm:$0xff] %vm1401, %v1358
        %1407 = vst.msk [vmem:[#allocation2 + $0x28] sm:$0xff] %vm196, %v1358
        %1408 = vst.msk [vmem:[#allocation2 + $0x30] sm:$0xff] %vm1401, %v1360
        %1409 = vst.msk [vmem:[#allocation2 + $0x38] sm:$0xff] %vm196, %v1360
        %1410 = vst.msk [vmem:[#allocation2 + $0x40] sm:$0xff] %vm1401, %v1362
        %1411 = vst.msk [vmem:[#allocation2 + $0x48] sm:$0xff] %vm196, %v1362
        %1412 = vst.msk [vmem:[#allocation2 + $0x50] sm:$0xff] %vm1401, %v1364
        %1413 = vst.msk [vmem:[#allocation2 + $0x58] sm:$0xff] %vm196, %v1364
        %1414 = vst.msk [vmem:[#allocation2 + $0x60] sm:$0xff] %vm1401, %v1366
        %1415 = vst.msk [vmem:[#allocation2 + $0x68] sm:$0xff] %vm196, %v1366
        %1416 = vst.msk [vmem:[#allocation2 + $0x70] sm:$0xff] %vm1401, %v1368
        %1417 = vst.msk [vmem:[#allocation2 + $0x78] sm:$0xff] %vm196, %v1368
        %1418 = vst.msk [vmem:[#allocation2 + $0x80] sm:$0xff] %vm1401, %v1370
        %1419 = vst.msk [vmem:[#allocation2 + $0x88] sm:$0xff] %vm196, %v1370
        %1420 = vst.msk [vmem:[#allocation2 + $0x90] sm:$0xff] %vm1401, %v1372
        %1421 = vst.msk [vmem:[#allocation2 + $0x98] sm:$0xff] %vm196, %v1372
        %1422 = vst.msk [vmem:[#allocation2 + $0xa0] sm:$0xff] %vm1401, %v1374
        %1423 = vst.msk [vmem:[#allocation2 + $0xa8] sm:$0xff] %vm196, %v1374
        %1424 = vst.msk [vmem:[#allocation2 + $0xb0] sm:$0xff] %vm1401, %v1376
        %1425 = vst.msk [vmem:[#allocation2 + $0xb8] sm:$0xff] %vm196, %v1376
        %1426 = vst.msk [vmem:[#allocation2 + $0xc0] sm:$0xff] %vm1401, %v1378
        %1427 = vst.msk [vmem:[#allocation2 + $0xc8] sm:$0xff] %vm196, %v1378
        %1428 = vst.msk [vmem:[#allocation2 + $0xd0] sm:$0xff] %vm1401, %v1380
        %1429 = vst.msk [vmem:[#allocation2 + $0xd8] sm:$0xff] %vm196, %v1380
        %1430 = vst.msk [vmem:[#allocation2 + $0xe0] sm:$0xff] %vm1401, %v1382
        %1431 = vst.msk [vmem:[#allocation2 + $0xe8] sm:$0xff] %vm196, %v1382
        %1432 = vst.msk [vmem:[#allocation2 + $0xf0] sm:$0xff] %vm1401, %v1384
        %1433 = vst.msk [vmem:[#allocation2 + $0xf8] sm:$0xff] %vm196, %v1384
        %v1434 = vld [vmem:[#allocation2] sm:$0xff]
        %v1435 = vld [vmem:[#allocation2 + $0x8] sm:$0xff]
        %v1436 = vld [vmem:[#allocation2 + $0x10] sm:$0xff]
        %v1437 = vld [vmem:[#allocation2 + $0x18] sm:$0xff]
        %v1438 = vld [vmem:[#allocation2 + $0x20] sm:$0xff]
        %v1439 = vld [vmem:[#allocation2 + $0x28] sm:$0xff]
        %v1440 = vld [vmem:[#allocation2 + $0x30] sm:$0xff]
        %v1441 = vld [vmem:[#allocation2 + $0x38] sm:$0xff]
        %v1442 = vld [vmem:[#allocation2 + $0x40] sm:$0xff]
        %v1443 = vld [vmem:[#allocation2 + $0x48] sm:$0xff]
        %v1444 = vld [vmem:[#allocation2 + $0x50] sm:$0xff]
        %v1445 = vld [vmem:[#allocation2 + $0x58] sm:$0xff]
        %v1446 = vld [vmem:[#allocation2 + $0x60] sm:$0xff]
        %v1447 = vld [vmem:[#allocation2 + $0x68] sm:$0xff]
        %v1448 = vld [vmem:[#allocation2 + $0x70] sm:$0xff]
        %v1449 = vld [vmem:[#allocation2 + $0x78] sm:$0xff]
        %v1450 = vld [vmem:[#allocation2 + $0x80] sm:$0xff]
        %v1451 = vld [vmem:[#allocation2 + $0x88] sm:$0xff]
        %v1452 = vld [vmem:[#allocation2 + $0x90] sm:$0xff]
        %v1453 = vld [vmem:[#allocation2 + $0x98] sm:$0xff]
        %v1454 = vld [vmem:[#allocation2 + $0xa0] sm:$0xff]
        %v1455 = vld [vmem:[#allocation2 + $0xa8] sm:$0xff]
        %v1456 = vld [vmem:[#allocation2 + $0xb0] sm:$0xff]
        %v1457 = vld [vmem:[#allocation2 + $0xb8] sm:$0xff]
        %v1458 = vld [vmem:[#allocation2 + $0xc0] sm:$0xff]
        %v1459 = vld [vmem:[#allocation2 + $0xc8] sm:$0xff]
        %v1460 = vld [vmem:[#allocation2 + $0xd0] sm:$0xff]
        %v1461 = vld [vmem:[#allocation2 + $0xd8] sm:$0xff]
        %v1462 = vld [vmem:[#allocation2 + $0xe0] sm:$0xff]
        %v1463 = vld [vmem:[#allocation2 + $0xe8] sm:$0xff]
        %v1464 = vld [vmem:[#allocation2 + $0xf0] sm:$0xff]
        %v1465 = vld [vmem:[#allocation2 + $0xf8] sm:$0xff]
        %1466 = vset.pattern.permute.xlu0 6
        %1467 = vperm.xlu0 %1466, %v372
        %v1468 = vpop.permute.xlu0 %1467
        %1470 = vset.pattern.permute.xlu0 6
        %1471 = vperm.xlu0 %1470, %v377
        %v1472 = vpop.permute.xlu0 %1471
        %1474 = vset.pattern.permute.xlu0 6
        %1475 = vperm.xlu0 %1474, %v382
        %v1476 = vpop.permute.xlu0 %1475
        %1478 = vset.pattern.permute.xlu0 6
        %1479 = vperm.xlu0 %1478, %v387
        %v1480 = vpop.permute.xlu0 %1479
        %1482 = vset.pattern.permute.xlu0 6
        %1483 = vperm.xlu0 %1482, %v392
        %v1484 = vpop.permute.xlu0 %1483
        %1486 = vset.pattern.permute.xlu0 6
        %1487 = vperm.xlu0 %1486, %v397
        %v1488 = vpop.permute.xlu0 %1487
        %1490 = vset.pattern.permute.xlu0 6
        %1491 = vperm.xlu0 %1490, %v402
        %v1492 = vpop.permute.xlu0 %1491
        %1494 = vset.pattern.permute.xlu0 6
        %1495 = vperm.xlu0 %1494, %v407
        %v1496 = vpop.permute.xlu0 %1495
        %1498 = vset.pattern.permute.xlu0 6
        %1499 = vperm.xlu0 %1498, %v412
        %v1500 = vpop.permute.xlu0 %1499
        %1502 = vset.pattern.permute.xlu0 6
        %1503 = vperm.xlu0 %1502, %v417
        %v1504 = vpop.permute.xlu0 %1503
        %1506 = vset.pattern.permute.xlu0 6
        %1507 = vperm.xlu0 %1506, %v422
        %v1508 = vpop.permute.xlu0 %1507
        %1510 = vset.pattern.permute.xlu0 6
        %1511 = vperm.xlu0 %1510, %v427
        %v1512 = vpop.permute.xlu0 %1511
        %1514 = vset.pattern.permute.xlu0 6
        %1515 = vperm.xlu0 %1514, %v432
        %v1516 = vpop.permute.xlu0 %1515
        %1518 = vset.pattern.permute.xlu0 6
        %1519 = vperm.xlu0 %1518, %v437
        %v1520 = vpop.permute.xlu0 %1519
        %1522 = vset.pattern.permute.xlu0 6
        %1523 = vperm.xlu0 %1522, %v442
        %v1524 = vpop.permute.xlu0 %1523
        %1526 = vset.pattern.permute.xlu0 6
        %1527 = vperm.xlu0 %1526, %v447
        %v1528 = vpop.permute.xlu0 %1527
        %v1530 = vmul.f32 %v1468, %v1434
        %v1531 = vmul.f32 %v1468, %v1435
        %v1532 = vmul.f32 %v1472, %v1436
        %v1533 = vmul.f32 %v1472, %v1437
        %v1534 = vmul.f32 %v1476, %v1438
        %v1535 = vmul.f32 %v1476, %v1439
        %v1536 = vmul.f32 %v1480, %v1440
        %v1537 = vmul.f32 %v1480, %v1441
        %v1538 = vmul.f32 %v1484, %v1442
        %v1539 = vmul.f32 %v1484, %v1443
        %v1540 = vmul.f32 %v1488, %v1444
        %v1541 = vmul.f32 %v1488, %v1445
        %v1542 = vmul.f32 %v1492, %v1446
        %v1543 = vmul.f32 %v1492, %v1447
        %v1544 = vmul.f32 %v1496, %v1448
        %v1545 = vmul.f32 %v1496, %v1449
        %v1546 = vmul.f32 %v1500, %v1450
        %v1547 = vmul.f32 %v1500, %v1451
        %v1548 = vmul.f32 %v1504, %v1452
        %v1549 = vmul.f32 %v1504, %v1453
        %v1550 = vmul.f32 %v1508, %v1454
        %v1551 = vmul.f32 %v1508, %v1455
        %v1552 = vmul.f32 %v1512, %v1456
        %v1553 = vmul.f32 %v1512, %v1457
        %v1554 = vmul.f32 %v1516, %v1458
        %v1555 = vmul.f32 %v1516, %v1459
        %v1556 = vmul.f32 %v1520, %v1460
        %v1557 = vmul.f32 %v1520, %v1461
        %v1558 = vmul.f32 %v1524, %v1462
        %v1559 = vmul.f32 %v1524, %v1463
        %v1560 = vmul.f32 %v1528, %v1464
        %v1561 = vmul.f32 %v1528, %v1465
        %1562 = vset.pattern.permute.xlu0 3
        %1563 = vperm.xlu0 %1562, %v372
        %v1564 = vpop.permute.xlu0 %1563
        %1566 = vset.pattern.permute.xlu0 3
        %1567 = vperm.xlu0 %1566, %v377
        %v1568 = vpop.permute.xlu0 %1567
        %1570 = vset.pattern.permute.xlu0 3
        %1571 = vperm.xlu0 %1570, %v382
        %v1572 = vpop.permute.xlu0 %1571
        %1574 = vset.pattern.permute.xlu0 3
        %1575 = vperm.xlu0 %1574, %v387
        %v1576 = vpop.permute.xlu0 %1575
        %1578 = vset.pattern.permute.xlu0 3
        %1579 = vperm.xlu0 %1578, %v392
        %v1580 = vpop.permute.xlu0 %1579
        %1582 = vset.pattern.permute.xlu0 3
        %1583 = vperm.xlu0 %1582, %v397
        %v1584 = vpop.permute.xlu0 %1583
        %1586 = vset.pattern.permute.xlu0 3
        %1587 = vperm.xlu0 %1586, %v402
        %v1588 = vpop.permute.xlu0 %1587
        %1590 = vset.pattern.permute.xlu0 3
        %1591 = vperm.xlu0 %1590, %v407
        %v1592 = vpop.permute.xlu0 %1591
        %1594 = vset.pattern.permute.xlu0 3
        %1595 = vperm.xlu0 %1594, %v412
        %v1596 = vpop.permute.xlu0 %1595
        %1598 = vset.pattern.permute.xlu0 3
        %1599 = vperm.xlu0 %1598, %v417
        %v1600 = vpop.permute.xlu0 %1599
        %1602 = vset.pattern.permute.xlu0 3
        %1603 = vperm.xlu0 %1602, %v422
        %v1604 = vpop.permute.xlu0 %1603
        %1606 = vset.pattern.permute.xlu0 3
        %1607 = vperm.xlu0 %1606, %v427
        %v1608 = vpop.permute.xlu0 %1607
        %1610 = vset.pattern.permute.xlu0 3
        %1611 = vperm.xlu0 %1610, %v432
        %v1612 = vpop.permute.xlu0 %1611
        %1614 = vset.pattern.permute.xlu0 3
        %1615 = vperm.xlu0 %1614, %v437
        %v1616 = vpop.permute.xlu0 %1615
        %1618 = vset.pattern.permute.xlu0 3
        %1619 = vperm.xlu0 %1618, %v442
        %v1620 = vpop.permute.xlu0 %1619
        %1622 = vset.pattern.permute.xlu0 3
        %1623 = vperm.xlu0 %1622, %v447
        %v1624 = vpop.permute.xlu0 %1623
        %v1626 = vadd.f32 %v1564, %v1530
        %v1627 = vadd.f32 %v1564, %v1531
        %v1628 = vadd.f32 %v1568, %v1532
        %v1629 = vadd.f32 %v1568, %v1533
        %v1630 = vadd.f32 %v1572, %v1534
        %v1631 = vadd.f32 %v1572, %v1535
        %v1632 = vadd.f32 %v1576, %v1536
        %v1633 = vadd.f32 %v1576, %v1537
        %v1634 = vadd.f32 %v1580, %v1538
        %v1635 = vadd.f32 %v1580, %v1539
        %v1636 = vadd.f32 %v1584, %v1540
        %v1637 = vadd.f32 %v1584, %v1541
        %v1638 = vadd.f32 %v1588, %v1542
        %v1639 = vadd.f32 %v1588, %v1543
        %v1640 = vadd.f32 %v1592, %v1544
        %v1641 = vadd.f32 %v1592, %v1545
        %v1642 = vadd.f32 %v1596, %v1546
        %v1643 = vadd.f32 %v1596, %v1547
        %v1644 = vadd.f32 %v1600, %v1548
        %v1645 = vadd.f32 %v1600, %v1549
        %v1646 = vadd.f32 %v1604, %v1550
        %v1647 = vadd.f32 %v1604, %v1551
        %v1648 = vadd.f32 %v1608, %v1552
        %v1649 = vadd.f32 %v1608, %v1553
        %v1650 = vadd.f32 %v1612, %v1554
        %v1651 = vadd.f32 %v1612, %v1555
        %v1652 = vadd.f32 %v1616, %v1556
        %v1653 = vadd.f32 %v1616, %v1557
        %v1654 = vadd.f32 %v1620, %v1558
        %v1655 = vadd.f32 %v1620, %v1559
        %v1656 = vadd.f32 %v1624, %v1560
        %v1657 = vadd.f32 %v1624, %v1561
        %1658 = vset.pattern.permute.xlu0 7
        %1659 = vperm.xlu0 %1658, %v372
        %v1660 = vpop.permute.xlu0 %1659
        %1662 = vset.pattern.permute.xlu0 7
        %1663 = vperm.xlu0 %1662, %v377
        %v1664 = vpop.permute.xlu0 %1663
        %1666 = vset.pattern.permute.xlu0 7
        %1667 = vperm.xlu0 %1666, %v382
        %v1668 = vpop.permute.xlu0 %1667
        %1670 = vset.pattern.permute.xlu0 7
        %1671 = vperm.xlu0 %1670, %v387
        %v1672 = vpop.permute.xlu0 %1671
        %1674 = vset.pattern.permute.xlu0 7
        %1675 = vperm.xlu0 %1674, %v392
        %v1676 = vpop.permute.xlu0 %1675
        %1678 = vset.pattern.permute.xlu0 7
        %1679 = vperm.xlu0 %1678, %v397
        %v1680 = vpop.permute.xlu0 %1679
        %1682 = vset.pattern.permute.xlu0 7
        %1683 = vperm.xlu0 %1682, %v402
        %v1684 = vpop.permute.xlu0 %1683
        %1686 = vset.pattern.permute.xlu0 7
        %1687 = vperm.xlu0 %1686, %v407
        %v1688 = vpop.permute.xlu0 %1687
        %1690 = vset.pattern.permute.xlu0 7
        %1691 = vperm.xlu0 %1690, %v412
        %v1692 = vpop.permute.xlu0 %1691
        %1694 = vset.pattern.permute.xlu0 7
        %1695 = vperm.xlu0 %1694, %v417
        %v1696 = vpop.permute.xlu0 %1695
        %1698 = vset.pattern.permute.xlu0 7
        %1699 = vperm.xlu0 %1698, %v422
        %v1700 = vpop.permute.xlu0 %1699
        %1702 = vset.pattern.permute.xlu0 7
        %1703 = vperm.xlu0 %1702, %v427
        %v1704 = vpop.permute.xlu0 %1703
        %1706 = vset.pattern.permute.xlu0 7
        %1707 = vperm.xlu0 %1706, %v432
        %v1708 = vpop.permute.xlu0 %1707
        %1710 = vset.pattern.permute.xlu0 7
        %1711 = vperm.xlu0 %1710, %v437
        %v1712 = vpop.permute.xlu0 %1711
        %1714 = vset.pattern.permute.xlu0 7
        %1715 = vperm.xlu0 %1714, %v442
        %v1716 = vpop.permute.xlu0 %1715
        %1718 = vset.pattern.permute.xlu0 7
        %1719 = vperm.xlu0 %1718, %v447
        %v1720 = vpop.permute.xlu0 %1719
        %v1722 = vmul.f32 %v1660, %v1434
        %v1723 = vmul.f32 %v1660, %v1435
        %v1724 = vmul.f32 %v1664, %v1436
        %v1725 = vmul.f32 %v1664, %v1437
        %v1726 = vmul.f32 %v1668, %v1438
        %v1727 = vmul.f32 %v1668, %v1439
        %v1728 = vmul.f32 %v1672, %v1440
        %v1729 = vmul.f32 %v1672, %v1441
        %v1730 = vmul.f32 %v1676, %v1442
        %v1731 = vmul.f32 %v1676, %v1443
        %v1732 = vmul.f32 %v1680, %v1444
        %v1733 = vmul.f32 %v1680, %v1445
        %v1734 = vmul.f32 %v1684, %v1446
        %v1735 = vmul.f32 %v1684, %v1447
        %v1736 = vmul.f32 %v1688, %v1448
        %v1737 = vmul.f32 %v1688, %v1449
        %v1738 = vmul.f32 %v1692, %v1450
        %v1739 = vmul.f32 %v1692, %v1451
        %v1740 = vmul.f32 %v1696, %v1452
        %v1741 = vmul.f32 %v1696, %v1453
        %v1742 = vmul.f32 %v1700, %v1454
        %v1743 = vmul.f32 %v1700, %v1455
        %v1744 = vmul.f32 %v1704, %v1456
        %v1745 = vmul.f32 %v1704, %v1457
        %v1746 = vmul.f32 %v1708, %v1458
        %v1747 = vmul.f32 %v1708, %v1459
        %v1748 = vmul.f32 %v1712, %v1460
        %v1749 = vmul.f32 %v1712, %v1461
        %v1750 = vmul.f32 %v1716, %v1462
        %v1751 = vmul.f32 %v1716, %v1463
        %v1752 = vmul.f32 %v1720, %v1464
        %v1753 = vmul.f32 %v1720, %v1465
        %1786 = vrot.lane.b32.xlu0 %v1722, 127
        %v1787 = vpop.permute.xlu0 %1786
        %1788 = vrot.lane.b32.xlu0 %v1723, 127
        %v1789 = vpop.permute.xlu0 %1788
        %1790 = vrot.lane.b32.xlu0 %v1724, 127
        %v1791 = vpop.permute.xlu0 %1790
        %1792 = vrot.lane.b32.xlu0 %v1725, 127
        %v1793 = vpop.permute.xlu0 %1792
        %1794 = vrot.lane.b32.xlu0 %v1726, 127
        %v1795 = vpop.permute.xlu0 %1794
        %1796 = vrot.lane.b32.xlu0 %v1727, 127
        %v1797 = vpop.permute.xlu0 %1796
        %1798 = vrot.lane.b32.xlu0 %v1728, 127
        %v1799 = vpop.permute.xlu0 %1798
        %1800 = vrot.lane.b32.xlu0 %v1729, 127
        %v1801 = vpop.permute.xlu0 %1800
        %1802 = vrot.lane.b32.xlu0 %v1730, 127
        %v1803 = vpop.permute.xlu0 %1802
        %1804 = vrot.lane.b32.xlu0 %v1731, 127
        %v1805 = vpop.permute.xlu0 %1804
        %1806 = vrot.lane.b32.xlu0 %v1732, 127
        %v1807 = vpop.permute.xlu0 %1806
        %1808 = vrot.lane.b32.xlu0 %v1733, 127
        %v1809 = vpop.permute.xlu0 %1808
        %1810 = vrot.lane.b32.xlu0 %v1734, 127
        %v1811 = vpop.permute.xlu0 %1810
        %1812 = vrot.lane.b32.xlu0 %v1735, 127
        %v1813 = vpop.permute.xlu0 %1812
        %1814 = vrot.lane.b32.xlu0 %v1736, 127
        %v1815 = vpop.permute.xlu0 %1814
        %1816 = vrot.lane.b32.xlu0 %v1737, 127
        %v1817 = vpop.permute.xlu0 %1816
        %1818 = vrot.lane.b32.xlu0 %v1738, 127
        %v1819 = vpop.permute.xlu0 %1818
        %1820 = vrot.lane.b32.xlu0 %v1739, 127
        %v1821 = vpop.permute.xlu0 %1820
        %1822 = vrot.lane.b32.xlu0 %v1740, 127
        %v1823 = vpop.permute.xlu0 %1822
        %1824 = vrot.lane.b32.xlu0 %v1741, 127
        %v1825 = vpop.permute.xlu0 %1824
        %1826 = vrot.lane.b32.xlu0 %v1742, 127
        %v1827 = vpop.permute.xlu0 %1826
        %1828 = vrot.lane.b32.xlu0 %v1743, 127
        %v1829 = vpop.permute.xlu0 %1828
        %1830 = vrot.lane.b32.xlu0 %v1744, 127
        %v1831 = vpop.permute.xlu0 %1830
        %1832 = vrot.lane.b32.xlu0 %v1745, 127
        %v1833 = vpop.permute.xlu0 %1832
        %1834 = vrot.lane.b32.xlu0 %v1746, 127
        %v1835 = vpop.permute.xlu0 %1834
        %1836 = vrot.lane.b32.xlu0 %v1747, 127
        %v1837 = vpop.permute.xlu0 %1836
        %1838 = vrot.lane.b32.xlu0 %v1748, 127
        %v1839 = vpop.permute.xlu0 %1838
        %1840 = vrot.lane.b32.xlu0 %v1749, 127
        %v1841 = vpop.permute.xlu0 %1840
        %1842 = vrot.lane.b32.xlu0 %v1750, 127
        %v1843 = vpop.permute.xlu0 %1842
        %1844 = vrot.lane.b32.xlu0 %v1751, 127
        %v1845 = vpop.permute.xlu0 %1844
        %1846 = vrot.lane.b32.xlu0 %v1752, 127
        %v1847 = vpop.permute.xlu0 %1846
        %1848 = vrot.lane.b32.xlu0 %v1753, 127
        %v1849 = vpop.permute.xlu0 %1848
        %vm1850 = vcmask 1039360
        %v1851 = vsel %vm1850, %v1787, %v1789
        %v1852 = vsel %vm1850, %v1791, %v1793
        %v1853 = vsel %vm1850, %v1795, %v1797
        %v1854 = vsel %vm1850, %v1799, %v1801
        %v1855 = vsel %vm1850, %v1803, %v1805
        %v1856 = vsel %vm1850, %v1807, %v1809
        %v1857 = vsel %vm1850, %v1811, %v1813
        %v1858 = vsel %vm1850, %v1815, %v1817
        %v1859 = vsel %vm1850, %v1819, %v1821
        %v1860 = vsel %vm1850, %v1823, %v1825
        %v1861 = vsel %vm1850, %v1827, %v1829
        %v1862 = vsel %vm1850, %v1831, %v1833
        %v1863 = vsel %vm1850, %v1835, %v1837
        %v1864 = vsel %vm1850, %v1839, %v1841
        %v1865 = vsel %vm1850, %v1843, %v1845
        %v1866 = vsel %vm1850, %v1847, %v1849
        %v1899 = vadd.f32 %v1626, %v1851
        %v1900 = vadd.f32 %v1627, %v1789
        %v1901 = vadd.f32 %v1628, %v1852
        %v1902 = vadd.f32 %v1629, %v1793
        %v1903 = vadd.f32 %v1630, %v1853
        %v1904 = vadd.f32 %v1631, %v1797
        %v1905 = vadd.f32 %v1632, %v1854
        %v1906 = vadd.f32 %v1633, %v1801
        %v1907 = vadd.f32 %v1634, %v1855
        %v1908 = vadd.f32 %v1635, %v1805
        %v1909 = vadd.f32 %v1636, %v1856
        %v1910 = vadd.f32 %v1637, %v1809
        %v1911 = vadd.f32 %v1638, %v1857
        %v1912 = vadd.f32 %v1639, %v1813
        %v1913 = vadd.f32 %v1640, %v1858
        %v1914 = vadd.f32 %v1641, %v1817
        %v1915 = vadd.f32 %v1642, %v1859
        %v1916 = vadd.f32 %v1643, %v1821
        %v1917 = vadd.f32 %v1644, %v1860
        %v1918 = vadd.f32 %v1645, %v1825
        %v1919 = vadd.f32 %v1646, %v1861
        %v1920 = vadd.f32 %v1647, %v1829
        %v1921 = vadd.f32 %v1648, %v1862
        %v1922 = vadd.f32 %v1649, %v1833
        %v1923 = vadd.f32 %v1650, %v1863
        %v1924 = vadd.f32 %v1651, %v1837
        %v1925 = vadd.f32 %v1652, %v1864
        %v1926 = vadd.f32 %v1653, %v1841
        %v1927 = vadd.f32 %v1654, %v1865
        %v1928 = vadd.f32 %v1655, %v1845
        %v1929 = vadd.f32 %v1656, %v1866
        %v1930 = vadd.f32 %v1657, %v1849
        %1931 = vset.pattern.permute.xlu0 8
        %1932 = vperm.xlu0 %1931, %v372
        %v1933 = vpop.permute.xlu0 %1932
        %1935 = vset.pattern.permute.xlu0 8
        %1936 = vperm.xlu0 %1935, %v377
        %v1937 = vpop.permute.xlu0 %1936
        %1939 = vset.pattern.permute.xlu0 8
        %1940 = vperm.xlu0 %1939, %v382
        %v1941 = vpop.permute.xlu0 %1940
        %1943 = vset.pattern.permute.xlu0 8
        %1944 = vperm.xlu0 %1943, %v387
        %v1945 = vpop.permute.xlu0 %1944
        %1947 = vset.pattern.permute.xlu0 8
        %1948 = vperm.xlu0 %1947, %v392
        %v1949 = vpop.permute.xlu0 %1948
        %1951 = vset.pattern.permute.xlu0 8
        %1952 = vperm.xlu0 %1951, %v397
        %v1953 = vpop.permute.xlu0 %1952
        %1955 = vset.pattern.permute.xlu0 8
        %1956 = vperm.xlu0 %1955, %v402
        %v1957 = vpop.permute.xlu0 %1956
        %1959 = vset.pattern.permute.xlu0 8
        %1960 = vperm.xlu0 %1959, %v407
        %v1961 = vpop.permute.xlu0 %1960
        %1963 = vset.pattern.permute.xlu0 8
        %1964 = vperm.xlu0 %1963, %v412
        %v1965 = vpop.permute.xlu0 %1964
        %1967 = vset.pattern.permute.xlu0 8
        %1968 = vperm.xlu0 %1967, %v417
        %v1969 = vpop.permute.xlu0 %1968
        %1971 = vset.pattern.permute.xlu0 8
        %1972 = vperm.xlu0 %1971, %v422
        %v1973 = vpop.permute.xlu0 %1972
        %1975 = vset.pattern.permute.xlu0 8
        %1976 = vperm.xlu0 %1975, %v427
        %v1977 = vpop.permute.xlu0 %1976
        %1979 = vset.pattern.permute.xlu0 8
        %1980 = vperm.xlu0 %1979, %v432
        %v1981 = vpop.permute.xlu0 %1980
        %1983 = vset.pattern.permute.xlu0 8
        %1984 = vperm.xlu0 %1983, %v437
        %v1985 = vpop.permute.xlu0 %1984
        %1987 = vset.pattern.permute.xlu0 8
        %1988 = vperm.xlu0 %1987, %v442
        %v1989 = vpop.permute.xlu0 %1988
        %1991 = vset.pattern.permute.xlu0 8
        %1992 = vperm.xlu0 %1991, %v447
        %v1993 = vpop.permute.xlu0 %1992
        %v1995 = vmul.f32 %v1933, %v1434
        %v1996 = vmul.f32 %v1933, %v1435
        %v1997 = vmul.f32 %v1937, %v1436
        %v1998 = vmul.f32 %v1937, %v1437
        %v1999 = vmul.f32 %v1941, %v1438
        %v2000 = vmul.f32 %v1941, %v1439
        %v2001 = vmul.f32 %v1945, %v1440
        %v2002 = vmul.f32 %v1945, %v1441
        %v2003 = vmul.f32 %v1949, %v1442
        %v2004 = vmul.f32 %v1949, %v1443
        %v2005 = vmul.f32 %v1953, %v1444
        %v2006 = vmul.f32 %v1953, %v1445
        %v2007 = vmul.f32 %v1957, %v1446
        %v2008 = vmul.f32 %v1957, %v1447
        %v2009 = vmul.f32 %v1961, %v1448
        %v2010 = vmul.f32 %v1961, %v1449
        %v2011 = vmul.f32 %v1965, %v1450
        %v2012 = vmul.f32 %v1965, %v1451
        %v2013 = vmul.f32 %v1969, %v1452
        %v2014 = vmul.f32 %v1969, %v1453
        %v2015 = vmul.f32 %v1973, %v1454
        %v2016 = vmul.f32 %v1973, %v1455
        %v2017 = vmul.f32 %v1977, %v1456
        %v2018 = vmul.f32 %v1977, %v1457
        %v2019 = vmul.f32 %v1981, %v1458
        %v2020 = vmul.f32 %v1981, %v1459
        %v2021 = vmul.f32 %v1985, %v1460
        %v2022 = vmul.f32 %v1985, %v1461
        %v2023 = vmul.f32 %v1989, %v1462
        %v2024 = vmul.f32 %v1989, %v1463
        %v2025 = vmul.f32 %v1993, %v1464
        %v2026 = vmul.f32 %v1993, %v1465
        %2059 = vrot.lane.b32.xlu0 %v1995, 126
        %v2060 = vpop.permute.xlu0 %2059
        %2061 = vrot.lane.b32.xlu0 %v1996, 126
        %v2062 = vpop.permute.xlu0 %2061
        %2063 = vrot.lane.b32.xlu0 %v1997, 126
        %v2064 = vpop.permute.xlu0 %2063
        %2065 = vrot.lane.b32.xlu0 %v1998, 126
        %v2066 = vpop.permute.xlu0 %2065
        %2067 = vrot.lane.b32.xlu0 %v1999, 126
        %v2068 = vpop.permute.xlu0 %2067
        %2069 = vrot.lane.b32.xlu0 %v2000, 126
        %v2070 = vpop.permute.xlu0 %2069
        %2071 = vrot.lane.b32.xlu0 %v2001, 126
        %v2072 = vpop.permute.xlu0 %2071
        %2073 = vrot.lane.b32.xlu0 %v2002, 126
        %v2074 = vpop.permute.xlu0 %2073
        %2075 = vrot.lane.b32.xlu0 %v2003, 126
        %v2076 = vpop.permute.xlu0 %2075
        %2077 = vrot.lane.b32.xlu0 %v2004, 126
        %v2078 = vpop.permute.xlu0 %2077
        %2079 = vrot.lane.b32.xlu0 %v2005, 126
        %v2080 = vpop.permute.xlu0 %2079
        %2081 = vrot.lane.b32.xlu0 %v2006, 126
        %v2082 = vpop.permute.xlu0 %2081
        %2083 = vrot.lane.b32.xlu0 %v2007, 126
        %v2084 = vpop.permute.xlu0 %2083
        %2085 = vrot.lane.b32.xlu0 %v2008, 126
        %v2086 = vpop.permute.xlu0 %2085
        %2087 = vrot.lane.b32.xlu0 %v2009, 126
        %v2088 = vpop.permute.xlu0 %2087
        %2089 = vrot.lane.b32.xlu0 %v2010, 126
        %v2090 = vpop.permute.xlu0 %2089
        %2091 = vrot.lane.b32.xlu0 %v2011, 126
        %v2092 = vpop.permute.xlu0 %2091
        %2093 = vrot.lane.b32.xlu0 %v2012, 126
        %v2094 = vpop.permute.xlu0 %2093
        %2095 = vrot.lane.b32.xlu0 %v2013, 126
        %v2096 = vpop.permute.xlu0 %2095
        %2097 = vrot.lane.b32.xlu0 %v2014, 126
        %v2098 = vpop.permute.xlu0 %2097
        %2099 = vrot.lane.b32.xlu0 %v2015, 126
        %v2100 = vpop.permute.xlu0 %2099
        %2101 = vrot.lane.b32.xlu0 %v2016, 126
        %v2102 = vpop.permute.xlu0 %2101
        %2103 = vrot.lane.b32.xlu0 %v2017, 126
        %v2104 = vpop.permute.xlu0 %2103
        %2105 = vrot.lane.b32.xlu0 %v2018, 126
        %v2106 = vpop.permute.xlu0 %2105
        %2107 = vrot.lane.b32.xlu0 %v2019, 126
        %v2108 = vpop.permute.xlu0 %2107
        %2109 = vrot.lane.b32.xlu0 %v2020, 126
        %v2110 = vpop.permute.xlu0 %2109
        %2111 = vrot.lane.b32.xlu0 %v2021, 126
        %v2112 = vpop.permute.xlu0 %2111
        %2113 = vrot.lane.b32.xlu0 %v2022, 126
        %v2114 = vpop.permute.xlu0 %2113
        %2115 = vrot.lane.b32.xlu0 %v2023, 126
        %v2116 = vpop.permute.xlu0 %2115
        %2117 = vrot.lane.b32.xlu0 %v2024, 126
        %v2118 = vpop.permute.xlu0 %2117
        %2119 = vrot.lane.b32.xlu0 %v2025, 126
        %v2120 = vpop.permute.xlu0 %2119
        %2121 = vrot.lane.b32.xlu0 %v2026, 126
        %v2122 = vpop.permute.xlu0 %2121
        %vm2123 = vcmask 1031168
        %v2124 = vsel %vm2123, %v2060, %v2062
        %v2125 = vsel %vm2123, %v2064, %v2066
        %v2126 = vsel %vm2123, %v2068, %v2070
        %v2127 = vsel %vm2123, %v2072, %v2074
        %v2128 = vsel %vm2123, %v2076, %v2078
        %v2129 = vsel %vm2123, %v2080, %v2082
        %v2130 = vsel %vm2123, %v2084, %v2086
        %v2131 = vsel %vm2123, %v2088, %v2090
        %v2132 = vsel %vm2123, %v2092, %v2094
        %v2133 = vsel %vm2123, %v2096, %v2098
        %v2134 = vsel %vm2123, %v2100, %v2102
        %v2135 = vsel %vm2123, %v2104, %v2106
        %v2136 = vsel %vm2123, %v2108, %v2110
        %v2137 = vsel %vm2123, %v2112, %v2114
        %v2138 = vsel %vm2123, %v2116, %v2118
        %v2139 = vsel %vm2123, %v2120, %v2122
        %v2172 = vadd.f32 %v1899, %v2124
        %v2173 = vadd.f32 %v1900, %v2062
        %v2174 = vadd.f32 %v1901, %v2125
        %v2175 = vadd.f32 %v1902, %v2066
        %v2176 = vadd.f32 %v1903, %v2126
        %v2177 = vadd.f32 %v1904, %v2070
        %v2178 = vadd.f32 %v1905, %v2127
        %v2179 = vadd.f32 %v1906, %v2074
        %v2180 = vadd.f32 %v1907, %v2128
        %v2181 = vadd.f32 %v1908, %v2078
        %v2182 = vadd.f32 %v1909, %v2129
        %v2183 = vadd.f32 %v1910, %v2082
        %v2184 = vadd.f32 %v1911, %v2130
        %v2185 = vadd.f32 %v1912, %v2086
        %v2186 = vadd.f32 %v1913, %v2131
        %v2187 = vadd.f32 %v1914, %v2090
        %v2188 = vadd.f32 %v1915, %v2132
        %v2189 = vadd.f32 %v1916, %v2094
        %v2190 = vadd.f32 %v1917, %v2133
        %v2191 = vadd.f32 %v1918, %v2098
        %v2192 = vadd.f32 %v1919, %v2134
        %v2193 = vadd.f32 %v1920, %v2102
        %v2194 = vadd.f32 %v1921, %v2135
        %v2195 = vadd.f32 %v1922, %v2106
        %v2196 = vadd.f32 %v1923, %v2136
        %v2197 = vadd.f32 %v1924, %v2110
        %v2198 = vadd.f32 %v1925, %v2137
        %v2199 = vadd.f32 %v1926, %v2114
        %v2200 = vadd.f32 %v1927, %v2138
        %v2201 = vadd.f32 %v1928, %v2118
        %v2202 = vadd.f32 %v1929, %v2139
        %v2203 = vadd.f32 %v1930, %v2122
        %vm2204 = vcmp.ge.f32.partialorder %v2172, 0.0
        %vm2205 = vcmp.ge.f32.partialorder %v2173, 0.0
        %vm2206 = vcmp.ge.f32.partialorder %v2174, 0.0
        %vm2207 = vcmp.ge.f32.partialorder %v2175, 0.0
        %vm2208 = vcmp.ge.f32.partialorder %v2176, 0.0
        %vm2209 = vcmp.ge.f32.partialorder %v2177, 0.0
        %vm2210 = vcmp.ge.f32.partialorder %v2178, 0.0
        %vm2211 = vcmp.ge.f32.partialorder %v2179, 0.0
        %vm2212 = vcmp.ge.f32.partialorder %v2180, 0.0
        %vm2213 = vcmp.ge.f32.partialorder %v2181, 0.0
        %vm2214 = vcmp.ge.f32.partialorder %v2182, 0.0
        %vm2215 = vcmp.ge.f32.partialorder %v2183, 0.0
        %vm2216 = vcmp.ge.f32.partialorder %v2184, 0.0
        %vm2217 = vcmp.ge.f32.partialorder %v2185, 0.0
        %vm2218 = vcmp.ge.f32.partialorder %v2186, 0.0
        %vm2219 = vcmp.ge.f32.partialorder %v2187, 0.0
        %vm2220 = vcmp.ge.f32.partialorder %v2188, 0.0
        %vm2221 = vcmp.ge.f32.partialorder %v2189, 0.0
        %vm2222 = vcmp.ge.f32.partialorder %v2190, 0.0
        %vm2223 = vcmp.ge.f32.partialorder %v2191, 0.0
        %vm2224 = vcmp.ge.f32.partialorder %v2192, 0.0
        %vm2225 = vcmp.ge.f32.partialorder %v2193, 0.0
        %vm2226 = vcmp.ge.f32.partialorder %v2194, 0.0
        %vm2227 = vcmp.ge.f32.partialorder %v2195, 0.0
        %vm2228 = vcmp.ge.f32.partialorder %v2196, 0.0
        %vm2229 = vcmp.ge.f32.partialorder %v2197, 0.0
        %vm2230 = vcmp.ge.f32.partialorder %v2198, 0.0
        %vm2231 = vcmp.ge.f32.partialorder %v2199, 0.0
        %vm2232 = vcmp.ge.f32.partialorder %v2200, 0.0
        %vm2233 = vcmp.ge.f32.partialorder %v2201, 0.0
        %vm2234 = vcmp.ge.f32.partialorder %v2202, 0.0
        %vm2235 = vcmp.ge.f32.partialorder %v2203, 0.0
        %2236 = vset.pattern.permute.xlu0 11
        %2237 = vperm.xlu0 %2236, %v372
        %v2238 = vpop.permute.xlu0 %2237
        %2240 = vset.pattern.permute.xlu0 11
        %2241 = vperm.xlu0 %2240, %v377
        %v2242 = vpop.permute.xlu0 %2241
        %2244 = vset.pattern.permute.xlu0 11
        %2245 = vperm.xlu0 %2244, %v382
        %v2246 = vpop.permute.xlu0 %2245
        %2248 = vset.pattern.permute.xlu0 11
        %2249 = vperm.xlu0 %2248, %v387
        %v2250 = vpop.permute.xlu0 %2249
        %2252 = vset.pattern.permute.xlu0 11
        %2253 = vperm.xlu0 %2252, %v392
        %v2254 = vpop.permute.xlu0 %2253
        %2256 = vset.pattern.permute.xlu0 11
        %2257 = vperm.xlu0 %2256, %v397
        %v2258 = vpop.permute.xlu0 %2257
        %2260 = vset.pattern.permute.xlu0 11
        %2261 = vperm.xlu0 %2260, %v402
        %v2262 = vpop.permute.xlu0 %2261
        %2264 = vset.pattern.permute.xlu0 11
        %2265 = vperm.xlu0 %2264, %v407
        %v2266 = vpop.permute.xlu0 %2265
        %2268 = vset.pattern.permute.xlu0 11
        %2269 = vperm.xlu0 %2268, %v412
        %v2270 = vpop.permute.xlu0 %2269
        %2272 = vset.pattern.permute.xlu0 11
        %2273 = vperm.xlu0 %2272, %v417
        %v2274 = vpop.permute.xlu0 %2273
        %2276 = vset.pattern.permute.xlu0 11
        %2277 = vperm.xlu0 %2276, %v422
        %v2278 = vpop.permute.xlu0 %2277
        %2280 = vset.pattern.permute.xlu0 11
        %2281 = vperm.xlu0 %2280, %v427
        %v2282 = vpop.permute.xlu0 %2281
        %2284 = vset.pattern.permute.xlu0 11
        %2285 = vperm.xlu0 %2284, %v432
        %v2286 = vpop.permute.xlu0 %2285
        %2288 = vset.pattern.permute.xlu0 11
        %2289 = vperm.xlu0 %2288, %v437
        %v2290 = vpop.permute.xlu0 %2289
        %2292 = vset.pattern.permute.xlu0 11
        %2293 = vperm.xlu0 %2292, %v442
        %v2294 = vpop.permute.xlu0 %2293
        %2296 = vset.pattern.permute.xlu0 11
        %2297 = vperm.xlu0 %2296, %v447
        %v2298 = vpop.permute.xlu0 %2297
        %v2300 = vmul.f32 %v2238, %v2172
        %v2301 = vmul.f32 %v2238, %v2173
        %v2302 = vmul.f32 %v2242, %v2174
        %v2303 = vmul.f32 %v2242, %v2175
        %v2304 = vmul.f32 %v2246, %v2176
        %v2305 = vmul.f32 %v2246, %v2177
        %v2306 = vmul.f32 %v2250, %v2178
        %v2307 = vmul.f32 %v2250, %v2179
        %v2308 = vmul.f32 %v2254, %v2180
        %v2309 = vmul.f32 %v2254, %v2181
        %v2310 = vmul.f32 %v2258, %v2182
        %v2311 = vmul.f32 %v2258, %v2183
        %v2312 = vmul.f32 %v2262, %v2184
        %v2313 = vmul.f32 %v2262, %v2185
        %v2314 = vmul.f32 %v2266, %v2186
        %v2315 = vmul.f32 %v2266, %v2187
        %v2316 = vmul.f32 %v2270, %v2188
        %v2317 = vmul.f32 %v2270, %v2189
        %v2318 = vmul.f32 %v2274, %v2190
        %v2319 = vmul.f32 %v2274, %v2191
        %v2320 = vmul.f32 %v2278, %v2192
        %v2321 = vmul.f32 %v2278, %v2193
        %v2322 = vmul.f32 %v2282, %v2194
        %v2323 = vmul.f32 %v2282, %v2195
        %v2324 = vmul.f32 %v2286, %v2196
        %v2325 = vmul.f32 %v2286, %v2197
        %v2326 = vmul.f32 %v2290, %v2198
        %v2327 = vmul.f32 %v2290, %v2199
        %v2328 = vmul.f32 %v2294, %v2200
        %v2329 = vmul.f32 %v2294, %v2201
        %v2330 = vmul.f32 %v2298, %v2202
        %v2331 = vmul.f32 %v2298, %v2203
        %v2332 = vsel %vm2204, %v2172, %v2300
        %v2333 = vsel %vm2205, %v2173, %v2301
        %v2334 = vsel %vm2206, %v2174, %v2302
        %v2335 = vsel %vm2207, %v2175, %v2303
        %v2336 = vsel %vm2208, %v2176, %v2304
        %v2337 = vsel %vm2209, %v2177, %v2305
        %v2338 = vsel %vm2210, %v2178, %v2306
        %v2339 = vsel %vm2211, %v2179, %v2307
        %v2340 = vsel %vm2212, %v2180, %v2308
        %v2341 = vsel %vm2213, %v2181, %v2309
        %v2342 = vsel %vm2214, %v2182, %v2310
        %v2343 = vsel %vm2215, %v2183, %v2311
        %v2344 = vsel %vm2216, %v2184, %v2312
        %v2345 = vsel %vm2217, %v2185, %v2313
        %v2346 = vsel %vm2218, %v2186, %v2314
        %v2347 = vsel %vm2219, %v2187, %v2315
        %v2348 = vsel %vm2220, %v2188, %v2316
        %v2349 = vsel %vm2221, %v2189, %v2317
        %v2350 = vsel %vm2222, %v2190, %v2318
        %v2351 = vsel %vm2223, %v2191, %v2319
        %v2352 = vsel %vm2224, %v2192, %v2320
        %v2353 = vsel %vm2225, %v2193, %v2321
        %v2354 = vsel %vm2226, %v2194, %v2322
        %v2355 = vsel %vm2227, %v2195, %v2323
        %v2356 = vsel %vm2228, %v2196, %v2324
        %v2357 = vsel %vm2229, %v2197, %v2325
        %v2358 = vsel %vm2230, %v2198, %v2326
        %v2359 = vsel %vm2231, %v2199, %v2327
        %v2360 = vsel %vm2232, %v2200, %v2328
        %v2361 = vsel %vm2233, %v2201, %v2329
        %v2362 = vsel %vm2234, %v2202, %v2330
        %v2363 = vsel %vm2235, %v2203, %v2331
        %2396 = vrot.lane.b32.xlu0 %v2332, 121
        %v2397 = vpop.permute.xlu0 %2396
        %2398 = vrot.lane.b32.xlu0 %v2333, 121
        %v2399 = vpop.permute.xlu0 %2398
        %2400 = vrot.lane.b32.xlu0 %v2334, 121
        %v2401 = vpop.permute.xlu0 %2400
        %2402 = vrot.lane.b32.xlu0 %v2335, 121
        %v2403 = vpop.permute.xlu0 %2402
        %2404 = vrot.lane.b32.xlu0 %v2336, 121
        %v2405 = vpop.permute.xlu0 %2404
        %2406 = vrot.lane.b32.xlu0 %v2337, 121
        %v2407 = vpop.permute.xlu0 %2406
        %2408 = vrot.lane.b32.xlu0 %v2338, 121
        %v2409 = vpop.permute.xlu0 %2408
        %2410 = vrot.lane.b32.xlu0 %v2339, 121
        %v2411 = vpop.permute.xlu0 %2410
        %2412 = vrot.lane.b32.xlu0 %v2340, 121
        %v2413 = vpop.permute.xlu0 %2412
        %2414 = vrot.lane.b32.xlu0 %v2341, 121
        %v2415 = vpop.permute.xlu0 %2414
        %2416 = vrot.lane.b32.xlu0 %v2342, 121
        %v2417 = vpop.permute.xlu0 %2416
        %2418 = vrot.lane.b32.xlu0 %v2343, 121
        %v2419 = vpop.permute.xlu0 %2418
        %2420 = vrot.lane.b32.xlu0 %v2344, 121
        %v2421 = vpop.permute.xlu0 %2420
        %2422 = vrot.lane.b32.xlu0 %v2345, 121
        %v2423 = vpop.permute.xlu0 %2422
        %2424 = vrot.lane.b32.xlu0 %v2346, 121
        %v2425 = vpop.permute.xlu0 %2424
        %2426 = vrot.lane.b32.xlu0 %v2347, 121
        %v2427 = vpop.permute.xlu0 %2426
        %2428 = vrot.lane.b32.xlu0 %v2348, 121
        %v2429 = vpop.permute.xlu0 %2428
        %2430 = vrot.lane.b32.xlu0 %v2349, 121
        %v2431 = vpop.permute.xlu0 %2430
        %2432 = vrot.lane.b32.xlu0 %v2350, 121
        %v2433 = vpop.permute.xlu0 %2432
        %2434 = vrot.lane.b32.xlu0 %v2351, 121
        %v2435 = vpop.permute.xlu0 %2434
        %2436 = vrot.lane.b32.xlu0 %v2352, 121
        %v2437 = vpop.permute.xlu0 %2436
        %2438 = vrot.lane.b32.xlu0 %v2353, 121
        %v2439 = vpop.permute.xlu0 %2438
        %2440 = vrot.lane.b32.xlu0 %v2354, 121
        %v2441 = vpop.permute.xlu0 %2440
        %2442 = vrot.lane.b32.xlu0 %v2355, 121
        %v2443 = vpop.permute.xlu0 %2442
        %2444 = vrot.lane.b32.xlu0 %v2356, 121
        %v2445 = vpop.permute.xlu0 %2444
        %2446 = vrot.lane.b32.xlu0 %v2357, 121
        %v2447 = vpop.permute.xlu0 %2446
        %2448 = vrot.lane.b32.xlu0 %v2358, 121
        %v2449 = vpop.permute.xlu0 %2448
        %2450 = vrot.lane.b32.xlu0 %v2359, 121
        %v2451 = vpop.permute.xlu0 %2450
        %2452 = vrot.lane.b32.xlu0 %v2360, 121
        %v2453 = vpop.permute.xlu0 %2452
        %2454 = vrot.lane.b32.xlu0 %v2361, 121
        %v2455 = vpop.permute.xlu0 %2454
        %2456 = vrot.lane.b32.xlu0 %v2362, 121
        %v2457 = vpop.permute.xlu0 %2456
        %2458 = vrot.lane.b32.xlu0 %v2363, 121
        %v2459 = vpop.permute.xlu0 %2458
        %vm2460 = vcmask 990208
        %v2461 = vsel %vm2460, %v2397, %v2399
        %v2462 = vsel %vm2460, %v2401, %v2403
        %v2463 = vsel %vm2460, %v2405, %v2407
        %v2464 = vsel %vm2460, %v2409, %v2411
        %v2465 = vsel %vm2460, %v2413, %v2415
        %v2466 = vsel %vm2460, %v2417, %v2419
        %v2467 = vsel %vm2460, %v2421, %v2423
        %v2468 = vsel %vm2460, %v2425, %v2427
        %v2469 = vsel %vm2460, %v2429, %v2431
        %v2470 = vsel %vm2460, %v2433, %v2435
        %v2471 = vsel %vm2460, %v2437, %v2439
        %v2472 = vsel %vm2460, %v2441, %v2443
        %v2473 = vsel %vm2460, %v2445, %v2447
        %v2474 = vsel %vm2460, %v2449, %v2451
        %v2475 = vsel %vm2460, %v2453, %v2455
        %v2476 = vsel %vm2460, %v2457, %v2459
        %2493 = vmatprep.subr.mxu0 0.0
        %2494 = vmatpush1.msra.mxu0 %v2461
        %2495 = vmatprep.subr.mxu0 0.0
        %2496 = vmatpush1.msra.mxu0 %v2462
        %2497 = vmatprep.subr.mxu0 0.0
        %2498 = vmatpush1.msra.mxu0 %v2463
        %2499 = vmatprep.subr.mxu0 0.0
        %2500 = vmatpush1.msra.mxu0 %v2464
        %2501 = vmatprep.subr.mxu0 0.0
        %2502 = vmatpush1.msra.mxu0 %v2465
        %2503 = vmatprep.subr.mxu0 0.0
        %2504 = vmatpush1.msra.mxu0 %v2466
        %2505 = vmatprep.subr.mxu0 0.0
        %2506 = vmatpush1.msra.mxu0 %v2467
        %2507 = vmatprep.subr.mxu0 0.0
        %2508 = vmatpush1.msra.mxu0 %v2468
        %2509 = vmatprep.subr.mxu0 0.0
        %2510 = vmatpush1.msra.mxu0 %v2469
        %2511 = vmatprep.subr.mxu0 0.0
        %2512 = vmatpush1.msra.mxu0 %v2470
        %2513 = vmatprep.subr.mxu0 0.0
        %2514 = vmatpush1.msra.mxu0 %v2471
        %2515 = vmatprep.subr.mxu0 0.0
        %2516 = vmatpush1.msra.mxu0 %v2472
        %2517 = vmatprep.subr.mxu0 0.0
        %2518 = vmatpush1.msra.mxu0 %v2473
        %2519 = vmatprep.subr.mxu0 0.0
        %2520 = vmatpush1.msra.mxu0 %v2474
        %2521 = vmatprep.subr.mxu0 0.0
        %2522 = vmatpush1.msra.mxu0 %v2475
        %2523 = vmatprep.subr.mxu0 0.0
        %2524 = vmatpush1.msra.mxu0 %v2476
        %2525 = vmatprep.subr.mxu0 0.0
        %2526 = vmatpush1.msra.mxu0 0.0
        %2527 = vmatprep.subr.mxu0 0.0
        %2528 = vmatpush1.msra.mxu0 0.0
        %2529 = vmatprep.subr.mxu0 0.0
        %2530 = vmatpush1.msra.mxu0 0.0
        %2531 = vmatprep.subr.mxu0 0.0
        %2532 = vmatpush1.msra.mxu0 0.0
        %2533 = vmatprep.subr.mxu0 0.0
        %2534 = vmatpush1.msra.mxu0 0.0
        %2535 = vmatprep.subr.mxu0 0.0
        %2536 = vmatpush1.msra.mxu0 0.0
        %2537 = vmatprep.subr.mxu0 0.0
        %2538 = vmatpush1.msra.mxu0 0.0
        %2539 = vmatprep.subr.mxu0 0.0
        %2540 = vmatpush1.msra.mxu0 0.0
        %2541 = vmatprep.subr.mxu0 0.0
        %2542 = vmatpush1.msra.mxu0 0.0
        %2543 = vmatprep.subr.mxu0 0.0
        %2544 = vmatpush1.msra.mxu0 0.0
        %2545 = vmatprep.subr.mxu0 0.0
        %2546 = vmatpush1.msra.mxu0 0.0
        %2547 = vmatprep.subr.mxu0 0.0
        %2548 = vmatpush1.msra.mxu0 0.0
        %2549 = vmatprep.subr.mxu0 0.0
        %2550 = vmatpush1.msra.mxu0 0.0
        %2551 = vmatprep.subr.mxu0 0.0
        %2552 = vmatpush1.msra.mxu0 0.0
        %2553 = vmatprep.subr.mxu0 0.0
        %2554 = vmatpush1.msra.mxu0 0.0
        %2555 = vmatprep.subr.mxu0 0.0
        %2556 = vmatpush1.msra.mxu0 0.0
        %2557 = vmatprep.mubr.f32.mxu0 0.0
        %2558 = vmatmul.mubr.f32.gmra.mrb[0].mxu0 1.0
        %v2559 = vpop.f32.mrb[0].mxu0
        %v2560 = vadd.f32 0.0, %v2559
        %v2561 = vpop.f32.mrb[0].mxu0
        %2562 = vdwg.mxu0
        %v2563 = vmul.f32 %v2332, %v2332
        %v2564 = vmul.f32 %v2333, %v2333
        %v2565 = vmul.f32 %v2334, %v2334
        %v2566 = vmul.f32 %v2335, %v2335
        %v2567 = vmul.f32 %v2336, %v2336
        %v2568 = vmul.f32 %v2337, %v2337
        %v2569 = vmul.f32 %v2338, %v2338
        %v2570 = vmul.f32 %v2339, %v2339
        %v2571 = vmul.f32 %v2340, %v2340
        %v2572 = vmul.f32 %v2341, %v2341
        %v2573 = vmul.f32 %v2342, %v2342
        %v2574 = vmul.f32 %v2343, %v2343
        %v2575 = vmul.f32 %v2344, %v2344
        %v2576 = vmul.f32 %v2345, %v2345
        %v2577 = vmul.f32 %v2346, %v2346
        %v2578 = vmul.f32 %v2347, %v2347
        %v2579 = vmul.f32 %v2348, %v2348
        %v2580 = vmul.f32 %v2349, %v2349
        %v2581 = vmul.f32 %v2350, %v2350
        %v2582 = vmul.f32 %v2351, %v2351
        %v2583 = vmul.f32 %v2352, %v2352
        %v2584 = vmul.f32 %v2353, %v2353
        %v2585 = vmul.f32 %v2354, %v2354
        %v2586 = vmul.f32 %v2355, %v2355
        %v2587 = vmul.f32 %v2356, %v2356
        %v2588 = vmul.f32 %v2357, %v2357
        %v2589 = vmul.f32 %v2358, %v2358
        %v2590 = vmul.f32 %v2359, %v2359
        %v2591 = vmul.f32 %v2360, %v2360
        %v2592 = vmul.f32 %v2361, %v2361
        %v2593 = vmul.f32 %v2362, %v2362
        %v2594 = vmul.f32 %v2363, %v2363
        %2627 = vrot.lane.b32.xlu0 %v2563, 121
        %v2628 = vpop.permute.xlu0 %2627
        %2629 = vrot.lane.b32.xlu0 %v2564, 121
        %v2630 = vpop.permute.xlu0 %2629
        %2631 = vrot.lane.b32.xlu0 %v2565, 121
        %v2632 = vpop.permute.xlu0 %2631
        %2633 = vrot.lane.b32.xlu0 %v2566, 121
        %v2634 = vpop.permute.xlu0 %2633
        %2635 = vrot.lane.b32.xlu0 %v2567, 121
        %v2636 = vpop.permute.xlu0 %2635
        %2637 = vrot.lane.b32.xlu0 %v2568, 121
        %v2638 = vpop.permute.xlu0 %2637
        %2639 = vrot.lane.b32.xlu0 %v2569, 121
        %v2640 = vpop.permute.xlu0 %2639
        %2641 = vrot.lane.b32.xlu0 %v2570, 121
        %v2642 = vpop.permute.xlu0 %2641
        %2643 = vrot.lane.b32.xlu0 %v2571, 121
        %v2644 = vpop.permute.xlu0 %2643
        %2645 = vrot.lane.b32.xlu0 %v2572, 121
        %v2646 = vpop.permute.xlu0 %2645
        %2647 = vrot.lane.b32.xlu0 %v2573, 121
        %v2648 = vpop.permute.xlu0 %2647
        %2649 = vrot.lane.b32.xlu0 %v2574, 121
        %v2650 = vpop.permute.xlu0 %2649
        %2651 = vrot.lane.b32.xlu0 %v2575, 121
        %v2652 = vpop.permute.xlu0 %2651
        %2653 = vrot.lane.b32.xlu0 %v2576, 121
        %v2654 = vpop.permute.xlu0 %2653
        %2655 = vrot.lane.b32.xlu0 %v2577, 121
        %v2656 = vpop.permute.xlu0 %2655
        %2657 = vrot.lane.b32.xlu0 %v2578, 121
        %v2658 = vpop.permute.xlu0 %2657
        %2659 = vrot.lane.b32.xlu0 %v2579, 121
        %v2660 = vpop.permute.xlu0 %2659
        %2661 = vrot.lane.b32.xlu0 %v2580, 121
        %v2662 = vpop.permute.xlu0 %2661
        %2663 = vrot.lane.b32.xlu0 %v2581, 121
        %v2664 = vpop.permute.xlu0 %2663
        %2665 = vrot.lane.b32.xlu0 %v2582, 121
        %v2666 = vpop.permute.xlu0 %2665
        %2667 = vrot.lane.b32.xlu0 %v2583, 121
        %v2668 = vpop.permute.xlu0 %2667
        %2669 = vrot.lane.b32.xlu0 %v2584, 121
        %v2670 = vpop.permute.xlu0 %2669
        %2671 = vrot.lane.b32.xlu0 %v2585, 121
        %v2672 = vpop.permute.xlu0 %2671
        %2673 = vrot.lane.b32.xlu0 %v2586, 121
        %v2674 = vpop.permute.xlu0 %2673
        %2675 = vrot.lane.b32.xlu0 %v2587, 121
        %v2676 = vpop.permute.xlu0 %2675
        %2677 = vrot.lane.b32.xlu0 %v2588, 121
        %v2678 = vpop.permute.xlu0 %2677
        %2679 = vrot.lane.b32.xlu0 %v2589, 121
        %v2680 = vpop.permute.xlu0 %2679
        %2681 = vrot.lane.b32.xlu0 %v2590, 121
        %v2682 = vpop.permute.xlu0 %2681
        %2683 = vrot.lane.b32.xlu0 %v2591, 121
        %v2684 = vpop.permute.xlu0 %2683
        %2685 = vrot.lane.b32.xlu0 %v2592, 121
        %v2686 = vpop.permute.xlu0 %2685
        %2687 = vrot.lane.b32.xlu0 %v2593, 121
        %v2688 = vpop.permute.xlu0 %2687
        %2689 = vrot.lane.b32.xlu0 %v2594, 121
        %v2690 = vpop.permute.xlu0 %2689
        %v2691 = vsel %vm2460, %v2628, %v2630
        %v2692 = vsel %vm2460, %v2632, %v2634
        %v2693 = vsel %vm2460, %v2636, %v2638
        %v2694 = vsel %vm2460, %v2640, %v2642
        %v2695 = vsel %vm2460, %v2644, %v2646
        %v2696 = vsel %vm2460, %v2648, %v2650
        %v2697 = vsel %vm2460, %v2652, %v2654
        %v2698 = vsel %vm2460, %v2656, %v2658
        %v2699 = vsel %vm2460, %v2660, %v2662
        %v2700 = vsel %vm2460, %v2664, %v2666
        %v2701 = vsel %vm2460, %v2668, %v2670
        %v2702 = vsel %vm2460, %v2672, %v2674
        %v2703 = vsel %vm2460, %v2676, %v2678
        %v2704 = vsel %vm2460, %v2680, %v2682
        %v2705 = vsel %vm2460, %v2684, %v2686
        %v2706 = vsel %vm2460, %v2688, %v2690
        %2723 = vmatprep.subr.mxu0 0.0
        %2724 = vmatpush1.msra.mxu0 %v2691
        %2725 = vmatprep.subr.mxu0 0.0
        %2726 = vmatpush1.msra.mxu0 %v2692
        %2727 = vmatprep.subr.mxu0 0.0
        %2728 = vmatpush1.msra.mxu0 %v2693
        %2729 = vmatprep.subr.mxu0 0.0
        %2730 = vmatpush1.msra.mxu0 %v2694
        %2731 = vmatprep.subr.mxu0 0.0
        %2732 = vmatpush1.msra.mxu0 %v2695
        %2733 = vmatprep.subr.mxu0 0.0
        %2734 = vmatpush1.msra.mxu0 %v2696
        %2735 = vmatprep.subr.mxu0 0.0
        %2736 = vmatpush1.msra.mxu0 %v2697
        %2737 = vmatprep.subr.mxu0 0.0
        %2738 = vmatpush1.msra.mxu0 %v2698
        %2739 = vmatprep.subr.mxu0 0.0
        %2740 = vmatpush1.msra.mxu0 %v2699
        %2741 = vmatprep.subr.mxu0 0.0
        %2742 = vmatpush1.msra.mxu0 %v2700
        %2743 = vmatprep.subr.mxu0 0.0
        %2744 = vmatpush1.msra.mxu0 %v2701
        %2745 = vmatprep.subr.mxu0 0.0
        %2746 = vmatpush1.msra.mxu0 %v2702
        %2747 = vmatprep.subr.mxu0 0.0
        %2748 = vmatpush1.msra.mxu0 %v2703
        %2749 = vmatprep.subr.mxu0 0.0
        %2750 = vmatpush1.msra.mxu0 %v2704
        %2751 = vmatprep.subr.mxu0 0.0
        %2752 = vmatpush1.msra.mxu0 %v2705
        %2753 = vmatprep.subr.mxu0 0.0
        %2754 = vmatpush1.msra.mxu0 %v2706
        %2755 = vmatprep.subr.mxu0 0.0
        %2756 = vmatpush1.msra.mxu0 0.0
        %2757 = vmatprep.subr.mxu0 0.0
        %2758 = vmatpush1.msra.mxu0 0.0
        %2759 = vmatprep.subr.mxu0 0.0
        %2760 = vmatpush1.msra.mxu0 0.0
        %2761 = vmatprep.subr.mxu0 0.0
        %2762 = vmatpush1.msra.mxu0 0.0
        %2763 = vmatprep.subr.mxu0 0.0
        %2764 = vmatpush1.msra.mxu0 0.0
        %2765 = vmatprep.subr.mxu0 0.0
        %2766 = vmatpush1.msra.mxu0 0.0
        %2767 = vmatprep.subr.mxu0 0.0
        %2768 = vmatpush1.msra.mxu0 0.0
        %2769 = vmatprep.subr.mxu0 0.0
        %2770 = vmatpush1.msra.mxu0 0.0
        %2771 = vmatprep.subr.mxu0 0.0
        %2772 = vmatpush1.msra.mxu0 0.0
        %2773 = vmatprep.subr.mxu0 0.0
        %2774 = vmatpush1.msra.mxu0 0.0
        %2775 = vmatprep.subr.mxu0 0.0
        %2776 = vmatpush1.msra.mxu0 0.0
        %2777 = vmatprep.subr.mxu0 0.0
        %2778 = vmatpush1.msra.mxu0 0.0
        %2779 = vmatprep.subr.mxu0 0.0
        %2780 = vmatpush1.msra.mxu0 0.0
        %2781 = vmatprep.subr.mxu0 0.0
        %2782 = vmatpush1.msra.mxu0 0.0
        %2783 = vmatprep.subr.mxu0 0.0
        %2784 = vmatpush1.msra.mxu0 0.0
        %2785 = vmatprep.subr.mxu0 0.0
        %2786 = vmatpush1.msra.mxu0 0.0
        %2787 = vmatprep.mubr.f32.mxu0 0.0
        %2788 = vmatmul.mubr.f32.gmra.mrb[0].mxu0 1.0
        %v2789 = vpop.f32.mrb[0].mxu0
        %v2790 = vadd.f32 0.0, %v2789
        %v2791 = vpop.f32.mrb[0].mxu0
        %2792 = vdwg.mxu0
        %v2793 = vsel %vm1012, %v2560, 0.0
        %2794 = vadd.xlane.f32.xlu0 %v2793
        %v2795 = vpop.xlane.xlu0 %2794
        %v2796 = vmul.f32 %v2795, 6.1035156e-05
        %v2797 = vsel %vm1012, %v2790, 0.0
        %2798 = vadd.xlane.f32.xlu0 %v2797
        %v2799 = vpop.xlane.xlu0 %2798
        %v2800 = vmul.f32 %v2799, 6.1035156e-05
        %v2801 = vmul.f32 %v2796, %v2796
        %v2802 = vsub.f32 %v2800, %v2801
        %v2803 = vadd.f32 %v2802, 1e-05
        %v2804 = vrsqrt.pop %v2803
        %v2805 = vlaneseq
        %v2806 = vshrl.u32 %v2805, 7
        %v2807 = vsub.s32 0, %v2806
        %v2808 = vrot.slane %v2804, %v2807
        %v2809 = vmul.f32 %v372, %v2808
        %v2810 = vmul.f32 %v377, %v2808
        %v2811 = vmul.f32 %v382, %v2808
        %v2812 = vmul.f32 %v387, %v2808
        %v2813 = vmul.f32 %v392, %v2808
        %v2814 = vmul.f32 %v397, %v2808
        %v2815 = vmul.f32 %v402, %v2808
        %v2816 = vmul.f32 %v407, %v2808
        %v2817 = vmul.f32 %v412, %v2808
        %v2818 = vmul.f32 %v417, %v2808
        %v2819 = vmul.f32 %v422, %v2808
        %v2820 = vmul.f32 %v427, %v2808
        %v2821 = vmul.f32 %v432, %v2808
        %v2822 = vmul.f32 %v437, %v2808
        %v2823 = vmul.f32 %v442, %v2808
        %v2824 = vmul.f32 %v447, %v2808
        %v2825 = vlaneseq
        %v2826 = vshrl.u32 %v2825, 7
        %v2827 = vsub.s32 0, %v2826
        %v2828 = vrot.slane %v2796, %v2827
        %v2829 = vmul.f32 %v2828, %v2809
        %v2830 = vmul.f32 %v2828, %v2810
        %v2831 = vmul.f32 %v2828, %v2811
        %v2832 = vmul.f32 %v2828, %v2812
        %v2833 = vmul.f32 %v2828, %v2813
        %v2834 = vmul.f32 %v2828, %v2814
        %v2835 = vmul.f32 %v2828, %v2815
        %v2836 = vmul.f32 %v2828, %v2816
        %v2837 = vmul.f32 %v2828, %v2817
        %v2838 = vmul.f32 %v2828, %v2818
        %v2839 = vmul.f32 %v2828, %v2819
        %v2840 = vmul.f32 %v2828, %v2820
        %v2841 = vmul.f32 %v2828, %v2821
        %v2842 = vmul.f32 %v2828, %v2822
        %v2843 = vmul.f32 %v2828, %v2823
        %v2844 = vmul.f32 %v2828, %v2824
        %2861 = vrot.lane.b32.xlu0 %v2829, 1
        %v2862 = vpop.permute.xlu0 %2861
        %2863 = vrot.lane.b32.xlu0 %v2830, 1
        %v2864 = vpop.permute.xlu0 %2863
        %2865 = vrot.lane.b32.xlu0 %v2831, 1
        %v2866 = vpop.permute.xlu0 %2865
        %2867 = vrot.lane.b32.xlu0 %v2832, 1
        %v2868 = vpop.permute.xlu0 %2867
        %2869 = vrot.lane.b32.xlu0 %v2833, 1
        %v2870 = vpop.permute.xlu0 %2869
        %2871 = vrot.lane.b32.xlu0 %v2834, 1
        %v2872 = vpop.permute.xlu0 %2871
        %2873 = vrot.lane.b32.xlu0 %v2835, 1
        %v2874 = vpop.permute.xlu0 %2873
        %2875 = vrot.lane.b32.xlu0 %v2836, 1
        %v2876 = vpop.permute.xlu0 %2875
        %2877 = vrot.lane.b32.xlu0 %v2837, 1
        %v2878 = vpop.permute.xlu0 %2877
        %2879 = vrot.lane.b32.xlu0 %v2838, 1
        %v2880 = vpop.permute.xlu0 %2879
        %2881 = vrot.lane.b32.xlu0 %v2839, 1
        %v2882 = vpop.permute.xlu0 %2881
        %2883 = vrot.lane.b32.xlu0 %v2840, 1
        %v2884 = vpop.permute.xlu0 %2883
        %2885 = vrot.lane.b32.xlu0 %v2841, 1
        %v2886 = vpop.permute.xlu0 %2885
        %2887 = vrot.lane.b32.xlu0 %v2842, 1
        %v2888 = vpop.permute.xlu0 %2887
        %2889 = vrot.lane.b32.xlu0 %v2843, 1
        %v2890 = vpop.permute.xlu0 %2889
        %2891 = vrot.lane.b32.xlu0 %v2844, 1
        %v2892 = vpop.permute.xlu0 %2891
        %v2909 = vsub.f32 %v372, %v2862
        %v2910 = vsub.f32 %v377, %v2864
        %v2911 = vsub.f32 %v382, %v2866
        %v2912 = vsub.f32 %v387, %v2868
        %v2913 = vsub.f32 %v392, %v2870
        %v2914 = vsub.f32 %v397, %v2872
        %v2915 = vsub.f32 %v402, %v2874
        %v2916 = vsub.f32 %v407, %v2876
        %v2917 = vsub.f32 %v412, %v2878
        %v2918 = vsub.f32 %v417, %v2880
        %v2919 = vsub.f32 %v422, %v2882
        %v2920 = vsub.f32 %v427, %v2884
        %v2921 = vsub.f32 %v432, %v2886
        %v2922 = vsub.f32 %v437, %v2888
        %v2923 = vsub.f32 %v442, %v2890
        %v2924 = vsub.f32 %v447, %v2892
        %2926 = vset.pattern.permute.xlu0 4
        %2927 = vperm.xlu0 %2926, %v2809
        %v2928 = vpop.permute.xlu0 %2927
        %2931 = vset.pattern.permute.xlu0 4
        %2932 = vperm.xlu0 %2931, %v2810
        %v2933 = vpop.permute.xlu0 %2932
        %2936 = vset.pattern.permute.xlu0 4
        %2937 = vperm.xlu0 %2936, %v2811
        %v2938 = vpop.permute.xlu0 %2937
        %2941 = vset.pattern.permute.xlu0 4
        %2942 = vperm.xlu0 %2941, %v2812
        %v2943 = vpop.permute.xlu0 %2942
        %2946 = vset.pattern.permute.xlu0 4
        %2947 = vperm.xlu0 %2946, %v2813
        %v2948 = vpop.permute.xlu0 %2947
        %2951 = vset.pattern.permute.xlu0 4
        %2952 = vperm.xlu0 %2951, %v2814
        %v2953 = vpop.permute.xlu0 %2952
        %2956 = vset.pattern.permute.xlu0 4
        %2957 = vperm.xlu0 %2956, %v2815
        %v2958 = vpop.permute.xlu0 %2957
        %2961 = vset.pattern.permute.xlu0 4
        %2962 = vperm.xlu0 %2961, %v2816
        %v2963 = vpop.permute.xlu0 %2962
        %2966 = vset.pattern.permute.xlu0 4
        %2967 = vperm.xlu0 %2966, %v2817
        %v2968 = vpop.permute.xlu0 %2967
        %2971 = vset.pattern.permute.xlu0 4
        %2972 = vperm.xlu0 %2971, %v2818
        %v2973 = vpop.permute.xlu0 %2972
        %2976 = vset.pattern.permute.xlu0 4
        %2977 = vperm.xlu0 %2976, %v2819
        %v2978 = vpop.permute.xlu0 %2977
        %2981 = vset.pattern.permute.xlu0 4
        %2982 = vperm.xlu0 %2981, %v2820
        %v2983 = vpop.permute.xlu0 %2982
        %2986 = vset.pattern.permute.xlu0 4
        %2987 = vperm.xlu0 %2986, %v2821
        %v2988 = vpop.permute.xlu0 %2987
        %2991 = vset.pattern.permute.xlu0 4
        %2992 = vperm.xlu0 %2991, %v2822
        %v2993 = vpop.permute.xlu0 %2992
        %2996 = vset.pattern.permute.xlu0 4
        %2997 = vperm.xlu0 %2996, %v2823
        %v2998 = vpop.permute.xlu0 %2997
        %3001 = vset.pattern.permute.xlu0 4
        %3002 = vperm.xlu0 %3001, %v2824
        %v3003 = vpop.permute.xlu0 %3002
        %v3005 = vmul.f32 %v2332, %v2928
        %v3006 = vmul.f32 %v2333, %v2928
        %v3007 = vmul.f32 %v2334, %v2933
        %v3008 = vmul.f32 %v2335, %v2933
        %v3009 = vmul.f32 %v2336, %v2938
        %v3010 = vmul.f32 %v2337, %v2938
        %v3011 = vmul.f32 %v2338, %v2943
        %v3012 = vmul.f32 %v2339, %v2943
        %v3013 = vmul.f32 %v2340, %v2948
        %v3014 = vmul.f32 %v2341, %v2948
        %v3015 = vmul.f32 %v2342, %v2953
        %v3016 = vmul.f32 %v2343, %v2953
        %v3017 = vmul.f32 %v2344, %v2958
        %v3018 = vmul.f32 %v2345, %v2958
        %v3019 = vmul.f32 %v2346, %v2963
        %v3020 = vmul.f32 %v2347, %v2963
        %v3021 = vmul.f32 %v2348, %v2968
        %v3022 = vmul.f32 %v2349, %v2968
        %v3023 = vmul.f32 %v2350, %v2973
        %v3024 = vmul.f32 %v2351, %v2973
        %v3025 = vmul.f32 %v2352, %v2978
        %v3026 = vmul.f32 %v2353, %v2978
        %v3027 = vmul.f32 %v2354, %v2983
        %v3028 = vmul.f32 %v2355, %v2983
        %v3029 = vmul.f32 %v2356, %v2988
        %v3030 = vmul.f32 %v2357, %v2988
        %v3031 = vmul.f32 %v2358, %v2993
        %v3032 = vmul.f32 %v2359, %v2993
        %v3033 = vmul.f32 %v2360, %v2998
        %v3034 = vmul.f32 %v2361, %v2998
        %v3035 = vmul.f32 %v2362, %v3003
        %v3036 = vmul.f32 %v2363, %v3003
        %3038 = vset.pattern.permute.xlu0 5
        %3039 = vperm.xlu0 %3038, %v2909
        %v3040 = vpop.permute.xlu0 %3039
        %3043 = vset.pattern.permute.xlu0 5
        %3044 = vperm.xlu0 %3043, %v2910
        %v3045 = vpop.permute.xlu0 %3044
        %3048 = vset.pattern.permute.xlu0 5
        %3049 = vperm.xlu0 %3048, %v2911
        %v3050 = vpop.permute.xlu0 %3049
        %3053 = vset.pattern.permute.xlu0 5
        %3054 = vperm.xlu0 %3053, %v2912
        %v3055 = vpop.permute.xlu0 %3054
        %3058 = vset.pattern.permute.xlu0 5
        %3059 = vperm.xlu0 %3058, %v2913
        %v3060 = vpop.permute.xlu0 %3059
        %3063 = vset.pattern.permute.xlu0 5
        %3064 = vperm.xlu0 %3063, %v2914
        %v3065 = vpop.permute.xlu0 %3064
        %3068 = vset.pattern.permute.xlu0 5
        %3069 = vperm.xlu0 %3068, %v2915
        %v3070 = vpop.permute.xlu0 %3069
        %3073 = vset.pattern.permute.xlu0 5
        %3074 = vperm.xlu0 %3073, %v2916
        %v3075 = vpop.permute.xlu0 %3074
        %3078 = vset.pattern.permute.xlu0 5
        %3079 = vperm.xlu0 %3078, %v2917
        %v3080 = vpop.permute.xlu0 %3079
        %3083 = vset.pattern.permute.xlu0 5
        %3084 = vperm.xlu0 %3083, %v2918
        %v3085 = vpop.permute.xlu0 %3084
        %3088 = vset.pattern.permute.xlu0 5
        %3089 = vperm.xlu0 %3088, %v2919
        %v3090 = vpop.permute.xlu0 %3089
        %3093 = vset.pattern.permute.xlu0 5
        %3094 = vperm.xlu0 %3093, %v2920
        %v3095 = vpop.permute.xlu0 %3094
        %3098 = vset.pattern.permute.xlu0 5
        %3099 = vperm.xlu0 %3098, %v2921
        %v3100 = vpop.permute.xlu0 %3099
        %3103 = vset.pattern.permute.xlu0 5
        %3104 = vperm.xlu0 %3103, %v2922
        %v3105 = vpop.permute.xlu0 %3104
        %3108 = vset.pattern.permute.xlu0 5
        %3109 = vperm.xlu0 %3108, %v2923
        %v3110 = vpop.permute.xlu0 %3109
        %3113 = vset.pattern.permute.xlu0 5
        %3114 = vperm.xlu0 %3113, %v2924
        %v3115 = vpop.permute.xlu0 %3114
        %v3117 = vadd.f32 %v3005, %v3040
        %v3118 = vadd.f32 %v3006, %v3040
        %v3119 = vadd.f32 %v3007, %v3045
        %v3120 = vadd.f32 %v3008, %v3045
        %v3121 = vadd.f32 %v3009, %v3050
        %v3122 = vadd.f32 %v3010, %v3050
        %v3123 = vadd.f32 %v3011, %v3055
        %v3124 = vadd.f32 %v3012, %v3055
        %v3125 = vadd.f32 %v3013, %v3060
        %v3126 = vadd.f32 %v3014, %v3060
        %v3127 = vadd.f32 %v3015, %v3065
        %v3128 = vadd.f32 %v3016, %v3065
        %v3129 = vadd.f32 %v3017, %v3070
        %v3130 = vadd.f32 %v3018, %v3070
        %v3131 = vadd.f32 %v3019, %v3075
        %v3132 = vadd.f32 %v3020, %v3075
        %v3133 = vadd.f32 %v3021, %v3080
        %v3134 = vadd.f32 %v3022, %v3080
        %v3135 = vadd.f32 %v3023, %v3085
        %v3136 = vadd.f32 %v3024, %v3085
        %v3137 = vadd.f32 %v3025, %v3090
        %v3138 = vadd.f32 %v3026, %v3090
        %v3139 = vadd.f32 %v3027, %v3095
        %v3140 = vadd.f32 %v3028, %v3095
        %v3141 = vadd.f32 %v3029, %v3100
        %v3142 = vadd.f32 %v3030, %v3100
        %v3143 = vadd.f32 %v3031, %v3105
        %v3144 = vadd.f32 %v3032, %v3105
        %v3145 = vadd.f32 %v3033, %v3110
        %v3146 = vadd.f32 %v3034, %v3110
        %v3147 = vadd.f32 %v3035, %v3115
        %v3148 = vadd.f32 %v3036, %v3115
        %v3149 = vld [vmem:[%s2] sm:$0xff]
        %v3150 = vld [vmem:[%s2 + $0x8] sm:$0xff]
        %v3151 = vld [vmem:[%s2 + $0x10] sm:$0xff]
        %v3152 = vld [vmem:[%s2 + $0x18] sm:$0xff]
        %3185 = vrot.lane.b32.xlu0 %v3117, 121
        %v3186 = vpop.permute.xlu0 %3185
        %3187 = vrot.lane.b32.xlu0 %v3118, 121
        %v3188 = vpop.permute.xlu0 %3187
        %3189 = vrot.lane.b32.xlu0 %v3119, 121
        %v3190 = vpop.permute.xlu0 %3189
        %3191 = vrot.lane.b32.xlu0 %v3120, 121
        %v3192 = vpop.permute.xlu0 %3191
        %3193 = vrot.lane.b32.xlu0 %v3121, 121
        %v3194 = vpop.permute.xlu0 %3193
        %3195 = vrot.lane.b32.xlu0 %v3122, 121
        %v3196 = vpop.permute.xlu0 %3195
        %3197 = vrot.lane.b32.xlu0 %v3123, 121
        %v3198 = vpop.permute.xlu0 %3197
        %3199 = vrot.lane.b32.xlu0 %v3124, 121
        %v3200 = vpop.permute.xlu0 %3199
        %3201 = vrot.lane.b32.xlu0 %v3125, 121
        %v3202 = vpop.permute.xlu0 %3201
        %3203 = vrot.lane.b32.xlu0 %v3126, 121
        %v3204 = vpop.permute.xlu0 %3203
        %3205 = vrot.lane.b32.xlu0 %v3127, 121
        %v3206 = vpop.permute.xlu0 %3205
        %3207 = vrot.lane.b32.xlu0 %v3128, 121
        %v3208 = vpop.permute.xlu0 %3207
        %3209 = vrot.lane.b32.xlu0 %v3129, 121
        %v3210 = vpop.permute.xlu0 %3209
        %3211 = vrot.lane.b32.xlu0 %v3130, 121
        %v3212 = vpop.permute.xlu0 %3211
        %3213 = vrot.lane.b32.xlu0 %v3131, 121
        %v3214 = vpop.permute.xlu0 %3213
        %3215 = vrot.lane.b32.xlu0 %v3132, 121
        %v3216 = vpop.permute.xlu0 %3215
        %3217 = vrot.lane.b32.xlu0 %v3133, 121
        %v3218 = vpop.permute.xlu0 %3217
        %3219 = vrot.lane.b32.xlu0 %v3134, 121
        %v3220 = vpop.permute.xlu0 %3219
        %3221 = vrot.lane.b32.xlu0 %v3135, 121
        %v3222 = vpop.permute.xlu0 %3221
        %3223 = vrot.lane.b32.xlu0 %v3136, 121
        %v3224 = vpop.permute.xlu0 %3223
        %3225 = vrot.lane.b32.xlu0 %v3137, 121
        %v3226 = vpop.permute.xlu0 %3225
        %3227 = vrot.lane.b32.xlu0 %v3138, 121
        %v3228 = vpop.permute.xlu0 %3227
        %3229 = vrot.lane.b32.xlu0 %v3139, 121
        %v3230 = vpop.permute.xlu0 %3229
        %3231 = vrot.lane.b32.xlu0 %v3140, 121
        %v3232 = vpop.permute.xlu0 %3231
        %3233 = vrot.lane.b32.xlu0 %v3141, 121
        %v3234 = vpop.permute.xlu0 %3233
        %3235 = vrot.lane.b32.xlu0 %v3142, 121
        %v3236 = vpop.permute.xlu0 %3235
        %3237 = vrot.lane.b32.xlu0 %v3143, 121
        %v3238 = vpop.permute.xlu0 %3237
        %3239 = vrot.lane.b32.xlu0 %v3144, 121
        %v3240 = vpop.permute.xlu0 %3239
        %3241 = vrot.lane.b32.xlu0 %v3145, 121
        %v3242 = vpop.permute.xlu0 %3241
        %3243 = vrot.lane.b32.xlu0 %v3146, 121
        %v3244 = vpop.permute.xlu0 %3243
        %3245 = vrot.lane.b32.xlu0 %v3147, 121
        %v3246 = vpop.permute.xlu0 %3245
        %3247 = vrot.lane.b32.xlu0 %v3148, 121
        %v3248 = vpop.permute.xlu0 %3247
        %v3249 = vsel %vm2460, %v3186, %v3188
        %v3250 = vsel %vm2460, %v3190, %v3192
        %v3251 = vsel %vm2460, %v3194, %v3196
        %v3252 = vsel %vm2460, %v3198, %v3200
        %v3253 = vsel %vm2460, %v3202, %v3204
        %v3254 = vsel %vm2460, %v3206, %v3208
        %v3255 = vsel %vm2460, %v3210, %v3212
        %v3256 = vsel %vm2460, %v3214, %v3216
        %v3257 = vsel %vm2460, %v3218, %v3220
        %v3258 = vsel %vm2460, %v3222, %v3224
        %v3259 = vsel %vm2460, %v3226, %v3228
        %v3260 = vsel %vm2460, %v3230, %v3232
        %v3261 = vsel %vm2460, %v3234, %v3236
        %v3262 = vsel %vm2460, %v3238, %v3240
        %v3263 = vsel %vm2460, %v3242, %v3244
        %v3264 = vsel %vm2460, %v3246, %v3248
        %3281 = vmatprep.subr.mxu0 0.0
        %3282 = vmatpush1.msra.mxu0 %v3249
        %3283 = vmatprep.subr.mxu0 0.0
        %3284 = vmatpush1.msra.mxu0 %v3250
        %3285 = vmatprep.subr.mxu0 0.0
        %3286 = vmatpush1.msra.mxu0 %v3251
        %3287 = vmatprep.subr.mxu0 0.0
        %3288 = vmatpush1.msra.mxu0 %v3252
        %3289 = vmatprep.subr.mxu0 0.0
        %3290 = vmatpush1.msra.mxu0 %v3253
        %3291 = vmatprep.subr.mxu0 0.0
        %3292 = vmatpush1.msra.mxu0 %v3254
        %3293 = vmatprep.subr.mxu0 0.0
        %3294 = vmatpush1.msra.mxu0 %v3255
        %3295 = vmatprep.subr.mxu0 0.0
        %3296 = vmatpush1.msra.mxu0 %v3256
        %3297 = vmatprep.subr.mxu0 0.0
        %3298 = vmatpush1.msra.mxu0 %v3257
        %3299 = vmatprep.subr.mxu0 0.0
        %3300 = vmatpush1.msra.mxu0 %v3258
        %3301 = vmatprep.subr.mxu0 0.0
        %3302 = vmatpush1.msra.mxu0 %v3259
        %3303 = vmatprep.subr.mxu0 0.0
        %3304 = vmatpush1.msra.mxu0 %v3260
        %3305 = vmatprep.subr.mxu0 0.0
        %3306 = vmatpush1.msra.mxu0 %v3261
        %3307 = vmatprep.subr.mxu0 0.0
        %3308 = vmatpush1.msra.mxu0 %v3262
        %3309 = vmatprep.subr.mxu0 0.0
        %3310 = vmatpush1.msra.mxu0 %v3263
        %3311 = vmatprep.subr.mxu0 0.0
        %3312 = vmatpush1.msra.mxu0 %v3264
        %3313 = vmatprep.subr.mxu0 0.0
        %3314 = vmatpush1.msra.mxu0 0.0
        %3315 = vmatprep.subr.mxu0 0.0
        %3316 = vmatpush1.msra.mxu0 0.0
        %3317 = vmatprep.subr.mxu0 0.0
        %3318 = vmatpush1.msra.mxu0 0.0
        %3319 = vmatprep.subr.mxu0 0.0
        %3320 = vmatpush1.msra.mxu0 0.0
        %3321 = vmatprep.subr.mxu0 0.0
        %3322 = vmatpush1.msra.mxu0 0.0
        %3323 = vmatprep.subr.mxu0 0.0
        %3324 = vmatpush1.msra.mxu0 0.0
        %3325 = vmatprep.subr.mxu0 0.0
        %3326 = vmatpush1.msra.mxu0 0.0
        %3327 = vmatprep.subr.mxu0 0.0
        %3328 = vmatpush1.msra.mxu0 0.0
        %3329 = vmatprep.subr.mxu0 0.0
        %3330 = vmatpush1.msra.mxu0 0.0
        %3331 = vmatprep.subr.mxu0 0.0
        %3332 = vmatpush1.msra.mxu0 0.0
        %3333 = vmatprep.subr.mxu0 0.0
        %3334 = vmatpush1.msra.mxu0 0.0
        %3335 = vmatprep.subr.mxu0 0.0
        %3336 = vmatpush1.msra.mxu0 0.0
        %3337 = vmatprep.subr.mxu0 0.0
        %3338 = vmatpush1.msra.mxu0 0.0
        %3339 = vmatprep.subr.mxu0 0.0
        %3340 = vmatpush1.msra.mxu0 0.0
        %3341 = vmatprep.subr.mxu0 0.0
        %3342 = vmatpush1.msra.mxu0 0.0
        %3343 = vmatprep.subr.mxu0 0.0
        %3344 = vmatpush1.msra.mxu0 0.0
        %3345 = vmatprep.mubr.f32.mxu0 0.0
        %3346 = vmatmul.mubr.f32.gmra.mrb[0].mxu0 %v3149
        %v3347 = vpop.f32.mrb[0].mxu0
        %v3348 = vadd.f32 0.0, %v3347
        %v3349 = vpop.f32.mrb[0].mxu0
        %3350 = vmatprep.mubr.f32.mxu0 0.0
        %3351 = vmatmul.mubr.f32.gmra.mrb[0].mxu0 %v3150
        %v3352 = vpop.f32.mrb[0].mxu0
        %v3353 = vadd.f32 0.0, %v3352
        %v3354 = vpop.f32.mrb[0].mxu0
        %3355 = vmatprep.mubr.f32.mxu0 0.0
        %3356 = vmatmul.mubr.f32.gmra.mrb[0].mxu0 %v3151
        %v3357 = vpop.f32.mrb[0].mxu0
        %v3358 = vadd.f32 0.0, %v3357
        %v3359 = vpop.f32.mrb[0].mxu0
        %3360 = vmatprep.mubr.f32.mxu0 0.0
        %3361 = vmatmul.mubr.f32.gmra.mrb[0].mxu0 %v3152
        %v3362 = vpop.f32.mrb[0].mxu0
        %v3363 = vadd.f32 0.0, %v3362
        %v3364 = vpop.f32.mrb[0].mxu0
        %3365 = vdwg.mxu0
        %v3366 = vadd.f32 %v450, %v3348
        %v3367 = vadd.f32 %v451, %v3353
        %v3368 = vadd.f32 %v452, %v3358
        %v3369 = vadd.f32 %v453, %v3363
        %3370 = vset.pattern.permute.xlu0 9
        %3371 = vperm.xlu0 %3370, %v372
        %v3372 = vpop.permute.xlu0 %3371
        %3374 = vset.pattern.permute.xlu0 9
        %3375 = vperm.xlu0 %3374, %v377
        %v3376 = vpop.permute.xlu0 %3375
        %3378 = vset.pattern.permute.xlu0 9
        %3379 = vperm.xlu0 %3378, %v382
        %v3380 = vpop.permute.xlu0 %3379
        %3382 = vset.pattern.permute.xlu0 9
        %3383 = vperm.xlu0 %3382, %v387
        %v3384 = vpop.permute.xlu0 %3383
        %v3386 = vadd.f32 %v3366, %v3372
        %v3387 = vadd.f32 %v3367, %v3376
        %v3388 = vadd.f32 %v3368, %v3380
        %v3389 = vadd.f32 %v3369, %v3384
        %s3390 = scalar_lea.vmem %s1, 128
        %v3391 = vld [vmem:[%s3390] sm:$0xff]
        %v3392 = vld [vmem:[%s3390 + $0x8] sm:$0xff]
        %v3393 = vld [vmem:[%s3390 + $0x10] sm:$0xff]
        %v3394 = vld [vmem:[%s3390 + $0x18] sm:$0xff]
        %v3395 = vld [vmem:[%s3390 + $0x20] sm:$0xff]
        %v3396 = vld [vmem:[%s3390 + $0x28] sm:$0xff]
        %v3397 = vld [vmem:[%s3390 + $0x30] sm:$0xff]
        %v3398 = vld [vmem:[%s3390 + $0x38] sm:$0xff]
        %v3399 = vld [vmem:[%s3390 + $0x40] sm:$0xff]
        %v3400 = vld [vmem:[%s3390 + $0x48] sm:$0xff]
        %v3401 = vld [vmem:[%s3390 + $0x50] sm:$0xff]
        %v3402 = vld [vmem:[%s3390 + $0x58] sm:$0xff]
        %v3403 = vld [vmem:[%s3390 + $0x60] sm:$0xff]
        %v3404 = vld [vmem:[%s3390 + $0x68] sm:$0xff]
        %v3405 = vld [vmem:[%s3390 + $0x70] sm:$0xff]
        %v3406 = vld [vmem:[%s3390 + $0x78] sm:$0xff]
        %3407 = vset.pattern.permute.xlu0 16
        %3408 = vperm.xlu0 %3407, %v372
        %v3409 = vpop.permute.xlu0 %3408
        %3411 = vset.pattern.permute.xlu0 16
        %3412 = vperm.xlu0 %3411, %v377
        %v3413 = vpop.permute.xlu0 %3412
        %3415 = vset.pattern.permute.xlu0 16
        %3416 = vperm.xlu0 %3415, %v382
        %v3417 = vpop.permute.xlu0 %3416
        %3419 = vset.pattern.permute.xlu0 16
        %3420 = vperm.xlu0 %3419, %v387
        %v3421 = vpop.permute.xlu0 %3420
        %3423 = vset.pattern.permute.xlu0 16
        %3424 = vperm.xlu0 %3423, %v392
        %v3425 = vpop.permute.xlu0 %3424
        %3427 = vset.pattern.permute.xlu0 16
        %3428 = vperm.xlu0 %3427, %v397
        %v3429 = vpop.permute.xlu0 %3428
        %3431 = vset.pattern.permute.xlu0 16
        %3432 = vperm.xlu0 %3431, %v402
        %v3433 = vpop.permute.xlu0 %3432
        %3435 = vset.pattern.permute.xlu0 16
        %3436 = vperm.xlu0 %3435, %v407
        %v3437 = vpop.permute.xlu0 %3436
        %3439 = vset.pattern.permute.xlu0 16
        %3440 = vperm.xlu0 %3439, %v412
        %v3441 = vpop.permute.xlu0 %3440
        %3443 = vset.pattern.permute.xlu0 16
        %3444 = vperm.xlu0 %3443, %v417
        %v3445 = vpop.permute.xlu0 %3444
        %3447 = vset.pattern.permute.xlu0 16
        %3448 = vperm.xlu0 %3447, %v422
        %v3449 = vpop.permute.xlu0 %3448
        %3451 = vset.pattern.permute.xlu0 16
        %3452 = vperm.xlu0 %3451, %v427
        %v3453 = vpop.permute.xlu0 %3452
        %3455 = vset.pattern.permute.xlu0 16
        %3456 = vperm.xlu0 %3455, %v432
        %v3457 = vpop.permute.xlu0 %3456
        %3459 = vset.pattern.permute.xlu0 16
        %3460 = vperm.xlu0 %3459, %v437
        %v3461 = vpop.permute.xlu0 %3460
        %3463 = vset.pattern.permute.xlu0 16
        %3464 = vperm.xlu0 %3463, %v442
        %v3465 = vpop.permute.xlu0 %3464
        %3467 = vset.pattern.permute.xlu0 16
        %3468 = vperm.xlu0 %3467, %v447
        %v3469 = vpop.permute.xlu0 %3468
        %v3472 = vsel %vm550, %v3391, 0
        %v3475 = vsel %vm550, %v3392, 0
        %v3478 = vsel %vm550, %v3393, 0
        %v3481 = vsel %vm550, %v3394, 0
        %v3484 = vsel %vm550, %v3395, 0
        %v3487 = vsel %vm550, %v3396, 0
        %v3490 = vsel %vm550, %v3397, 0
        %v3493 = vsel %vm550, %v3398, 0
        %v3496 = vsel %vm550, %v3399, 0
        %v3499 = vsel %vm550, %v3400, 0
        %v3502 = vsel %vm550, %v3401, 0
        %v3505 = vsel %vm550, %v3402, 0
        %v3508 = vsel %vm550, %v3403, 0
        %v3511 = vsel %vm550, %v3404, 0
        %v3514 = vsel %vm550, %v3405, 0
        %v3517 = vsel %vm550, %v3406, 0
        %3519 = vmatprep.subr.mxu0 0.0
        %3520 = vmatpush1.msra.mxu0 %v3386
        %3521 = vmatprep.subr.mxu0 0.0
        %3522 = vmatpush1.msra.mxu0 %v3387
        %3523 = vmatprep.subr.mxu0 0.0
        %3524 = vmatpush1.msra.mxu0 %v3388
        %3525 = vmatprep.subr.mxu0 0.0
        %3526 = vmatpush1.msra.mxu0 %v3389
        %3527 = vmatprep.subr.mxu0 0.0
        %3528 = vmatpush1.msra.mxu0 0.0
        %3529 = vmatprep.subr.mxu0 0.0
        %3530 = vmatpush1.msra.mxu0 0.0
        %3531 = vmatprep.subr.mxu0 0.0
        %3532 = vmatpush1.msra.mxu0 0.0
        %3533 = vmatprep.subr.mxu0 0.0
        %3534 = vmatpush1.msra.mxu0 0.0
        %3535 = vmatprep.subr.mxu0 0.0
        %3536 = vmatpush1.msra.mxu0 0.0
        %3537 = vmatprep.subr.mxu0 0.0
        %3538 = vmatpush1.msra.mxu0 0.0
        %3539 = vmatprep.subr.mxu0 0.0
        %3540 = vmatpush1.msra.mxu0 0.0
        %3541 = vmatprep.subr.mxu0 0.0
        %3542 = vmatpush1.msra.mxu0 0.0
        %3543 = vmatprep.subr.mxu0 0.0
        %3544 = vmatpush1.msra.mxu0 0.0
        %3545 = vmatprep.subr.mxu0 0.0
        %3546 = vmatpush1.msra.mxu0 0.0
        %3547 = vmatprep.subr.mxu0 0.0
        %3548 = vmatpush1.msra.mxu0 0.0
        %3549 = vmatprep.subr.mxu0 0.0
        %3550 = vmatpush1.msra.mxu0 0.0
        %3551 = vmatprep.subr.mxu0 0.0
        %3552 = vmatpush1.msra.mxu0 0.0
        %3553 = vmatprep.subr.mxu0 0.0
        %3554 = vmatpush1.msra.mxu0 0.0
        %3555 = vmatprep.subr.mxu0 0.0
        %3556 = vmatpush1.msra.mxu0 0.0
        %3557 = vmatprep.subr.mxu0 0.0
        %3558 = vmatpush1.msra.mxu0 0.0
        %3559 = vmatprep.subr.mxu0 0.0
        %3560 = vmatpush1.msra.mxu0 0.0
        %3561 = vmatprep.subr.mxu0 0.0
        %3562 = vmatpush1.msra.mxu0 0.0
        %3563 = vmatprep.subr.mxu0 0.0
        %3564 = vmatpush1.msra.mxu0 0.0
        %3565 = vmatprep.subr.mxu0 0.0
        %3566 = vmatpush1.msra.mxu0 0.0
        %3567 = vmatprep.subr.mxu0 0.0
        %3568 = vmatpush1.msra.mxu0 0.0
        %3569 = vmatprep.subr.mxu0 0.0
        %3570 = vmatpush1.msra.mxu0 0.0
        %3571 = vmatprep.subr.mxu0 0.0
        %3572 = vmatpush1.msra.mxu0 0.0
        %3573 = vmatprep.subr.mxu0 0.0
        %3574 = vmatpush1.msra.mxu0 0.0
        %3575 = vmatprep.subr.mxu0 0.0
        %3576 = vmatpush1.msra.mxu0 0.0
        %3577 = vmatprep.subr.mxu0 0.0
        %3578 = vmatpush1.msra.mxu0 0.0
        %3579 = vmatprep.subr.mxu0 0.0
        %3580 = vmatpush1.msra.mxu0 0.0
        %3581 = vmatprep.subr.mxu0 0.0
        %3582 = vmatpush1.msra.mxu0 0.0
        %3583 = vmatprep.mubr.f32.mxu0 0.0
        %3584 = vmatmul.mubr.f32.gmra.mrb[0].mxu0 %v3472
        %v3585 = vpop.f32.mrb[0].mxu0
        %v3586 = vadd.f32 %v3409, %v3585
        %v3587 = vpop.f32.mrb[0].mxu0
        %3588 = vmatprep.mubr.f32.mxu0 0.0
        %3589 = vmatmul.mubr.f32.gmra.mrb[0].mxu0 %v3475
        %v3590 = vpop.f32.mrb[0].mxu0
        %v3591 = vadd.f32 %v3413, %v3590
        %v3592 = vpop.f32.mrb[0].mxu0
        %3593 = vmatprep.mubr.f32.mxu0 0.0
        %3594 = vmatmul.mubr.f32.gmra.mrb[0].mxu0 %v3478
        %v3595 = vpop.f32.mrb[0].mxu0
        %v3596 = vadd.f32 %v3417, %v3595
        %v3597 = vpop.f32.mrb[0].mxu0
        %3598 = vmatprep.mubr.f32.mxu0 0.0
        %3599 = vmatmul.mubr.f32.gmra.mrb[0].mxu0 %v3481
        %v3600 = vpop.f32.mrb[0].mxu0
        %v3601 = vadd.f32 %v3421, %v3600
        %v3602 = vpop.f32.mrb[0].mxu0
        %3603 = vmatprep.mubr.f32.mxu0 0.0
        %3604 = vmatmul.mubr.f32.gmra.mrb[0].mxu0 %v3484
        %v3605 = vpop.f32.mrb[0].mxu0
        %v3606 = vadd.f32 %v3425, %v3605
        %v3607 = vpop.f32.mrb[0].mxu0
        %3608 = vmatprep.mubr.f32.mxu0 0.0
        %3609 = vmatmul.mubr.f32.gmra.mrb[0].mxu0 %v3487
        %v3610 = vpop.f32.mrb[0].mxu0
        %v3611 = vadd.f32 %v3429, %v3610
        %v3612 = vpop.f32.mrb[0].mxu0
        %3613 = vmatprep.mubr.f32.mxu0 0.0
        %3614 = vmatmul.mubr.f32.gmra.mrb[0].mxu0 %v3490
        %v3615 = vpop.f32.mrb[0].mxu0
        %v3616 = vadd.f32 %v3433, %v3615
        %v3617 = vpop.f32.mrb[0].mxu0
        %3618 = vmatprep.mubr.f32.mxu0 0.0
        %3619 = vmatmul.mubr.f32.gmra.mrb[0].mxu0 %v3493
        %v3620 = vpop.f32.mrb[0].mxu0
        %v3621 = vadd.f32 %v3437, %v3620
        %v3622 = vpop.f32.mrb[0].mxu0
        %3623 = vmatprep.mubr.f32.mxu0 0.0
        %3624 = vmatmul.mubr.f32.gmra.mrb[0].mxu0 %v3496
        %v3625 = vpop.f32.mrb[0].mxu0
        %v3626 = vadd.f32 %v3441, %v3625
        %v3627 = vpop.f32.mrb[0].mxu0
        %3628 = vmatprep.mubr.f32.mxu0 0.0
        %3629 = vmatmul.mubr.f32.gmra.mrb[0].mxu0 %v3499
        %v3630 = vpop.f32.mrb[0].mxu0
        %v3631 = vadd.f32 %v3445, %v3630
        %v3632 = vpop.f32.mrb[0].mxu0
        %3633 = vmatprep.mubr.f32.mxu0 0.0
        %3634 = vmatmul.mubr.f32.gmra.mrb[0].mxu0 %v3502
        %v3635 = vpop.f32.mrb[0].mxu0
        %v3636 = vadd.f32 %v3449, %v3635
        %v3637 = vpop.f32.mrb[0].mxu0
        %3638 = vmatprep.mubr.f32.mxu0 0.0
        %3639 = vmatmul.mubr.f32.gmra.mrb[0].mxu0 %v3505
        %v3640 = vpop.f32.mrb[0].mxu0
        %v3641 = vadd.f32 %v3453, %v3640
        %v3642 = vpop.f32.mrb[0].mxu0
        %3643 = vmatprep.mubr.f32.mxu0 0.0
        %3644 = vmatmul.mubr.f32.gmra.mrb[0].mxu0 %v3508
        %v3645 = vpop.f32.mrb[0].mxu0
        %v3646 = vadd.f32 %v3457, %v3645
        %v3647 = vpop.f32.mrb[0].mxu0
        %3648 = vmatprep.mubr.f32.mxu0 0.0
        %3649 = vmatmul.mubr.f32.gmra.mrb[0].mxu0 %v3511
        %v3650 = vpop.f32.mrb[0].mxu0
        %v3651 = vadd.f32 %v3461, %v3650
        %v3652 = vpop.f32.mrb[0].mxu0
        %3653 = vmatprep.mubr.f32.mxu0 0.0
        %3654 = vmatmul.mubr.f32.gmra.mrb[0].mxu0 %v3514
        %v3655 = vpop.f32.mrb[0].mxu0
        %v3656 = vadd.f32 %v3465, %v3655
        %v3657 = vpop.f32.mrb[0].mxu0
        %3658 = vmatprep.mubr.f32.mxu0 0.0
        %3659 = vmatmul.mubr.f32.gmra.mrb[0].mxu0 %v3517
        %v3660 = vpop.f32.mrb[0].mxu0
        %v3661 = vadd.f32 %v3469, %v3660
        %v3662 = vpop.f32.mrb[0].mxu0
        %3663 = vdwg.mxu0
        %vm3664 = vcmp.ge.f32.partialorder %v3586, 0.0
        %vm3665 = vcmp.ge.f32.partialorder %v3591, 0.0
        %vm3666 = vcmp.ge.f32.partialorder %v3596, 0.0
        %vm3667 = vcmp.ge.f32.partialorder %v3601, 0.0
        %vm3668 = vcmp.ge.f32.partialorder %v3606, 0.0
        %vm3669 = vcmp.ge.f32.partialorder %v3611, 0.0
        %vm3670 = vcmp.ge.f32.partialorder %v3616, 0.0
        %vm3671 = vcmp.ge.f32.partialorder %v3621, 0.0
        %vm3672 = vcmp.ge.f32.partialorder %v3626, 0.0
        %vm3673 = vcmp.ge.f32.partialorder %v3631, 0.0
        %vm3674 = vcmp.ge.f32.partialorder %v3636, 0.0
        %vm3675 = vcmp.ge.f32.partialorder %v3641, 0.0
        %vm3676 = vcmp.ge.f32.partialorder %v3646, 0.0
        %vm3677 = vcmp.ge.f32.partialorder %v3651, 0.0
        %vm3678 = vcmp.ge.f32.partialorder %v3656, 0.0
        %vm3679 = vcmp.ge.f32.partialorder %v3661, 0.0
        %3680 = vset.pattern.permute.xlu0 26
        %3681 = vperm.xlu0 %3680, %v372
        %v3682 = vpop.permute.xlu0 %3681
        %3684 = vset.pattern.permute.xlu0 26
        %3685 = vperm.xlu0 %3684, %v377
        %v3686 = vpop.permute.xlu0 %3685
        %3688 = vset.pattern.permute.xlu0 26
        %3689 = vperm.xlu0 %3688, %v382
        %v3690 = vpop.permute.xlu0 %3689
        %3692 = vset.pattern.permute.xlu0 26
        %3693 = vperm.xlu0 %3692, %v387
        %v3694 = vpop.permute.xlu0 %3693
        %3696 = vset.pattern.permute.xlu0 26
        %3697 = vperm.xlu0 %3696, %v392
        %v3698 = vpop.permute.xlu0 %3697
        %3700 = vset.pattern.permute.xlu0 26
        %3701 = vperm.xlu0 %3700, %v397
        %v3702 = vpop.permute.xlu0 %3701
        %3704 = vset.pattern.permute.xlu0 26
        %3705 = vperm.xlu0 %3704, %v402
        %v3706 = vpop.permute.xlu0 %3705
        %3708 = vset.pattern.permute.xlu0 26
        %3709 = vperm.xlu0 %3708, %v407
        %v3710 = vpop.permute.xlu0 %3709
        %3712 = vset.pattern.permute.xlu0 26
        %3713 = vperm.xlu0 %3712, %v412
        %v3714 = vpop.permute.xlu0 %3713
        %3716 = vset.pattern.permute.xlu0 26
        %3717 = vperm.xlu0 %3716, %v417
        %v3718 = vpop.permute.xlu0 %3717
        %3720 = vset.pattern.permute.xlu0 26
        %3721 = vperm.xlu0 %3720, %v422
        %v3722 = vpop.permute.xlu0 %3721
        %3724 = vset.pattern.permute.xlu0 26
        %3725 = vperm.xlu0 %3724, %v427
        %v3726 = vpop.permute.xlu0 %3725
        %3728 = vset.pattern.permute.xlu0 26
        %3729 = vperm.xlu0 %3728, %v432
        %v3730 = vpop.permute.xlu0 %3729
        %3732 = vset.pattern.permute.xlu0 26
        %3733 = vperm.xlu0 %3732, %v437
        %v3734 = vpop.permute.xlu0 %3733
        %3736 = vset.pattern.permute.xlu0 26
        %3737 = vperm.xlu0 %3736, %v442
        %v3738 = vpop.permute.xlu0 %3737
        %3740 = vset.pattern.permute.xlu0 26
        %3741 = vperm.xlu0 %3740, %v447
        %v3742 = vpop.permute.xlu0 %3741
        %v3744 = vmul.f32 %v3682, %v3586
        %v3745 = vmul.f32 %v3686, %v3591
        %v3746 = vmul.f32 %v3690, %v3596
        %v3747 = vmul.f32 %v3694, %v3601
        %v3748 = vmul.f32 %v3698, %v3606
        %v3749 = vmul.f32 %v3702, %v3611
        %v3750 = vmul.f32 %v3706, %v3616
        %v3751 = vmul.f32 %v3710, %v3621
        %v3752 = vmul.f32 %v3714, %v3626
        %v3753 = vmul.f32 %v3718, %v3631
        %v3754 = vmul.f32 %v3722, %v3636
        %v3755 = vmul.f32 %v3726, %v3641
        %v3756 = vmul.f32 %v3730, %v3646
        %v3757 = vmul.f32 %v3734, %v3651
        %v3758 = vmul.f32 %v3738, %v3656
        %v3759 = vmul.f32 %v3742, %v3661
        %v3760 = vsel %vm3664, %v3586, %v3744
        %v3761 = vsel %vm3665, %v3591, %v3745
        %v3762 = vsel %vm3666, %v3596, %v3746
        %v3763 = vsel %vm3667, %v3601, %v3747
        %v3764 = vsel %vm3668, %v3606, %v3748
        %v3765 = vsel %vm3669, %v3611, %v3749
        %v3766 = vsel %vm3670, %v3616, %v3750
        %v3767 = vsel %vm3671, %v3621, %v3751
        %v3768 = vsel %vm3672, %v3626, %v3752
        %v3769 = vsel %vm3673, %v3631, %v3753
        %v3770 = vsel %vm3674, %v3636, %v3754
        %v3771 = vsel %vm3675, %v3641, %v3755
        %v3772 = vsel %vm3676, %v3646, %v3756
        %v3773 = vsel %vm3677, %v3651, %v3757
        %v3774 = vsel %vm3678, %v3656, %v3758
        %v3775 = vsel %vm3679, %v3661, %v3759
        %3776 = vmatprep.subr.mxu0 0.0
        %3777 = vmatpush1.msra.mxu0 %v3760
        %3778 = vmatprep.subr.mxu0 0.0
        %3779 = vmatpush1.msra.mxu0 %v3761
        %3780 = vmatprep.subr.mxu0 0.0
        %3781 = vmatpush1.msra.mxu0 %v3762
        %3782 = vmatprep.subr.mxu0 0.0
        %3783 = vmatpush1.msra.mxu0 %v3763
        %3784 = vmatprep.subr.mxu0 0.0
        %3785 = vmatpush1.msra.mxu0 %v3764
        %3786 = vmatprep.subr.mxu0 0.0
        %3787 = vmatpush1.msra.mxu0 %v3765
        %3788 = vmatprep.subr.mxu0 0.0
        %3789 = vmatpush1.msra.mxu0 %v3766
        %3790 = vmatprep.subr.mxu0 0.0
        %3791 = vmatpush1.msra.mxu0 %v3767
        %3792 = vmatprep.subr.mxu0 0.0
        %3793 = vmatpush1.msra.mxu0 %v3768
        %3794 = vmatprep.subr.mxu0 0.0
        %3795 = vmatpush1.msra.mxu0 %v3769
        %3796 = vmatprep.subr.mxu0 0.0
        %3797 = vmatpush1.msra.mxu0 %v3770
        %3798 = vmatprep.subr.mxu0 0.0
        %3799 = vmatpush1.msra.mxu0 %v3771
        %3800 = vmatprep.subr.mxu0 0.0
        %3801 = vmatpush1.msra.mxu0 %v3772
        %3802 = vmatprep.subr.mxu0 0.0
        %3803 = vmatpush1.msra.mxu0 %v3773
        %3804 = vmatprep.subr.mxu0 0.0
        %3805 = vmatpush1.msra.mxu0 %v3774
        %3806 = vmatprep.subr.mxu0 0.0
        %3807 = vmatpush1.msra.mxu0 %v3775
        %3808 = vmatprep.subr.mxu0 0.0
        %3809 = vmatpush1.msra.mxu0 0.0
        %3810 = vmatprep.subr.mxu0 0.0
        %3811 = vmatpush1.msra.mxu0 0.0
        %3812 = vmatprep.subr.mxu0 0.0
        %3813 = vmatpush1.msra.mxu0 0.0
        %3814 = vmatprep.subr.mxu0 0.0
        %3815 = vmatpush1.msra.mxu0 0.0
        %3816 = vmatprep.subr.mxu0 0.0
        %3817 = vmatpush1.msra.mxu0 0.0
        %3818 = vmatprep.subr.mxu0 0.0
        %3819 = vmatpush1.msra.mxu0 0.0
        %3820 = vmatprep.subr.mxu0 0.0
        %3821 = vmatpush1.msra.mxu0 0.0
        %3822 = vmatprep.subr.mxu0 0.0
        %3823 = vmatpush1.msra.mxu0 0.0
        %3824 = vmatprep.subr.mxu0 0.0
        %3825 = vmatpush1.msra.mxu0 0.0
        %3826 = vmatprep.subr.mxu0 0.0
        %3827 = vmatpush1.msra.mxu0 0.0
        %3828 = vmatprep.subr.mxu0 0.0
        %3829 = vmatpush1.msra.mxu0 0.0
        %3830 = vmatprep.subr.mxu0 0.0
        %3831 = vmatpush1.msra.mxu0 0.0
        %3832 = vmatprep.subr.mxu0 0.0
        %3833 = vmatpush1.msra.mxu0 0.0
        %3834 = vmatprep.subr.mxu0 0.0
        %3835 = vmatpush1.msra.mxu0 0.0
        %3836 = vmatprep.subr.mxu0 0.0
        %3837 = vmatpush1.msra.mxu0 0.0
        %3838 = vmatprep.subr.mxu0 0.0
        %3839 = vmatpush1.msra.mxu0 0.0
        %3840 = vmatprep.mubr.f32.mxu0 0.0
        %3841 = vmatmul.mubr.f32.gmra.mrb[0].mxu0 1.0
        %v3842 = vpop.f32.mrb[0].mxu0
        %v3843 = vadd.f32 0.0, %v3842
        %v3844 = vpop.f32.mrb[0].mxu0
        %3845 = vdwg.mxu0
        %v3846 = vmul.f32 %v3760, %v3760
        %v3847 = vmul.f32 %v3761, %v3761
        %v3848 = vmul.f32 %v3762, %v3762
        %v3849 = vmul.f32 %v3763, %v3763
        %v3850 = vmul.f32 %v3764, %v3764
        %v3851 = vmul.f32 %v3765, %v3765
        %v3852 = vmul.f32 %v3766, %v3766
        %v3853 = vmul.f32 %v3767, %v3767
        %v3854 = vmul.f32 %v3768, %v3768
        %v3855 = vmul.f32 %v3769, %v3769
        %v3856 = vmul.f32 %v3770, %v3770
        %v3857 = vmul.f32 %v3771, %v3771
        %v3858 = vmul.f32 %v3772, %v3772
        %v3859 = vmul.f32 %v3773, %v3773
        %v3860 = vmul.f32 %v3774, %v3774
        %v3861 = vmul.f32 %v3775, %v3775
        %3862 = vmatprep.subr.mxu0 0.0
        %3863 = vmatpush1.msra.mxu0 %v3846
        %3864 = vmatprep.subr.mxu0 0.0
        %3865 = vmatpush1.msra.mxu0 %v3847
        %3866 = vmatprep.subr.mxu0 0.0
        %3867 = vmatpush1.msra.mxu0 %v3848
        %3868 = vmatprep.subr.mxu0 0.0
        %3869 = vmatpush1.msra.mxu0 %v3849
        %3870 = vmatprep.subr.mxu0 0.0
        %3871 = vmatpush1.msra.mxu0 %v3850
        %3872 = vmatprep.subr.mxu0 0.0
        %3873 = vmatpush1.msra.mxu0 %v3851
        %3874 = vmatprep.subr.mxu0 0.0
        %3875 = vmatpush1.msra.mxu0 %v3852
        %3876 = vmatprep.subr.mxu0 0.0
        %3877 = vmatpush1.msra.mxu0 %v3853
        %3878 = vmatprep.subr.mxu0 0.0
        %3879 = vmatpush1.msra.mxu0 %v3854
        %3880 = vmatprep.subr.mxu0 0.0
        %3881 = vmatpush1.msra.mxu0 %v3855
        %3882 = vmatprep.subr.mxu0 0.0
        %3883 = vmatpush1.msra.mxu0 %v3856
        %3884 = vmatprep.subr.mxu0 0.0
        %3885 = vmatpush1.msra.mxu0 %v3857
        %3886 = vmatprep.subr.mxu0 0.0
        %3887 = vmatpush1.msra.mxu0 %v3858
        %3888 = vmatprep.subr.mxu0 0.0
        %3889 = vmatpush1.msra.mxu0 %v3859
        %3890 = vmatprep.subr.mxu0 0.0
        %3891 = vmatpush1.msra.mxu0 %v3860
        %3892 = vmatprep.subr.mxu0 0.0
        %3893 = vmatpush1.msra.mxu0 %v3861
        %3894 = vmatprep.subr.mxu0 0.0
        %3895 = vmatpush1.msra.mxu0 0.0
        %3896 = vmatprep.subr.mxu0 0.0
        %3897 = vmatpush1.msra.mxu0 0.0
        %3898 = vmatprep.subr.mxu0 0.0
        %3899 = vmatpush1.msra.mxu0 0.0
        %3900 = vmatprep.subr.mxu0 0.0
        %3901 = vmatpush1.msra.mxu0 0.0
        %3902 = vmatprep.subr.mxu0 0.0
        %3903 = vmatpush1.msra.mxu0 0.0
        %3904 = vmatprep.subr.mxu0 0.0
        %3905 = vmatpush1.msra.mxu0 0.0
        %3906 = vmatprep.subr.mxu0 0.0
        %3907 = vmatpush1.msra.mxu0 0.0
        %3908 = vmatprep.subr.mxu0 0.0
        %3909 = vmatpush1.msra.mxu0 0.0
        %3910 = vmatprep.subr.mxu0 0.0
        %3911 = vmatpush1.msra.mxu0 0.0
        %3912 = vmatprep.subr.mxu0 0.0
        %3913 = vmatpush1.msra.mxu0 0.0
        %3914 = vmatprep.subr.mxu0 0.0
        %3915 = vmatpush1.msra.mxu0 0.0
        %3916 = vmatprep.subr.mxu0 0.0
        %3917 = vmatpush1.msra.mxu0 0.0
        %3918 = vmatprep.subr.mxu0 0.0
        %3919 = vmatpush1.msra.mxu0 0.0
        %3920 = vmatprep.subr.mxu0 0.0
        %3921 = vmatpush1.msra.mxu0 0.0
        %3922 = vmatprep.subr.mxu0 0.0
        %3923 = vmatpush1.msra.mxu0 0.0
        %3924 = vmatprep.subr.mxu0 0.0
        %3925 = vmatpush1.msra.mxu0 0.0
        %3926 = vmatprep.mubr.f32.mxu0 0.0
        %3927 = vmatmul.mubr.f32.gmra.mrb[0].mxu0 1.0
        %v3928 = vpop.f32.mrb[0].mxu0
        %v3929 = vadd.f32 0.0, %v3928
        %v3930 = vpop.f32.mrb[0].mxu0
        %3931 = vdwg.mxu0
        %v3932 = vsel %vm1012, %v3843, 0.0
        %3933 = vadd.xlane.f32.xlu0 %v3932
        %v3934 = vpop.xlane.xlu0 %3933
        %v3935 = vmul.f32 %v3934, 6.1035156e-05
        %v3936 = vsel %vm1012, %v3929, 0.0
        %3937 = vadd.xlane.f32.xlu0 %v3936
        %v3938 = vpop.xlane.xlu0 %3937
        %v3939 = vmul.f32 %v3938, 6.1035156e-05
        %v3940 = vmul.f32 %v3935, %v3935
        %v3941 = vsub.f32 %v3939, %v3940
        %v3942 = vadd.f32 %v3941, 1e-05
        %v3943 = vrsqrt.pop %v3942
        %v3944 = vlaneseq
        %v3945 = vshrl.u32 %v3944, 7
        %v3946 = vsub.s32 0, %v3945
        %v3947 = vrot.slane %v3943, %v3946
        %v3948 = vmul.f32 %v372, %v3947
        %v3949 = vmul.f32 %v377, %v3947
        %v3950 = vmul.f32 %v382, %v3947
        %v3951 = vmul.f32 %v387, %v3947
        %v3952 = vmul.f32 %v392, %v3947
        %v3953 = vmul.f32 %v397, %v3947
        %v3954 = vmul.f32 %v402, %v3947
        %v3955 = vmul.f32 %v407, %v3947
        %v3956 = vmul.f32 %v412, %v3947
        %v3957 = vmul.f32 %v417, %v3947
        %v3958 = vmul.f32 %v422, %v3947
        %v3959 = vmul.f32 %v427, %v3947
        %v3960 = vmul.f32 %v432, %v3947
        %v3961 = vmul.f32 %v437, %v3947
        %v3962 = vmul.f32 %v442, %v3947
        %v3963 = vmul.f32 %v447, %v3947
        %v3964 = vlaneseq
        %v3965 = vshrl.u32 %v3964, 7
        %v3966 = vsub.s32 0, %v3965
        %v3967 = vrot.slane %v3935, %v3966
        %v3968 = vmul.f32 %v3967, %v3948
        %v3969 = vmul.f32 %v3967, %v3949
        %v3970 = vmul.f32 %v3967, %v3950
        %v3971 = vmul.f32 %v3967, %v3951
        %v3972 = vmul.f32 %v3967, %v3952
        %v3973 = vmul.f32 %v3967, %v3953
        %v3974 = vmul.f32 %v3967, %v3954
        %v3975 = vmul.f32 %v3967, %v3955
        %v3976 = vmul.f32 %v3967, %v3956
        %v3977 = vmul.f32 %v3967, %v3957
        %v3978 = vmul.f32 %v3967, %v3958
        %v3979 = vmul.f32 %v3967, %v3959
        %v3980 = vmul.f32 %v3967, %v3960
        %v3981 = vmul.f32 %v3967, %v3961
        %v3982 = vmul.f32 %v3967, %v3962
        %v3983 = vmul.f32 %v3967, %v3963
        %4000 = vrot.lane.b32.xlu0 %v3968, 1
        %v4001 = vpop.permute.xlu0 %4000
        %4002 = vrot.lane.b32.xlu0 %v3969, 1
        %v4003 = vpop.permute.xlu0 %4002
        %4004 = vrot.lane.b32.xlu0 %v3970, 1
        %v4005 = vpop.permute.xlu0 %4004
        %4006 = vrot.lane.b32.xlu0 %v3971, 1
        %v4007 = vpop.permute.xlu0 %4006
        %4008 = vrot.lane.b32.xlu0 %v3972, 1
        %v4009 = vpop.permute.xlu0 %4008
        %4010 = vrot.lane.b32.xlu0 %v3973, 1
        %v4011 = vpop.permute.xlu0 %4010
        %4012 = vrot.lane.b32.xlu0 %v3974, 1
        %v4013 = vpop.permute.xlu0 %4012
        %4014 = vrot.lane.b32.xlu0 %v3975, 1
        %v4015 = vpop.permute.xlu0 %4014
        %4016 = vrot.lane.b32.xlu0 %v3976, 1
        %v4017 = vpop.permute.xlu0 %4016
        %4018 = vrot.lane.b32.xlu0 %v3977, 1
        %v4019 = vpop.permute.xlu0 %4018
        %4020 = vrot.lane.b32.xlu0 %v3978, 1
        %v4021 = vpop.permute.xlu0 %4020
        %4022 = vrot.lane.b32.xlu0 %v3979, 1
        %v4023 = vpop.permute.xlu0 %4022
        %4024 = vrot.lane.b32.xlu0 %v3980, 1
        %v4025 = vpop.permute.xlu0 %4024
        %4026 = vrot.lane.b32.xlu0 %v3981, 1
        %v4027 = vpop.permute.xlu0 %4026
        %4028 = vrot.lane.b32.xlu0 %v3982, 1
        %v4029 = vpop.permute.xlu0 %4028
        %4030 = vrot.lane.b32.xlu0 %v3983, 1
        %v4031 = vpop.permute.xlu0 %4030
        %v4048 = vsub.f32 %v372, %v4001
        %v4049 = vsub.f32 %v377, %v4003
        %v4050 = vsub.f32 %v382, %v4005
        %v4051 = vsub.f32 %v387, %v4007
        %v4052 = vsub.f32 %v392, %v4009
        %v4053 = vsub.f32 %v397, %v4011
        %v4054 = vsub.f32 %v402, %v4013
        %v4055 = vsub.f32 %v407, %v4015
        %v4056 = vsub.f32 %v412, %v4017
        %v4057 = vsub.f32 %v417, %v4019
        %v4058 = vsub.f32 %v422, %v4021
        %v4059 = vsub.f32 %v427, %v4023
        %v4060 = vsub.f32 %v432, %v4025
        %v4061 = vsub.f32 %v437, %v4027
        %v4062 = vsub.f32 %v442, %v4029
        %v4063 = vsub.f32 %v447, %v4031
        %4065 = vset.pattern.permute.xlu0 17
        %4066 = vperm.xlu0 %4065, %v3948
        %v4067 = vpop.permute.xlu0 %4066
        %4070 = vset.pattern.permute.xlu0 17
        %4071 = vperm.xlu0 %4070, %v3949
        %v4072 = vpop.permute.xlu0 %4071
        %4075 = vset.pattern.permute.xlu0 17
        %4076 = vperm.xlu0 %4075, %v3950
        %v4077 = vpop.permute.xlu0 %4076
        %4080 = vset.pattern.permute.xlu0 17
        %4081 = vperm.xlu0 %4080, %v3951
        %v4082 = vpop.permute.xlu0 %4081
        %4085 = vset.pattern.permute.xlu0 17
        %4086 = vperm.xlu0 %4085, %v3952
        %v4087 = vpop.permute.xlu0 %4086
        %4090 = vset.pattern.permute.xlu0 17
        %4091 = vperm.xlu0 %4090, %v3953
        %v4092 = vpop.permute.xlu0 %4091
        %4095 = vset.pattern.permute.xlu0 17
        %4096 = vperm.xlu0 %4095, %v3954
        %v4097 = vpop.permute.xlu0 %4096
        %4100 = vset.pattern.permute.xlu0 17
        %4101 = vperm.xlu0 %4100, %v3955
        %v4102 = vpop.permute.xlu0 %4101
        %4105 = vset.pattern.permute.xlu0 17
        %4106 = vperm.xlu0 %4105, %v3956
        %v4107 = vpop.permute.xlu0 %4106
        %4110 = vset.pattern.permute.xlu0 17
        %4111 = vperm.xlu0 %4110, %v3957
        %v4112 = vpop.permute.xlu0 %4111
        %4115 = vset.pattern.permute.xlu0 17
        %4116 = vperm.xlu0 %4115, %v3958
        %v4117 = vpop.permute.xlu0 %4116
        %4120 = vset.pattern.permute.xlu0 17
        %4121 = vperm.xlu0 %4120, %v3959
        %v4122 = vpop.permute.xlu0 %4121
        %4125 = vset.pattern.permute.xlu0 17
        %4126 = vperm.xlu0 %4125, %v3960
        %v4127 = vpop.permute.xlu0 %4126
        %4130 = vset.pattern.permute.xlu0 17
        %4131 = vperm.xlu0 %4130, %v3961
        %v4132 = vpop.permute.xlu0 %4131
        %4135 = vset.pattern.permute.xlu0 17
        %4136 = vperm.xlu0 %4135, %v3962
        %v4137 = vpop.permute.xlu0 %4136
        %4140 = vset.pattern.permute.xlu0 17
        %4141 = vperm.xlu0 %4140, %v3963
        %v4142 = vpop.permute.xlu0 %4141
        %v4144 = vmul.f32 %v3760, %v4067
        %v4145 = vmul.f32 %v3761, %v4072
        %v4146 = vmul.f32 %v3762, %v4077
        %v4147 = vmul.f32 %v3763, %v4082
        %v4148 = vmul.f32 %v3764, %v4087
        %v4149 = vmul.f32 %v3765, %v4092
        %v4150 = vmul.f32 %v3766, %v4097
        %v4151 = vmul.f32 %v3767, %v4102
        %v4152 = vmul.f32 %v3768, %v4107
        %v4153 = vmul.f32 %v3769, %v4112
        %v4154 = vmul.f32 %v3770, %v4117
        %v4155 = vmul.f32 %v3771, %v4122
        %v4156 = vmul.f32 %v3772, %v4127
        %v4157 = vmul.f32 %v3773, %v4132
        %v4158 = vmul.f32 %v3774, %v4137
        %v4159 = vmul.f32 %v3775, %v4142
        %4161 = vset.pattern.permute.xlu0 18
        %4162 = vperm.xlu0 %4161, %v4048
        %v4163 = vpop.permute.xlu0 %4162
        %4166 = vset.pattern.permute.xlu0 18
        %4167 = vperm.xlu0 %4166, %v4049
        %v4168 = vpop.permute.xlu0 %4167
        %4171 = vset.pattern.permute.xlu0 18
        %4172 = vperm.xlu0 %4171, %v4050
        %v4173 = vpop.permute.xlu0 %4172
        %4176 = vset.pattern.permute.xlu0 18
        %4177 = vperm.xlu0 %4176, %v4051
        %v4178 = vpop.permute.xlu0 %4177
        %4181 = vset.pattern.permute.xlu0 18
        %4182 = vperm.xlu0 %4181, %v4052
        %v4183 = vpop.permute.xlu0 %4182
        %4186 = vset.pattern.permute.xlu0 18
        %4187 = vperm.xlu0 %4186, %v4053
        %v4188 = vpop.permute.xlu0 %4187
        %4191 = vset.pattern.permute.xlu0 18
        %4192 = vperm.xlu0 %4191, %v4054
        %v4193 = vpop.permute.xlu0 %4192
        %4196 = vset.pattern.permute.xlu0 18
        %4197 = vperm.xlu0 %4196, %v4055
        %v4198 = vpop.permute.xlu0 %4197
        %4201 = vset.pattern.permute.xlu0 18
        %4202 = vperm.xlu0 %4201, %v4056
        %v4203 = vpop.permute.xlu0 %4202
        %4206 = vset.pattern.permute.xlu0 18
        %4207 = vperm.xlu0 %4206, %v4057
        %v4208 = vpop.permute.xlu0 %4207
        %4211 = vset.pattern.permute.xlu0 18
        %4212 = vperm.xlu0 %4211, %v4058
        %v4213 = vpop.permute.xlu0 %4212
        %4216 = vset.pattern.permute.xlu0 18
        %4217 = vperm.xlu0 %4216, %v4059
        %v4218 = vpop.permute.xlu0 %4217
        %4221 = vset.pattern.permute.xlu0 18
        %4222 = vperm.xlu0 %4221, %v4060
        %v4223 = vpop.permute.xlu0 %4222
        %4226 = vset.pattern.permute.xlu0 18
        %4227 = vperm.xlu0 %4226, %v4061
        %v4228 = vpop.permute.xlu0 %4227
        %4231 = vset.pattern.permute.xlu0 18
        %4232 = vperm.xlu0 %4231, %v4062
        %v4233 = vpop.permute.xlu0 %4232
        %4236 = vset.pattern.permute.xlu0 18
        %4237 = vperm.xlu0 %4236, %v4063
        %v4238 = vpop.permute.xlu0 %4237
        %v4240 = vadd.f32 %v4144, %v4163
        %v4241 = vadd.f32 %v4145, %v4168
        %v4242 = vadd.f32 %v4146, %v4173
        %v4243 = vadd.f32 %v4147, %v4178
        %v4244 = vadd.f32 %v4148, %v4183
        %v4245 = vadd.f32 %v4149, %v4188
        %v4246 = vadd.f32 %v4150, %v4193
        %v4247 = vadd.f32 %v4151, %v4198
        %v4248 = vadd.f32 %v4152, %v4203
        %v4249 = vadd.f32 %v4153, %v4208
        %v4250 = vadd.f32 %v4154, %v4213
        %v4251 = vadd.f32 %v4155, %v4218
        %v4252 = vadd.f32 %v4156, %v4223
        %v4253 = vadd.f32 %v4157, %v4228
        %v4254 = vadd.f32 %v4158, %v4233
        %v4255 = vadd.f32 %v4159, %v4238
        %4272 = vrot.lane.b32.xlu0 %v4240, 8
        %v4273 = vpop.permute.xlu0 %4272
        %4274 = vrot.lane.b32.xlu0 %v4241, 8
        %v4275 = vpop.permute.xlu0 %4274
        %4276 = vrot.lane.b32.xlu0 %v4242, 8
        %v4277 = vpop.permute.xlu0 %4276
        %4278 = vrot.lane.b32.xlu0 %v4243, 8
        %v4279 = vpop.permute.xlu0 %4278
        %4280 = vrot.lane.b32.xlu0 %v4244, 8
        %v4281 = vpop.permute.xlu0 %4280
        %4282 = vrot.lane.b32.xlu0 %v4245, 8
        %v4283 = vpop.permute.xlu0 %4282
        %4284 = vrot.lane.b32.xlu0 %v4246, 8
        %v4285 = vpop.permute.xlu0 %4284
        %4286 = vrot.lane.b32.xlu0 %v4247, 8
        %v4287 = vpop.permute.xlu0 %4286
        %4288 = vrot.lane.b32.xlu0 %v4248, 8
        %v4289 = vpop.permute.xlu0 %4288
        %4290 = vrot.lane.b32.xlu0 %v4249, 8
        %v4291 = vpop.permute.xlu0 %4290
        %4292 = vrot.lane.b32.xlu0 %v4250, 8
        %v4293 = vpop.permute.xlu0 %4292
        %4294 = vrot.lane.b32.xlu0 %v4251, 8
        %v4295 = vpop.permute.xlu0 %4294
        %4296 = vrot.lane.b32.xlu0 %v4252, 8
        %v4297 = vpop.permute.xlu0 %4296
        %4298 = vrot.lane.b32.xlu0 %v4253, 8
        %v4299 = vpop.permute.xlu0 %4298
        %4300 = vrot.lane.b32.xlu0 %v4254, 8
        %v4301 = vpop.permute.xlu0 %4300
        %4302 = vrot.lane.b32.xlu0 %v4255, 8
        %v4303 = vpop.permute.xlu0 %4302
        %4320 = vst.msk [vmem:[#allocation2] sm:$0xff] %vm1401, %v4273
        %4321 = vst.msk [vmem:[#allocation2 + $0x8] sm:$0xff] %vm196, %v4273
        %4322 = vst.msk [vmem:[#allocation2 + $0x10] sm:$0xff] %vm1401, %v4275
        %4323 = vst.msk [vmem:[#allocation2 + $0x18] sm:$0xff] %vm196, %v4275
        %4324 = vst.msk [vmem:[#allocation2 + $0x20] sm:$0xff] %vm1401, %v4277
        %4325 = vst.msk [vmem:[#allocation2 + $0x28] sm:$0xff] %vm196, %v4277
        %4326 = vst.msk [vmem:[#allocation2 + $0x30] sm:$0xff] %vm1401, %v4279
        %4327 = vst.msk [vmem:[#allocation2 + $0x38] sm:$0xff] %vm196, %v4279
        %4328 = vst.msk [vmem:[#allocation2 + $0x40] sm:$0xff] %vm1401, %v4281
        %4329 = vst.msk [vmem:[#allocation2 + $0x48] sm:$0xff] %vm196, %v4281
        %4330 = vst.msk [vmem:[#allocation2 + $0x50] sm:$0xff] %vm1401, %v4283
        %4331 = vst.msk [vmem:[#allocation2 + $0x58] sm:$0xff] %vm196, %v4283
        %4332 = vst.msk [vmem:[#allocation2 + $0x60] sm:$0xff] %vm1401, %v4285
        %4333 = vst.msk [vmem:[#allocation2 + $0x68] sm:$0xff] %vm196, %v4285
        %4334 = vst.msk [vmem:[#allocation2 + $0x70] sm:$0xff] %vm1401, %v4287
        %4335 = vst.msk [vmem:[#allocation2 + $0x78] sm:$0xff] %vm196, %v4287
        %4336 = vst.msk [vmem:[#allocation2 + $0x80] sm:$0xff] %vm1401, %v4289
        %4337 = vst.msk [vmem:[#allocation2 + $0x88] sm:$0xff] %vm196, %v4289
        %4338 = vst.msk [vmem:[#allocation2 + $0x90] sm:$0xff] %vm1401, %v4291
        %4339 = vst.msk [vmem:[#allocation2 + $0x98] sm:$0xff] %vm196, %v4291
        %4340 = vst.msk [vmem:[#allocation2 + $0xa0] sm:$0xff] %vm1401, %v4293
        %4341 = vst.msk [vmem:[#allocation2 + $0xa8] sm:$0xff] %vm196, %v4293
        %4342 = vst.msk [vmem:[#allocation2 + $0xb0] sm:$0xff] %vm1401, %v4295
        %4343 = vst.msk [vmem:[#allocation2 + $0xb8] sm:$0xff] %vm196, %v4295
        %4344 = vst.msk [vmem:[#allocation2 + $0xc0] sm:$0xff] %vm1401, %v4297
        %4345 = vst.msk [vmem:[#allocation2 + $0xc8] sm:$0xff] %vm196, %v4297
        %4346 = vst.msk [vmem:[#allocation2 + $0xd0] sm:$0xff] %vm1401, %v4299
        %4347 = vst.msk [vmem:[#allocation2 + $0xd8] sm:$0xff] %vm196, %v4299
        %4348 = vst.msk [vmem:[#allocation2 + $0xe0] sm:$0xff] %vm1401, %v4301
        %4349 = vst.msk [vmem:[#allocation2 + $0xe8] sm:$0xff] %vm196, %v4301
        %4350 = vst.msk [vmem:[#allocation2 + $0xf0] sm:$0xff] %vm1401, %v4303
        %4351 = vst.msk [vmem:[#allocation2 + $0xf8] sm:$0xff] %vm196, %v4303
        %v4352 = vld [vmem:[#allocation2] sm:$0xff]
        %v4353 = vld [vmem:[#allocation2 + $0x8] sm:$0xff]
        %v4354 = vld [vmem:[#allocation2 + $0x10] sm:$0xff]
        %v4355 = vld [vmem:[#allocation2 + $0x18] sm:$0xff]
        %v4356 = vld [vmem:[#allocation2 + $0x20] sm:$0xff]
        %v4357 = vld [vmem:[#allocation2 + $0x28] sm:$0xff]
        %v4358 = vld [vmem:[#allocation2 + $0x30] sm:$0xff]
        %v4359 = vld [vmem:[#allocation2 + $0x38] sm:$0xff]
        %v4360 = vld [vmem:[#allocation2 + $0x40] sm:$0xff]
        %v4361 = vld [vmem:[#allocation2 + $0x48] sm:$0xff]
        %v4362 = vld [vmem:[#allocation2 + $0x50] sm:$0xff]
        %v4363 = vld [vmem:[#allocation2 + $0x58] sm:$0xff]
        %v4364 = vld [vmem:[#allocation2 + $0x60] sm:$0xff]
        %v4365 = vld [vmem:[#allocation2 + $0x68] sm:$0xff]
        %v4366 = vld [vmem:[#allocation2 + $0x70] sm:$0xff]
        %v4367 = vld [vmem:[#allocation2 + $0x78] sm:$0xff]
        %v4368 = vld [vmem:[#allocation2 + $0x80] sm:$0xff]
        %v4369 = vld [vmem:[#allocation2 + $0x88] sm:$0xff]
        %v4370 = vld [vmem:[#allocation2 + $0x90] sm:$0xff]
        %v4371 = vld [vmem:[#allocation2 + $0x98] sm:$0xff]
        %v4372 = vld [vmem:[#allocation2 + $0xa0] sm:$0xff]
        %v4373 = vld [vmem:[#allocation2 + $0xa8] sm:$0xff]
        %v4374 = vld [vmem:[#allocation2 + $0xb0] sm:$0xff]
        %v4375 = vld [vmem:[#allocation2 + $0xb8] sm:$0xff]
        %v4376 = vld [vmem:[#allocation2 + $0xc0] sm:$0xff]
        %v4377 = vld [vmem:[#allocation2 + $0xc8] sm:$0xff]
        %v4378 = vld [vmem:[#allocation2 + $0xd0] sm:$0xff]
        %v4379 = vld [vmem:[#allocation2 + $0xd8] sm:$0xff]
        %v4380 = vld [vmem:[#allocation2 + $0xe0] sm:$0xff]
        %v4381 = vld [vmem:[#allocation2 + $0xe8] sm:$0xff]
        %v4382 = vld [vmem:[#allocation2 + $0xf0] sm:$0xff]
        %v4383 = vld [vmem:[#allocation2 + $0xf8] sm:$0xff]
        %4384 = vset.pattern.permute.xlu0 22
        %4385 = vperm.xlu0 %4384, %v372
        %v4386 = vpop.permute.xlu0 %4385
        %4388 = vset.pattern.permute.xlu0 22
        %4389 = vperm.xlu0 %4388, %v377
        %v4390 = vpop.permute.xlu0 %4389
        %4392 = vset.pattern.permute.xlu0 22
        %4393 = vperm.xlu0 %4392, %v382
        %v4394 = vpop.permute.xlu0 %4393
        %4396 = vset.pattern.permute.xlu0 22
        %4397 = vperm.xlu0 %4396, %v387
        %v4398 = vpop.permute.xlu0 %4397
        %4400 = vset.pattern.permute.xlu0 22
        %4401 = vperm.xlu0 %4400, %v392
        %v4402 = vpop.permute.xlu0 %4401
        %4404 = vset.pattern.permute.xlu0 22
        %4405 = vperm.xlu0 %4404, %v397
        %v4406 = vpop.permute.xlu0 %4405
        %4408 = vset.pattern.permute.xlu0 22
        %4409 = vperm.xlu0 %4408, %v402
        %v4410 = vpop.permute.xlu0 %4409
        %4412 = vset.pattern.permute.xlu0 22
        %4413 = vperm.xlu0 %4412, %v407
        %v4414 = vpop.permute.xlu0 %4413
        %4416 = vset.pattern.permute.xlu0 22
        %4417 = vperm.xlu0 %4416, %v412
        %v4418 = vpop.permute.xlu0 %4417
        %4420 = vset.pattern.permute.xlu0 22
        %4421 = vperm.xlu0 %4420, %v417
        %v4422 = vpop.permute.xlu0 %4421
        %4424 = vset.pattern.permute.xlu0 22
        %4425 = vperm.xlu0 %4424, %v422
        %v4426 = vpop.permute.xlu0 %4425
        %4428 = vset.pattern.permute.xlu0 22
        %4429 = vperm.xlu0 %4428, %v427
        %v4430 = vpop.permute.xlu0 %4429
        %4432 = vset.pattern.permute.xlu0 22
        %4433 = vperm.xlu0 %4432, %v432
        %v4434 = vpop.permute.xlu0 %4433
        %4436 = vset.pattern.permute.xlu0 22
        %4437 = vperm.xlu0 %4436, %v437
        %v4438 = vpop.permute.xlu0 %4437
        %4440 = vset.pattern.permute.xlu0 22
        %4441 = vperm.xlu0 %4440, %v442
        %v4442 = vpop.permute.xlu0 %4441
        %4444 = vset.pattern.permute.xlu0 22
        %4445 = vperm.xlu0 %4444, %v447
        %v4446 = vpop.permute.xlu0 %4445
        %v4448 = vmul.f32 %v4386, %v4352
        %v4449 = vmul.f32 %v4386, %v4353
        %v4450 = vmul.f32 %v4390, %v4354
        %v4451 = vmul.f32 %v4390, %v4355
        %v4452 = vmul.f32 %v4394, %v4356
        %v4453 = vmul.f32 %v4394, %v4357
        %v4454 = vmul.f32 %v4398, %v4358
        %v4455 = vmul.f32 %v4398, %v4359
        %v4456 = vmul.f32 %v4402, %v4360
        %v4457 = vmul.f32 %v4402, %v4361
        %v4458 = vmul.f32 %v4406, %v4362
        %v4459 = vmul.f32 %v4406, %v4363
        %v4460 = vmul.f32 %v4410, %v4364
        %v4461 = vmul.f32 %v4410, %v4365
        %v4462 = vmul.f32 %v4414, %v4366
        %v4463 = vmul.f32 %v4414, %v4367
        %v4464 = vmul.f32 %v4418, %v4368
        %v4465 = vmul.f32 %v4418, %v4369
        %v4466 = vmul.f32 %v4422, %v4370
        %v4467 = vmul.f32 %v4422, %v4371
        %v4468 = vmul.f32 %v4426, %v4372
        %v4469 = vmul.f32 %v4426, %v4373
        %v4470 = vmul.f32 %v4430, %v4374
        %v4471 = vmul.f32 %v4430, %v4375
        %v4472 = vmul.f32 %v4434, %v4376
        %v4473 = vmul.f32 %v4434, %v4377
        %v4474 = vmul.f32 %v4438, %v4378
        %v4475 = vmul.f32 %v4438, %v4379
        %v4476 = vmul.f32 %v4442, %v4380
        %v4477 = vmul.f32 %v4442, %v4381
        %v4478 = vmul.f32 %v4446, %v4382
        %v4479 = vmul.f32 %v4446, %v4383
        %4480 = vset.pattern.permute.xlu0 19
        %4481 = vperm.xlu0 %4480, %v372
        %v4482 = vpop.permute.xlu0 %4481
        %4484 = vset.pattern.permute.xlu0 19
        %4485 = vperm.xlu0 %4484, %v377
        %v4486 = vpop.permute.xlu0 %4485
        %4488 = vset.pattern.permute.xlu0 19
        %4489 = vperm.xlu0 %4488, %v382
        %v4490 = vpop.permute.xlu0 %4489
        %4492 = vset.pattern.permute.xlu0 19
        %4493 = vperm.xlu0 %4492, %v387
        %v4494 = vpop.permute.xlu0 %4493
        %4496 = vset.pattern.permute.xlu0 19
        %4497 = vperm.xlu0 %4496, %v392
        %v4498 = vpop.permute.xlu0 %4497
        %4500 = vset.pattern.permute.xlu0 19
        %4501 = vperm.xlu0 %4500, %v397
        %v4502 = vpop.permute.xlu0 %4501
        %4504 = vset.pattern.permute.xlu0 19
        %4505 = vperm.xlu0 %4504, %v402
        %v4506 = vpop.permute.xlu0 %4505
        %4508 = vset.pattern.permute.xlu0 19
        %4509 = vperm.xlu0 %4508, %v407
        %v4510 = vpop.permute.xlu0 %4509
        %4512 = vset.pattern.permute.xlu0 19
        %4513 = vperm.xlu0 %4512, %v412
        %v4514 = vpop.permute.xlu0 %4513
        %4516 = vset.pattern.permute.xlu0 19
        %4517 = vperm.xlu0 %4516, %v417
        %v4518 = vpop.permute.xlu0 %4517
        %4520 = vset.pattern.permute.xlu0 19
        %4521 = vperm.xlu0 %4520, %v422
        %v4522 = vpop.permute.xlu0 %4521
        %4524 = vset.pattern.permute.xlu0 19
        %4525 = vperm.xlu0 %4524, %v427
        %v4526 = vpop.permute.xlu0 %4525
        %4528 = vset.pattern.permute.xlu0 19
        %4529 = vperm.xlu0 %4528, %v432
        %v4530 = vpop.permute.xlu0 %4529
        %4532 = vset.pattern.permute.xlu0 19
        %4533 = vperm.xlu0 %4532, %v437
        %v4534 = vpop.permute.xlu0 %4533
        %4536 = vset.pattern.permute.xlu0 19
        %4537 = vperm.xlu0 %4536, %v442
        %v4538 = vpop.permute.xlu0 %4537
        %4540 = vset.pattern.permute.xlu0 19
        %4541 = vperm.xlu0 %4540, %v447
        %v4542 = vpop.permute.xlu0 %4541
        %v4544 = vadd.f32 %v4482, %v4448
        %v4545 = vadd.f32 %v4482, %v4449
        %v4546 = vadd.f32 %v4486, %v4450
        %v4547 = vadd.f32 %v4486, %v4451
        %v4548 = vadd.f32 %v4490, %v4452
        %v4549 = vadd.f32 %v4490, %v4453
        %v4550 = vadd.f32 %v4494, %v4454
        %v4551 = vadd.f32 %v4494, %v4455
        %v4552 = vadd.f32 %v4498, %v4456
        %v4553 = vadd.f32 %v4498, %v4457
        %v4554 = vadd.f32 %v4502, %v4458
        %v4555 = vadd.f32 %v4502, %v4459
        %v4556 = vadd.f32 %v4506, %v4460
        %v4557 = vadd.f32 %v4506, %v4461
        %v4558 = vadd.f32 %v4510, %v4462
        %v4559 = vadd.f32 %v4510, %v4463
        %v4560 = vadd.f32 %v4514, %v4464
        %v4561 = vadd.f32 %v4514, %v4465
        %v4562 = vadd.f32 %v4518, %v4466
        %v4563 = vadd.f32 %v4518, %v4467
        %v4564 = vadd.f32 %v4522, %v4468
        %v4565 = vadd.f32 %v4522, %v4469
        %v4566 = vadd.f32 %v4526, %v4470
        %v4567 = vadd.f32 %v4526, %v4471
        %v4568 = vadd.f32 %v4530, %v4472
        %v4569 = vadd.f32 %v4530, %v4473
        %v4570 = vadd.f32 %v4534, %v4474
        %v4571 = vadd.f32 %v4534, %v4475
        %v4572 = vadd.f32 %v4538, %v4476
        %v4573 = vadd.f32 %v4538, %v4477
        %v4574 = vadd.f32 %v4542, %v4478
        %v4575 = vadd.f32 %v4542, %v4479
        %4576 = vset.pattern.permute.xlu0 23
        %4577 = vperm.xlu0 %4576, %v372
        %v4578 = vpop.permute.xlu0 %4577
        %4580 = vset.pattern.permute.xlu0 23
        %4581 = vperm.xlu0 %4580, %v377
        %v4582 = vpop.permute.xlu0 %4581
        %4584 = vset.pattern.permute.xlu0 23
        %4585 = vperm.xlu0 %4584, %v382
        %v4586 = vpop.permute.xlu0 %4585
        %4588 = vset.pattern.permute.xlu0 23
        %4589 = vperm.xlu0 %4588, %v387
        %v4590 = vpop.permute.xlu0 %4589
        %4592 = vset.pattern.permute.xlu0 23
        %4593 = vperm.xlu0 %4592, %v392
        %v4594 = vpop.permute.xlu0 %4593
        %4596 = vset.pattern.permute.xlu0 23
        %4597 = vperm.xlu0 %4596, %v397
        %v4598 = vpop.permute.xlu0 %4597
        %4600 = vset.pattern.permute.xlu0 23
        %4601 = vperm.xlu0 %4600, %v402
        %v4602 = vpop.permute.xlu0 %4601
        %4604 = vset.pattern.permute.xlu0 23
        %4605 = vperm.xlu0 %4604, %v407
        %v4606 = vpop.permute.xlu0 %4605
        %4608 = vset.pattern.permute.xlu0 23
        %4609 = vperm.xlu0 %4608, %v412
        %v4610 = vpop.permute.xlu0 %4609
        %4612 = vset.pattern.permute.xlu0 23
        %4613 = vperm.xlu0 %4612, %v417
        %v4614 = vpop.permute.xlu0 %4613
        %4616 = vset.pattern.permute.xlu0 23
        %4617 = vperm.xlu0 %4616, %v422
        %v4618 = vpop.permute.xlu0 %4617
        %4620 = vset.pattern.permute.xlu0 23
        %4621 = vperm.xlu0 %4620, %v427
        %v4622 = vpop.permute.xlu0 %4621
        %4624 = vset.pattern.permute.xlu0 23
        %4625 = vperm.xlu0 %4624, %v432
        %v4626 = vpop.permute.xlu0 %4625
        %4628 = vset.pattern.permute.xlu0 23
        %4629 = vperm.xlu0 %4628, %v437
        %v4630 = vpop.permute.xlu0 %4629
        %4632 = vset.pattern.permute.xlu0 23
        %4633 = vperm.xlu0 %4632, %v442
        %v4634 = vpop.permute.xlu0 %4633
        %4636 = vset.pattern.permute.xlu0 23
        %4637 = vperm.xlu0 %4636, %v447
        %v4638 = vpop.permute.xlu0 %4637
        %v4640 = vmul.f32 %v4578, %v4352
        %v4641 = vmul.f32 %v4578, %v4353
        %v4642 = vmul.f32 %v4582, %v4354
        %v4643 = vmul.f32 %v4582, %v4355
        %v4644 = vmul.f32 %v4586, %v4356
        %v4645 = vmul.f32 %v4586, %v4357
        %v4646 = vmul.f32 %v4590, %v4358
        %v4647 = vmul.f32 %v4590, %v4359
        %v4648 = vmul.f32 %v4594, %v4360
        %v4649 = vmul.f32 %v4594, %v4361
        %v4650 = vmul.f32 %v4598, %v4362
        %v4651 = vmul.f32 %v4598, %v4363
        %v4652 = vmul.f32 %v4602, %v4364
        %v4653 = vmul.f32 %v4602, %v4365
        %v4654 = vmul.f32 %v4606, %v4366
        %v4655 = vmul.f32 %v4606, %v4367
        %v4656 = vmul.f32 %v4610, %v4368
        %v4657 = vmul.f32 %v4610, %v4369
        %v4658 = vmul.f32 %v4614, %v4370
        %v4659 = vmul.f32 %v4614, %v4371
        %v4660 = vmul.f32 %v4618, %v4372
        %v4661 = vmul.f32 %v4618, %v4373
        %v4662 = vmul.f32 %v4622, %v4374
        %v4663 = vmul.f32 %v4622, %v4375
        %v4664 = vmul.f32 %v4626, %v4376
        %v4665 = vmul.f32 %v4626, %v4377
        %v4666 = vmul.f32 %v4630, %v4378
        %v4667 = vmul.f32 %v4630, %v4379
        %v4668 = vmul.f32 %v4634, %v4380
        %v4669 = vmul.f32 %v4634, %v4381
        %v4670 = vmul.f32 %v4638, %v4382
        %v4671 = vmul.f32 %v4638, %v4383
        %4704 = vrot.lane.b32.xlu0 %v4640, 126
        %v4705 = vpop.permute.xlu0 %4704
        %4706 = vrot.lane.b32.xlu0 %v4641, 126
        %v4707 = vpop.permute.xlu0 %4706
        %4708 = vrot.lane.b32.xlu0 %v4642, 126
        %v4709 = vpop.permute.xlu0 %4708
        %4710 = vrot.lane.b32.xlu0 %v4643, 126
        %v4711 = vpop.permute.xlu0 %4710
        %4712 = vrot.lane.b32.xlu0 %v4644, 126
        %v4713 = vpop.permute.xlu0 %4712
        %4714 = vrot.lane.b32.xlu0 %v4645, 126
        %v4715 = vpop.permute.xlu0 %4714
        %4716 = vrot.lane.b32.xlu0 %v4646, 126
        %v4717 = vpop.permute.xlu0 %4716
        %4718 = vrot.lane.b32.xlu0 %v4647, 126
        %v4719 = vpop.permute.xlu0 %4718
        %4720 = vrot.lane.b32.xlu0 %v4648, 126
        %v4721 = vpop.permute.xlu0 %4720
        %4722 = vrot.lane.b32.xlu0 %v4649, 126
        %v4723 = vpop.permute.xlu0 %4722
        %4724 = vrot.lane.b32.xlu0 %v4650, 126
        %v4725 = vpop.permute.xlu0 %4724
        %4726 = vrot.lane.b32.xlu0 %v4651, 126
        %v4727 = vpop.permute.xlu0 %4726
        %4728 = vrot.lane.b32.xlu0 %v4652, 126
        %v4729 = vpop.permute.xlu0 %4728
        %4730 = vrot.lane.b32.xlu0 %v4653, 126
        %v4731 = vpop.permute.xlu0 %4730
        %4732 = vrot.lane.b32.xlu0 %v4654, 126
        %v4733 = vpop.permute.xlu0 %4732
        %4734 = vrot.lane.b32.xlu0 %v4655, 126
        %v4735 = vpop.permute.xlu0 %4734
        %4736 = vrot.lane.b32.xlu0 %v4656, 126
        %v4737 = vpop.permute.xlu0 %4736
        %4738 = vrot.lane.b32.xlu0 %v4657, 126
        %v4739 = vpop.permute.xlu0 %4738
        %4740 = vrot.lane.b32.xlu0 %v4658, 126
        %v4741 = vpop.permute.xlu0 %4740
        %4742 = vrot.lane.b32.xlu0 %v4659, 126
        %v4743 = vpop.permute.xlu0 %4742
        %4744 = vrot.lane.b32.xlu0 %v4660, 126
        %v4745 = vpop.permute.xlu0 %4744
        %4746 = vrot.lane.b32.xlu0 %v4661, 126
        %v4747 = vpop.permute.xlu0 %4746
        %4748 = vrot.lane.b32.xlu0 %v4662, 126
        %v4749 = vpop.permute.xlu0 %4748
        %4750 = vrot.lane.b32.xlu0 %v4663, 126
        %v4751 = vpop.permute.xlu0 %4750
        %4752 = vrot.lane.b32.xlu0 %v4664, 126
        %v4753 = vpop.permute.xlu0 %4752
        %4754 = vrot.lane.b32.xlu0 %v4665, 126
        %v4755 = vpop.permute.xlu0 %4754
        %4756 = vrot.lane.b32.xlu0 %v4666, 126
        %v4757 = vpop.permute.xlu0 %4756
        %4758 = vrot.lane.b32.xlu0 %v4667, 126
        %v4759 = vpop.permute.xlu0 %4758
        %4760 = vrot.lane.b32.xlu0 %v4668, 126
        %v4761 = vpop.permute.xlu0 %4760
        %4762 = vrot.lane.b32.xlu0 %v4669, 126
        %v4763 = vpop.permute.xlu0 %4762
        %4764 = vrot.lane.b32.xlu0 %v4670, 126
        %v4765 = vpop.permute.xlu0 %4764
        %4766 = vrot.lane.b32.xlu0 %v4671, 126
        %v4767 = vpop.permute.xlu0 %4766
        %v4768 = vsel %vm2123, %v4705, %v4707
        %v4769 = vsel %vm2123, %v4709, %v4711
        %v4770 = vsel %vm2123, %v4713, %v4715
        %v4771 = vsel %vm2123, %v4717, %v4719
        %v4772 = vsel %vm2123, %v4721, %v4723
        %v4773 = vsel %vm2123, %v4725, %v4727
        %v4774 = vsel %vm2123, %v4729, %v4731
        %v4775 = vsel %vm2123, %v4733, %v4735
        %v4776 = vsel %vm2123, %v4737, %v4739
        %v4777 = vsel %vm2123, %v4741, %v4743
        %v4778 = vsel %vm2123, %v4745, %v4747
        %v4779 = vsel %vm2123, %v4749, %v4751
        %v4780 = vsel %vm2123, %v4753, %v4755
        %v4781 = vsel %vm2123, %v4757, %v4759
        %v4782 = vsel %vm2123, %v4761, %v4763
        %v4783 = vsel %vm2123, %v4765, %v4767
        %v4816 = vadd.f32 %v4544, %v4768
        %v4817 = vadd.f32 %v4545, %v4707
        %v4818 = vadd.f32 %v4546, %v4769
        %v4819 = vadd.f32 %v4547, %v4711
        %v4820 = vadd.f32 %v4548, %v4770
        %v4821 = vadd.f32 %v4549, %v4715
        %v4822 = vadd.f32 %v4550, %v4771
        %v4823 = vadd.f32 %v4551, %v4719
        %v4824 = vadd.f32 %v4552, %v4772
        %v4825 = vadd.f32 %v4553, %v4723
        %v4826 = vadd.f32 %v4554, %v4773
        %v4827 = vadd.f32 %v4555, %v4727
        %v4828 = vadd.f32 %v4556, %v4774
        %v4829 = vadd.f32 %v4557, %v4731
        %v4830 = vadd.f32 %v4558, %v4775
        %v4831 = vadd.f32 %v4559, %v4735
        %v4832 = vadd.f32 %v4560, %v4776
        %v4833 = vadd.f32 %v4561, %v4739
        %v4834 = vadd.f32 %v4562, %v4777
        %v4835 = vadd.f32 %v4563, %v4743
        %v4836 = vadd.f32 %v4564, %v4778
        %v4837 = vadd.f32 %v4565, %v4747
        %v4838 = vadd.f32 %v4566, %v4779
        %v4839 = vadd.f32 %v4567, %v4751
        %v4840 = vadd.f32 %v4568, %v4780
        %v4841 = vadd.f32 %v4569, %v4755
        %v4842 = vadd.f32 %v4570, %v4781
        %v4843 = vadd.f32 %v4571, %v4759
        %v4844 = vadd.f32 %v4572, %v4782
        %v4845 = vadd.f32 %v4573, %v4763
        %v4846 = vadd.f32 %v4574, %v4783
        %v4847 = vadd.f32 %v4575, %v4767
        %4848 = vset.pattern.permute.xlu0 24
        %4849 = vperm.xlu0 %4848, %v372
        %v4850 = vpop.permute.xlu0 %4849
        %4852 = vset.pattern.permute.xlu0 24
        %4853 = vperm.xlu0 %4852, %v377
        %v4854 = vpop.permute.xlu0 %4853
        %4856 = vset.pattern.permute.xlu0 24
        %4857 = vperm.xlu0 %4856, %v382
        %v4858 = vpop.permute.xlu0 %4857
        %4860 = vset.pattern.permute.xlu0 24
        %4861 = vperm.xlu0 %4860, %v387
        %v4862 = vpop.permute.xlu0 %4861
        %4864 = vset.pattern.permute.xlu0 24
        %4865 = vperm.xlu0 %4864, %v392
        %v4866 = vpop.permute.xlu0 %4865
        %4868 = vset.pattern.permute.xlu0 24
        %4869 = vperm.xlu0 %4868, %v397
        %v4870 = vpop.permute.xlu0 %4869
        %4872 = vset.pattern.permute.xlu0 24
        %4873 = vperm.xlu0 %4872, %v402
        %v4874 = vpop.permute.xlu0 %4873
        %4876 = vset.pattern.permute.xlu0 24
        %4877 = vperm.xlu0 %4876, %v407
        %v4878 = vpop.permute.xlu0 %4877
        %4880 = vset.pattern.permute.xlu0 24
        %4881 = vperm.xlu0 %4880, %v412
        %v4882 = vpop.permute.xlu0 %4881
        %4884 = vset.pattern.permute.xlu0 24
        %4885 = vperm.xlu0 %4884, %v417
        %v4886 = vpop.permute.xlu0 %4885
        %4888 = vset.pattern.permute.xlu0 24
        %4889 = vperm.xlu0 %4888, %v422
        %v4890 = vpop.permute.xlu0 %4889
        %4892 = vset.pattern.permute.xlu0 24
        %4893 = vperm.xlu0 %4892, %v427
        %v4894 = vpop.permute.xlu0 %4893
        %4896 = vset.pattern.permute.xlu0 24
        %4897 = vperm.xlu0 %4896, %v432
        %v4898 = vpop.permute.xlu0 %4897
        %4900 = vset.pattern.permute.xlu0 24
        %4901 = vperm.xlu0 %4900, %v437
        %v4902 = vpop.permute.xlu0 %4901
        %4904 = vset.pattern.permute.xlu0 24
        %4905 = vperm.xlu0 %4904, %v442
        %v4906 = vpop.permute.xlu0 %4905
        %4908 = vset.pattern.permute.xlu0 24
        %4909 = vperm.xlu0 %4908, %v447
        %v4910 = vpop.permute.xlu0 %4909
        %v4912 = vmul.f32 %v4850, %v4352
        %v4913 = vmul.f32 %v4850, %v4353
        %v4914 = vmul.f32 %v4854, %v4354
        %v4915 = vmul.f32 %v4854, %v4355
        %v4916 = vmul.f32 %v4858, %v4356
        %v4917 = vmul.f32 %v4858, %v4357
        %v4918 = vmul.f32 %v4862, %v4358
        %v4919 = vmul.f32 %v4862, %v4359
        %v4920 = vmul.f32 %v4866, %v4360
        %v4921 = vmul.f32 %v4866, %v4361
        %v4922 = vmul.f32 %v4870, %v4362
        %v4923 = vmul.f32 %v4870, %v4363
        %v4924 = vmul.f32 %v4874, %v4364
        %v4925 = vmul.f32 %v4874, %v4365
        %v4926 = vmul.f32 %v4878, %v4366
        %v4927 = vmul.f32 %v4878, %v4367
        %v4928 = vmul.f32 %v4882, %v4368
        %v4929 = vmul.f32 %v4882, %v4369
        %v4930 = vmul.f32 %v4886, %v4370
        %v4931 = vmul.f32 %v4886, %v4371
        %v4932 = vmul.f32 %v4890, %v4372
        %v4933 = vmul.f32 %v4890, %v4373
        %v4934 = vmul.f32 %v4894, %v4374
        %v4935 = vmul.f32 %v4894, %v4375
        %v4936 = vmul.f32 %v4898, %v4376
        %v4937 = vmul.f32 %v4898, %v4377
        %v4938 = vmul.f32 %v4902, %v4378
        %v4939 = vmul.f32 %v4902, %v4379
        %v4940 = vmul.f32 %v4906, %v4380
        %v4941 = vmul.f32 %v4906, %v4381
        %v4942 = vmul.f32 %v4910, %v4382
        %v4943 = vmul.f32 %v4910, %v4383
        %4976 = vrot.lane.b32.xlu0 %v4912, 124
        %v4977 = vpop.permute.xlu0 %4976
        %4978 = vrot.lane.b32.xlu0 %v4913, 124
        %v4979 = vpop.permute.xlu0 %4978
        %4980 = vrot.lane.b32.xlu0 %v4914, 124
        %v4981 = vpop.permute.xlu0 %4980
        %4982 = vrot.lane.b32.xlu0 %v4915, 124
        %v4983 = vpop.permute.xlu0 %4982
        %4984 = vrot.lane.b32.xlu0 %v4916, 124
        %v4985 = vpop.permute.xlu0 %4984
        %4986 = vrot.lane.b32.xlu0 %v4917, 124
        %v4987 = vpop.permute.xlu0 %4986
        %4988 = vrot.lane.b32.xlu0 %v4918, 124
        %v4989 = vpop.permute.xlu0 %4988
        %4990 = vrot.lane.b32.xlu0 %v4919, 124
        %v4991 = vpop.permute.xlu0 %4990
        %4992 = vrot.lane.b32.xlu0 %v4920, 124
        %v4993 = vpop.permute.xlu0 %4992
        %4994 = vrot.lane.b32.xlu0 %v4921, 124
        %v4995 = vpop.permute.xlu0 %4994
        %4996 = vrot.lane.b32.xlu0 %v4922, 124
        %v4997 = vpop.permute.xlu0 %4996
        %4998 = vrot.lane.b32.xlu0 %v4923, 124
        %v4999 = vpop.permute.xlu0 %4998
        %5000 = vrot.lane.b32.xlu0 %v4924, 124
        %v5001 = vpop.permute.xlu0 %5000
        %5002 = vrot.lane.b32.xlu0 %v4925, 124
        %v5003 = vpop.permute.xlu0 %5002
        %5004 = vrot.lane.b32.xlu0 %v4926, 124
        %v5005 = vpop.permute.xlu0 %5004
        %5006 = vrot.lane.b32.xlu0 %v4927, 124
        %v5007 = vpop.permute.xlu0 %5006
        %5008 = vrot.lane.b32.xlu0 %v4928, 124
        %v5009 = vpop.permute.xlu0 %5008
        %5010 = vrot.lane.b32.xlu0 %v4929, 124
        %v5011 = vpop.permute.xlu0 %5010
        %5012 = vrot.lane.b32.xlu0 %v4930, 124
        %v5013 = vpop.permute.xlu0 %5012
        %5014 = vrot.lane.b32.xlu0 %v4931, 124
        %v5015 = vpop.permute.xlu0 %5014
        %5016 = vrot.lane.b32.xlu0 %v4932, 124
        %v5017 = vpop.permute.xlu0 %5016
        %5018 = vrot.lane.b32.xlu0 %v4933, 124
        %v5019 = vpop.permute.xlu0 %5018
        %5020 = vrot.lane.b32.xlu0 %v4934, 124
        %v5021 = vpop.permute.xlu0 %5020
        %5022 = vrot.lane.b32.xlu0 %v4935, 124
        %v5023 = vpop.permute.xlu0 %5022
        %5024 = vrot.lane.b32.xlu0 %v4936, 124
        %v5025 = vpop.permute.xlu0 %5024
        %5026 = vrot.lane.b32.xlu0 %v4937, 124
        %v5027 = vpop.permute.xlu0 %5026
        %5028 = vrot.lane.b32.xlu0 %v4938, 124
        %v5029 = vpop.permute.xlu0 %5028
        %5030 = vrot.lane.b32.xlu0 %v4939, 124
        %v5031 = vpop.permute.xlu0 %5030
        %5032 = vrot.lane.b32.xlu0 %v4940, 124
        %v5033 = vpop.permute.xlu0 %5032
        %5034 = vrot.lane.b32.xlu0 %v4941, 124
        %v5035 = vpop.permute.xlu0 %5034
        %5036 = vrot.lane.b32.xlu0 %v4942, 124
        %v5037 = vpop.permute.xlu0 %5036
        %5038 = vrot.lane.b32.xlu0 %v4943, 124
        %v5039 = vpop.permute.xlu0 %5038
        %vm5040 = vcmask 1014784
        %v5041 = vsel %vm5040, %v4977, %v4979
        %v5042 = vsel %vm5040, %v4981, %v4983
        %v5043 = vsel %vm5040, %v4985, %v4987
        %v5044 = vsel %vm5040, %v4989, %v4991
        %v5045 = vsel %vm5040, %v4993, %v4995
        %v5046 = vsel %vm5040, %v4997, %v4999
        %v5047 = vsel %vm5040, %v5001, %v5003
        %v5048 = vsel %vm5040, %v5005, %v5007
        %v5049 = vsel %vm5040, %v5009, %v5011
        %v5050 = vsel %vm5040, %v5013, %v5015
        %v5051 = vsel %vm5040, %v5017, %v5019
        %v5052 = vsel %vm5040, %v5021, %v5023
        %v5053 = vsel %vm5040, %v5025, %v5027
        %v5054 = vsel %vm5040, %v5029, %v5031
        %v5055 = vsel %vm5040, %v5033, %v5035
        %v5056 = vsel %vm5040, %v5037, %v5039
        %v5089 = vadd.f32 %v4816, %v5041
        %v5090 = vadd.f32 %v4817, %v4979
        %v5091 = vadd.f32 %v4818, %v5042
        %v5092 = vadd.f32 %v4819, %v4983
        %v5093 = vadd.f32 %v4820, %v5043
        %v5094 = vadd.f32 %v4821, %v4987
        %v5095 = vadd.f32 %v4822, %v5044
        %v5096 = vadd.f32 %v4823, %v4991
        %v5097 = vadd.f32 %v4824, %v5045
        %v5098 = vadd.f32 %v4825, %v4995
        %v5099 = vadd.f32 %v4826, %v5046
        %v5100 = vadd.f32 %v4827, %v4999
        %v5101 = vadd.f32 %v4828, %v5047
        %v5102 = vadd.f32 %v4829, %v5003
        %v5103 = vadd.f32 %v4830, %v5048
        %v5104 = vadd.f32 %v4831, %v5007
        %v5105 = vadd.f32 %v4832, %v5049
        %v5106 = vadd.f32 %v4833, %v5011
        %v5107 = vadd.f32 %v4834, %v5050
        %v5108 = vadd.f32 %v4835, %v5015
        %v5109 = vadd.f32 %v4836, %v5051
        %v5110 = vadd.f32 %v4837, %v5019
        %v5111 = vadd.f32 %v4838, %v5052
        %v5112 = vadd.f32 %v4839, %v5023
        %v5113 = vadd.f32 %v4840, %v5053
        %v5114 = vadd.f32 %v4841, %v5027
        %v5115 = vadd.f32 %v4842, %v5054
        %v5116 = vadd.f32 %v4843, %v5031
        %v5117 = vadd.f32 %v4844, %v5055
        %v5118 = vadd.f32 %v4845, %v5035
        %v5119 = vadd.f32 %v4846, %v5056
        %v5120 = vadd.f32 %v4847, %v5039
        %vm5121 = vcmp.ge.f32.partialorder %v5089, 0.0
        %vm5122 = vcmp.ge.f32.partialorder %v5090, 0.0
        %vm5123 = vcmp.ge.f32.partialorder %v5091, 0.0
        %vm5124 = vcmp.ge.f32.partialorder %v5092, 0.0
        %vm5125 = vcmp.ge.f32.partialorder %v5093, 0.0
        %vm5126 = vcmp.ge.f32.partialorder %v5094, 0.0
        %vm5127 = vcmp.ge.f32.partialorder %v5095, 0.0
        %vm5128 = vcmp.ge.f32.partialorder %v5096, 0.0
        %vm5129 = vcmp.ge.f32.partialorder %v5097, 0.0
        %vm5130 = vcmp.ge.f32.partialorder %v5098, 0.0
        %vm5131 = vcmp.ge.f32.partialorder %v5099, 0.0
        %vm5132 = vcmp.ge.f32.partialorder %v5100, 0.0
        %vm5133 = vcmp.ge.f32.partialorder %v5101, 0.0
        %vm5134 = vcmp.ge.f32.partialorder %v5102, 0.0
        %vm5135 = vcmp.ge.f32.partialorder %v5103, 0.0
        %vm5136 = vcmp.ge.f32.partialorder %v5104, 0.0
        %vm5137 = vcmp.ge.f32.partialorder %v5105, 0.0
        %vm5138 = vcmp.ge.f32.partialorder %v5106, 0.0
        %vm5139 = vcmp.ge.f32.partialorder %v5107, 0.0
        %vm5140 = vcmp.ge.f32.partialorder %v5108, 0.0
        %vm5141 = vcmp.ge.f32.partialorder %v5109, 0.0
        %vm5142 = vcmp.ge.f32.partialorder %v5110, 0.0
        %vm5143 = vcmp.ge.f32.partialorder %v5111, 0.0
        %vm5144 = vcmp.ge.f32.partialorder %v5112, 0.0
        %vm5145 = vcmp.ge.f32.partialorder %v5113, 0.0
        %vm5146 = vcmp.ge.f32.partialorder %v5114, 0.0
        %vm5147 = vcmp.ge.f32.partialorder %v5115, 0.0
        %vm5148 = vcmp.ge.f32.partialorder %v5116, 0.0
        %vm5149 = vcmp.ge.f32.partialorder %v5117, 0.0
        %vm5150 = vcmp.ge.f32.partialorder %v5118, 0.0
        %vm5151 = vcmp.ge.f32.partialorder %v5119, 0.0
        %vm5152 = vcmp.ge.f32.partialorder %v5120, 0.0
        %5153 = vset.pattern.permute.xlu0 27
        %5154 = vperm.xlu0 %5153, %v372
        %v5155 = vpop.permute.xlu0 %5154
        %5157 = vset.pattern.permute.xlu0 27
        %5158 = vperm.xlu0 %5157, %v377
        %v5159 = vpop.permute.xlu0 %5158
        %5161 = vset.pattern.permute.xlu0 27
        %5162 = vperm.xlu0 %5161, %v382
        %v5163 = vpop.permute.xlu0 %5162
        %5165 = vset.pattern.permute.xlu0 27
        %5166 = vperm.xlu0 %5165, %v387
        %v5167 = vpop.permute.xlu0 %5166
        %5169 = vset.pattern.permute.xlu0 27
        %5170 = vperm.xlu0 %5169, %v392
        %v5171 = vpop.permute.xlu0 %5170
        %5173 = vset.pattern.permute.xlu0 27
        %5174 = vperm.xlu0 %5173, %v397
        %v5175 = vpop.permute.xlu0 %5174
        %5177 = vset.pattern.permute.xlu0 27
        %5178 = vperm.xlu0 %5177, %v402
        %v5179 = vpop.permute.xlu0 %5178
        %5181 = vset.pattern.permute.xlu0 27
        %5182 = vperm.xlu0 %5181, %v407
        %v5183 = vpop.permute.xlu0 %5182
        %5185 = vset.pattern.permute.xlu0 27
        %5186 = vperm.xlu0 %5185, %v412
        %v5187 = vpop.permute.xlu0 %5186
        %5189 = vset.pattern.permute.xlu0 27
        %5190 = vperm.xlu0 %5189, %v417
        %v5191 = vpop.permute.xlu0 %5190
        %5193 = vset.pattern.permute.xlu0 27
        %5194 = vperm.xlu0 %5193, %v422
        %v5195 = vpop.permute.xlu0 %5194
        %5197 = vset.pattern.permute.xlu0 27
        %5198 = vperm.xlu0 %5197, %v427
        %v5199 = vpop.permute.xlu0 %5198
        %5201 = vset.pattern.permute.xlu0 27
        %5202 = vperm.xlu0 %5201, %v432
        %v5203 = vpop.permute.xlu0 %5202
        %5205 = vset.pattern.permute.xlu0 27
        %5206 = vperm.xlu0 %5205, %v437
        %v5207 = vpop.permute.xlu0 %5206
        %5209 = vset.pattern.permute.xlu0 27
        %5210 = vperm.xlu0 %5209, %v442
        %v5211 = vpop.permute.xlu0 %5210
        %5213 = vset.pattern.permute.xlu0 27
        %5214 = vperm.xlu0 %5213, %v447
        %v5215 = vpop.permute.xlu0 %5214
        %v5217 = vmul.f32 %v5155, %v5089
        %v5218 = vmul.f32 %v5155, %v5090
        %v5219 = vmul.f32 %v5159, %v5091
        %v5220 = vmul.f32 %v5159, %v5092
        %v5221 = vmul.f32 %v5163, %v5093
        %v5222 = vmul.f32 %v5163, %v5094
        %v5223 = vmul.f32 %v5167, %v5095
        %v5224 = vmul.f32 %v5167, %v5096
        %v5225 = vmul.f32 %v5171, %v5097
        %v5226 = vmul.f32 %v5171, %v5098
        %v5227 = vmul.f32 %v5175, %v5099
        %v5228 = vmul.f32 %v5175, %v5100
        %v5229 = vmul.f32 %v5179, %v5101
        %v5230 = vmul.f32 %v5179, %v5102
        %v5231 = vmul.f32 %v5183, %v5103
        %v5232 = vmul.f32 %v5183, %v5104
        %v5233 = vmul.f32 %v5187, %v5105
        %v5234 = vmul.f32 %v5187, %v5106
        %v5235 = vmul.f32 %v5191, %v5107
        %v5236 = vmul.f32 %v5191, %v5108
        %v5237 = vmul.f32 %v5195, %v5109
        %v5238 = vmul.f32 %v5195, %v5110
        %v5239 = vmul.f32 %v5199, %v5111
        %v5240 = vmul.f32 %v5199, %v5112
        %v5241 = vmul.f32 %v5203, %v5113
        %v5242 = vmul.f32 %v5203, %v5114
        %v5243 = vmul.f32 %v5207, %v5115
        %v5244 = vmul.f32 %v5207, %v5116
        %v5245 = vmul.f32 %v5211, %v5117
        %v5246 = vmul.f32 %v5211, %v5118
        %v5247 = vmul.f32 %v5215, %v5119
        %v5248 = vmul.f32 %v5215, %v5120
        %v5249 = vsel %vm5121, %v5089, %v5217
        %v5250 = vsel %vm5122, %v5090, %v5218
        %v5251 = vsel %vm5123, %v5091, %v5219
        %v5252 = vsel %vm5124, %v5092, %v5220
        %v5253 = vsel %vm5125, %v5093, %v5221
        %v5254 = vsel %vm5126, %v5094, %v5222
        %v5255 = vsel %vm5127, %v5095, %v5223
        %v5256 = vsel %vm5128, %v5096, %v5224
        %v5257 = vsel %vm5129, %v5097, %v5225
        %v5258 = vsel %vm5130, %v5098, %v5226
        %v5259 = vsel %vm5131, %v5099, %v5227
        %v5260 = vsel %vm5132, %v5100, %v5228
        %v5261 = vsel %vm5133, %v5101, %v5229
        %v5262 = vsel %vm5134, %v5102, %v5230
        %v5263 = vsel %vm5135, %v5103, %v5231
        %v5264 = vsel %vm5136, %v5104, %v5232
        %v5265 = vsel %vm5137, %v5105, %v5233
        %v5266 = vsel %vm5138, %v5106, %v5234
        %v5267 = vsel %vm5139, %v5107, %v5235
        %v5268 = vsel %vm5140, %v5108, %v5236
        %v5269 = vsel %vm5141, %v5109, %v5237
        %v5270 = vsel %vm5142, %v5110, %v5238
        %v5271 = vsel %vm5143, %v5111, %v5239
        %v5272 = vsel %vm5144, %v5112, %v5240
        %v5273 = vsel %vm5145, %v5113, %v5241
        %v5274 = vsel %vm5146, %v5114, %v5242
        %v5275 = vsel %vm5147, %v5115, %v5243
        %v5276 = vsel %vm5148, %v5116, %v5244
        %v5277 = vsel %vm5149, %v5117, %v5245
        %v5278 = vsel %vm5150, %v5118, %v5246
        %v5279 = vsel %vm5151, %v5119, %v5247
        %v5280 = vsel %vm5152, %v5120, %v5248
        %5313 = vrot.lane.b32.xlu0 %v5249, 122
        %v5314 = vpop.permute.xlu0 %5313
        %5315 = vrot.lane.b32.xlu0 %v5250, 122
        %v5316 = vpop.permute.xlu0 %5315
        %5317 = vrot.lane.b32.xlu0 %v5251, 122
        %v5318 = vpop.permute.xlu0 %5317
        %5319 = vrot.lane.b32.xlu0 %v5252, 122
        %v5320 = vpop.permute.xlu0 %5319
        %5321 = vrot.lane.b32.xlu0 %v5253, 122
        %v5322 = vpop.permute.xlu0 %5321
        %5323 = vrot.lane.b32.xlu0 %v5254, 122
        %v5324 = vpop.permute.xlu0 %5323
        %5325 = vrot.lane.b32.xlu0 %v5255, 122
        %v5326 = vpop.permute.xlu0 %5325
        %5327 = vrot.lane.b32.xlu0 %v5256, 122
        %v5328 = vpop.permute.xlu0 %5327
        %5329 = vrot.lane.b32.xlu0 %v5257, 122
        %v5330 = vpop.permute.xlu0 %5329
        %5331 = vrot.lane.b32.xlu0 %v5258, 122
        %v5332 = vpop.permute.xlu0 %5331
        %5333 = vrot.lane.b32.xlu0 %v5259, 122
        %v5334 = vpop.permute.xlu0 %5333
        %5335 = vrot.lane.b32.xlu0 %v5260, 122
        %v5336 = vpop.permute.xlu0 %5335
        %5337 = vrot.lane.b32.xlu0 %v5261, 122
        %v5338 = vpop.permute.xlu0 %5337
        %5339 = vrot.lane.b32.xlu0 %v5262, 122
        %v5340 = vpop.permute.xlu0 %5339
        %5341 = vrot.lane.b32.xlu0 %v5263, 122
        %v5342 = vpop.permute.xlu0 %5341
        %5343 = vrot.lane.b32.xlu0 %v5264, 122
        %v5344 = vpop.permute.xlu0 %5343
        %5345 = vrot.lane.b32.xlu0 %v5265, 122
        %v5346 = vpop.permute.xlu0 %5345
        %5347 = vrot.lane.b32.xlu0 %v5266, 122
        %v5348 = vpop.permute.xlu0 %5347
        %5349 = vrot.lane.b32.xlu0 %v5267, 122
        %v5350 = vpop.permute.xlu0 %5349
        %5351 = vrot.lane.b32.xlu0 %v5268, 122
        %v5352 = vpop.permute.xlu0 %5351
        %5353 = vrot.lane.b32.xlu0 %v5269, 122
        %v5354 = vpop.permute.xlu0 %5353
        %5355 = vrot.lane.b32.xlu0 %v5270, 122
        %v5356 = vpop.permute.xlu0 %5355
        %5357 = vrot.lane.b32.xlu0 %v5271, 122
        %v5358 = vpop.permute.xlu0 %5357
        %5359 = vrot.lane.b32.xlu0 %v5272, 122
        %v5360 = vpop.permute.xlu0 %5359
        %5361 = vrot.lane.b32.xlu0 %v5273, 122
        %v5362 = vpop.permute.xlu0 %5361
        %5363 = vrot.lane.b32.xlu0 %v5274, 122
        %v5364 = vpop.permute.xlu0 %5363
        %5365 = vrot.lane.b32.xlu0 %v5275, 122
        %v5366 = vpop.permute.xlu0 %5365
        %5367 = vrot.lane.b32.xlu0 %v5276, 122
        %v5368 = vpop.permute.xlu0 %5367
        %5369 = vrot.lane.b32.xlu0 %v5277, 122
        %v5370 = vpop.permute.xlu0 %5369
        %5371 = vrot.lane.b32.xlu0 %v5278, 122
        %v5372 = vpop.permute.xlu0 %5371
        %5373 = vrot.lane.b32.xlu0 %v5279, 122
        %v5374 = vpop.permute.xlu0 %5373
        %5375 = vrot.lane.b32.xlu0 %v5280, 122
        %v5376 = vpop.permute.xlu0 %5375
        %vm5377 = vcmask 998400
        %v5378 = vsel %vm5377, %v5314, %v5316
        %v5379 = vsel %vm5377, %v5318, %v5320
        %v5380 = vsel %vm5377, %v5322, %v5324
        %v5381 = vsel %vm5377, %v5326, %v5328
        %v5382 = vsel %vm5377, %v5330, %v5332
        %v5383 = vsel %vm5377, %v5334, %v5336
        %v5384 = vsel %vm5377, %v5338, %v5340
        %v5385 = vsel %vm5377, %v5342, %v5344
        %v5386 = vsel %vm5377, %v5346, %v5348
        %v5387 = vsel %vm5377, %v5350, %v5352
        %v5388 = vsel %vm5377, %v5354, %v5356
        %v5389 = vsel %vm5377, %v5358, %v5360
        %v5390 = vsel %vm5377, %v5362, %v5364
        %v5391 = vsel %vm5377, %v5366, %v5368
        %v5392 = vsel %vm5377, %v5370, %v5372
        %v5393 = vsel %vm5377, %v5374, %v5376
        %5410 = vmatprep.subr.mxu0 0.0
        %5411 = vmatpush1.msra.mxu0 %v5378
        %5412 = vmatprep.subr.mxu0 0.0
        %5413 = vmatpush1.msra.mxu0 %v5379
        %5414 = vmatprep.subr.mxu0 0.0
        %5415 = vmatpush1.msra.mxu0 %v5380
        %5416 = vmatprep.subr.mxu0 0.0
        %5417 = vmatpush1.msra.mxu0 %v5381
        %5418 = vmatprep.subr.mxu0 0.0
        %5419 = vmatpush1.msra.mxu0 %v5382
        %5420 = vmatprep.subr.mxu0 0.0
        %5421 = vmatpush1.msra.mxu0 %v5383
        %5422 = vmatprep.subr.mxu0 0.0
        %5423 = vmatpush1.msra.mxu0 %v5384
        %5424 = vmatprep.subr.mxu0 0.0
        %5425 = vmatpush1.msra.mxu0 %v5385
        %5426 = vmatprep.subr.mxu0 0.0
        %5427 = vmatpush1.msra.mxu0 %v5386
        %5428 = vmatprep.subr.mxu0 0.0
        %5429 = vmatpush1.msra.mxu0 %v5387
        %5430 = vmatprep.subr.mxu0 0.0
        %5431 = vmatpush1.msra.mxu0 %v5388
        %5432 = vmatprep.subr.mxu0 0.0
        %5433 = vmatpush1.msra.mxu0 %v5389
        %5434 = vmatprep.subr.mxu0 0.0
        %5435 = vmatpush1.msra.mxu0 %v5390
        %5436 = vmatprep.subr.mxu0 0.0
        %5437 = vmatpush1.msra.mxu0 %v5391
        %5438 = vmatprep.subr.mxu0 0.0
        %5439 = vmatpush1.msra.mxu0 %v5392
        %5440 = vmatprep.subr.mxu0 0.0
        %5441 = vmatpush1.msra.mxu0 %v5393
        %5442 = vmatprep.subr.mxu0 0.0
        %5443 = vmatpush1.msra.mxu0 0.0
        %5444 = vmatprep.subr.mxu0 0.0
        %5445 = vmatpush1.msra.mxu0 0.0
        %5446 = vmatprep.subr.mxu0 0.0
        %5447 = vmatpush1.msra.mxu0 0.0
        %5448 = vmatprep.subr.mxu0 0.0
        %5449 = vmatpush1.msra.mxu0 0.0
        %5450 = vmatprep.subr.mxu0 0.0
        %5451 = vmatpush1.msra.mxu0 0.0
        %5452 = vmatprep.subr.mxu0 0.0
        %5453 = vmatpush1.msra.mxu0 0.0
        %5454 = vmatprep.subr.mxu0 0.0
        %5455 = vmatpush1.msra.mxu0 0.0
        %5456 = vmatprep.subr.mxu0 0.0
        %5457 = vmatpush1.msra.mxu0 0.0
        %5458 = vmatprep.subr.mxu0 0.0
        %5459 = vmatpush1.msra.mxu0 0.0
        %5460 = vmatprep.subr.mxu0 0.0
        %5461 = vmatpush1.msra.mxu0 0.0
        %5462 = vmatprep.subr.mxu0 0.0
        %5463 = vmatpush1.msra.mxu0 0.0
        %5464 = vmatprep.subr.mxu0 0.0
        %5465 = vmatpush1.msra.mxu0 0.0
        %5466 = vmatprep.subr.mxu0 0.0
        %5467 = vmatpush1.msra.mxu0 0.0
        %5468 = vmatprep.subr.mxu0 0.0
        %5469 = vmatpush1.msra.mxu0 0.0
        %5470 = vmatprep.subr.mxu0 0.0
        %5471 = vmatpush1.msra.mxu0 0.0
        %5472 = vmatprep.subr.mxu0 0.0
        %5473 = vmatpush1.msra.mxu0 0.0
        %5474 = vmatprep.mubr.f32.mxu0 0.0
        %5475 = vmatmul.mubr.f32.gmra.mrb[0].mxu0 1.0
        %v5476 = vpop.f32.mrb[0].mxu0
        %v5477 = vadd.f32 0.0, %v5476
        %v5478 = vpop.f32.mrb[0].mxu0
        %5479 = vdwg.mxu0
        %v5480 = vmul.f32 %v5249, %v5249
        %v5481 = vmul.f32 %v5250, %v5250
        %v5482 = vmul.f32 %v5251, %v5251
        %v5483 = vmul.f32 %v5252, %v5252
        %v5484 = vmul.f32 %v5253, %v5253
        %v5485 = vmul.f32 %v5254, %v5254
        %v5486 = vmul.f32 %v5255, %v5255
        %v5487 = vmul.f32 %v5256, %v5256
        %v5488 = vmul.f32 %v5257, %v5257
        %v5489 = vmul.f32 %v5258, %v5258
        %v5490 = vmul.f32 %v5259, %v5259
        %v5491 = vmul.f32 %v5260, %v5260
        %v5492 = vmul.f32 %v5261, %v5261
        %v5493 = vmul.f32 %v5262, %v5262
        %v5494 = vmul.f32 %v5263, %v5263
        %v5495 = vmul.f32 %v5264, %v5264
        %v5496 = vmul.f32 %v5265, %v5265
        %v5497 = vmul.f32 %v5266, %v5266
        %v5498 = vmul.f32 %v5267, %v5267
        %v5499 = vmul.f32 %v5268, %v5268
        %v5500 = vmul.f32 %v5269, %v5269
        %v5501 = vmul.f32 %v5270, %v5270
        %v5502 = vmul.f32 %v5271, %v5271
        %v5503 = vmul.f32 %v5272, %v5272
        %v5504 = vmul.f32 %v5273, %v5273
        %v5505 = vmul.f32 %v5274, %v5274
        %v5506 = vmul.f32 %v5275, %v5275
        %v5507 = vmul.f32 %v5276, %v5276
        %v5508 = vmul.f32 %v5277, %v5277
        %v5509 = vmul.f32 %v5278, %v5278
        %v5510 = vmul.f32 %v5279, %v5279
        %v5511 = vmul.f32 %v5280, %v5280
        %5544 = vrot.lane.b32.xlu0 %v5480, 122
        %v5545 = vpop.permute.xlu0 %5544
        %5546 = vrot.lane.b32.xlu0 %v5481, 122
        %v5547 = vpop.permute.xlu0 %5546
        %5548 = vrot.lane.b32.xlu0 %v5482, 122
        %v5549 = vpop.permute.xlu0 %5548
        %5550 = vrot.lane.b32.xlu0 %v5483, 122
        %v5551 = vpop.permute.xlu0 %5550
        %5552 = vrot.lane.b32.xlu0 %v5484, 122
        %v5553 = vpop.permute.xlu0 %5552
        %5554 = vrot.lane.b32.xlu0 %v5485, 122
        %v5555 = vpop.permute.xlu0 %5554
        %5556 = vrot.lane.b32.xlu0 %v5486, 122
        %v5557 = vpop.permute.xlu0 %5556
        %5558 = vrot.lane.b32.xlu0 %v5487, 122
        %v5559 = vpop.permute.xlu0 %5558
        %5560 = vrot.lane.b32.xlu0 %v5488, 122
        %v5561 = vpop.permute.xlu0 %5560
        %5562 = vrot.lane.b32.xlu0 %v5489, 122
        %v5563 = vpop.permute.xlu0 %5562
        %5564 = vrot.lane.b32.xlu0 %v5490, 122
        %v5565 = vpop.permute.xlu0 %5564
        %5566 = vrot.lane.b32.xlu0 %v5491, 122
        %v5567 = vpop.permute.xlu0 %5566
        %5568 = vrot.lane.b32.xlu0 %v5492, 122
        %v5569 = vpop.permute.xlu0 %5568
        %5570 = vrot.lane.b32.xlu0 %v5493, 122
        %v5571 = vpop.permute.xlu0 %5570
        %5572 = vrot.lane.b32.xlu0 %v5494, 122
        %v5573 = vpop.permute.xlu0 %5572
        %5574 = vrot.lane.b32.xlu0 %v5495, 122
        %v5575 = vpop.permute.xlu0 %5574
        %5576 = vrot.lane.b32.xlu0 %v5496, 122
        %v5577 = vpop.permute.xlu0 %5576
        %5578 = vrot.lane.b32.xlu0 %v5497, 122
        %v5579 = vpop.permute.xlu0 %5578
        %5580 = vrot.lane.b32.xlu0 %v5498, 122
        %v5581 = vpop.permute.xlu0 %5580
        %5582 = vrot.lane.b32.xlu0 %v5499, 122
        %v5583 = vpop.permute.xlu0 %5582
        %5584 = vrot.lane.b32.xlu0 %v5500, 122
        %v5585 = vpop.permute.xlu0 %5584
        %5586 = vrot.lane.b32.xlu0 %v5501, 122
        %v5587 = vpop.permute.xlu0 %5586
        %5588 = vrot.lane.b32.xlu0 %v5502, 122
        %v5589 = vpop.permute.xlu0 %5588
        %5590 = vrot.lane.b32.xlu0 %v5503, 122
        %v5591 = vpop.permute.xlu0 %5590
        %5592 = vrot.lane.b32.xlu0 %v5504, 122
        %v5593 = vpop.permute.xlu0 %5592
        %5594 = vrot.lane.b32.xlu0 %v5505, 122
        %v5595 = vpop.permute.xlu0 %5594
        %5596 = vrot.lane.b32.xlu0 %v5506, 122
        %v5597 = vpop.permute.xlu0 %5596
        %5598 = vrot.lane.b32.xlu0 %v5507, 122
        %v5599 = vpop.permute.xlu0 %5598
        %5600 = vrot.lane.b32.xlu0 %v5508, 122
        %v5601 = vpop.permute.xlu0 %5600
        %5602 = vrot.lane.b32.xlu0 %v5509, 122
        %v5603 = vpop.permute.xlu0 %5602
        %5604 = vrot.lane.b32.xlu0 %v5510, 122
        %v5605 = vpop.permute.xlu0 %5604
        %5606 = vrot.lane.b32.xlu0 %v5511, 122
        %v5607 = vpop.permute.xlu0 %5606
        %v5608 = vsel %vm5377, %v5545, %v5547
        %v5609 = vsel %vm5377, %v5549, %v5551
        %v5610 = vsel %vm5377, %v5553, %v5555
        %v5611 = vsel %vm5377, %v5557, %v5559
        %v5612 = vsel %vm5377, %v5561, %v5563
        %v5613 = vsel %vm5377, %v5565, %v5567
        %v5614 = vsel %vm5377, %v5569, %v5571
        %v5615 = vsel %vm5377, %v5573, %v5575
        %v5616 = vsel %vm5377, %v5577, %v5579
        %v5617 = vsel %vm5377, %v5581, %v5583
        %v5618 = vsel %vm5377, %v5585, %v5587
        %v5619 = vsel %vm5377, %v5589, %v5591
        %v5620 = vsel %vm5377, %v5593, %v5595
        %v5621 = vsel %vm5377, %v5597, %v5599
        %v5622 = vsel %vm5377, %v5601, %v5603
        %v5623 = vsel %vm5377, %v5605, %v5607
        %5640 = vmatprep.subr.mxu0 0.0
        %5641 = vmatpush1.msra.mxu0 %v5608
        %5642 = vmatprep.subr.mxu0 0.0
        %5643 = vmatpush1.msra.mxu0 %v5609
        %5644 = vmatprep.subr.mxu0 0.0
        %5645 = vmatpush1.msra.mxu0 %v5610
        %5646 = vmatprep.subr.mxu0 0.0
        %5647 = vmatpush1.msra.mxu0 %v5611
        %5648 = vmatprep.subr.mxu0 0.0
        %5649 = vmatpush1.msra.mxu0 %v5612
        %5650 = vmatprep.subr.mxu0 0.0
        %5651 = vmatpush1.msra.mxu0 %v5613
        %5652 = vmatprep.subr.mxu0 0.0
        %5653 = vmatpush1.msra.mxu0 %v5614
        %5654 = vmatprep.subr.mxu0 0.0
        %5655 = vmatpush1.msra.mxu0 %v5615
        %5656 = vmatprep.subr.mxu0 0.0
        %5657 = vmatpush1.msra.mxu0 %v5616
        %5658 = vmatprep.subr.mxu0 0.0
        %5659 = vmatpush1.msra.mxu0 %v5617
        %5660 = vmatprep.subr.mxu0 0.0
        %5661 = vmatpush1.msra.mxu0 %v5618
        %5662 = vmatprep.subr.mxu0 0.0
        %5663 = vmatpush1.msra.mxu0 %v5619
        %5664 = vmatprep.subr.mxu0 0.0
        %5665 = vmatpush1.msra.mxu0 %v5620
        %5666 = vmatprep.subr.mxu0 0.0
        %5667 = vmatpush1.msra.mxu0 %v5621
        %5668 = vmatprep.subr.mxu0 0.0
        %5669 = vmatpush1.msra.mxu0 %v5622
        %5670 = vmatprep.subr.mxu0 0.0
        %5671 = vmatpush1.msra.mxu0 %v5623
        %5672 = vmatprep.subr.mxu0 0.0
        %5673 = vmatpush1.msra.mxu0 0.0
        %5674 = vmatprep.subr.mxu0 0.0
        %5675 = vmatpush1.msra.mxu0 0.0
        %5676 = vmatprep.subr.mxu0 0.0
        %5677 = vmatpush1.msra.mxu0 0.0
        %5678 = vmatprep.subr.mxu0 0.0
        %5679 = vmatpush1.msra.mxu0 0.0
        %5680 = vmatprep.subr.mxu0 0.0
        %5681 = vmatpush1.msra.mxu0 0.0
        %5682 = vmatprep.subr.mxu0 0.0
        %5683 = vmatpush1.msra.mxu0 0.0
        %5684 = vmatprep.subr.mxu0 0.0
        %5685 = vmatpush1.msra.mxu0 0.0
        %5686 = vmatprep.subr.mxu0 0.0
        %5687 = vmatpush1.msra.mxu0 0.0
        %5688 = vmatprep.subr.mxu0 0.0
        %5689 = vmatpush1.msra.mxu0 0.0
        %5690 = vmatprep.subr.mxu0 0.0
        %5691 = vmatpush1.msra.mxu0 0.0
        %5692 = vmatprep.subr.mxu0 0.0
        %5693 = vmatpush1.msra.mxu0 0.0
        %5694 = vmatprep.subr.mxu0 0.0
        %5695 = vmatpush1.msra.mxu0 0.0
        %5696 = vmatprep.subr.mxu0 0.0
        %5697 = vmatpush1.msra.mxu0 0.0
        %5698 = vmatprep.subr.mxu0 0.0
        %5699 = vmatpush1.msra.mxu0 0.0
        %5700 = vmatprep.subr.mxu0 0.0
        %5701 = vmatpush1.msra.mxu0 0.0
        %5702 = vmatprep.subr.mxu0 0.0
        %5703 = vmatpush1.msra.mxu0 0.0
        %5704 = vmatprep.mubr.f32.mxu0 0.0
        %5705 = vmatmul.mubr.f32.gmra.mrb[0].mxu0 1.0
        %v5706 = vpop.f32.mrb[0].mxu0
        %v5707 = vadd.f32 0.0, %v5706
        %v5708 = vpop.f32.mrb[0].mxu0
        %5709 = vdwg.mxu0
        %v5710 = vsel %vm1012, %v5477, 0.0
        %5711 = vadd.xlane.f32.xlu0 %v5710
        %v5712 = vpop.xlane.xlu0 %5711
        %v5713 = vmul.f32 %v5712, 6.1035156e-05
        %v5714 = vsel %vm1012, %v5707, 0.0
        %5715 = vadd.xlane.f32.xlu0 %v5714
        %v5716 = vpop.xlane.xlu0 %5715
        %v5717 = vmul.f32 %v5716, 6.1035156e-05
        %v5718 = vmul.f32 %v5713, %v5713
        %v5719 = vsub.f32 %v5717, %v5718
        %v5720 = vadd.f32 %v5719, 1e-05
        %v5721 = vrsqrt.pop %v5720
        %v5722 = vlaneseq
        %v5723 = vshrl.u32 %v5722, 7
        %v5724 = vsub.s32 0, %v5723
        %v5725 = vrot.slane %v5721, %v5724
        %v5726 = vmul.f32 %v372, %v5725
        %v5727 = vmul.f32 %v377, %v5725
        %v5728 = vmul.f32 %v382, %v5725
        %v5729 = vmul.f32 %v387, %v5725
        %v5730 = vmul.f32 %v392, %v5725
        %v5731 = vmul.f32 %v397, %v5725
        %v5732 = vmul.f32 %v402, %v5725
        %v5733 = vmul.f32 %v407, %v5725
        %v5734 = vmul.f32 %v412, %v5725
        %v5735 = vmul.f32 %v417, %v5725
        %v5736 = vmul.f32 %v422, %v5725
        %v5737 = vmul.f32 %v427, %v5725
        %v5738 = vmul.f32 %v432, %v5725
        %v5739 = vmul.f32 %v437, %v5725
        %v5740 = vmul.f32 %v442, %v5725
        %v5741 = vmul.f32 %v447, %v5725
        %v5742 = vlaneseq
        %v5743 = vshrl.u32 %v5742, 7
        %v5744 = vsub.s32 0, %v5743
        %v5745 = vrot.slane %v5713, %v5744
        %v5746 = vmul.f32 %v5745, %v5726
        %v5747 = vmul.f32 %v5745, %v5727
        %v5748 = vmul.f32 %v5745, %v5728
        %v5749 = vmul.f32 %v5745, %v5729
        %v5750 = vmul.f32 %v5745, %v5730
        %v5751 = vmul.f32 %v5745, %v5731
        %v5752 = vmul.f32 %v5745, %v5732
        %v5753 = vmul.f32 %v5745, %v5733
        %v5754 = vmul.f32 %v5745, %v5734
        %v5755 = vmul.f32 %v5745, %v5735
        %v5756 = vmul.f32 %v5745, %v5736
        %v5757 = vmul.f32 %v5745, %v5737
        %v5758 = vmul.f32 %v5745, %v5738
        %v5759 = vmul.f32 %v5745, %v5739
        %v5760 = vmul.f32 %v5745, %v5740
        %v5761 = vmul.f32 %v5745, %v5741
        %5778 = vrot.lane.b32.xlu0 %v5746, 1
        %v5779 = vpop.permute.xlu0 %5778
        %5780 = vrot.lane.b32.xlu0 %v5747, 1
        %v5781 = vpop.permute.xlu0 %5780
        %5782 = vrot.lane.b32.xlu0 %v5748, 1
        %v5783 = vpop.permute.xlu0 %5782
        %5784 = vrot.lane.b32.xlu0 %v5749, 1
        %v5785 = vpop.permute.xlu0 %5784
        %5786 = vrot.lane.b32.xlu0 %v5750, 1
        %v5787 = vpop.permute.xlu0 %5786
        %5788 = vrot.lane.b32.xlu0 %v5751, 1
        %v5789 = vpop.permute.xlu0 %5788
        %5790 = vrot.lane.b32.xlu0 %v5752, 1
        %v5791 = vpop.permute.xlu0 %5790
        %5792 = vrot.lane.b32.xlu0 %v5753, 1
        %v5793 = vpop.permute.xlu0 %5792
        %5794 = vrot.lane.b32.xlu0 %v5754, 1
        %v5795 = vpop.permute.xlu0 %5794
        %5796 = vrot.lane.b32.xlu0 %v5755, 1
        %v5797 = vpop.permute.xlu0 %5796
        %5798 = vrot.lane.b32.xlu0 %v5756, 1
        %v5799 = vpop.permute.xlu0 %5798
        %5800 = vrot.lane.b32.xlu0 %v5757, 1
        %v5801 = vpop.permute.xlu0 %5800
        %5802 = vrot.lane.b32.xlu0 %v5758, 1
        %v5803 = vpop.permute.xlu0 %5802
        %5804 = vrot.lane.b32.xlu0 %v5759, 1
        %v5805 = vpop.permute.xlu0 %5804
        %5806 = vrot.lane.b32.xlu0 %v5760, 1
        %v5807 = vpop.permute.xlu0 %5806
        %5808 = vrot.lane.b32.xlu0 %v5761, 1
        %v5809 = vpop.permute.xlu0 %5808
        %v5826 = vsub.f32 %v372, %v5779
        %v5827 = vsub.f32 %v377, %v5781
        %v5828 = vsub.f32 %v382, %v5783
        %v5829 = vsub.f32 %v387, %v5785
        %v5830 = vsub.f32 %v392, %v5787
        %v5831 = vsub.f32 %v397, %v5789
        %v5832 = vsub.f32 %v402, %v5791
        %v5833 = vsub.f32 %v407, %v5793
        %v5834 = vsub.f32 %v412, %v5795
        %v5835 = vsub.f32 %v417, %v5797
        %v5836 = vsub.f32 %v422, %v5799
        %v5837 = vsub.f32 %v427, %v5801
        %v5838 = vsub.f32 %v432, %v5803
        %v5839 = vsub.f32 %v437, %v5805
        %v5840 = vsub.f32 %v442, %v5807
        %v5841 = vsub.f32 %v447, %v5809
        %5843 = vset.pattern.permute.xlu0 20
        %5844 = vperm.xlu0 %5843, %v5726
        %v5845 = vpop.permute.xlu0 %5844
        %5848 = vset.pattern.permute.xlu0 20
        %5849 = vperm.xlu0 %5848, %v5727
        %v5850 = vpop.permute.xlu0 %5849
        %5853 = vset.pattern.permute.xlu0 20
        %5854 = vperm.xlu0 %5853, %v5728
        %v5855 = vpop.permute.xlu0 %5854
        %5858 = vset.pattern.permute.xlu0 20
        %5859 = vperm.xlu0 %5858, %v5729
        %v5860 = vpop.permute.xlu0 %5859
        %5863 = vset.pattern.permute.xlu0 20
        %5864 = vperm.xlu0 %5863, %v5730
        %v5865 = vpop.permute.xlu0 %5864
        %5868 = vset.pattern.permute.xlu0 20
        %5869 = vperm.xlu0 %5868, %v5731
        %v5870 = vpop.permute.xlu0 %5869
        %5873 = vset.pattern.permute.xlu0 20
        %5874 = vperm.xlu0 %5873, %v5732
        %v5875 = vpop.permute.xlu0 %5874
        %5878 = vset.pattern.permute.xlu0 20
        %5879 = vperm.xlu0 %5878, %v5733
        %v5880 = vpop.permute.xlu0 %5879
        %5883 = vset.pattern.permute.xlu0 20
        %5884 = vperm.xlu0 %5883, %v5734
        %v5885 = vpop.permute.xlu0 %5884
        %5888 = vset.pattern.permute.xlu0 20
        %5889 = vperm.xlu0 %5888, %v5735
        %v5890 = vpop.permute.xlu0 %5889
        %5893 = vset.pattern.permute.xlu0 20
        %5894 = vperm.xlu0 %5893, %v5736
        %v5895 = vpop.permute.xlu0 %5894
        %5898 = vset.pattern.permute.xlu0 20
        %5899 = vperm.xlu0 %5898, %v5737
        %v5900 = vpop.permute.xlu0 %5899
        %5903 = vset.pattern.permute.xlu0 20
        %5904 = vperm.xlu0 %5903, %v5738
        %v5905 = vpop.permute.xlu0 %5904
        %5908 = vset.pattern.permute.xlu0 20
        %5909 = vperm.xlu0 %5908, %v5739
        %v5910 = vpop.permute.xlu0 %5909
        %5913 = vset.pattern.permute.xlu0 20
        %5914 = vperm.xlu0 %5913, %v5740
        %v5915 = vpop.permute.xlu0 %5914
        %5918 = vset.pattern.permute.xlu0 20
        %5919 = vperm.xlu0 %5918, %v5741
        %v5920 = vpop.permute.xlu0 %5919
        %v5922 = vmul.f32 %v5249, %v5845
        %v5923 = vmul.f32 %v5250, %v5845
        %v5924 = vmul.f32 %v5251, %v5850
        %v5925 = vmul.f32 %v5252, %v5850
        %v5926 = vmul.f32 %v5253, %v5855
        %v5927 = vmul.f32 %v5254, %v5855
        %v5928 = vmul.f32 %v5255, %v5860
        %v5929 = vmul.f32 %v5256, %v5860
        %v5930 = vmul.f32 %v5257, %v5865
        %v5931 = vmul.f32 %v5258, %v5865
        %v5932 = vmul.f32 %v5259, %v5870
        %v5933 = vmul.f32 %v5260, %v5870
        %v5934 = vmul.f32 %v5261, %v5875
        %v5935 = vmul.f32 %v5262, %v5875
        %v5936 = vmul.f32 %v5263, %v5880
        %v5937 = vmul.f32 %v5264, %v5880
        %v5938 = vmul.f32 %v5265, %v5885
        %v5939 = vmul.f32 %v5266, %v5885
        %v5940 = vmul.f32 %v5267, %v5890
        %v5941 = vmul.f32 %v5268, %v5890
        %v5942 = vmul.f32 %v5269, %v5895
        %v5943 = vmul.f32 %v5270, %v5895
        %v5944 = vmul.f32 %v5271, %v5900
        %v5945 = vmul.f32 %v5272, %v5900
        %v5946 = vmul.f32 %v5273, %v5905
        %v5947 = vmul.f32 %v5274, %v5905
        %v5948 = vmul.f32 %v5275, %v5910
        %v5949 = vmul.f32 %v5276, %v5910
        %v5950 = vmul.f32 %v5277, %v5915
        %v5951 = vmul.f32 %v5278, %v5915
        %v5952 = vmul.f32 %v5279, %v5920
        %v5953 = vmul.f32 %v5280, %v5920
        %5955 = vset.pattern.permute.xlu0 21
        %5956 = vperm.xlu0 %5955, %v5826
        %v5957 = vpop.permute.xlu0 %5956
        %5960 = vset.pattern.permute.xlu0 21
        %5961 = vperm.xlu0 %5960, %v5827
        %v5962 = vpop.permute.xlu0 %5961
        %5965 = vset.pattern.permute.xlu0 21
        %5966 = vperm.xlu0 %5965, %v5828
        %v5967 = vpop.permute.xlu0 %5966
        %5970 = vset.pattern.permute.xlu0 21
        %5971 = vperm.xlu0 %5970, %v5829
        %v5972 = vpop.permute.xlu0 %5971
        %5975 = vset.pattern.permute.xlu0 21
        %5976 = vperm.xlu0 %5975, %v5830
        %v5977 = vpop.permute.xlu0 %5976
        %5980 = vset.pattern.permute.xlu0 21
        %5981 = vperm.xlu0 %5980, %v5831
        %v5982 = vpop.permute.xlu0 %5981
        %5985 = vset.pattern.permute.xlu0 21
        %5986 = vperm.xlu0 %5985, %v5832
        %v5987 = vpop.permute.xlu0 %5986
        %5990 = vset.pattern.permute.xlu0 21
        %5991 = vperm.xlu0 %5990, %v5833
        %v5992 = vpop.permute.xlu0 %5991
        %5995 = vset.pattern.permute.xlu0 21
        %5996 = vperm.xlu0 %5995, %v5834
        %v5997 = vpop.permute.xlu0 %5996
        %6000 = vset.pattern.permute.xlu0 21
        %6001 = vperm.xlu0 %6000, %v5835
        %v6002 = vpop.permute.xlu0 %6001
        %6005 = vset.pattern.permute.xlu0 21
        %6006 = vperm.xlu0 %6005, %v5836
        %v6007 = vpop.permute.xlu0 %6006
        %6010 = vset.pattern.permute.xlu0 21
        %6011 = vperm.xlu0 %6010, %v5837
        %v6012 = vpop.permute.xlu0 %6011
        %6015 = vset.pattern.permute.xlu0 21
        %6016 = vperm.xlu0 %6015, %v5838
        %v6017 = vpop.permute.xlu0 %6016
        %6020 = vset.pattern.permute.xlu0 21
        %6021 = vperm.xlu0 %6020, %v5839
        %v6022 = vpop.permute.xlu0 %6021
        %6025 = vset.pattern.permute.xlu0 21
        %6026 = vperm.xlu0 %6025, %v5840
        %v6027 = vpop.permute.xlu0 %6026
        %6030 = vset.pattern.permute.xlu0 21
        %6031 = vperm.xlu0 %6030, %v5841
        %v6032 = vpop.permute.xlu0 %6031
        %v6034 = vadd.f32 %v5922, %v5957
        %v6035 = vadd.f32 %v5923, %v5957
        %v6036 = vadd.f32 %v5924, %v5962
        %v6037 = vadd.f32 %v5925, %v5962
        %v6038 = vadd.f32 %v5926, %v5967
        %v6039 = vadd.f32 %v5927, %v5967
        %v6040 = vadd.f32 %v5928, %v5972
        %v6041 = vadd.f32 %v5929, %v5972
        %v6042 = vadd.f32 %v5930, %v5977
        %v6043 = vadd.f32 %v5931, %v5977
        %v6044 = vadd.f32 %v5932, %v5982
        %v6045 = vadd.f32 %v5933, %v5982
        %v6046 = vadd.f32 %v5934, %v5987
        %v6047 = vadd.f32 %v5935, %v5987
        %v6048 = vadd.f32 %v5936, %v5992
        %v6049 = vadd.f32 %v5937, %v5992
        %v6050 = vadd.f32 %v5938, %v5997
        %v6051 = vadd.f32 %v5939, %v5997
        %v6052 = vadd.f32 %v5940, %v6002
        %v6053 = vadd.f32 %v5941, %v6002
        %v6054 = vadd.f32 %v5942, %v6007
        %v6055 = vadd.f32 %v5943, %v6007
        %v6056 = vadd.f32 %v5944, %v6012
        %v6057 = vadd.f32 %v5945, %v6012
        %v6058 = vadd.f32 %v5946, %v6017
        %v6059 = vadd.f32 %v5947, %v6017
        %v6060 = vadd.f32 %v5948, %v6022
        %v6061 = vadd.f32 %v5949, %v6022
        %v6062 = vadd.f32 %v5950, %v6027
        %v6063 = vadd.f32 %v5951, %v6027
        %v6064 = vadd.f32 %v5952, %v6032
        %v6065 = vadd.f32 %v5953, %v6032
        %s6066 = scalar_lea.vmem %s2, 32
        %v6067 = vld [vmem:[%s6066] sm:$0xff]
        %v6068 = vld [vmem:[%s6066 + $0x8] sm:$0xff]
        %v6069 = vld [vmem:[%s6066 + $0x10] sm:$0xff]
        %v6070 = vld [vmem:[%s6066 + $0x18] sm:$0xff]
        %6103 = vrot.lane.b32.xlu0 %v6034, 122
        %v6104 = vpop.permute.xlu0 %6103
        %6105 = vrot.lane.b32.xlu0 %v6035, 122
        %v6106 = vpop.permute.xlu0 %6105
        %6107 = vrot.lane.b32.xlu0 %v6036, 122
        %v6108 = vpop.permute.xlu0 %6107
        %6109 = vrot.lane.b32.xlu0 %v6037, 122
        %v6110 = vpop.permute.xlu0 %6109
        %6111 = vrot.lane.b32.xlu0 %v6038, 122
        %v6112 = vpop.permute.xlu0 %6111
        %6113 = vrot.lane.b32.xlu0 %v6039, 122
        %v6114 = vpop.permute.xlu0 %6113
        %6115 = vrot.lane.b32.xlu0 %v6040, 122
        %v6116 = vpop.permute.xlu0 %6115
        %6117 = vrot.lane.b32.xlu0 %v6041, 122
        %v6118 = vpop.permute.xlu0 %6117
        %6119 = vrot.lane.b32.xlu0 %v6042, 122
        %v6120 = vpop.permute.xlu0 %6119
        %6121 = vrot.lane.b32.xlu0 %v6043, 122
        %v6122 = vpop.permute.xlu0 %6121
        %6123 = vrot.lane.b32.xlu0 %v6044, 122
        %v6124 = vpop.permute.xlu0 %6123
        %6125 = vrot.lane.b32.xlu0 %v6045, 122
        %v6126 = vpop.permute.xlu0 %6125
        %6127 = vrot.lane.b32.xlu0 %v6046, 122
        %v6128 = vpop.permute.xlu0 %6127
        %6129 = vrot.lane.b32.xlu0 %v6047, 122
        %v6130 = vpop.permute.xlu0 %6129
        %6131 = vrot.lane.b32.xlu0 %v6048, 122
        %v6132 = vpop.permute.xlu0 %6131
        %6133 = vrot.lane.b32.xlu0 %v6049, 122
        %v6134 = vpop.permute.xlu0 %6133
        %6135 = vrot.lane.b32.xlu0 %v6050, 122
        %v6136 = vpop.permute.xlu0 %6135
        %6137 = vrot.lane.b32.xlu0 %v6051, 122
        %v6138 = vpop.permute.xlu0 %6137
        %6139 = vrot.lane.b32.xlu0 %v6052, 122
        %v6140 = vpop.permute.xlu0 %6139
        %6141 = vrot.lane.b32.xlu0 %v6053, 122
        %v6142 = vpop.permute.xlu0 %6141
        %6143 = vrot.lane.b32.xlu0 %v6054, 122
        %v6144 = vpop.permute.xlu0 %6143
        %6145 = vrot.lane.b32.xlu0 %v6055, 122
        %v6146 = vpop.permute.xlu0 %6145
        %6147 = vrot.lane.b32.xlu0 %v6056, 122
        %v6148 = vpop.permute.xlu0 %6147
        %6149 = vrot.lane.b32.xlu0 %v6057, 122
        %v6150 = vpop.permute.xlu0 %6149
        %6151 = vrot.lane.b32.xlu0 %v6058, 122
        %v6152 = vpop.permute.xlu0 %6151
        %6153 = vrot.lane.b32.xlu0 %v6059, 122
        %v6154 = vpop.permute.xlu0 %6153
        %6155 = vrot.lane.b32.xlu0 %v6060, 122
        %v6156 = vpop.permute.xlu0 %6155
        %6157 = vrot.lane.b32.xlu0 %v6061, 122
        %v6158 = vpop.permute.xlu0 %6157
        %6159 = vrot.lane.b32.xlu0 %v6062, 122
        %v6160 = vpop.permute.xlu0 %6159
        %6161 = vrot.lane.b32.xlu0 %v6063, 122
        %v6162 = vpop.permute.xlu0 %6161
        %6163 = vrot.lane.b32.xlu0 %v6064, 122
        %v6164 = vpop.permute.xlu0 %6163
        %6165 = vrot.lane.b32.xlu0 %v6065, 122
        %v6166 = vpop.permute.xlu0 %6165
        %v6167 = vsel %vm5377, %v6104, %v6106
        %v6168 = vsel %vm5377, %v6108, %v6110
        %v6169 = vsel %vm5377, %v6112, %v6114
        %v6170 = vsel %vm5377, %v6116, %v6118
        %v6171 = vsel %vm5377, %v6120, %v6122
        %v6172 = vsel %vm5377, %v6124, %v6126
        %v6173 = vsel %vm5377, %v6128, %v6130
        %v6174 = vsel %vm5377, %v6132, %v6134
        %v6175 = vsel %vm5377, %v6136, %v6138
        %v6176 = vsel %vm5377, %v6140, %v6142
        %v6177 = vsel %vm5377, %v6144, %v6146
        %v6178 = vsel %vm5377, %v6148, %v6150
        %v6179 = vsel %vm5377, %v6152, %v6154
        %v6180 = vsel %vm5377, %v6156, %v6158
        %v6181 = vsel %vm5377, %v6160, %v6162
        %v6182 = vsel %vm5377, %v6164, %v6166
        %6199 = vmatprep.subr.mxu0 0.0
        %6200 = vmatpush1.msra.mxu0 %v6167
        %6201 = vmatprep.subr.mxu0 0.0
        %6202 = vmatpush1.msra.mxu0 %v6168
        %6203 = vmatprep.subr.mxu0 0.0
        %6204 = vmatpush1.msra.mxu0 %v6169
        %6205 = vmatprep.subr.mxu0 0.0
        %6206 = vmatpush1.msra.mxu0 %v6170
        %6207 = vmatprep.subr.mxu0 0.0
        %6208 = vmatpush1.msra.mxu0 %v6171
        %6209 = vmatprep.subr.mxu0 0.0
        %6210 = vmatpush1.msra.mxu0 %v6172
        %6211 = vmatprep.subr.mxu0 0.0
        %6212 = vmatpush1.msra.mxu0 %v6173
        %6213 = vmatprep.subr.mxu0 0.0
        %6214 = vmatpush1.msra.mxu0 %v6174
        %6215 = vmatprep.subr.mxu0 0.0
        %6216 = vmatpush1.msra.mxu0 %v6175
        %6217 = vmatprep.subr.mxu0 0.0
        %6218 = vmatpush1.msra.mxu0 %v6176
        %6219 = vmatprep.subr.mxu0 0.0
        %6220 = vmatpush1.msra.mxu0 %v6177
        %6221 = vmatprep.subr.mxu0 0.0
        %6222 = vmatpush1.msra.mxu0 %v6178
        %6223 = vmatprep.subr.mxu0 0.0
        %6224 = vmatpush1.msra.mxu0 %v6179
        %6225 = vmatprep.subr.mxu0 0.0
        %6226 = vmatpush1.msra.mxu0 %v6180
        %6227 = vmatprep.subr.mxu0 0.0
        %6228 = vmatpush1.msra.mxu0 %v6181
        %6229 = vmatprep.subr.mxu0 0.0
        %6230 = vmatpush1.msra.mxu0 %v6182
        %6231 = vmatprep.subr.mxu0 0.0
        %6232 = vmatpush1.msra.mxu0 0.0
        %6233 = vmatprep.subr.mxu0 0.0
        %6234 = vmatpush1.msra.mxu0 0.0
        %6235 = vmatprep.subr.mxu0 0.0
        %6236 = vmatpush1.msra.mxu0 0.0
        %6237 = vmatprep.subr.mxu0 0.0
        %6238 = vmatpush1.msra.mxu0 0.0
        %6239 = vmatprep.subr.mxu0 0.0
        %6240 = vmatpush1.msra.mxu0 0.0
        %6241 = vmatprep.subr.mxu0 0.0
        %6242 = vmatpush1.msra.mxu0 0.0
        %6243 = vmatprep.subr.mxu0 0.0
        %6244 = vmatpush1.msra.mxu0 0.0
        %6245 = vmatprep.subr.mxu0 0.0
        %6246 = vmatpush1.msra.mxu0 0.0
        %6247 = vmatprep.subr.mxu0 0.0
        %6248 = vmatpush1.msra.mxu0 0.0
        %6249 = vmatprep.subr.mxu0 0.0
        %6250 = vmatpush1.msra.mxu0 0.0
        %6251 = vmatprep.subr.mxu0 0.0
        %6252 = vmatpush1.msra.mxu0 0.0
        %6253 = vmatprep.subr.mxu0 0.0
        %6254 = vmatpush1.msra.mxu0 0.0
        %6255 = vmatprep.subr.mxu0 0.0
        %6256 = vmatpush1.msra.mxu0 0.0
        %6257 = vmatprep.subr.mxu0 0.0
        %6258 = vmatpush1.msra.mxu0 0.0
        %6259 = vmatprep.subr.mxu0 0.0
        %6260 = vmatpush1.msra.mxu0 0.0
        %6261 = vmatprep.subr.mxu0 0.0
        %6262 = vmatpush1.msra.mxu0 0.0
        %6263 = vmatprep.mubr.f32.mxu0 0.0
        %6264 = vmatmul.mubr.f32.gmra.mrb[0].mxu0 %v6067
        %v6265 = vpop.f32.mrb[0].mxu0
        %v6266 = vadd.f32 0.0, %v6265
        %v6267 = vpop.f32.mrb[0].mxu0
        %6268 = vmatprep.mubr.f32.mxu0 0.0
        %6269 = vmatmul.mubr.f32.gmra.mrb[0].mxu0 %v6068
        %v6270 = vpop.f32.mrb[0].mxu0
        %v6271 = vadd.f32 0.0, %v6270
        %v6272 = vpop.f32.mrb[0].mxu0
        %6273 = vmatprep.mubr.f32.mxu0 0.0
        %6274 = vmatmul.mubr.f32.gmra.mrb[0].mxu0 %v6069
        %v6275 = vpop.f32.mrb[0].mxu0
        %v6276 = vadd.f32 0.0, %v6275
        %v6277 = vpop.f32.mrb[0].mxu0
        %6278 = vmatprep.mubr.f32.mxu0 0.0
        %6279 = vmatmul.mubr.f32.gmra.mrb[0].mxu0 %v6070
        %v6280 = vpop.f32.mrb[0].mxu0
        %v6281 = vadd.f32 0.0, %v6280
        %v6282 = vpop.f32.mrb[0].mxu0
        %6283 = vdwg.mxu0
        %v6284 = vadd.f32 %v3386, %v6266
        %v6285 = vadd.f32 %v3387, %v6271
        %v6286 = vadd.f32 %v3388, %v6276
        %v6287 = vadd.f32 %v3389, %v6281
        %6288 = vset.pattern.permute.xlu0 25
        %6289 = vperm.xlu0 %6288, %v372
        %v6290 = vpop.permute.xlu0 %6289
        %6292 = vset.pattern.permute.xlu0 25
        %6293 = vperm.xlu0 %6292, %v377
        %v6294 = vpop.permute.xlu0 %6293
        %6296 = vset.pattern.permute.xlu0 25
        %6297 = vperm.xlu0 %6296, %v382
        %v6298 = vpop.permute.xlu0 %6297
        %6300 = vset.pattern.permute.xlu0 25
        %6301 = vperm.xlu0 %6300, %v387
        %v6302 = vpop.permute.xlu0 %6301
        %v6304 = vadd.f32 %v6284, %v6290
        %v6305 = vadd.f32 %v6285, %v6294
        %v6306 = vadd.f32 %v6286, %v6298
        %v6307 = vadd.f32 %v6287, %v6302
        %s6308 = scalar_lea.vmem %s1, 256
        %v6309 = vld [vmem:[%s6308] sm:$0xff]
        %v6310 = vld [vmem:[%s6308 + $0x8] sm:$0xff]
        %v6311 = vld [vmem:[%s6308 + $0x10] sm:$0xff]
        %v6312 = vld [vmem:[%s6308 + $0x18] sm:$0xff]
        %v6313 = vld [vmem:[%s6308 + $0x20] sm:$0xff]
        %v6314 = vld [vmem:[%s6308 + $0x28] sm:$0xff]
        %v6315 = vld [vmem:[%s6308 + $0x30] sm:$0xff]
        %v6316 = vld [vmem:[%s6308 + $0x38] sm:$0xff]
        %v6317 = vld [vmem:[%s6308 + $0x40] sm:$0xff]
        %v6318 = vld [vmem:[%s6308 + $0x48] sm:$0xff]
        %v6319 = vld [vmem:[%s6308 + $0x50] sm:$0xff]
        %v6320 = vld [vmem:[%s6308 + $0x58] sm:$0xff]
        %v6321 = vld [vmem:[%s6308 + $0x60] sm:$0xff]
        %v6322 = vld [vmem:[%s6308 + $0x68] sm:$0xff]
        %v6323 = vld [vmem:[%s6308 + $0x70] sm:$0xff]
        %v6324 = vld [vmem:[%s6308 + $0x78] sm:$0xff]
        %6325 = vset.pattern.permute.xlu0 32
        %6326 = vperm.xlu0 %6325, %v372
        %v6327 = vpop.permute.xlu0 %6326
        %6329 = vset.pattern.permute.xlu0 32
        %6330 = vperm.xlu0 %6329, %v377
        %v6331 = vpop.permute.xlu0 %6330
        %6333 = vset.pattern.permute.xlu0 32
        %6334 = vperm.xlu0 %6333, %v382
        %v6335 = vpop.permute.xlu0 %6334
        %6337 = vset.pattern.permute.xlu0 32
        %6338 = vperm.xlu0 %6337, %v387
        %v6339 = vpop.permute.xlu0 %6338
        %6341 = vset.pattern.permute.xlu0 32
        %6342 = vperm.xlu0 %6341, %v392
        %v6343 = vpop.permute.xlu0 %6342
        %6345 = vset.pattern.permute.xlu0 32
        %6346 = vperm.xlu0 %6345, %v397
        %v6347 = vpop.permute.xlu0 %6346
        %6349 = vset.pattern.permute.xlu0 32
        %6350 = vperm.xlu0 %6349, %v402
        %v6351 = vpop.permute.xlu0 %6350
        %6353 = vset.pattern.permute.xlu0 32
        %6354 = vperm.xlu0 %6353, %v407
        %v6355 = vpop.permute.xlu0 %6354
        %6357 = vset.pattern.permute.xlu0 32
        %6358 = vperm.xlu0 %6357, %v412
        %v6359 = vpop.permute.xlu0 %6358
        %6361 = vset.pattern.permute.xlu0 32
        %6362 = vperm.xlu0 %6361, %v417
        %v6363 = vpop.permute.xlu0 %6362
        %6365 = vset.pattern.permute.xlu0 32
        %6366 = vperm.xlu0 %6365, %v422
        %v6367 = vpop.permute.xlu0 %6366
        %6369 = vset.pattern.permute.xlu0 32
        %6370 = vperm.xlu0 %6369, %v427
        %v6371 = vpop.permute.xlu0 %6370
        %6373 = vset.pattern.permute.xlu0 32
        %6374 = vperm.xlu0 %6373, %v432
        %v6375 = vpop.permute.xlu0 %6374
        %6377 = vset.pattern.permute.xlu0 32
        %6378 = vperm.xlu0 %6377, %v437
        %v6379 = vpop.permute.xlu0 %6378
        %6381 = vset.pattern.permute.xlu0 32
        %6382 = vperm.xlu0 %6381, %v442
        %v6383 = vpop.permute.xlu0 %6382
        %6385 = vset.pattern.permute.xlu0 32
        %6386 = vperm.xlu0 %6385, %v447
        %v6387 = vpop.permute.xlu0 %6386
        %v6390 = vsel %vm550, %v6309, 0
        %v6393 = vsel %vm550, %v6310, 0
        %v6396 = vsel %vm550, %v6311, 0
        %v6399 = vsel %vm550, %v6312, 0
        %v6402 = vsel %vm550, %v6313, 0
        %v6405 = vsel %vm550, %v6314, 0
        %v6408 = vsel %vm550, %v6315, 0
        %v6411 = vsel %vm550, %v6316, 0
        %v6414 = vsel %vm550, %v6317, 0
        %v6417 = vsel %vm550, %v6318, 0
        %v6420 = vsel %vm550, %v6319, 0
        %v6423 = vsel %vm550, %v6320, 0
        %v6426 = vsel %vm550, %v6321, 0
        %v6429 = vsel %vm550, %v6322, 0
        %v6432 = vsel %vm550, %v6323, 0
        %v6435 = vsel %vm550, %v6324, 0
        %6437 = vmatprep.subr.mxu0 0.0
        %6438 = vmatpush1.msra.mxu0 %v6304
        %6439 = vmatprep.subr.mxu0 0.0
        %6440 = vmatpush1.msra.mxu0 %v6305
        %6441 = vmatprep.subr.mxu0 0.0
        %6442 = vmatpush1.msra.mxu0 %v6306
        %6443 = vmatprep.subr.mxu0 0.0
        %6444 = vmatpush1.msra.mxu0 %v6307
        %6445 = vmatprep.subr.mxu0 0.0
        %6446 = vmatpush1.msra.mxu0 0.0
        %6447 = vmatprep.subr.mxu0 0.0
        %6448 = vmatpush1.msra.mxu0 0.0
        %6449 = vmatprep.subr.mxu0 0.0
        %6450 = vmatpush1.msra.mxu0 0.0
        %6451 = vmatprep.subr.mxu0 0.0
        %6452 = vmatpush1.msra.mxu0 0.0
        %6453 = vmatprep.subr.mxu0 0.0
        %6454 = vmatpush1.msra.mxu0 0.0
        %6455 = vmatprep.subr.mxu0 0.0
        %6456 = vmatpush1.msra.mxu0 0.0
        %6457 = vmatprep.subr.mxu0 0.0
        %6458 = vmatpush1.msra.mxu0 0.0
        %6459 = vmatprep.subr.mxu0 0.0
        %6460 = vmatpush1.msra.mxu0 0.0
        %6461 = vmatprep.subr.mxu0 0.0
        %6462 = vmatpush1.msra.mxu0 0.0
        %6463 = vmatprep.subr.mxu0 0.0
        %6464 = vmatpush1.msra.mxu0 0.0
        %6465 = vmatprep.subr.mxu0 0.0
        %6466 = vmatpush1.msra.mxu0 0.0
        %6467 = vmatprep.subr.mxu0 0.0
        %6468 = vmatpush1.msra.mxu0 0.0
        %6469 = vmatprep.subr.mxu0 0.0
        %6470 = vmatpush1.msra.mxu0 0.0
        %6471 = vmatprep.subr.mxu0 0.0
        %6472 = vmatpush1.msra.mxu0 0.0
        %6473 = vmatprep.subr.mxu0 0.0
        %6474 = vmatpush1.msra.mxu0 0.0
        %6475 = vmatprep.subr.mxu0 0.0
        %6476 = vmatpush1.msra.mxu0 0.0
        %6477 = vmatprep.subr.mxu0 0.0
        %6478 = vmatpush1.msra.mxu0 0.0
        %6479 = vmatprep.subr.mxu0 0.0
        %6480 = vmatpush1.msra.mxu0 0.0
        %6481 = vmatprep.subr.mxu0 0.0
        %6482 = vmatpush1.msra.mxu0 0.0
        %6483 = vmatprep.subr.mxu0 0.0
        %6484 = vmatpush1.msra.mxu0 0.0
        %6485 = vmatprep.subr.mxu0 0.0
        %6486 = vmatpush1.msra.mxu0 0.0
        %6487 = vmatprep.subr.mxu0 0.0
        %6488 = vmatpush1.msra.mxu0 0.0
        %6489 = vmatprep.subr.mxu0 0.0
        %6490 = vmatpush1.msra.mxu0 0.0
        %6491 = vmatprep.subr.mxu0 0.0
        %6492 = vmatpush1.msra.mxu0 0.0
        %6493 = vmatprep.subr.mxu0 0.0
        %6494 = vmatpush1.msra.mxu0 0.0
        %6495 = vmatprep.subr.mxu0 0.0
        %6496 = vmatpush1.msra.mxu0 0.0
        %6497 = vmatprep.subr.mxu0 0.0
        %6498 = vmatpush1.msra.mxu0 0.0
        %6499 = vmatprep.subr.mxu0 0.0
        %6500 = vmatpush1.msra.mxu0 0.0
        %6501 = vmatprep.mubr.f32.mxu0 0.0
        %6502 = vmatmul.mubr.f32.gmra.mrb[0].mxu0 %v6390
        %v6503 = vpop.f32.mrb[0].mxu0
        %v6504 = vadd.f32 %v6327, %v6503
        %v6505 = vpop.f32.mrb[0].mxu0
        %6506 = vmatprep.mubr.f32.mxu0 0.0
        %6507 = vmatmul.mubr.f32.gmra.mrb[0].mxu0 %v6393
        %v6508 = vpop.f32.mrb[0].mxu0
        %v6509 = vadd.f32 %v6331, %v6508
        %v6510 = vpop.f32.mrb[0].mxu0
        %6511 = vmatprep.mubr.f32.mxu0 0.0
        %6512 = vmatmul.mubr.f32.gmra.mrb[0].mxu0 %v6396
        %v6513 = vpop.f32.mrb[0].mxu0
        %v6514 = vadd.f32 %v6335, %v6513
        %v6515 = vpop.f32.mrb[0].mxu0
        %6516 = vmatprep.mubr.f32.mxu0 0.0
        %6517 = vmatmul.mubr.f32.gmra.mrb[0].mxu0 %v6399
        %v6518 = vpop.f32.mrb[0].mxu0
        %v6519 = vadd.f32 %v6339, %v6518
        %v6520 = vpop.f32.mrb[0].mxu0
        %6521 = vmatprep.mubr.f32.mxu0 0.0
        %6522 = vmatmul.mubr.f32.gmra.mrb[0].mxu0 %v6402
        %v6523 = vpop.f32.mrb[0].mxu0
        %v6524 = vadd.f32 %v6343, %v6523
        %v6525 = vpop.f32.mrb[0].mxu0
        %6526 = vmatprep.mubr.f32.mxu0 0.0
        %6527 = vmatmul.mubr.f32.gmra.mrb[0].mxu0 %v6405
        %v6528 = vpop.f32.mrb[0].mxu0
        %v6529 = vadd.f32 %v6347, %v6528
        %v6530 = vpop.f32.mrb[0].mxu0
        %6531 = vmatprep.mubr.f32.mxu0 0.0
        %6532 = vmatmul.mubr.f32.gmra.mrb[0].mxu0 %v6408
        %v6533 = vpop.f32.mrb[0].mxu0
        %v6534 = vadd.f32 %v6351, %v6533
        %v6535 = vpop.f32.mrb[0].mxu0
        %6536 = vmatprep.mubr.f32.mxu0 0.0
        %6537 = vmatmul.mubr.f32.gmra.mrb[0].mxu0 %v6411
        %v6538 = vpop.f32.mrb[0].mxu0
        %v6539 = vadd.f32 %v6355, %v6538
        %v6540 = vpop.f32.mrb[0].mxu0
        %6541 = vmatprep.mubr.f32.mxu0 0.0
        %6542 = vmatmul.mubr.f32.gmra.mrb[0].mxu0 %v6414
        %v6543 = vpop.f32.mrb[0].mxu0
        %v6544 = vadd.f32 %v6359, %v6543
        %v6545 = vpop.f32.mrb[0].mxu0
        %6546 = vmatprep.mubr.f32.mxu0 0.0
        %6547 = vmatmul.mubr.f32.gmra.mrb[0].mxu0 %v6417
        %v6548 = vpop.f32.mrb[0].mxu0
        %v6549 = vadd.f32 %v6363, %v6548
        %v6550 = vpop.f32.mrb[0].mxu0
        %6551 = vmatprep.mubr.f32.mxu0 0.0
        %6552 = vmatmul.mubr.f32.gmra.mrb[0].mxu0 %v6420
        %v6553 = vpop.f32.mrb[0].mxu0
        %v6554 = vadd.f32 %v6367, %v6553
        %v6555 = vpop.f32.mrb[0].mxu0
        %6556 = vmatprep.mubr.f32.mxu0 0.0
        %6557 = vmatmul.mubr.f32.gmra.mrb[0].mxu0 %v6423
        %v6558 = vpop.f32.mrb[0].mxu0
        %v6559 = vadd.f32 %v6371, %v6558
        %v6560 = vpop.f32.mrb[0].mxu0
        %6561 = vmatprep.mubr.f32.mxu0 0.0
        %6562 = vmatmul.mubr.f32.gmra.mrb[0].mxu0 %v6426
        %v6563 = vpop.f32.mrb[0].mxu0
        %v6564 = vadd.f32 %v6375, %v6563
        %v6565 = vpop.f32.mrb[0].mxu0
        %6566 = vmatprep.mubr.f32.mxu0 0.0
        %6567 = vmatmul.mubr.f32.gmra.mrb[0].mxu0 %v6429
        %v6568 = vpop.f32.mrb[0].mxu0
        %v6569 = vadd.f32 %v6379, %v6568
        %v6570 = vpop.f32.mrb[0].mxu0
        %6571 = vmatprep.mubr.f32.mxu0 0.0
        %6572 = vmatmul.mubr.f32.gmra.mrb[0].mxu0 %v6432
        %v6573 = vpop.f32.mrb[0].mxu0
        %v6574 = vadd.f32 %v6383, %v6573
        %v6575 = vpop.f32.mrb[0].mxu0
        %6576 = vmatprep.mubr.f32.mxu0 0.0
        %6577 = vmatmul.mubr.f32.gmra.mrb[0].mxu0 %v6435
        %v6578 = vpop.f32.mrb[0].mxu0
        %v6579 = vadd.f32 %v6387, %v6578
        %v6580 = vpop.f32.mrb[0].mxu0
        %6581 = vdwg.mxu0
        %vm6582 = vcmp.ge.f32.partialorder %v6504, 0.0
        %vm6583 = vcmp.ge.f32.partialorder %v6509, 0.0
        %vm6584 = vcmp.ge.f32.partialorder %v6514, 0.0
        %vm6585 = vcmp.ge.f32.partialorder %v6519, 0.0
        %vm6586 = vcmp.ge.f32.partialorder %v6524, 0.0
        %vm6587 = vcmp.ge.f32.partialorder %v6529, 0.0
        %vm6588 = vcmp.ge.f32.partialorder %v6534, 0.0
        %vm6589 = vcmp.ge.f32.partialorder %v6539, 0.0
        %vm6590 = vcmp.ge.f32.partialorder %v6544, 0.0
        %vm6591 = vcmp.ge.f32.partialorder %v6549, 0.0
        %vm6592 = vcmp.ge.f32.partialorder %v6554, 0.0
        %vm6593 = vcmp.ge.f32.partialorder %v6559, 0.0
        %vm6594 = vcmp.ge.f32.partialorder %v6564, 0.0
        %vm6595 = vcmp.ge.f32.partialorder %v6569, 0.0
        %vm6596 = vcmp.ge.f32.partialorder %v6574, 0.0
        %vm6597 = vcmp.ge.f32.partialorder %v6579, 0.0
        %6598 = vset.pattern.permute.xlu0 42
        %6599 = vperm.xlu0 %6598, %v372
        %v6600 = vpop.permute.xlu0 %6599
        %6602 = vset.pattern.permute.xlu0 42
        %6603 = vperm.xlu0 %6602, %v377
        %v6604 = vpop.permute.xlu0 %6603
        %6606 = vset.pattern.permute.xlu0 42
        %6607 = vperm.xlu0 %6606, %v382
        %v6608 = vpop.permute.xlu0 %6607
        %6610 = vset.pattern.permute.xlu0 42
        %6611 = vperm.xlu0 %6610, %v387
        %v6612 = vpop.permute.xlu0 %6611
        %6614 = vset.pattern.permute.xlu0 42
        %6615 = vperm.xlu0 %6614, %v392
        %v6616 = vpop.permute.xlu0 %6615
        %6618 = vset.pattern.permute.xlu0 42
        %6619 = vperm.xlu0 %6618, %v397
        %v6620 = vpop.permute.xlu0 %6619
        %6622 = vset.pattern.permute.xlu0 42
        %6623 = vperm.xlu0 %6622, %v402
        %v6624 = vpop.permute.xlu0 %6623
        %6626 = vset.pattern.permute.xlu0 42
        %6627 = vperm.xlu0 %6626, %v407
        %v6628 = vpop.permute.xlu0 %6627
        %6630 = vset.pattern.permute.xlu0 42
        %6631 = vperm.xlu0 %6630, %v412
        %v6632 = vpop.permute.xlu0 %6631
        %6634 = vset.pattern.permute.xlu0 42
        %6635 = vperm.xlu0 %6634, %v417
        %v6636 = vpop.permute.xlu0 %6635
        %6638 = vset.pattern.permute.xlu0 42
        %6639 = vperm.xlu0 %6638, %v422
        %v6640 = vpop.permute.xlu0 %6639
        %6642 = vset.pattern.permute.xlu0 42
        %6643 = vperm.xlu0 %6642, %v427
        %v6644 = vpop.permute.xlu0 %6643
        %6646 = vset.pattern.permute.xlu0 42
        %6647 = vperm.xlu0 %6646, %v432
        %v6648 = vpop.permute.xlu0 %6647
        %6650 = vset.pattern.permute.xlu0 42
        %6651 = vperm.xlu0 %6650, %v437
        %v6652 = vpop.permute.xlu0 %6651
        %6654 = vset.pattern.permute.xlu0 42
        %6655 = vperm.xlu0 %6654, %v442
        %v6656 = vpop.permute.xlu0 %6655
        %6658 = vset.pattern.permute.xlu0 42
        %6659 = vperm.xlu0 %6658, %v447
        %v6660 = vpop.permute.xlu0 %6659
        %v6662 = vmul.f32 %v6600, %v6504
        %v6663 = vmul.f32 %v6604, %v6509
        %v6664 = vmul.f32 %v6608, %v6514
        %v6665 = vmul.f32 %v6612, %v6519
        %v6666 = vmul.f32 %v6616, %v6524
        %v6667 = vmul.f32 %v6620, %v6529
        %v6668 = vmul.f32 %v6624, %v6534
        %v6669 = vmul.f32 %v6628, %v6539
        %v6670 = vmul.f32 %v6632, %v6544
        %v6671 = vmul.f32 %v6636, %v6549
        %v6672 = vmul.f32 %v6640, %v6554
        %v6673 = vmul.f32 %v6644, %v6559
        %v6674 = vmul.f32 %v6648, %v6564
        %v6675 = vmul.f32 %v6652, %v6569
        %v6676 = vmul.f32 %v6656, %v6574
        %v6677 = vmul.f32 %v6660, %v6579
        %v6678 = vsel %vm6582, %v6504, %v6662
        %v6679 = vsel %vm6583, %v6509, %v6663
        %v6680 = vsel %vm6584, %v6514, %v6664
        %v6681 = vsel %vm6585, %v6519, %v6665
        %v6682 = vsel %vm6586, %v6524, %v6666
        %v6683 = vsel %vm6587, %v6529, %v6667
        %v6684 = vsel %vm6588, %v6534, %v6668
        %v6685 = vsel %vm6589, %v6539, %v6669
        %v6686 = vsel %vm6590, %v6544, %v6670
        %v6687 = vsel %vm6591, %v6549, %v6671
        %v6688 = vsel %vm6592, %v6554, %v6672
        %v6689 = vsel %vm6593, %v6559, %v6673
        %v6690 = vsel %vm6594, %v6564, %v6674
        %v6691 = vsel %vm6595, %v6569, %v6675
        %v6692 = vsel %vm6596, %v6574, %v6676
        %v6693 = vsel %vm6597, %v6579, %v6677
        %6694 = vmatprep.subr.mxu0 0.0
        %6695 = vmatpush1.msra.mxu0 %v6678
        %6696 = vmatprep.subr.mxu0 0.0
        %6697 = vmatpush1.msra.mxu0 %v6679
        %6698 = vmatprep.subr.mxu0 0.0
        %6699 = vmatpush1.msra.mxu0 %v6680
        %6700 = vmatprep.subr.mxu0 0.0
        %6701 = vmatpush1.msra.mxu0 %v6681
        %6702 = vmatprep.subr.mxu0 0.0
        %6703 = vmatpush1.msra.mxu0 %v6682
        %6704 = vmatprep.subr.mxu0 0.0
        %6705 = vmatpush1.msra.mxu0 %v6683
        %6706 = vmatprep.subr.mxu0 0.0
        %6707 = vmatpush1.msra.mxu0 %v6684
        %6708 = vmatprep.subr.mxu0 0.0
        %6709 = vmatpush1.msra.mxu0 %v6685
        %6710 = vmatprep.subr.mxu0 0.0
        %6711 = vmatpush1.msra.mxu0 %v6686
        %6712 = vmatprep.subr.mxu0 0.0
        %6713 = vmatpush1.msra.mxu0 %v6687
        %6714 = vmatprep.subr.mxu0 0.0
        %6715 = vmatpush1.msra.mxu0 %v6688
        %6716 = vmatprep.subr.mxu0 0.0
        %6717 = vmatpush1.msra.mxu0 %v6689
        %6718 = vmatprep.subr.mxu0 0.0
        %6719 = vmatpush1.msra.mxu0 %v6690
        %6720 = vmatprep.subr.mxu0 0.0
        %6721 = vmatpush1.msra.mxu0 %v6691
        %6722 = vmatprep.subr.mxu0 0.0
        %6723 = vmatpush1.msra.mxu0 %v6692
        %6724 = vmatprep.subr.mxu0 0.0
        %6725 = vmatpush1.msra.mxu0 %v6693
        %6726 = vmatprep.subr.mxu0 0.0
        %6727 = vmatpush1.msra.mxu0 0.0
        %6728 = vmatprep.subr.mxu0 0.0
        %6729 = vmatpush1.msra.mxu0 0.0
        %6730 = vmatprep.subr.mxu0 0.0
        %6731 = vmatpush1.msra.mxu0 0.0
        %6732 = vmatprep.subr.mxu0 0.0
        %6733 = vmatpush1.msra.mxu0 0.0
        %6734 = vmatprep.subr.mxu0 0.0
        %6735 = vmatpush1.msra.mxu0 0.0
        %6736 = vmatprep.subr.mxu0 0.0
        %6737 = vmatpush1.msra.mxu0 0.0
        %6738 = vmatprep.subr.mxu0 0.0
        %6739 = vmatpush1.msra.mxu0 0.0
        %6740 = vmatprep.subr.mxu0 0.0
        %6741 = vmatpush1.msra.mxu0 0.0
        %6742 = vmatprep.subr.mxu0 0.0
        %6743 = vmatpush1.msra.mxu0 0.0
        %6744 = vmatprep.subr.mxu0 0.0
        %6745 = vmatpush1.msra.mxu0 0.0
        %6746 = vmatprep.subr.mxu0 0.0
        %6747 = vmatpush1.msra.mxu0 0.0
        %6748 = vmatprep.subr.mxu0 0.0
        %6749 = vmatpush1.msra.mxu0 0.0
        %6750 = vmatprep.subr.mxu0 0.0
        %6751 = vmatpush1.msra.mxu0 0.0
        %6752 = vmatprep.subr.mxu0 0.0
        %6753 = vmatpush1.msra.mxu0 0.0
        %6754 = vmatprep.subr.mxu0 0.0
        %6755 = vmatpush1.msra.mxu0 0.0
        %6756 = vmatprep.subr.mxu0 0.0
        %6757 = vmatpush1.msra.mxu0 0.0
        %6758 = vmatprep.mubr.f32.mxu0 0.0
        %6759 = vmatmul.mubr.f32.gmra.mrb[0].mxu0 1.0
        %v6760 = vpop.f32.mrb[0].mxu0
        %v6761 = vadd.f32 0.0, %v6760
        %v6762 = vpop.f32.mrb[0].mxu0
        %6763 = vdwg.mxu0
        %v6764 = vmul.f32 %v6678, %v6678
        %v6765 = vmul.f32 %v6679, %v6679
        %v6766 = vmul.f32 %v6680, %v6680
        %v6767 = vmul.f32 %v6681, %v6681
        %v6768 = vmul.f32 %v6682, %v6682
        %v6769 = vmul.f32 %v6683, %v6683
        %v6770 = vmul.f32 %v6684, %v6684
        %v6771 = vmul.f32 %v6685, %v6685
        %v6772 = vmul.f32 %v6686, %v6686
        %v6773 = vmul.f32 %v6687, %v6687
        %v6774 = vmul.f32 %v6688, %v6688
        %v6775 = vmul.f32 %v6689, %v6689
        %v6776 = vmul.f32 %v6690, %v6690
        %v6777 = vmul.f32 %v6691, %v6691
        %v6778 = vmul.f32 %v6692, %v6692
        %v6779 = vmul.f32 %v6693, %v6693
        %6780 = vmatprep.subr.mxu0 0.0
        %6781 = vmatpush1.msra.mxu0 %v6764
        %6782 = vmatprep.subr.mxu0 0.0
        %6783 = vmatpush1.msra.mxu0 %v6765
        %6784 = vmatprep.subr.mxu0 0.0
        %6785 = vmatpush1.msra.mxu0 %v6766
        %6786 = vmatprep.subr.mxu0 0.0
        %6787 = vmatpush1.msra.mxu0 %v6767
        %6788 = vmatprep.subr.mxu0 0.0
        %6789 = vmatpush1.msra.mxu0 %v6768
        %6790 = vmatprep.subr.mxu0 0.0
        %6791 = vmatpush1.msra.mxu0 %v6769
        %6792 = vmatprep.subr.mxu0 0.0
        %6793 = vmatpush1.msra.mxu0 %v6770
        %6794 = vmatprep.subr.mxu0 0.0
        %6795 = vmatpush1.msra.mxu0 %v6771
        %6796 = vmatprep.subr.mxu0 0.0
        %6797 = vmatpush1.msra.mxu0 %v6772
        %6798 = vmatprep.subr.mxu0 0.0
        %6799 = vmatpush1.msra.mxu0 %v6773
        %6800 = vmatprep.subr.mxu0 0.0
        %6801 = vmatpush1.msra.mxu0 %v6774
        %6802 = vmatprep.subr.mxu0 0.0
        %6803 = vmatpush1.msra.mxu0 %v6775
        %6804 = vmatprep.subr.mxu0 0.0
        %6805 = vmatpush1.msra.mxu0 %v6776
        %6806 = vmatprep.subr.mxu0 0.0
        %6807 = vmatpush1.msra.mxu0 %v6777
        %6808 = vmatprep.subr.mxu0 0.0
        %6809 = vmatpush1.msra.mxu0 %v6778
        %6810 = vmatprep.subr.mxu0 0.0
        %6811 = vmatpush1.msra.mxu0 %v6779
        %6812 = vmatprep.subr.mxu0 0.0
        %6813 = vmatpush1.msra.mxu0 0.0
        %6814 = vmatprep.subr.mxu0 0.0
        %6815 = vmatpush1.msra.mxu0 0.0
        %6816 = vmatprep.subr.mxu0 0.0
        %6817 = vmatpush1.msra.mxu0 0.0
        %6818 = vmatprep.subr.mxu0 0.0
        %6819 = vmatpush1.msra.mxu0 0.0
        %6820 = vmatprep.subr.mxu0 0.0
        %6821 = vmatpush1.msra.mxu0 0.0
        %6822 = vmatprep.subr.mxu0 0.0
        %6823 = vmatpush1.msra.mxu0 0.0
        %6824 = vmatprep.subr.mxu0 0.0
        %6825 = vmatpush1.msra.mxu0 0.0
        %6826 = vmatprep.subr.mxu0 0.0
        %6827 = vmatpush1.msra.mxu0 0.0
        %6828 = vmatprep.subr.mxu0 0.0
        %6829 = vmatpush1.msra.mxu0 0.0
        %6830 = vmatprep.subr.mxu0 0.0
        %6831 = vmatpush1.msra.mxu0 0.0
        %6832 = vmatprep.subr.mxu0 0.0
        %6833 = vmatpush1.msra.mxu0 0.0
        %6834 = vmatprep.subr.mxu0 0.0
        %6835 = vmatpush1.msra.mxu0 0.0
        %6836 = vmatprep.subr.mxu0 0.0
        %6837 = vmatpush1.msra.mxu0 0.0
        %6838 = vmatprep.subr.mxu0 0.0
        %6839 = vmatpush1.msra.mxu0 0.0
        %6840 = vmatprep.subr.mxu0 0.0
        %6841 = vmatpush1.msra.mxu0 0.0
        %6842 = vmatprep.subr.mxu0 0.0
        %6843 = vmatpush1.msra.mxu0 0.0
        %6844 = vmatprep.mubr.f32.mxu0 0.0
        %6845 = vmatmul.mubr.f32.gmra.mrb[0].mxu0 1.0
        %v6846 = vpop.f32.mrb[0].mxu0
        %v6847 = vadd.f32 0.0, %v6846
        %v6848 = vpop.f32.mrb[0].mxu0
        %6849 = vdwg.mxu0
        %v6850 = vsel %vm1012, %v6761, 0.0
        %6851 = vadd.xlane.f32.xlu0 %v6850
        %v6852 = vpop.xlane.xlu0 %6851
        %v6853 = vmul.f32 %v6852, 6.1035156e-05
        %v6854 = vsel %vm1012, %v6847, 0.0
        %6855 = vadd.xlane.f32.xlu0 %v6854
        %v6856 = vpop.xlane.xlu0 %6855
        %v6857 = vmul.f32 %v6856, 6.1035156e-05
        %v6858 = vmul.f32 %v6853, %v6853
        %v6859 = vsub.f32 %v6857, %v6858
        %v6860 = vadd.f32 %v6859, 1e-05
        %v6861 = vrsqrt.pop %v6860
        %v6862 = vlaneseq
        %v6863 = vshrl.u32 %v6862, 7
        %v6864 = vsub.s32 0, %v6863
        %v6865 = vrot.slane %v6861, %v6864
        %v6866 = vmul.f32 %v372, %v6865
        %v6867 = vmul.f32 %v377, %v6865
        %v6868 = vmul.f32 %v382, %v6865
        %v6869 = vmul.f32 %v387, %v6865
        %v6870 = vmul.f32 %v392, %v6865
        %v6871 = vmul.f32 %v397, %v6865
        %v6872 = vmul.f32 %v402, %v6865
        %v6873 = vmul.f32 %v407, %v6865
        %v6874 = vmul.f32 %v412, %v6865
        %v6875 = vmul.f32 %v417, %v6865
        %v6876 = vmul.f32 %v422, %v6865
        %v6877 = vmul.f32 %v427, %v6865
        %v6878 = vmul.f32 %v432, %v6865
        %v6879 = vmul.f32 %v437, %v6865
        %v6880 = vmul.f32 %v442, %v6865
        %v6881 = vmul.f32 %v447, %v6865
        %v6882 = vlaneseq
        %v6883 = vshrl.u32 %v6882, 7
        %v6884 = vsub.s32 0, %v6883
        %v6885 = vrot.slane %v6853, %v6884
        %v6886 = vmul.f32 %v6885, %v6866
        %v6887 = vmul.f32 %v6885, %v6867
        %v6888 = vmul.f32 %v6885, %v6868
        %v6889 = vmul.f32 %v6885, %v6869
        %v6890 = vmul.f32 %v6885, %v6870
        %v6891 = vmul.f32 %v6885, %v6871
        %v6892 = vmul.f32 %v6885, %v6872
        %v6893 = vmul.f32 %v6885, %v6873
        %v6894 = vmul.f32 %v6885, %v6874
        %v6895 = vmul.f32 %v6885, %v6875
        %v6896 = vmul.f32 %v6885, %v6876
        %v6897 = vmul.f32 %v6885, %v6877
        %v6898 = vmul.f32 %v6885, %v6878
        %v6899 = vmul.f32 %v6885, %v6879
        %v6900 = vmul.f32 %v6885, %v6880
        %v6901 = vmul.f32 %v6885, %v6881
        %6918 = vrot.lane.b32.xlu0 %v6886, 1
        %v6919 = vpop.permute.xlu0 %6918
        %6920 = vrot.lane.b32.xlu0 %v6887, 1
        %v6921 = vpop.permute.xlu0 %6920
        %6922 = vrot.lane.b32.xlu0 %v6888, 1
        %v6923 = vpop.permute.xlu0 %6922
        %6924 = vrot.lane.b32.xlu0 %v6889, 1
        %v6925 = vpop.permute.xlu0 %6924
        %6926 = vrot.lane.b32.xlu0 %v6890, 1
        %v6927 = vpop.permute.xlu0 %6926
        %6928 = vrot.lane.b32.xlu0 %v6891, 1
        %v6929 = vpop.permute.xlu0 %6928
        %6930 = vrot.lane.b32.xlu0 %v6892, 1
        %v6931 = vpop.permute.xlu0 %6930
        %6932 = vrot.lane.b32.xlu0 %v6893, 1
        %v6933 = vpop.permute.xlu0 %6932
        %6934 = vrot.lane.b32.xlu0 %v6894, 1
        %v6935 = vpop.permute.xlu0 %6934
        %6936 = vrot.lane.b32.xlu0 %v6895, 1
        %v6937 = vpop.permute.xlu0 %6936
        %6938 = vrot.lane.b32.xlu0 %v6896, 1
        %v6939 = vpop.permute.xlu0 %6938
        %6940 = vrot.lane.b32.xlu0 %v6897, 1
        %v6941 = vpop.permute.xlu0 %6940
        %6942 = vrot.lane.b32.xlu0 %v6898, 1
        %v6943 = vpop.permute.xlu0 %6942
        %6944 = vrot.lane.b32.xlu0 %v6899, 1
        %v6945 = vpop.permute.xlu0 %6944
        %6946 = vrot.lane.b32.xlu0 %v6900, 1
        %v6947 = vpop.permute.xlu0 %6946
        %6948 = vrot.lane.b32.xlu0 %v6901, 1
        %v6949 = vpop.permute.xlu0 %6948
        %v6966 = vsub.f32 %v372, %v6919
        %v6967 = vsub.f32 %v377, %v6921
        %v6968 = vsub.f32 %v382, %v6923
        %v6969 = vsub.f32 %v387, %v6925
        %v6970 = vsub.f32 %v392, %v6927
        %v6971 = vsub.f32 %v397, %v6929
        %v6972 = vsub.f32 %v402, %v6931
        %v6973 = vsub.f32 %v407, %v6933
        %v6974 = vsub.f32 %v412, %v6935
        %v6975 = vsub.f32 %v417, %v6937
        %v6976 = vsub.f32 %v422, %v6939
        %v6977 = vsub.f32 %v427, %v6941
        %v6978 = vsub.f32 %v432, %v6943
        %v6979 = vsub.f32 %v437, %v6945
        %v6980 = vsub.f32 %v442, %v6947
        %v6981 = vsub.f32 %v447, %v6949
        %6983 = vset.pattern.permute.xlu0 33
        %6984 = vperm.xlu0 %6983, %v6866
        %v6985 = vpop.permute.xlu0 %6984
        %6988 = vset.pattern.permute.xlu0 33
        %6989 = vperm.xlu0 %6988, %v6867
        %v6990 = vpop.permute.xlu0 %6989
        %6993 = vset.pattern.permute.xlu0 33
        %6994 = vperm.xlu0 %6993, %v6868
        %v6995 = vpop.permute.xlu0 %6994
        %6998 = vset.pattern.permute.xlu0 33
        %6999 = vperm.xlu0 %6998, %v6869
        %v7000 = vpop.permute.xlu0 %6999
        %7003 = vset.pattern.permute.xlu0 33
        %7004 = vperm.xlu0 %7003, %v6870
        %v7005 = vpop.permute.xlu0 %7004
        %7008 = vset.pattern.permute.xlu0 33
        %7009 = vperm.xlu0 %7008, %v6871
        %v7010 = vpop.permute.xlu0 %7009
        %7013 = vset.pattern.permute.xlu0 33
        %7014 = vperm.xlu0 %7013, %v6872
        %v7015 = vpop.permute.xlu0 %7014
        %7018 = vset.pattern.permute.xlu0 33
        %7019 = vperm.xlu0 %7018, %v6873
        %v7020 = vpop.permute.xlu0 %7019
        %7023 = vset.pattern.permute.xlu0 33
        %7024 = vperm.xlu0 %7023, %v6874
        %v7025 = vpop.permute.xlu0 %7024
        %7028 = vset.pattern.permute.xlu0 33
        %7029 = vperm.xlu0 %7028, %v6875
        %v7030 = vpop.permute.xlu0 %7029
        %7033 = vset.pattern.permute.xlu0 33
        %7034 = vperm.xlu0 %7033, %v6876
        %v7035 = vpop.permute.xlu0 %7034
        %7038 = vset.pattern.permute.xlu0 33
        %7039 = vperm.xlu0 %7038, %v6877
        %v7040 = vpop.permute.xlu0 %7039
        %7043 = vset.pattern.permute.xlu0 33
        %7044 = vperm.xlu0 %7043, %v6878
        %v7045 = vpop.permute.xlu0 %7044
        %7048 = vset.pattern.permute.xlu0 33
        %7049 = vperm.xlu0 %7048, %v6879
        %v7050 = vpop.permute.xlu0 %7049
        %7053 = vset.pattern.permute.xlu0 33
        %7054 = vperm.xlu0 %7053, %v6880
        %v7055 = vpop.permute.xlu0 %7054
        %7058 = vset.pattern.permute.xlu0 33
        %7059 = vperm.xlu0 %7058, %v6881
        %v7060 = vpop.permute.xlu0 %7059
        %v7062 = vmul.f32 %v6678, %v6985
        %v7063 = vmul.f32 %v6679, %v6990
        %v7064 = vmul.f32 %v6680, %v6995
        %v7065 = vmul.f32 %v6681, %v7000
        %v7066 = vmul.f32 %v6682, %v7005
        %v7067 = vmul.f32 %v6683, %v7010
        %v7068 = vmul.f32 %v6684, %v7015
        %v7069 = vmul.f32 %v6685, %v7020
        %v7070 = vmul.f32 %v6686, %v7025
        %v7071 = vmul.f32 %v6687, %v7030
        %v7072 = vmul.f32 %v6688, %v7035
        %v7073 = vmul.f32 %v6689, %v7040
        %v7074 = vmul.f32 %v6690, %v7045
        %v7075 = vmul.f32 %v6691, %v7050
        %v7076 = vmul.f32 %v6692, %v7055
        %v7077 = vmul.f32 %v6693, %v7060
        %7079 = vset.pattern.permute.xlu0 34
        %7080 = vperm.xlu0 %7079, %v6966
        %v7081 = vpop.permute.xlu0 %7080
        %7084 = vset.pattern.permute.xlu0 34
        %7085 = vperm.xlu0 %7084, %v6967
        %v7086 = vpop.permute.xlu0 %7085
        %7089 = vset.pattern.permute.xlu0 34
        %7090 = vperm.xlu0 %7089, %v6968
        %v7091 = vpop.permute.xlu0 %7090
        %7094 = vset.pattern.permute.xlu0 34
        %7095 = vperm.xlu0 %7094, %v6969
        %v7096 = vpop.permute.xlu0 %7095
        %7099 = vset.pattern.permute.xlu0 34
        %7100 = vperm.xlu0 %7099, %v6970
        %v7101 = vpop.permute.xlu0 %7100
        %7104 = vset.pattern.permute.xlu0 34
        %7105 = vperm.xlu0 %7104, %v6971
        %v7106 = vpop.permute.xlu0 %7105
        %7109 = vset.pattern.permute.xlu0 34
        %7110 = vperm.xlu0 %7109, %v6972
        %v7111 = vpop.permute.xlu0 %7110
        %7114 = vset.pattern.permute.xlu0 34
        %7115 = vperm.xlu0 %7114, %v6973
        %v7116 = vpop.permute.xlu0 %7115
        %7119 = vset.pattern.permute.xlu0 34
        %7120 = vperm.xlu0 %7119, %v6974
        %v7121 = vpop.permute.xlu0 %7120
        %7124 = vset.pattern.permute.xlu0 34
        %7125 = vperm.xlu0 %7124, %v6975
        %v7126 = vpop.permute.xlu0 %7125
        %7129 = vset.pattern.permute.xlu0 34
        %7130 = vperm.xlu0 %7129, %v6976
        %v7131 = vpop.permute.xlu0 %7130
        %7134 = vset.pattern.permute.xlu0 34
        %7135 = vperm.xlu0 %7134, %v6977
        %v7136 = vpop.permute.xlu0 %7135
        %7139 = vset.pattern.permute.xlu0 34
        %7140 = vperm.xlu0 %7139, %v6978
        %v7141 = vpop.permute.xlu0 %7140
        %7144 = vset.pattern.permute.xlu0 34
        %7145 = vperm.xlu0 %7144, %v6979
        %v7146 = vpop.permute.xlu0 %7145
        %7149 = vset.pattern.permute.xlu0 34
        %7150 = vperm.xlu0 %7149, %v6980
        %v7151 = vpop.permute.xlu0 %7150
        %7154 = vset.pattern.permute.xlu0 34
        %7155 = vperm.xlu0 %7154, %v6981
        %v7156 = vpop.permute.xlu0 %7155
        %v7158 = vadd.f32 %v7062, %v7081
        %v7159 = vadd.f32 %v7063, %v7086
        %v7160 = vadd.f32 %v7064, %v7091
        %v7161 = vadd.f32 %v7065, %v7096
        %v7162 = vadd.f32 %v7066, %v7101
        %v7163 = vadd.f32 %v7067, %v7106
        %v7164 = vadd.f32 %v7068, %v7111
        %v7165 = vadd.f32 %v7069, %v7116
        %v7166 = vadd.f32 %v7070, %v7121
        %v7167 = vadd.f32 %v7071, %v7126
        %v7168 = vadd.f32 %v7072, %v7131
        %v7169 = vadd.f32 %v7073, %v7136
        %v7170 = vadd.f32 %v7074, %v7141
        %v7171 = vadd.f32 %v7075, %v7146
        %v7172 = vadd.f32 %v7076, %v7151
        %v7173 = vadd.f32 %v7077, %v7156
        %7190 = vrot.lane.b32.xlu0 %v7158, 8
        %v7191 = vpop.permute.xlu0 %7190
        %7192 = vrot.lane.b32.xlu0 %v7159, 8
        %v7193 = vpop.permute.xlu0 %7192
        %7194 = vrot.lane.b32.xlu0 %v7160, 8
        %v7195 = vpop.permute.xlu0 %7194
        %7196 = vrot.lane.b32.xlu0 %v7161, 8
        %v7197 = vpop.permute.xlu0 %7196
        %7198 = vrot.lane.b32.xlu0 %v7162, 8
        %v7199 = vpop.permute.xlu0 %7198
        %7200 = vrot.lane.b32.xlu0 %v7163, 8
        %v7201 = vpop.permute.xlu0 %7200
        %7202 = vrot.lane.b32.xlu0 %v7164, 8
        %v7203 = vpop.permute.xlu0 %7202
        %7204 = vrot.lane.b32.xlu0 %v7165, 8
        %v7205 = vpop.permute.xlu0 %7204
        %7206 = vrot.lane.b32.xlu0 %v7166, 8
        %v7207 = vpop.permute.xlu0 %7206
        %7208 = vrot.lane.b32.xlu0 %v7167, 8
        %v7209 = vpop.permute.xlu0 %7208
        %7210 = vrot.lane.b32.xlu0 %v7168, 8
        %v7211 = vpop.permute.xlu0 %7210
        %7212 = vrot.lane.b32.xlu0 %v7169, 8
        %v7213 = vpop.permute.xlu0 %7212
        %7214 = vrot.lane.b32.xlu0 %v7170, 8
        %v7215 = vpop.permute.xlu0 %7214
        %7216 = vrot.lane.b32.xlu0 %v7171, 8
        %v7217 = vpop.permute.xlu0 %7216
        %7218 = vrot.lane.b32.xlu0 %v7172, 8
        %v7219 = vpop.permute.xlu0 %7218
        %7220 = vrot.lane.b32.xlu0 %v7173, 8
        %v7221 = vpop.permute.xlu0 %7220
        %7238 = vst.msk [vmem:[#allocation2] sm:$0xff] %vm1401, %v7191
        %7239 = vst.msk [vmem:[#allocation2 + $0x8] sm:$0xff] %vm196, %v7191
        %7240 = vst.msk [vmem:[#allocation2 + $0x10] sm:$0xff] %vm1401, %v7193
        %7241 = vst.msk [vmem:[#allocation2 + $0x18] sm:$0xff] %vm196, %v7193
        %7242 = vst.msk [vmem:[#allocation2 + $0x20] sm:$0xff] %vm1401, %v7195
        %7243 = vst.msk [vmem:[#allocation2 + $0x28] sm:$0xff] %vm196, %v7195
        %7244 = vst.msk [vmem:[#allocation2 + $0x30] sm:$0xff] %vm1401, %v7197
        %7245 = vst.msk [vmem:[#allocation2 + $0x38] sm:$0xff] %vm196, %v7197
        %7246 = vst.msk [vmem:[#allocation2 + $0x40] sm:$0xff] %vm1401, %v7199
        %7247 = vst.msk [vmem:[#allocation2 + $0x48] sm:$0xff] %vm196, %v7199
        %7248 = vst.msk [vmem:[#allocation2 + $0x50] sm:$0xff] %vm1401, %v7201
        %7249 = vst.msk [vmem:[#allocation2 + $0x58] sm:$0xff] %vm196, %v7201
        %7250 = vst.msk [vmem:[#allocation2 + $0x60] sm:$0xff] %vm1401, %v7203
        %7251 = vst.msk [vmem:[#allocation2 + $0x68] sm:$0xff] %vm196, %v7203
        %7252 = vst.msk [vmem:[#allocation2 + $0x70] sm:$0xff] %vm1401, %v7205
        %7253 = vst.msk [vmem:[#allocation2 + $0x78] sm:$0xff] %vm196, %v7205
        %7254 = vst.msk [vmem:[#allocation2 + $0x80] sm:$0xff] %vm1401, %v7207
        %7255 = vst.msk [vmem:[#allocation2 + $0x88] sm:$0xff] %vm196, %v7207
        %7256 = vst.msk [vmem:[#allocation2 + $0x90] sm:$0xff] %vm1401, %v7209
        %7257 = vst.msk [vmem:[#allocation2 + $0x98] sm:$0xff] %vm196, %v7209
        %7258 = vst.msk [vmem:[#allocation2 + $0xa0] sm:$0xff] %vm1401, %v7211
        %7259 = vst.msk [vmem:[#allocation2 + $0xa8] sm:$0xff] %vm196, %v7211
        %7260 = vst.msk [vmem:[#allocation2 + $0xb0] sm:$0xff] %vm1401, %v7213
        %7261 = vst.msk [vmem:[#allocation2 + $0xb8] sm:$0xff] %vm196, %v7213
        %7262 = vst.msk [vmem:[#allocation2 + $0xc0] sm:$0xff] %vm1401, %v7215
        %7263 = vst.msk [vmem:[#allocation2 + $0xc8] sm:$0xff] %vm196, %v7215
        %7264 = vst.msk [vmem:[#allocation2 + $0xd0] sm:$0xff] %vm1401, %v7217
        %7265 = vst.msk [vmem:[#allocation2 + $0xd8] sm:$0xff] %vm196, %v7217
        %7266 = vst.msk [vmem:[#allocation2 + $0xe0] sm:$0xff] %vm1401, %v7219
        %7267 = vst.msk [vmem:[#allocation2 + $0xe8] sm:$0xff] %vm196, %v7219
        %7268 = vst.msk [vmem:[#allocation2 + $0xf0] sm:$0xff] %vm1401, %v7221
        %7269 = vst.msk [vmem:[#allocation2 + $0xf8] sm:$0xff] %vm196, %v7221
        %v7270 = vld [vmem:[#allocation2] sm:$0xff]
        %v7271 = vld [vmem:[#allocation2 + $0x8] sm:$0xff]
        %v7272 = vld [vmem:[#allocation2 + $0x10] sm:$0xff]
        %v7273 = vld [vmem:[#allocation2 + $0x18] sm:$0xff]
        %v7274 = vld [vmem:[#allocation2 + $0x20] sm:$0xff]
        %v7275 = vld [vmem:[#allocation2 + $0x28] sm:$0xff]
        %v7276 = vld [vmem:[#allocation2 + $0x30] sm:$0xff]
        %v7277 = vld [vmem:[#allocation2 + $0x38] sm:$0xff]
        %v7278 = vld [vmem:[#allocation2 + $0x40] sm:$0xff]
        %v7279 = vld [vmem:[#allocation2 + $0x48] sm:$0xff]
        %v7280 = vld [vmem:[#allocation2 + $0x50] sm:$0xff]
        %v7281 = vld [vmem:[#allocation2 + $0x58] sm:$0xff]
        %v7282 = vld [vmem:[#allocation2 + $0x60] sm:$0xff]
        %v7283 = vld [vmem:[#allocation2 + $0x68] sm:$0xff]
        %v7284 = vld [vmem:[#allocation2 + $0x70] sm:$0xff]
        %v7285 = vld [vmem:[#allocation2 + $0x78] sm:$0xff]
        %v7286 = vld [vmem:[#allocation2 + $0x80] sm:$0xff]
        %v7287 = vld [vmem:[#allocation2 + $0x88] sm:$0xff]
        %v7288 = vld [vmem:[#allocation2 + $0x90] sm:$0xff]
        %v7289 = vld [vmem:[#allocation2 + $0x98] sm:$0xff]
        %v7290 = vld [vmem:[#allocation2 + $0xa0] sm:$0xff]
        %v7291 = vld [vmem:[#allocation2 + $0xa8] sm:$0xff]
        %v7292 = vld [vmem:[#allocation2 + $0xb0] sm:$0xff]
        %v7293 = vld [vmem:[#allocation2 + $0xb8] sm:$0xff]
        %v7294 = vld [vmem:[#allocation2 + $0xc0] sm:$0xff]
        %v7295 = vld [vmem:[#allocation2 + $0xc8] sm:$0xff]
        %v7296 = vld [vmem:[#allocation2 + $0xd0] sm:$0xff]
        %v7297 = vld [vmem:[#allocation2 + $0xd8] sm:$0xff]
        %v7298 = vld [vmem:[#allocation2 + $0xe0] sm:$0xff]
        %v7299 = vld [vmem:[#allocation2 + $0xe8] sm:$0xff]
        %v7300 = vld [vmem:[#allocation2 + $0xf0] sm:$0xff]
        %v7301 = vld [vmem:[#allocation2 + $0xf8] sm:$0xff]
        %7302 = vset.pattern.permute.xlu0 38
        %7303 = vperm.xlu0 %7302, %v372
        %v7304 = vpop.permute.xlu0 %7303
        %7306 = vset.pattern.permute.xlu0 38
        %7307 = vperm.xlu0 %7306, %v377
        %v7308 = vpop.permute.xlu0 %7307
        %7310 = vset.pattern.permute.xlu0 38
        %7311 = vperm.xlu0 %7310, %v382
        %v7312 = vpop.permute.xlu0 %7311
        %7314 = vset.pattern.permute.xlu0 38
        %7315 = vperm.xlu0 %7314, %v387
        %v7316 = vpop.permute.xlu0 %7315
        %7318 = vset.pattern.permute.xlu0 38
        %7319 = vperm.xlu0 %7318, %v392
        %v7320 = vpop.permute.xlu0 %7319
        %7322 = vset.pattern.permute.xlu0 38
        %7323 = vperm.xlu0 %7322, %v397
        %v7324 = vpop.permute.xlu0 %7323
        %7326 = vset.pattern.permute.xlu0 38
        %7327 = vperm.xlu0 %7326, %v402
        %v7328 = vpop.permute.xlu0 %7327
        %7330 = vset.pattern.permute.xlu0 38
        %7331 = vperm.xlu0 %7330, %v407
        %v7332 = vpop.permute.xlu0 %7331
        %7334 = vset.pattern.permute.xlu0 38
        %7335 = vperm.xlu0 %7334, %v412
        %v7336 = vpop.permute.xlu0 %7335
        %7338 = vset.pattern.permute.xlu0 38
        %7339 = vperm.xlu0 %7338, %v417
        %v7340 = vpop.permute.xlu0 %7339
        %7342 = vset.pattern.permute.xlu0 38
        %7343 = vperm.xlu0 %7342, %v422
        %v7344 = vpop.permute.xlu0 %7343
        %7346 = vset.pattern.permute.xlu0 38
        %7347 = vperm.xlu0 %7346, %v427
        %v7348 = vpop.permute.xlu0 %7347
        %7350 = vset.pattern.permute.xlu0 38
        %7351 = vperm.xlu0 %7350, %v432
        %v7352 = vpop.permute.xlu0 %7351
        %7354 = vset.pattern.permute.xlu0 38
        %7355 = vperm.xlu0 %7354, %v437
        %v7356 = vpop.permute.xlu0 %7355
        %7358 = vset.pattern.permute.xlu0 38
        %7359 = vperm.xlu0 %7358, %v442
        %v7360 = vpop.permute.xlu0 %7359
        %7362 = vset.pattern.permute.xlu0 38
        %7363 = vperm.xlu0 %7362, %v447
        %v7364 = vpop.permute.xlu0 %7363
        %v7366 = vmul.f32 %v7304, %v7270
        %v7367 = vmul.f32 %v7304, %v7271
        %v7368 = vmul.f32 %v7308, %v7272
        %v7369 = vmul.f32 %v7308, %v7273
        %v7370 = vmul.f32 %v7312, %v7274
        %v7371 = vmul.f32 %v7312, %v7275
        %v7372 = vmul.f32 %v7316, %v7276
        %v7373 = vmul.f32 %v7316, %v7277
        %v7374 = vmul.f32 %v7320, %v7278
        %v7375 = vmul.f32 %v7320, %v7279
        %v7376 = vmul.f32 %v7324, %v7280
        %v7377 = vmul.f32 %v7324, %v7281
        %v7378 = vmul.f32 %v7328, %v7282
        %v7379 = vmul.f32 %v7328, %v7283
        %v7380 = vmul.f32 %v7332, %v7284
        %v7381 = vmul.f32 %v7332, %v7285
        %v7382 = vmul.f32 %v7336, %v7286
        %v7383 = vmul.f32 %v7336, %v7287
        %v7384 = vmul.f32 %v7340, %v7288
        %v7385 = vmul.f32 %v7340, %v7289
        %v7386 = vmul.f32 %v7344, %v7290
        %v7387 = vmul.f32 %v7344, %v7291
        %v7388 = vmul.f32 %v7348, %v7292
        %v7389 = vmul.f32 %v7348, %v7293
        %v7390 = vmul.f32 %v7352, %v7294
        %v7391 = vmul.f32 %v7352, %v7295
        %v7392 = vmul.f32 %v7356, %v7296
        %v7393 = vmul.f32 %v7356, %v7297
        %v7394 = vmul.f32 %v7360, %v7298
        %v7395 = vmul.f32 %v7360, %v7299
        %v7396 = vmul.f32 %v7364, %v7300
        %v7397 = vmul.f32 %v7364, %v7301
        %7398 = vset.pattern.permute.xlu0 35
        %7399 = vperm.xlu0 %7398, %v372
        %v7400 = vpop.permute.xlu0 %7399
        %7402 = vset.pattern.permute.xlu0 35
        %7403 = vperm.xlu0 %7402, %v377
        %v7404 = vpop.permute.xlu0 %7403
        %7406 = vset.pattern.permute.xlu0 35
        %7407 = vperm.xlu0 %7406, %v382
        %v7408 = vpop.permute.xlu0 %7407
        %7410 = vset.pattern.permute.xlu0 35
        %7411 = vperm.xlu0 %7410, %v387
        %v7412 = vpop.permute.xlu0 %7411
        %7414 = vset.pattern.permute.xlu0 35
        %7415 = vperm.xlu0 %7414, %v392
        %v7416 = vpop.permute.xlu0 %7415
        %7418 = vset.pattern.permute.xlu0 35
        %7419 = vperm.xlu0 %7418, %v397
        %v7420 = vpop.permute.xlu0 %7419
        %7422 = vset.pattern.permute.xlu0 35
        %7423 = vperm.xlu0 %7422, %v402
        %v7424 = vpop.permute.xlu0 %7423
        %7426 = vset.pattern.permute.xlu0 35
        %7427 = vperm.xlu0 %7426, %v407
        %v7428 = vpop.permute.xlu0 %7427
        %7430 = vset.pattern.permute.xlu0 35
        %7431 = vperm.xlu0 %7430, %v412
        %v7432 = vpop.permute.xlu0 %7431
        %7434 = vset.pattern.permute.xlu0 35
        %7435 = vperm.xlu0 %7434, %v417
        %v7436 = vpop.permute.xlu0 %7435
        %7438 = vset.pattern.permute.xlu0 35
        %7439 = vperm.xlu0 %7438, %v422
        %v7440 = vpop.permute.xlu0 %7439
        %7442 = vset.pattern.permute.xlu0 35
        %7443 = vperm.xlu0 %7442, %v427
        %v7444 = vpop.permute.xlu0 %7443
        %7446 = vset.pattern.permute.xlu0 35
        %7447 = vperm.xlu0 %7446, %v432
        %v7448 = vpop.permute.xlu0 %7447
        %7450 = vset.pattern.permute.xlu0 35
        %7451 = vperm.xlu0 %7450, %v437
        %v7452 = vpop.permute.xlu0 %7451
        %7454 = vset.pattern.permute.xlu0 35
        %7455 = vperm.xlu0 %7454, %v442
        %v7456 = vpop.permute.xlu0 %7455
        %7458 = vset.pattern.permute.xlu0 35
        %7459 = vperm.xlu0 %7458, %v447
        %v7460 = vpop.permute.xlu0 %7459
        %v7462 = vadd.f32 %v7400, %v7366
        %v7463 = vadd.f32 %v7400, %v7367
        %v7464 = vadd.f32 %v7404, %v7368
        %v7465 = vadd.f32 %v7404, %v7369
        %v7466 = vadd.f32 %v7408, %v7370
        %v7467 = vadd.f32 %v7408, %v7371
        %v7468 = vadd.f32 %v7412, %v7372
        %v7469 = vadd.f32 %v7412, %v7373
        %v7470 = vadd.f32 %v7416, %v7374
        %v7471 = vadd.f32 %v7416, %v7375
        %v7472 = vadd.f32 %v7420, %v7376
        %v7473 = vadd.f32 %v7420, %v7377
        %v7474 = vadd.f32 %v7424, %v7378
        %v7475 = vadd.f32 %v7424, %v7379
        %v7476 = vadd.f32 %v7428, %v7380
        %v7477 = vadd.f32 %v7428, %v7381
        %v7478 = vadd.f32 %v7432, %v7382
        %v7479 = vadd.f32 %v7432, %v7383
        %v7480 = vadd.f32 %v7436, %v7384
        %v7481 = vadd.f32 %v7436, %v7385
        %v7482 = vadd.f32 %v7440, %v7386
        %v7483 = vadd.f32 %v7440, %v7387
        %v7484 = vadd.f32 %v7444, %v7388
        %v7485 = vadd.f32 %v7444, %v7389
        %v7486 = vadd.f32 %v7448, %v7390
        %v7487 = vadd.f32 %v7448, %v7391
        %v7488 = vadd.f32 %v7452, %v7392
        %v7489 = vadd.f32 %v7452, %v7393
        %v7490 = vadd.f32 %v7456, %v7394
        %v7491 = vadd.f32 %v7456, %v7395
        %v7492 = vadd.f32 %v7460, %v7396
        %v7493 = vadd.f32 %v7460, %v7397
        %7494 = vset.pattern.permute.xlu0 39
        %7495 = vperm.xlu0 %7494, %v372
        %v7496 = vpop.permute.xlu0 %7495
        %7498 = vset.pattern.permute.xlu0 39
        %7499 = vperm.xlu0 %7498, %v377
        %v7500 = vpop.permute.xlu0 %7499
        %7502 = vset.pattern.permute.xlu0 39
        %7503 = vperm.xlu0 %7502, %v382
        %v7504 = vpop.permute.xlu0 %7503
        %7506 = vset.pattern.permute.xlu0 39
        %7507 = vperm.xlu0 %7506, %v387
        %v7508 = vpop.permute.xlu0 %7507
        %7510 = vset.pattern.permute.xlu0 39
        %7511 = vperm.xlu0 %7510, %v392
        %v7512 = vpop.permute.xlu0 %7511
        %7514 = vset.pattern.permute.xlu0 39
        %7515 = vperm.xlu0 %7514, %v397
        %v7516 = vpop.permute.xlu0 %7515
        %7518 = vset.pattern.permute.xlu0 39
        %7519 = vperm.xlu0 %7518, %v402
        %v7520 = vpop.permute.xlu0 %7519
        %7522 = vset.pattern.permute.xlu0 39
        %7523 = vperm.xlu0 %7522, %v407
        %v7524 = vpop.permute.xlu0 %7523
        %7526 = vset.pattern.permute.xlu0 39
        %7527 = vperm.xlu0 %7526, %v412
        %v7528 = vpop.permute.xlu0 %7527
        %7530 = vset.pattern.permute.xlu0 39
        %7531 = vperm.xlu0 %7530, %v417
        %v7532 = vpop.permute.xlu0 %7531
        %7534 = vset.pattern.permute.xlu0 39
        %7535 = vperm.xlu0 %7534, %v422
        %v7536 = vpop.permute.xlu0 %7535
        %7538 = vset.pattern.permute.xlu0 39
        %7539 = vperm.xlu0 %7538, %v427
        %v7540 = vpop.permute.xlu0 %7539
        %7542 = vset.pattern.permute.xlu0 39
        %7543 = vperm.xlu0 %7542, %v432
        %v7544 = vpop.permute.xlu0 %7543
        %7546 = vset.pattern.permute.xlu0 39
        %7547 = vperm.xlu0 %7546, %v437
        %v7548 = vpop.permute.xlu0 %7547
        %7550 = vset.pattern.permute.xlu0 39
        %7551 = vperm.xlu0 %7550, %v442
        %v7552 = vpop.permute.xlu0 %7551
        %7554 = vset.pattern.permute.xlu0 39
        %7555 = vperm.xlu0 %7554, %v447
        %v7556 = vpop.permute.xlu0 %7555
        %v7558 = vmul.f32 %v7496, %v7270
        %v7559 = vmul.f32 %v7496, %v7271
        %v7560 = vmul.f32 %v7500, %v7272
        %v7561 = vmul.f32 %v7500, %v7273
        %v7562 = vmul.f32 %v7504, %v7274
        %v7563 = vmul.f32 %v7504, %v7275
        %v7564 = vmul.f32 %v7508, %v7276
        %v7565 = vmul.f32 %v7508, %v7277
        %v7566 = vmul.f32 %v7512, %v7278
        %v7567 = vmul.f32 %v7512, %v7279
        %v7568 = vmul.f32 %v7516, %v7280
        %v7569 = vmul.f32 %v7516, %v7281
        %v7570 = vmul.f32 %v7520, %v7282
        %v7571 = vmul.f32 %v7520, %v7283
        %v7572 = vmul.f32 %v7524, %v7284
        %v7573 = vmul.f32 %v7524, %v7285
        %v7574 = vmul.f32 %v7528, %v7286
        %v7575 = vmul.f32 %v7528, %v7287
        %v7576 = vmul.f32 %v7532, %v7288
        %v7577 = vmul.f32 %v7532, %v7289
        %v7578 = vmul.f32 %v7536, %v7290
        %v7579 = vmul.f32 %v7536, %v7291
        %v7580 = vmul.f32 %v7540, %v7292
        %v7581 = vmul.f32 %v7540, %v7293
        %v7582 = vmul.f32 %v7544, %v7294
        %v7583 = vmul.f32 %v7544, %v7295
        %v7584 = vmul.f32 %v7548, %v7296
        %v7585 = vmul.f32 %v7548, %v7297
        %v7586 = vmul.f32 %v7552, %v7298
        %v7587 = vmul.f32 %v7552, %v7299
        %v7588 = vmul.f32 %v7556, %v7300
        %v7589 = vmul.f32 %v7556, %v7301
        %7622 = vrot.lane.b32.xlu0 %v7558, 124
        %v7623 = vpop.permute.xlu0 %7622
        %7624 = vrot.lane.b32.xlu0 %v7559, 124
        %v7625 = vpop.permute.xlu0 %7624
        %7626 = vrot.lane.b32.xlu0 %v7560, 124
        %v7627 = vpop.permute.xlu0 %7626
        %7628 = vrot.lane.b32.xlu0 %v7561, 124
        %v7629 = vpop.permute.xlu0 %7628
        %7630 = vrot.lane.b32.xlu0 %v7562, 124
        %v7631 = vpop.permute.xlu0 %7630
        %7632 = vrot.lane.b32.xlu0 %v7563, 124
        %v7633 = vpop.permute.xlu0 %7632
        %7634 = vrot.lane.b32.xlu0 %v7564, 124
        %v7635 = vpop.permute.xlu0 %7634
        %7636 = vrot.lane.b32.xlu0 %v7565, 124
        %v7637 = vpop.permute.xlu0 %7636
        %7638 = vrot.lane.b32.xlu0 %v7566, 124
        %v7639 = vpop.permute.xlu0 %7638
        %7640 = vrot.lane.b32.xlu0 %v7567, 124
        %v7641 = vpop.permute.xlu0 %7640
        %7642 = vrot.lane.b32.xlu0 %v7568, 124
        %v7643 = vpop.permute.xlu0 %7642
        %7644 = vrot.lane.b32.xlu0 %v7569, 124
        %v7645 = vpop.permute.xlu0 %7644
        %7646 = vrot.lane.b32.xlu0 %v7570, 124
        %v7647 = vpop.permute.xlu0 %7646
        %7648 = vrot.lane.b32.xlu0 %v7571, 124
        %v7649 = vpop.permute.xlu0 %7648
        %7650 = vrot.lane.b32.xlu0 %v7572, 124
        %v7651 = vpop.permute.xlu0 %7650
        %7652 = vrot.lane.b32.xlu0 %v7573, 124
        %v7653 = vpop.permute.xlu0 %7652
        %7654 = vrot.lane.b32.xlu0 %v7574, 124
        %v7655 = vpop.permute.xlu0 %7654
        %7656 = vrot.lane.b32.xlu0 %v7575, 124
        %v7657 = vpop.permute.xlu0 %7656
        %7658 = vrot.lane.b32.xlu0 %v7576, 124
        %v7659 = vpop.permute.xlu0 %7658
        %7660 = vrot.lane.b32.xlu0 %v7577, 124
        %v7661 = vpop.permute.xlu0 %7660
        %7662 = vrot.lane.b32.xlu0 %v7578, 124
        %v7663 = vpop.permute.xlu0 %7662
        %7664 = vrot.lane.b32.xlu0 %v7579, 124
        %v7665 = vpop.permute.xlu0 %7664
        %7666 = vrot.lane.b32.xlu0 %v7580, 124
        %v7667 = vpop.permute.xlu0 %7666
        %7668 = vrot.lane.b32.xlu0 %v7581, 124
        %v7669 = vpop.permute.xlu0 %7668
        %7670 = vrot.lane.b32.xlu0 %v7582, 124
        %v7671 = vpop.permute.xlu0 %7670
        %7672 = vrot.lane.b32.xlu0 %v7583, 124
        %v7673 = vpop.permute.xlu0 %7672
        %7674 = vrot.lane.b32.xlu0 %v7584, 124
        %v7675 = vpop.permute.xlu0 %7674
        %7676 = vrot.lane.b32.xlu0 %v7585, 124
        %v7677 = vpop.permute.xlu0 %7676
        %7678 = vrot.lane.b32.xlu0 %v7586, 124
        %v7679 = vpop.permute.xlu0 %7678
        %7680 = vrot.lane.b32.xlu0 %v7587, 124
        %v7681 = vpop.permute.xlu0 %7680
        %7682 = vrot.lane.b32.xlu0 %v7588, 124
        %v7683 = vpop.permute.xlu0 %7682
        %7684 = vrot.lane.b32.xlu0 %v7589, 124
        %v7685 = vpop.permute.xlu0 %7684
        %v7686 = vsel %vm5040, %v7623, %v7625
        %v7687 = vsel %vm5040, %v7627, %v7629
        %v7688 = vsel %vm5040, %v7631, %v7633
        %v7689 = vsel %vm5040, %v7635, %v7637
        %v7690 = vsel %vm5040, %v7639, %v7641
        %v7691 = vsel %vm5040, %v7643, %v7645
        %v7692 = vsel %vm5040, %v7647, %v7649
        %v7693 = vsel %vm5040, %v7651, %v7653
        %v7694 = vsel %vm5040, %v7655, %v7657
        %v7695 = vsel %vm5040, %v7659, %v7661
        %v7696 = vsel %vm5040, %v7663, %v7665
        %v7697 = vsel %vm5040, %v7667, %v7669
        %v7698 = vsel %vm5040, %v7671, %v7673
        %v7699 = vsel %vm5040, %v7675, %v7677
        %v7700 = vsel %vm5040, %v7679, %v7681
        %v7701 = vsel %vm5040, %v7683, %v7685
        %v7734 = vadd.f32 %v7462, %v7686
        %v7735 = vadd.f32 %v7463, %v7625
        %v7736 = vadd.f32 %v7464, %v7687
        %v7737 = vadd.f32 %v7465, %v7629
        %v7738 = vadd.f32 %v7466, %v7688
        %v7739 = vadd.f32 %v7467, %v7633
        %v7740 = vadd.f32 %v7468, %v7689
        %v7741 = vadd.f32 %v7469, %v7637
        %v7742 = vadd.f32 %v7470, %v7690
        %v7743 = vadd.f32 %v7471, %v7641
        %v7744 = vadd.f32 %v7472, %v7691
        %v7745 = vadd.f32 %v7473, %v7645
        %v7746 = vadd.f32 %v7474, %v7692
        %v7747 = vadd.f32 %v7475, %v7649
        %v7748 = vadd.f32 %v7476, %v7693
        %v7749 = vadd.f32 %v7477, %v7653
        %v7750 = vadd.f32 %v7478, %v7694
        %v7751 = vadd.f32 %v7479, %v7657
        %v7752 = vadd.f32 %v7480, %v7695
        %v7753 = vadd.f32 %v7481, %v7661
        %v7754 = vadd.f32 %v7482, %v7696
        %v7755 = vadd.f32 %v7483, %v7665
        %v7756 = vadd.f32 %v7484, %v7697
        %v7757 = vadd.f32 %v7485, %v7669
        %v7758 = vadd.f32 %v7486, %v7698
        %v7759 = vadd.f32 %v7487, %v7673
        %v7760 = vadd.f32 %v7488, %v7699
        %v7761 = vadd.f32 %v7489, %v7677
        %v7762 = vadd.f32 %v7490, %v7700
        %v7763 = vadd.f32 %v7491, %v7681
        %v7764 = vadd.f32 %v7492, %v7701
        %v7765 = vadd.f32 %v7493, %v7685
        %7766 = vset.pattern.permute.xlu0 40
        %7767 = vperm.xlu0 %7766, %v372
        %v7768 = vpop.permute.xlu0 %7767
        %7770 = vset.pattern.permute.xlu0 40
        %7771 = vperm.xlu0 %7770, %v377
        %v7772 = vpop.permute.xlu0 %7771
        %7774 = vset.pattern.permute.xlu0 40
        %7775 = vperm.xlu0 %7774, %v382
        %v7776 = vpop.permute.xlu0 %7775
        %7778 = vset.pattern.permute.xlu0 40
        %7779 = vperm.xlu0 %7778, %v387
        %v7780 = vpop.permute.xlu0 %7779
        %7782 = vset.pattern.permute.xlu0 40
        %7783 = vperm.xlu0 %7782, %v392
        %v7784 = vpop.permute.xlu0 %7783
        %7786 = vset.pattern.permute.xlu0 40
        %7787 = vperm.xlu0 %7786, %v397
        %v7788 = vpop.permute.xlu0 %7787
        %7790 = vset.pattern.permute.xlu0 40
        %7791 = vperm.xlu0 %7790, %v402
        %v7792 = vpop.permute.xlu0 %7791
        %7794 = vset.pattern.permute.xlu0 40
        %7795 = vperm.xlu0 %7794, %v407
        %v7796 = vpop.permute.xlu0 %7795
        %7798 = vset.pattern.permute.xlu0 40
        %7799 = vperm.xlu0 %7798, %v412
        %v7800 = vpop.permute.xlu0 %7799
        %7802 = vset.pattern.permute.xlu0 40
        %7803 = vperm.xlu0 %7802, %v417
        %v7804 = vpop.permute.xlu0 %7803
        %7806 = vset.pattern.permute.xlu0 40
        %7807 = vperm.xlu0 %7806, %v422
        %v7808 = vpop.permute.xlu0 %7807
        %7810 = vset.pattern.permute.xlu0 40
        %7811 = vperm.xlu0 %7810, %v427
        %v7812 = vpop.permute.xlu0 %7811
        %7814 = vset.pattern.permute.xlu0 40
        %7815 = vperm.xlu0 %7814, %v432
        %v7816 = vpop.permute.xlu0 %7815
        %7818 = vset.pattern.permute.xlu0 40
        %7819 = vperm.xlu0 %7818, %v437
        %v7820 = vpop.permute.xlu0 %7819
        %7822 = vset.pattern.permute.xlu0 40
        %7823 = vperm.xlu0 %7822, %v442
        %v7824 = vpop.permute.xlu0 %7823
        %7826 = vset.pattern.permute.xlu0 40
        %7827 = vperm.xlu0 %7826, %v447
        %v7828 = vpop.permute.xlu0 %7827
        %v7830 = vmul.f32 %v7768, %v7270
        %v7831 = vmul.f32 %v7768, %v7271
        %v7832 = vmul.f32 %v7772, %v7272
        %v7833 = vmul.f32 %v7772, %v7273
        %v7834 = vmul.f32 %v7776, %v7274
        %v7835 = vmul.f32 %v7776, %v7275
        %v7836 = vmul.f32 %v7780, %v7276
        %v7837 = vmul.f32 %v7780, %v7277
        %v7838 = vmul.f32 %v7784, %v7278
        %v7839 = vmul.f32 %v7784, %v7279
        %v7840 = vmul.f32 %v7788, %v7280
        %v7841 = vmul.f32 %v7788, %v7281
        %v7842 = vmul.f32 %v7792, %v7282
        %v7843 = vmul.f32 %v7792, %v7283
        %v7844 = vmul.f32 %v7796, %v7284
        %v7845 = vmul.f32 %v7796, %v7285
        %v7846 = vmul.f32 %v7800, %v7286
        %v7847 = vmul.f32 %v7800, %v7287
        %v7848 = vmul.f32 %v7804, %v7288
        %v7849 = vmul.f32 %v7804, %v7289
        %v7850 = vmul.f32 %v7808, %v7290
        %v7851 = vmul.f32 %v7808, %v7291
        %v7852 = vmul.f32 %v7812, %v7292
        %v7853 = vmul.f32 %v7812, %v7293
        %v7854 = vmul.f32 %v7816, %v7294
        %v7855 = vmul.f32 %v7816, %v7295
        %v7856 = vmul.f32 %v7820, %v7296
        %v7857 = vmul.f32 %v7820, %v7297
        %v7858 = vmul.f32 %v7824, %v7298
        %v7859 = vmul.f32 %v7824, %v7299
        %v7860 = vmul.f32 %v7828, %v7300
        %v7861 = vmul.f32 %v7828, %v7301
        %7894 = vrot.lane.b32.xlu0 %v7830, 120
        %v7895 = vpop.permute.xlu0 %7894
        %7896 = vrot.lane.b32.xlu0 %v7831, 120
        %v7897 = vpop.permute.xlu0 %7896
        %7898 = vrot.lane.b32.xlu0 %v7832, 120
        %v7899 = vpop.permute.xlu0 %7898
        %7900 = vrot.lane.b32.xlu0 %v7833, 120
        %v7901 = vpop.permute.xlu0 %7900
        %7902 = vrot.lane.b32.xlu0 %v7834, 120
        %v7903 = vpop.permute.xlu0 %7902
        %7904 = vrot.lane.b32.xlu0 %v7835, 120
        %v7905 = vpop.permute.xlu0 %7904
        %7906 = vrot.lane.b32.xlu0 %v7836, 120
        %v7907 = vpop.permute.xlu0 %7906
        %7908 = vrot.lane.b32.xlu0 %v7837, 120
        %v7909 = vpop.permute.xlu0 %7908
        %7910 = vrot.lane.b32.xlu0 %v7838, 120
        %v7911 = vpop.permute.xlu0 %7910
        %7912 = vrot.lane.b32.xlu0 %v7839, 120
        %v7913 = vpop.permute.xlu0 %7912
        %7914 = vrot.lane.b32.xlu0 %v7840, 120
        %v7915 = vpop.permute.xlu0 %7914
        %7916 = vrot.lane.b32.xlu0 %v7841, 120
        %v7917 = vpop.permute.xlu0 %7916
        %7918 = vrot.lane.b32.xlu0 %v7842, 120
        %v7919 = vpop.permute.xlu0 %7918
        %7920 = vrot.lane.b32.xlu0 %v7843, 120
        %v7921 = vpop.permute.xlu0 %7920
        %7922 = vrot.lane.b32.xlu0 %v7844, 120
        %v7923 = vpop.permute.xlu0 %7922
        %7924 = vrot.lane.b32.xlu0 %v7845, 120
        %v7925 = vpop.permute.xlu0 %7924
        %7926 = vrot.lane.b32.xlu0 %v7846, 120
        %v7927 = vpop.permute.xlu0 %7926
        %7928 = vrot.lane.b32.xlu0 %v7847, 120
        %v7929 = vpop.permute.xlu0 %7928
        %7930 = vrot.lane.b32.xlu0 %v7848, 120
        %v7931 = vpop.permute.xlu0 %7930
        %7932 = vrot.lane.b32.xlu0 %v7849, 120
        %v7933 = vpop.permute.xlu0 %7932
        %7934 = vrot.lane.b32.xlu0 %v7850, 120
        %v7935 = vpop.permute.xlu0 %7934
        %7936 = vrot.lane.b32.xlu0 %v7851, 120
        %v7937 = vpop.permute.xlu0 %7936
        %7938 = vrot.lane.b32.xlu0 %v7852, 120
        %v7939 = vpop.permute.xlu0 %7938
        %7940 = vrot.lane.b32.xlu0 %v7853, 120
        %v7941 = vpop.permute.xlu0 %7940
        %7942 = vrot.lane.b32.xlu0 %v7854, 120
        %v7943 = vpop.permute.xlu0 %7942
        %7944 = vrot.lane.b32.xlu0 %v7855, 120
        %v7945 = vpop.permute.xlu0 %7944
        %7946 = vrot.lane.b32.xlu0 %v7856, 120
        %v7947 = vpop.permute.xlu0 %7946
        %7948 = vrot.lane.b32.xlu0 %v7857, 120
        %v7949 = vpop.permute.xlu0 %7948
        %7950 = vrot.lane.b32.xlu0 %v7858, 120
        %v7951 = vpop.permute.xlu0 %7950
        %7952 = vrot.lane.b32.xlu0 %v7859, 120
        %v7953 = vpop.permute.xlu0 %7952
        %7954 = vrot.lane.b32.xlu0 %v7860, 120
        %v7955 = vpop.permute.xlu0 %7954
        %7956 = vrot.lane.b32.xlu0 %v7861, 120
        %v7957 = vpop.permute.xlu0 %7956
        %vm7958 = vcmask 982016
        %v7959 = vsel %vm7958, %v7895, %v7897
        %v7960 = vsel %vm7958, %v7899, %v7901
        %v7961 = vsel %vm7958, %v7903, %v7905
        %v7962 = vsel %vm7958, %v7907, %v7909
        %v7963 = vsel %vm7958, %v7911, %v7913
        %v7964 = vsel %vm7958, %v7915, %v7917
        %v7965 = vsel %vm7958, %v7919, %v7921
        %v7966 = vsel %vm7958, %v7923, %v7925
        %v7967 = vsel %vm7958, %v7927, %v7929
        %v7968 = vsel %vm7958, %v7931, %v7933
        %v7969 = vsel %vm7958, %v7935, %v7937
        %v7970 = vsel %vm7958, %v7939, %v7941
        %v7971 = vsel %vm7958, %v7943, %v7945
        %v7972 = vsel %vm7958, %v7947, %v7949
        %v7973 = vsel %vm7958, %v7951, %v7953
        %v7974 = vsel %vm7958, %v7955, %v7957
        %v8007 = vadd.f32 %v7734, %v7959
        %v8008 = vadd.f32 %v7735, %v7897
        %v8009 = vadd.f32 %v7736, %v7960
        %v8010 = vadd.f32 %v7737, %v7901
        %v8011 = vadd.f32 %v7738, %v7961
        %v8012 = vadd.f32 %v7739, %v7905
        %v8013 = vadd.f32 %v7740, %v7962
        %v8014 = vadd.f32 %v7741, %v7909
        %v8015 = vadd.f32 %v7742, %v7963
        %v8016 = vadd.f32 %v7743, %v7913
        %v8017 = vadd.f32 %v7744, %v7964
        %v8018 = vadd.f32 %v7745, %v7917
        %v8019 = vadd.f32 %v7746, %v7965
        %v8020 = vadd.f32 %v7747, %v7921
        %v8021 = vadd.f32 %v7748, %v7966
        %v8022 = vadd.f32 %v7749, %v7925
        %v8023 = vadd.f32 %v7750, %v7967
        %v8024 = vadd.f32 %v7751, %v7929
        %v8025 = vadd.f32 %v7752, %v7968
        %v8026 = vadd.f32 %v7753, %v7933
        %v8027 = vadd.f32 %v7754, %v7969
        %v8028 = vadd.f32 %v7755, %v7937
        %v8029 = vadd.f32 %v7756, %v7970
        %v8030 = vadd.f32 %v7757, %v7941
        %v8031 = vadd.f32 %v7758, %v7971
        %v8032 = vadd.f32 %v7759, %v7945
        %v8033 = vadd.f32 %v7760, %v7972
        %v8034 = vadd.f32 %v7761, %v7949
        %v8035 = vadd.f32 %v7762, %v7973
        %v8036 = vadd.f32 %v7763, %v7953
        %v8037 = vadd.f32 %v7764, %v7974
        %v8038 = vadd.f32 %v7765, %v7957
        %vm8039 = vcmp.ge.f32.partialorder %v8007, 0.0
        %vm8040 = vcmp.ge.f32.partialorder %v8008, 0.0
        %vm8041 = vcmp.ge.f32.partialorder %v8009, 0.0
        %vm8042 = vcmp.ge.f32.partialorder %v8010, 0.0
        %vm8043 = vcmp.ge.f32.partialorder %v8011, 0.0
        %vm8044 = vcmp.ge.f32.partialorder %v8012, 0.0
        %vm8045 = vcmp.ge.f32.partialorder %v8013, 0.0
        %vm8046 = vcmp.ge.f32.partialorder %v8014, 0.0
        %vm8047 = vcmp.ge.f32.partialorder %v8015, 0.0
        %vm8048 = vcmp.ge.f32.partialorder %v8016, 0.0
        %vm8049 = vcmp.ge.f32.partialorder %v8017, 0.0
        %vm8050 = vcmp.ge.f32.partialorder %v8018, 0.0
        %vm8051 = vcmp.ge.f32.partialorder %v8019, 0.0
        %vm8052 = vcmp.ge.f32.partialorder %v8020, 0.0
        %vm8053 = vcmp.ge.f32.partialorder %v8021, 0.0
        %vm8054 = vcmp.ge.f32.partialorder %v8022, 0.0
        %vm8055 = vcmp.ge.f32.partialorder %v8023, 0.0
        %vm8056 = vcmp.ge.f32.partialorder %v8024, 0.0
        %vm8057 = vcmp.ge.f32.partialorder %v8025, 0.0
        %vm8058 = vcmp.ge.f32.partialorder %v8026, 0.0
        %vm8059 = vcmp.ge.f32.partialorder %v8027, 0.0
        %vm8060 = vcmp.ge.f32.partialorder %v8028, 0.0
        %vm8061 = vcmp.ge.f32.partialorder %v8029, 0.0
        %vm8062 = vcmp.ge.f32.partialorder %v8030, 0.0
        %vm8063 = vcmp.ge.f32.partialorder %v8031, 0.0
        %vm8064 = vcmp.ge.f32.partialorder %v8032, 0.0
        %vm8065 = vcmp.ge.f32.partialorder %v8033, 0.0
        %vm8066 = vcmp.ge.f32.partialorder %v8034, 0.0
        %vm8067 = vcmp.ge.f32.partialorder %v8035, 0.0
        %vm8068 = vcmp.ge.f32.partialorder %v8036, 0.0
        %vm8069 = vcmp.ge.f32.partialorder %v8037, 0.0
        %vm8070 = vcmp.ge.f32.partialorder %v8038, 0.0
        %8071 = vset.pattern.permute.xlu0 43
        %8072 = vperm.xlu0 %8071, %v372
        %v8073 = vpop.permute.xlu0 %8072
        %8075 = vset.pattern.permute.xlu0 43
        %8076 = vperm.xlu0 %8075, %v377
        %v8077 = vpop.permute.xlu0 %8076
        %8079 = vset.pattern.permute.xlu0 43
        %8080 = vperm.xlu0 %8079, %v382
        %v8081 = vpop.permute.xlu0 %8080
        %8083 = vset.pattern.permute.xlu0 43
        %8084 = vperm.xlu0 %8083, %v387
        %v8085 = vpop.permute.xlu0 %8084
        %8087 = vset.pattern.permute.xlu0 43
        %8088 = vperm.xlu0 %8087, %v392
        %v8089 = vpop.permute.xlu0 %8088
        %8091 = vset.pattern.permute.xlu0 43
        %8092 = vperm.xlu0 %8091, %v397
        %v8093 = vpop.permute.xlu0 %8092
        %8095 = vset.pattern.permute.xlu0 43
        %8096 = vperm.xlu0 %8095, %v402
        %v8097 = vpop.permute.xlu0 %8096
        %8099 = vset.pattern.permute.xlu0 43
        %8100 = vperm.xlu0 %8099, %v407
        %v8101 = vpop.permute.xlu0 %8100
        %8103 = vset.pattern.permute.xlu0 43
        %8104 = vperm.xlu0 %8103, %v412
        %v8105 = vpop.permute.xlu0 %8104
        %8107 = vset.pattern.permute.xlu0 43
        %8108 = vperm.xlu0 %8107, %v417
        %v8109 = vpop.permute.xlu0 %8108
        %8111 = vset.pattern.permute.xlu0 43
        %8112 = vperm.xlu0 %8111, %v422
        %v8113 = vpop.permute.xlu0 %8112
        %8115 = vset.pattern.permute.xlu0 43
        %8116 = vperm.xlu0 %8115, %v427
        %v8117 = vpop.permute.xlu0 %8116
        %8119 = vset.pattern.permute.xlu0 43
        %8120 = vperm.xlu0 %8119, %v432
        %v8121 = vpop.permute.xlu0 %8120
        %8123 = vset.pattern.permute.xlu0 43
        %8124 = vperm.xlu0 %8123, %v437
        %v8125 = vpop.permute.xlu0 %8124
        %8127 = vset.pattern.permute.xlu0 43
        %8128 = vperm.xlu0 %8127, %v442
        %v8129 = vpop.permute.xlu0 %8128
        %8131 = vset.pattern.permute.xlu0 43
        %8132 = vperm.xlu0 %8131, %v447
        %v8133 = vpop.permute.xlu0 %8132
        %v8135 = vmul.f32 %v8073, %v8007
        %v8136 = vmul.f32 %v8073, %v8008
        %v8137 = vmul.f32 %v8077, %v8009
        %v8138 = vmul.f32 %v8077, %v8010
        %v8139 = vmul.f32 %v8081, %v8011
        %v8140 = vmul.f32 %v8081, %v8012
        %v8141 = vmul.f32 %v8085, %v8013
        %v8142 = vmul.f32 %v8085, %v8014
        %v8143 = vmul.f32 %v8089, %v8015
        %v8144 = vmul.f32 %v8089, %v8016
        %v8145 = vmul.f32 %v8093, %v8017
        %v8146 = vmul.f32 %v8093, %v8018
        %v8147 = vmul.f32 %v8097, %v8019
        %v8148 = vmul.f32 %v8097, %v8020
        %v8149 = vmul.f32 %v8101, %v8021
        %v8150 = vmul.f32 %v8101, %v8022
        %v8151 = vmul.f32 %v8105, %v8023
        %v8152 = vmul.f32 %v8105, %v8024
        %v8153 = vmul.f32 %v8109, %v8025
        %v8154 = vmul.f32 %v8109, %v8026
        %v8155 = vmul.f32 %v8113, %v8027
        %v8156 = vmul.f32 %v8113, %v8028
        %v8157 = vmul.f32 %v8117, %v8029
        %v8158 = vmul.f32 %v8117, %v8030
        %v8159 = vmul.f32 %v8121, %v8031
        %v8160 = vmul.f32 %v8121, %v8032
        %v8161 = vmul.f32 %v8125, %v8033
        %v8162 = vmul.f32 %v8125, %v8034
        %v8163 = vmul.f32 %v8129, %v8035
        %v8164 = vmul.f32 %v8129, %v8036
        %v8165 = vmul.f32 %v8133, %v8037
        %v8166 = vmul.f32 %v8133, %v8038
        %v8167 = vsel %vm8039, %v8007, %v8135
        %v8168 = vsel %vm8040, %v8008, %v8136
        %v8169 = vsel %vm8041, %v8009, %v8137
        %v8170 = vsel %vm8042, %v8010, %v8138
        %v8171 = vsel %vm8043, %v8011, %v8139
        %v8172 = vsel %vm8044, %v8012, %v8140
        %v8173 = vsel %vm8045, %v8013, %v8141
        %v8174 = vsel %vm8046, %v8014, %v8142
        %v8175 = vsel %vm8047, %v8015, %v8143
        %v8176 = vsel %vm8048, %v8016, %v8144
        %v8177 = vsel %vm8049, %v8017, %v8145
        %v8178 = vsel %vm8050, %v8018, %v8146
        %v8179 = vsel %vm8051, %v8019, %v8147
        %v8180 = vsel %vm8052, %v8020, %v8148
        %v8181 = vsel %vm8053, %v8021, %v8149
        %v8182 = vsel %vm8054, %v8022, %v8150
        %v8183 = vsel %vm8055, %v8023, %v8151
        %v8184 = vsel %vm8056, %v8024, %v8152
        %v8185 = vsel %vm8057, %v8025, %v8153
        %v8186 = vsel %vm8058, %v8026, %v8154
        %v8187 = vsel %vm8059, %v8027, %v8155
        %v8188 = vsel %vm8060, %v8028, %v8156
        %v8189 = vsel %vm8061, %v8029, %v8157
        %v8190 = vsel %vm8062, %v8030, %v8158
        %v8191 = vsel %vm8063, %v8031, %v8159
        %v8192 = vsel %vm8064, %v8032, %v8160
        %v8193 = vsel %vm8065, %v8033, %v8161
        %v8194 = vsel %vm8066, %v8034, %v8162
        %v8195 = vsel %vm8067, %v8035, %v8163
        %v8196 = vsel %vm8068, %v8036, %v8164
        %v8197 = vsel %vm8069, %v8037, %v8165
        %v8198 = vsel %vm8070, %v8038, %v8166
        %8231 = vrot.lane.b32.xlu0 %v8167, 124
        %v8232 = vpop.permute.xlu0 %8231
        %8233 = vrot.lane.b32.xlu0 %v8168, 124
        %v8234 = vpop.permute.xlu0 %8233
        %8235 = vrot.lane.b32.xlu0 %v8169, 124
        %v8236 = vpop.permute.xlu0 %8235
        %8237 = vrot.lane.b32.xlu0 %v8170, 124
        %v8238 = vpop.permute.xlu0 %8237
        %8239 = vrot.lane.b32.xlu0 %v8171, 124
        %v8240 = vpop.permute.xlu0 %8239
        %8241 = vrot.lane.b32.xlu0 %v8172, 124
        %v8242 = vpop.permute.xlu0 %8241
        %8243 = vrot.lane.b32.xlu0 %v8173, 124
        %v8244 = vpop.permute.xlu0 %8243
        %8245 = vrot.lane.b32.xlu0 %v8174, 124
        %v8246 = vpop.permute.xlu0 %8245
        %8247 = vrot.lane.b32.xlu0 %v8175, 124
        %v8248 = vpop.permute.xlu0 %8247
        %8249 = vrot.lane.b32.xlu0 %v8176, 124
        %v8250 = vpop.permute.xlu0 %8249
        %8251 = vrot.lane.b32.xlu0 %v8177, 124
        %v8252 = vpop.permute.xlu0 %8251
        %8253 = vrot.lane.b32.xlu0 %v8178, 124
        %v8254 = vpop.permute.xlu0 %8253
        %8255 = vrot.lane.b32.xlu0 %v8179, 124
        %v8256 = vpop.permute.xlu0 %8255
        %8257 = vrot.lane.b32.xlu0 %v8180, 124
        %v8258 = vpop.permute.xlu0 %8257
        %8259 = vrot.lane.b32.xlu0 %v8181, 124
        %v8260 = vpop.permute.xlu0 %8259
        %8261 = vrot.lane.b32.xlu0 %v8182, 124
        %v8262 = vpop.permute.xlu0 %8261
        %8263 = vrot.lane.b32.xlu0 %v8183, 124
        %v8264 = vpop.permute.xlu0 %8263
        %8265 = vrot.lane.b32.xlu0 %v8184, 124
        %v8266 = vpop.permute.xlu0 %8265
        %8267 = vrot.lane.b32.xlu0 %v8185, 124
        %v8268 = vpop.permute.xlu0 %8267
        %8269 = vrot.lane.b32.xlu0 %v8186, 124
        %v8270 = vpop.permute.xlu0 %8269
        %8271 = vrot.lane.b32.xlu0 %v8187, 124
        %v8272 = vpop.permute.xlu0 %8271
        %8273 = vrot.lane.b32.xlu0 %v8188, 124
        %v8274 = vpop.permute.xlu0 %8273
        %8275 = vrot.lane.b32.xlu0 %v8189, 124
        %v8276 = vpop.permute.xlu0 %8275
        %8277 = vrot.lane.b32.xlu0 %v8190, 124
        %v8278 = vpop.permute.xlu0 %8277
        %8279 = vrot.lane.b32.xlu0 %v8191, 124
        %v8280 = vpop.permute.xlu0 %8279
        %8281 = vrot.lane.b32.xlu0 %v8192, 124
        %v8282 = vpop.permute.xlu0 %8281
        %8283 = vrot.lane.b32.xlu0 %v8193, 124
        %v8284 = vpop.permute.xlu0 %8283
        %8285 = vrot.lane.b32.xlu0 %v8194, 124
        %v8286 = vpop.permute.xlu0 %8285
        %8287 = vrot.lane.b32.xlu0 %v8195, 124
        %v8288 = vpop.permute.xlu0 %8287
        %8289 = vrot.lane.b32.xlu0 %v8196, 124
        %v8290 = vpop.permute.xlu0 %8289
        %8291 = vrot.lane.b32.xlu0 %v8197, 124
        %v8292 = vpop.permute.xlu0 %8291
        %8293 = vrot.lane.b32.xlu0 %v8198, 124
        %v8294 = vpop.permute.xlu0 %8293
        %v8295 = vsel %vm5040, %v8232, %v8234
        %v8296 = vsel %vm5040, %v8236, %v8238
        %v8297 = vsel %vm5040, %v8240, %v8242
        %v8298 = vsel %vm5040, %v8244, %v8246
        %v8299 = vsel %vm5040, %v8248, %v8250
        %v8300 = vsel %vm5040, %v8252, %v8254
        %v8301 = vsel %vm5040, %v8256, %v8258
        %v8302 = vsel %vm5040, %v8260, %v8262
        %v8303 = vsel %vm5040, %v8264, %v8266
        %v8304 = vsel %vm5040, %v8268, %v8270
        %v8305 = vsel %vm5040, %v8272, %v8274
        %v8306 = vsel %vm5040, %v8276, %v8278
        %v8307 = vsel %vm5040, %v8280, %v8282
        %v8308 = vsel %vm5040, %v8284, %v8286
        %v8309 = vsel %vm5040, %v8288, %v8290
        %v8310 = vsel %vm5040, %v8292, %v8294
        %8327 = vmatprep.subr.mxu0 0.0
        %8328 = vmatpush1.msra.mxu0 %v8295
        %8329 = vmatprep.subr.mxu0 0.0
        %8330 = vmatpush1.msra.mxu0 %v8296
        %8331 = vmatprep.subr.mxu0 0.0
        %8332 = vmatpush1.msra.mxu0 %v8297
        %8333 = vmatprep.subr.mxu0 0.0
        %8334 = vmatpush1.msra.mxu0 %v8298
        %8335 = vmatprep.subr.mxu0 0.0
        %8336 = vmatpush1.msra.mxu0 %v8299
        %8337 = vmatprep.subr.mxu0 0.0
        %8338 = vmatpush1.msra.mxu0 %v8300
        %8339 = vmatprep.subr.mxu0 0.0
        %8340 = vmatpush1.msra.mxu0 %v8301
        %8341 = vmatprep.subr.mxu0 0.0
        %8342 = vmatpush1.msra.mxu0 %v8302
        %8343 = vmatprep.subr.mxu0 0.0
        %8344 = vmatpush1.msra.mxu0 %v8303
        %8345 = vmatprep.subr.mxu0 0.0
        %8346 = vmatpush1.msra.mxu0 %v8304
        %8347 = vmatprep.subr.mxu0 0.0
        %8348 = vmatpush1.msra.mxu0 %v8305
        %8349 = vmatprep.subr.mxu0 0.0
        %8350 = vmatpush1.msra.mxu0 %v8306
        %8351 = vmatprep.subr.mxu0 0.0
        %8352 = vmatpush1.msra.mxu0 %v8307
        %8353 = vmatprep.subr.mxu0 0.0
        %8354 = vmatpush1.msra.mxu0 %v8308
        %8355 = vmatprep.subr.mxu0 0.0
        %8356 = vmatpush1.msra.mxu0 %v8309
        %8357 = vmatprep.subr.mxu0 0.0
        %8358 = vmatpush1.msra.mxu0 %v8310
        %8359 = vmatprep.subr.mxu0 0.0
        %8360 = vmatpush1.msra.mxu0 0.0
        %8361 = vmatprep.subr.mxu0 0.0
        %8362 = vmatpush1.msra.mxu0 0.0
        %8363 = vmatprep.subr.mxu0 0.0
        %8364 = vmatpush1.msra.mxu0 0.0
        %8365 = vmatprep.subr.mxu0 0.0
        %8366 = vmatpush1.msra.mxu0 0.0
        %8367 = vmatprep.subr.mxu0 0.0
        %8368 = vmatpush1.msra.mxu0 0.0
        %8369 = vmatprep.subr.mxu0 0.0
        %8370 = vmatpush1.msra.mxu0 0.0
        %8371 = vmatprep.subr.mxu0 0.0
        %8372 = vmatpush1.msra.mxu0 0.0
        %8373 = vmatprep.subr.mxu0 0.0
        %8374 = vmatpush1.msra.mxu0 0.0
        %8375 = vmatprep.subr.mxu0 0.0
        %8376 = vmatpush1.msra.mxu0 0.0
        %8377 = vmatprep.subr.mxu0 0.0
        %8378 = vmatpush1.msra.mxu0 0.0
        %8379 = vmatprep.subr.mxu0 0.0
        %8380 = vmatpush1.msra.mxu0 0.0
        %8381 = vmatprep.subr.mxu0 0.0
        %8382 = vmatpush1.msra.mxu0 0.0
        %8383 = vmatprep.subr.mxu0 0.0
        %8384 = vmatpush1.msra.mxu0 0.0
        %8385 = vmatprep.subr.mxu0 0.0
        %8386 = vmatpush1.msra.mxu0 0.0
        %8387 = vmatprep.subr.mxu0 0.0
        %8388 = vmatpush1.msra.mxu0 0.0
        %8389 = vmatprep.subr.mxu0 0.0
        %8390 = vmatpush1.msra.mxu0 0.0
        %8391 = vmatprep.mubr.f32.mxu0 0.0
        %8392 = vmatmul.mubr.f32.gmra.mrb[0].mxu0 1.0
        %v8393 = vpop.f32.mrb[0].mxu0
        %v8394 = vadd.f32 0.0, %v8393
        %v8395 = vpop.f32.mrb[0].mxu0
        %8396 = vdwg.mxu0
        %v8397 = vmul.f32 %v8167, %v8167
        %v8398 = vmul.f32 %v8168, %v8168
        %v8399 = vmul.f32 %v8169, %v8169
        %v8400 = vmul.f32 %v8170, %v8170
        %v8401 = vmul.f32 %v8171, %v8171
        %v8402 = vmul.f32 %v8172, %v8172
        %v8403 = vmul.f32 %v8173, %v8173
        %v8404 = vmul.f32 %v8174, %v8174
        %v8405 = vmul.f32 %v8175, %v8175
        %v8406 = vmul.f32 %v8176, %v8176
        %v8407 = vmul.f32 %v8177, %v8177
        %v8408 = vmul.f32 %v8178, %v8178
        %v8409 = vmul.f32 %v8179, %v8179
        %v8410 = vmul.f32 %v8180, %v8180
        %v8411 = vmul.f32 %v8181, %v8181
        %v8412 = vmul.f32 %v8182, %v8182
        %v8413 = vmul.f32 %v8183, %v8183
        %v8414 = vmul.f32 %v8184, %v8184
        %v8415 = vmul.f32 %v8185, %v8185
        %v8416 = vmul.f32 %v8186, %v8186
        %v8417 = vmul.f32 %v8187, %v8187
        %v8418 = vmul.f32 %v8188, %v8188
        %v8419 = vmul.f32 %v8189, %v8189
        %v8420 = vmul.f32 %v8190, %v8190
        %v8421 = vmul.f32 %v8191, %v8191
        %v8422 = vmul.f32 %v8192, %v8192
        %v8423 = vmul.f32 %v8193, %v8193
        %v8424 = vmul.f32 %v8194, %v8194
        %v8425 = vmul.f32 %v8195, %v8195
        %v8426 = vmul.f32 %v8196, %v8196
        %v8427 = vmul.f32 %v8197, %v8197
        %v8428 = vmul.f32 %v8198, %v8198
        %8461 = vrot.lane.b32.xlu0 %v8397, 124
        %v8462 = vpop.permute.xlu0 %8461
        %8463 = vrot.lane.b32.xlu0 %v8398, 124
        %v8464 = vpop.permute.xlu0 %8463
        %8465 = vrot.lane.b32.xlu0 %v8399, 124
        %v8466 = vpop.permute.xlu0 %8465
        %8467 = vrot.lane.b32.xlu0 %v8400, 124
        %v8468 = vpop.permute.xlu0 %8467
        %8469 = vrot.lane.b32.xlu0 %v8401, 124
        %v8470 = vpop.permute.xlu0 %8469
        %8471 = vrot.lane.b32.xlu0 %v8402, 124
        %v8472 = vpop.permute.xlu0 %8471
        %8473 = vrot.lane.b32.xlu0 %v8403, 124
        %v8474 = vpop.permute.xlu0 %8473
        %8475 = vrot.lane.b32.xlu0 %v8404, 124
        %v8476 = vpop.permute.xlu0 %8475
        %8477 = vrot.lane.b32.xlu0 %v8405, 124
        %v8478 = vpop.permute.xlu0 %8477
        %8479 = vrot.lane.b32.xlu0 %v8406, 124
        %v8480 = vpop.permute.xlu0 %8479
        %8481 = vrot.lane.b32.xlu0 %v8407, 124
        %v8482 = vpop.permute.xlu0 %8481
        %8483 = vrot.lane.b32.xlu0 %v8408, 124
        %v8484 = vpop.permute.xlu0 %8483
        %8485 = vrot.lane.b32.xlu0 %v8409, 124
        %v8486 = vpop.permute.xlu0 %8485
        %8487 = vrot.lane.b32.xlu0 %v8410, 124
        %v8488 = vpop.permute.xlu0 %8487
        %8489 = vrot.lane.b32.xlu0 %v8411, 124
        %v8490 = vpop.permute.xlu0 %8489
        %8491 = vrot.lane.b32.xlu0 %v8412, 124
        %v8492 = vpop.permute.xlu0 %8491
        %8493 = vrot.lane.b32.xlu0 %v8413, 124
        %v8494 = vpop.permute.xlu0 %8493
        %8495 = vrot.lane.b32.xlu0 %v8414, 124
        %v8496 = vpop.permute.xlu0 %8495
        %8497 = vrot.lane.b32.xlu0 %v8415, 124
        %v8498 = vpop.permute.xlu0 %8497
        %8499 = vrot.lane.b32.xlu0 %v8416, 124
        %v8500 = vpop.permute.xlu0 %8499
        %8501 = vrot.lane.b32.xlu0 %v8417, 124
        %v8502 = vpop.permute.xlu0 %8501
        %8503 = vrot.lane.b32.xlu0 %v8418, 124
        %v8504 = vpop.permute.xlu0 %8503
        %8505 = vrot.lane.b32.xlu0 %v8419, 124
        %v8506 = vpop.permute.xlu0 %8505
        %8507 = vrot.lane.b32.xlu0 %v8420, 124
        %v8508 = vpop.permute.xlu0 %8507
        %8509 = vrot.lane.b32.xlu0 %v8421, 124
        %v8510 = vpop.permute.xlu0 %8509
        %8511 = vrot.lane.b32.xlu0 %v8422, 124
        %v8512 = vpop.permute.xlu0 %8511
        %8513 = vrot.lane.b32.xlu0 %v8423, 124
        %v8514 = vpop.permute.xlu0 %8513
        %8515 = vrot.lane.b32.xlu0 %v8424, 124
        %v8516 = vpop.permute.xlu0 %8515
        %8517 = vrot.lane.b32.xlu0 %v8425, 124
        %v8518 = vpop.permute.xlu0 %8517
        %8519 = vrot.lane.b32.xlu0 %v8426, 124
        %v8520 = vpop.permute.xlu0 %8519
        %8521 = vrot.lane.b32.xlu0 %v8427, 124
        %v8522 = vpop.permute.xlu0 %8521
        %8523 = vrot.lane.b32.xlu0 %v8428, 124
        %v8524 = vpop.permute.xlu0 %8523
        %v8525 = vsel %vm5040, %v8462, %v8464
        %v8526 = vsel %vm5040, %v8466, %v8468
        %v8527 = vsel %vm5040, %v8470, %v8472
        %v8528 = vsel %vm5040, %v8474, %v8476
        %v8529 = vsel %vm5040, %v8478, %v8480
        %v8530 = vsel %vm5040, %v8482, %v8484
        %v8531 = vsel %vm5040, %v8486, %v8488
        %v8532 = vsel %vm5040, %v8490, %v8492
        %v8533 = vsel %vm5040, %v8494, %v8496
        %v8534 = vsel %vm5040, %v8498, %v8500
        %v8535 = vsel %vm5040, %v8502, %v8504
        %v8536 = vsel %vm5040, %v8506, %v8508
        %v8537 = vsel %vm5040, %v8510, %v8512
        %v8538 = vsel %vm5040, %v8514, %v8516
        %v8539 = vsel %vm5040, %v8518, %v8520
        %v8540 = vsel %vm5040, %v8522, %v8524
        %8557 = vmatprep.subr.mxu0 0.0
        %8558 = vmatpush1.msra.mxu0 %v8525
        %8559 = vmatprep.subr.mxu0 0.0
        %8560 = vmatpush1.msra.mxu0 %v8526
        %8561 = vmatprep.subr.mxu0 0.0
        %8562 = vmatpush1.msra.mxu0 %v8527
        %8563 = vmatprep.subr.mxu0 0.0
        %8564 = vmatpush1.msra.mxu0 %v8528
        %8565 = vmatprep.subr.mxu0 0.0
        %8566 = vmatpush1.msra.mxu0 %v8529
        %8567 = vmatprep.subr.mxu0 0.0
        %8568 = vmatpush1.msra.mxu0 %v8530
        %8569 = vmatprep.subr.mxu0 0.0
        %8570 = vmatpush1.msra.mxu0 %v8531
        %8571 = vmatprep.subr.mxu0 0.0
        %8572 = vmatpush1.msra.mxu0 %v8532
        %8573 = vmatprep.subr.mxu0 0.0
        %8574 = vmatpush1.msra.mxu0 %v8533
        %8575 = vmatprep.subr.mxu0 0.0
        %8576 = vmatpush1.msra.mxu0 %v8534
        %8577 = vmatprep.subr.mxu0 0.0
        %8578 = vmatpush1.msra.mxu0 %v8535
        %8579 = vmatprep.subr.mxu0 0.0
        %8580 = vmatpush1.msra.mxu0 %v8536
        %8581 = vmatprep.subr.mxu0 0.0
        %8582 = vmatpush1.msra.mxu0 %v8537
        %8583 = vmatprep.subr.mxu0 0.0
        %8584 = vmatpush1.msra.mxu0 %v8538
        %8585 = vmatprep.subr.mxu0 0.0
        %8586 = vmatpush1.msra.mxu0 %v8539
        %8587 = vmatprep.subr.mxu0 0.0
        %8588 = vmatpush1.msra.mxu0 %v8540
        %8589 = vmatprep.subr.mxu0 0.0
        %8590 = vmatpush1.msra.mxu0 0.0
        %8591 = vmatprep.subr.mxu0 0.0
        %8592 = vmatpush1.msra.mxu0 0.0
        %8593 = vmatprep.subr.mxu0 0.0
        %8594 = vmatpush1.msra.mxu0 0.0
        %8595 = vmatprep.subr.mxu0 0.0
        %8596 = vmatpush1.msra.mxu0 0.0
        %8597 = vmatprep.subr.mxu0 0.0
        %8598 = vmatpush1.msra.mxu0 0.0
        %8599 = vmatprep.subr.mxu0 0.0
        %8600 = vmatpush1.msra.mxu0 0.0
        %8601 = vmatprep.subr.mxu0 0.0
        %8602 = vmatpush1.msra.mxu0 0.0
        %8603 = vmatprep.subr.mxu0 0.0
        %8604 = vmatpush1.msra.mxu0 0.0
        %8605 = vmatprep.subr.mxu0 0.0
        %8606 = vmatpush1.msra.mxu0 0.0
        %8607 = vmatprep.subr.mxu0 0.0
        %8608 = vmatpush1.msra.mxu0 0.0
        %8609 = vmatprep.subr.mxu0 0.0
        %8610 = vmatpush1.msra.mxu0 0.0
        %8611 = vmatprep.subr.mxu0 0.0
        %8612 = vmatpush1.msra.mxu0 0.0
        %8613 = vmatprep.subr.mxu0 0.0
        %8614 = vmatpush1.msra.mxu0 0.0
        %8615 = vmatprep.subr.mxu0 0.0
        %8616 = vmatpush1.msra.mxu0 0.0
        %8617 = vmatprep.subr.mxu0 0.0
        %8618 = vmatpush1.msra.mxu0 0.0
        %8619 = vmatprep.subr.mxu0 0.0
        %8620 = vmatpush1.msra.mxu0 0.0
        %8621 = vmatprep.mubr.f32.mxu0 0.0
        %8622 = vmatmul.mubr.f32.gmra.mrb[0].mxu0 1.0
        %v8623 = vpop.f32.mrb[0].mxu0
        %v8624 = vadd.f32 0.0, %v8623
        %v8625 = vpop.f32.mrb[0].mxu0
        %8626 = vdwg.mxu0
        %v8627 = vsel %vm1012, %v8394, 0.0
        %8628 = vadd.xlane.f32.xlu0 %v8627
        %v8629 = vpop.xlane.xlu0 %8628
        %v8630 = vmul.f32 %v8629, 6.1035156e-05
        %v8631 = vsel %vm1012, %v8624, 0.0
        %8632 = vadd.xlane.f32.xlu0 %v8631
        %v8633 = vpop.xlane.xlu0 %8632
        %v8634 = vmul.f32 %v8633, 6.1035156e-05
        %v8635 = vmul.f32 %v8630, %v8630
        %v8636 = vsub.f32 %v8634, %v8635
        %v8637 = vadd.f32 %v8636, 1e-05
        %v8638 = vrsqrt.pop %v8637
        %v8639 = vlaneseq
        %v8640 = vshrl.u32 %v8639, 7
        %v8641 = vsub.s32 0, %v8640
        %v8642 = vrot.slane %v8638, %v8641
        %v8643 = vmul.f32 %v372, %v8642
        %v8644 = vmul.f32 %v377, %v8642
        %v8645 = vmul.f32 %v382, %v8642
        %v8646 = vmul.f32 %v387, %v8642
        %v8647 = vmul.f32 %v392, %v8642
        %v8648 = vmul.f32 %v397, %v8642
        %v8649 = vmul.f32 %v402, %v8642
        %v8650 = vmul.f32 %v407, %v8642
        %v8651 = vmul.f32 %v412, %v8642
        %v8652 = vmul.f32 %v417, %v8642
        %v8653 = vmul.f32 %v422, %v8642
        %v8654 = vmul.f32 %v427, %v8642
        %v8655 = vmul.f32 %v432, %v8642
        %v8656 = vmul.f32 %v437, %v8642
        %v8657 = vmul.f32 %v442, %v8642
        %v8658 = vmul.f32 %v447, %v8642
        %v8659 = vlaneseq
        %v8660 = vshrl.u32 %v8659, 7
        %v8661 = vsub.s32 0, %v8660
        %v8662 = vrot.slane %v8630, %v8661
        %v8663 = vmul.f32 %v8662, %v8643
        %v8664 = vmul.f32 %v8662, %v8644
        %v8665 = vmul.f32 %v8662, %v8645
        %v8666 = vmul.f32 %v8662, %v8646
        %v8667 = vmul.f32 %v8662, %v8647
        %v8668 = vmul.f32 %v8662, %v8648
        %v8669 = vmul.f32 %v8662, %v8649
        %v8670 = vmul.f32 %v8662, %v8650
        %v8671 = vmul.f32 %v8662, %v8651
        %v8672 = vmul.f32 %v8662, %v8652
        %v8673 = vmul.f32 %v8662, %v8653
        %v8674 = vmul.f32 %v8662, %v8654
        %v8675 = vmul.f32 %v8662, %v8655
        %v8676 = vmul.f32 %v8662, %v8656
        %v8677 = vmul.f32 %v8662, %v8657
        %v8678 = vmul.f32 %v8662, %v8658
        %8695 = vrot.lane.b32.xlu0 %v8663, 1
        %v8696 = vpop.permute.xlu0 %8695
        %8697 = vrot.lane.b32.xlu0 %v8664, 1
        %v8698 = vpop.permute.xlu0 %8697
        %8699 = vrot.lane.b32.xlu0 %v8665, 1
        %v8700 = vpop.permute.xlu0 %8699
        %8701 = vrot.lane.b32.xlu0 %v8666, 1
        %v8702 = vpop.permute.xlu0 %8701
        %8703 = vrot.lane.b32.xlu0 %v8667, 1
        %v8704 = vpop.permute.xlu0 %8703
        %8705 = vrot.lane.b32.xlu0 %v8668, 1
        %v8706 = vpop.permute.xlu0 %8705
        %8707 = vrot.lane.b32.xlu0 %v8669, 1
        %v8708 = vpop.permute.xlu0 %8707
        %8709 = vrot.lane.b32.xlu0 %v8670, 1
        %v8710 = vpop.permute.xlu0 %8709
        %8711 = vrot.lane.b32.xlu0 %v8671, 1
        %v8712 = vpop.permute.xlu0 %8711
        %8713 = vrot.lane.b32.xlu0 %v8672, 1
        %v8714 = vpop.permute.xlu0 %8713
        %8715 = vrot.lane.b32.xlu0 %v8673, 1
        %v8716 = vpop.permute.xlu0 %8715
        %8717 = vrot.lane.b32.xlu0 %v8674, 1
        %v8718 = vpop.permute.xlu0 %8717
        %8719 = vrot.lane.b32.xlu0 %v8675, 1
        %v8720 = vpop.permute.xlu0 %8719
        %8721 = vrot.lane.b32.xlu0 %v8676, 1
        %v8722 = vpop.permute.xlu0 %8721
        %8723 = vrot.lane.b32.xlu0 %v8677, 1
        %v8724 = vpop.permute.xlu0 %8723
        %8725 = vrot.lane.b32.xlu0 %v8678, 1
        %v8726 = vpop.permute.xlu0 %8725
        %v8743 = vsub.f32 %v372, %v8696
        %v8744 = vsub.f32 %v377, %v8698
        %v8745 = vsub.f32 %v382, %v8700
        %v8746 = vsub.f32 %v387, %v8702
        %v8747 = vsub.f32 %v392, %v8704
        %v8748 = vsub.f32 %v397, %v8706
        %v8749 = vsub.f32 %v402, %v8708
        %v8750 = vsub.f32 %v407, %v8710
        %v8751 = vsub.f32 %v412, %v8712
        %v8752 = vsub.f32 %v417, %v8714
        %v8753 = vsub.f32 %v422, %v8716
        %v8754 = vsub.f32 %v427, %v8718
        %v8755 = vsub.f32 %v432, %v8720
        %v8756 = vsub.f32 %v437, %v8722
        %v8757 = vsub.f32 %v442, %v8724
        %v8758 = vsub.f32 %v447, %v8726
        %8760 = vset.pattern.permute.xlu0 36
        %8761 = vperm.xlu0 %8760, %v8643
        %v8762 = vpop.permute.xlu0 %8761
        %8765 = vset.pattern.permute.xlu0 36
        %8766 = vperm.xlu0 %8765, %v8644
        %v8767 = vpop.permute.xlu0 %8766
        %8770 = vset.pattern.permute.xlu0 36
        %8771 = vperm.xlu0 %8770, %v8645
        %v8772 = vpop.permute.xlu0 %8771
        %8775 = vset.pattern.permute.xlu0 36
        %8776 = vperm.xlu0 %8775, %v8646
        %v8777 = vpop.permute.xlu0 %8776
        %8780 = vset.pattern.permute.xlu0 36
        %8781 = vperm.xlu0 %8780, %v8647
        %v8782 = vpop.permute.xlu0 %8781
        %8785 = vset.pattern.permute.xlu0 36
        %8786 = vperm.xlu0 %8785, %v8648
        %v8787 = vpop.permute.xlu0 %8786
        %8790 = vset.pattern.permute.xlu0 36
        %8791 = vperm.xlu0 %8790, %v8649
        %v8792 = vpop.permute.xlu0 %8791
        %8795 = vset.pattern.permute.xlu0 36
        %8796 = vperm.xlu0 %8795, %v8650
        %v8797 = vpop.permute.xlu0 %8796
        %8800 = vset.pattern.permute.xlu0 36
        %8801 = vperm.xlu0 %8800, %v8651
        %v8802 = vpop.permute.xlu0 %8801
        %8805 = vset.pattern.permute.xlu0 36
        %8806 = vperm.xlu0 %8805, %v8652
        %v8807 = vpop.permute.xlu0 %8806
        %8810 = vset.pattern.permute.xlu0 36
        %8811 = vperm.xlu0 %8810, %v8653
        %v8812 = vpop.permute.xlu0 %8811
        %8815 = vset.pattern.permute.xlu0 36
        %8816 = vperm.xlu0 %8815, %v8654
        %v8817 = vpop.permute.xlu0 %8816
        %8820 = vset.pattern.permute.xlu0 36
        %8821 = vperm.xlu0 %8820, %v8655
        %v8822 = vpop.permute.xlu0 %8821
        %8825 = vset.pattern.permute.xlu0 36
        %8826 = vperm.xlu0 %8825, %v8656
        %v8827 = vpop.permute.xlu0 %8826
        %8830 = vset.pattern.permute.xlu0 36
        %8831 = vperm.xlu0 %8830, %v8657
        %v8832 = vpop.permute.xlu0 %8831
        %8835 = vset.pattern.permute.xlu0 36
        %8836 = vperm.xlu0 %8835, %v8658
        %v8837 = vpop.permute.xlu0 %8836
        %v8839 = vmul.f32 %v8167, %v8762
        %v8840 = vmul.f32 %v8168, %v8762
        %v8841 = vmul.f32 %v8169, %v8767
        %v8842 = vmul.f32 %v8170, %v8767
        %v8843 = vmul.f32 %v8171, %v8772
        %v8844 = vmul.f32 %v8172, %v8772
        %v8845 = vmul.f32 %v8173, %v8777
        %v8846 = vmul.f32 %v8174, %v8777
        %v8847 = vmul.f32 %v8175, %v8782
        %v8848 = vmul.f32 %v8176, %v8782
        %v8849 = vmul.f32 %v8177, %v8787
        %v8850 = vmul.f32 %v8178, %v8787
        %v8851 = vmul.f32 %v8179, %v8792
        %v8852 = vmul.f32 %v8180, %v8792
        %v8853 = vmul.f32 %v8181, %v8797
        %v8854 = vmul.f32 %v8182, %v8797
        %v8855 = vmul.f32 %v8183, %v8802
        %v8856 = vmul.f32 %v8184, %v8802
        %v8857 = vmul.f32 %v8185, %v8807
        %v8858 = vmul.f32 %v8186, %v8807
        %v8859 = vmul.f32 %v8187, %v8812
        %v8860 = vmul.f32 %v8188, %v8812
        %v8861 = vmul.f32 %v8189, %v8817
        %v8862 = vmul.f32 %v8190, %v8817
        %v8863 = vmul.f32 %v8191, %v8822
        %v8864 = vmul.f32 %v8192, %v8822
        %v8865 = vmul.f32 %v8193, %v8827
        %v8866 = vmul.f32 %v8194, %v8827
        %v8867 = vmul.f32 %v8195, %v8832
        %v8868 = vmul.f32 %v8196, %v8832
        %v8869 = vmul.f32 %v8197, %v8837
        %v8870 = vmul.f32 %v8198, %v8837
        %8872 = vset.pattern.permute.xlu0 37
        %8873 = vperm.xlu0 %8872, %v8743
        %v8874 = vpop.permute.xlu0 %8873
        %8877 = vset.pattern.permute.xlu0 37
        %8878 = vperm.xlu0 %8877, %v8744
        %v8879 = vpop.permute.xlu0 %8878
        %8882 = vset.pattern.permute.xlu0 37
        %8883 = vperm.xlu0 %8882, %v8745
        %v8884 = vpop.permute.xlu0 %8883
        %8887 = vset.pattern.permute.xlu0 37
        %8888 = vperm.xlu0 %8887, %v8746
        %v8889 = vpop.permute.xlu0 %8888
        %8892 = vset.pattern.permute.xlu0 37
        %8893 = vperm.xlu0 %8892, %v8747
        %v8894 = vpop.permute.xlu0 %8893
        %8897 = vset.pattern.permute.xlu0 37
        %8898 = vperm.xlu0 %8897, %v8748
        %v8899 = vpop.permute.xlu0 %8898
        %8902 = vset.pattern.permute.xlu0 37
        %8903 = vperm.xlu0 %8902, %v8749
        %v8904 = vpop.permute.xlu0 %8903
        %8907 = vset.pattern.permute.xlu0 37
        %8908 = vperm.xlu0 %8907, %v8750
        %v8909 = vpop.permute.xlu0 %8908
        %8912 = vset.pattern.permute.xlu0 37
        %8913 = vperm.xlu0 %8912, %v8751
        %v8914 = vpop.permute.xlu0 %8913
        %8917 = vset.pattern.permute.xlu0 37
        %8918 = vperm.xlu0 %8917, %v8752
        %v8919 = vpop.permute.xlu0 %8918
        %8922 = vset.pattern.permute.xlu0 37
        %8923 = vperm.xlu0 %8922, %v8753
        %v8924 = vpop.permute.xlu0 %8923
        %8927 = vset.pattern.permute.xlu0 37
        %8928 = vperm.xlu0 %8927, %v8754
        %v8929 = vpop.permute.xlu0 %8928
        %8932 = vset.pattern.permute.xlu0 37
        %8933 = vperm.xlu0 %8932, %v8755
        %v8934 = vpop.permute.xlu0 %8933
        %8937 = vset.pattern.permute.xlu0 37
        %8938 = vperm.xlu0 %8937, %v8756
        %v8939 = vpop.permute.xlu0 %8938
        %8942 = vset.pattern.permute.xlu0 37
        %8943 = vperm.xlu0 %8942, %v8757
        %v8944 = vpop.permute.xlu0 %8943
        %8947 = vset.pattern.permute.xlu0 37
        %8948 = vperm.xlu0 %8947, %v8758
        %v8949 = vpop.permute.xlu0 %8948
        %v8951 = vadd.f32 %v8839, %v8874
        %v8952 = vadd.f32 %v8840, %v8874
        %v8953 = vadd.f32 %v8841, %v8879
        %v8954 = vadd.f32 %v8842, %v8879
        %v8955 = vadd.f32 %v8843, %v8884
        %v8956 = vadd.f32 %v8844, %v8884
        %v8957 = vadd.f32 %v8845, %v8889
        %v8958 = vadd.f32 %v8846, %v8889
        %v8959 = vadd.f32 %v8847, %v8894
        %v8960 = vadd.f32 %v8848, %v8894
        %v8961 = vadd.f32 %v8849, %v8899
        %v8962 = vadd.f32 %v8850, %v8899
        %v8963 = vadd.f32 %v8851, %v8904
        %v8964 = vadd.f32 %v8852, %v8904
        %v8965 = vadd.f32 %v8853, %v8909
        %v8966 = vadd.f32 %v8854, %v8909
        %v8967 = vadd.f32 %v8855, %v8914
        %v8968 = vadd.f32 %v8856, %v8914
        %v8969 = vadd.f32 %v8857, %v8919
        %v8970 = vadd.f32 %v8858, %v8919
        %v8971 = vadd.f32 %v8859, %v8924
        %v8972 = vadd.f32 %v8860, %v8924
        %v8973 = vadd.f32 %v8861, %v8929
        %v8974 = vadd.f32 %v8862, %v8929
        %v8975 = vadd.f32 %v8863, %v8934
        %v8976 = vadd.f32 %v8864, %v8934
        %v8977 = vadd.f32 %v8865, %v8939
        %v8978 = vadd.f32 %v8866, %v8939
        %v8979 = vadd.f32 %v8867, %v8944
        %v8980 = vadd.f32 %v8868, %v8944
        %v8981 = vadd.f32 %v8869, %v8949
        %v8982 = vadd.f32 %v8870, %v8949
        %s8983 = scalar_lea.vmem %s2, 64
        %v8984 = vld [vmem:[%s8983] sm:$0xff]
        %v8985 = vld [vmem:[%s8983 + $0x8] sm:$0xff]
        %v8986 = vld [vmem:[%s8983 + $0x10] sm:$0xff]
        %v8987 = vld [vmem:[%s8983 + $0x18] sm:$0xff]
        %9020 = vrot.lane.b32.xlu0 %v8951, 124
        %v9021 = vpop.permute.xlu0 %9020
        %9022 = vrot.lane.b32.xlu0 %v8952, 124
        %v9023 = vpop.permute.xlu0 %9022
        %9024 = vrot.lane.b32.xlu0 %v8953, 124
        %v9025 = vpop.permute.xlu0 %9024
        %9026 = vrot.lane.b32.xlu0 %v8954, 124
        %v9027 = vpop.permute.xlu0 %9026
        %9028 = vrot.lane.b32.xlu0 %v8955, 124
        %v9029 = vpop.permute.xlu0 %9028
        %9030 = vrot.lane.b32.xlu0 %v8956, 124
        %v9031 = vpop.permute.xlu0 %9030
        %9032 = vrot.lane.b32.xlu0 %v8957, 124
        %v9033 = vpop.permute.xlu0 %9032
        %9034 = vrot.lane.b32.xlu0 %v8958, 124
        %v9035 = vpop.permute.xlu0 %9034
        %9036 = vrot.lane.b32.xlu0 %v8959, 124
        %v9037 = vpop.permute.xlu0 %9036
        %9038 = vrot.lane.b32.xlu0 %v8960, 124
        %v9039 = vpop.permute.xlu0 %9038
        %9040 = vrot.lane.b32.xlu0 %v8961, 124
        %v9041 = vpop.permute.xlu0 %9040
        %9042 = vrot.lane.b32.xlu0 %v8962, 124
        %v9043 = vpop.permute.xlu0 %9042
        %9044 = vrot.lane.b32.xlu0 %v8963, 124
        %v9045 = vpop.permute.xlu0 %9044
        %9046 = vrot.lane.b32.xlu0 %v8964, 124
        %v9047 = vpop.permute.xlu0 %9046
        %9048 = vrot.lane.b32.xlu0 %v8965, 124
        %v9049 = vpop.permute.xlu0 %9048
        %9050 = vrot.lane.b32.xlu0 %v8966, 124
        %v9051 = vpop.permute.xlu0 %9050
        %9052 = vrot.lane.b32.xlu0 %v8967, 124
        %v9053 = vpop.permute.xlu0 %9052
        %9054 = vrot.lane.b32.xlu0 %v8968, 124
        %v9055 = vpop.permute.xlu0 %9054
        %9056 = vrot.lane.b32.xlu0 %v8969, 124
        %v9057 = vpop.permute.xlu0 %9056
        %9058 = vrot.lane.b32.xlu0 %v8970, 124
        %v9059 = vpop.permute.xlu0 %9058
        %9060 = vrot.lane.b32.xlu0 %v8971, 124
        %v9061 = vpop.permute.xlu0 %9060
        %9062 = vrot.lane.b32.xlu0 %v8972, 124
        %v9063 = vpop.permute.xlu0 %9062
        %9064 = vrot.lane.b32.xlu0 %v8973, 124
        %v9065 = vpop.permute.xlu0 %9064
        %9066 = vrot.lane.b32.xlu0 %v8974, 124
        %v9067 = vpop.permute.xlu0 %9066
        %9068 = vrot.lane.b32.xlu0 %v8975, 124
        %v9069 = vpop.permute.xlu0 %9068
        %9070 = vrot.lane.b32.xlu0 %v8976, 124
        %v9071 = vpop.permute.xlu0 %9070
        %9072 = vrot.lane.b32.xlu0 %v8977, 124
        %v9073 = vpop.permute.xlu0 %9072
        %9074 = vrot.lane.b32.xlu0 %v8978, 124
        %v9075 = vpop.permute.xlu0 %9074
        %9076 = vrot.lane.b32.xlu0 %v8979, 124
        %v9077 = vpop.permute.xlu0 %9076
        %9078 = vrot.lane.b32.xlu0 %v8980, 124
        %v9079 = vpop.permute.xlu0 %9078
        %9080 = vrot.lane.b32.xlu0 %v8981, 124
        %v9081 = vpop.permute.xlu0 %9080
        %9082 = vrot.lane.b32.xlu0 %v8982, 124
        %v9083 = vpop.permute.xlu0 %9082
        %v9084 = vsel %vm5040, %v9021, %v9023
        %v9085 = vsel %vm5040, %v9025, %v9027
        %v9086 = vsel %vm5040, %v9029, %v9031
        %v9087 = vsel %vm5040, %v9033, %v9035
        %v9088 = vsel %vm5040, %v9037, %v9039
        %v9089 = vsel %vm5040, %v9041, %v9043
        %v9090 = vsel %vm5040, %v9045, %v9047
        %v9091 = vsel %vm5040, %v9049, %v9051
        %v9092 = vsel %vm5040, %v9053, %v9055
        %v9093 = vsel %vm5040, %v9057, %v9059
        %v9094 = vsel %vm5040, %v9061, %v9063
        %v9095 = vsel %vm5040, %v9065, %v9067
        %v9096 = vsel %vm5040, %v9069, %v9071
        %v9097 = vsel %vm5040, %v9073, %v9075
        %v9098 = vsel %vm5040, %v9077, %v9079
        %v9099 = vsel %vm5040, %v9081, %v9083
        %9116 = vmatprep.subr.mxu0 0.0
        %9117 = vmatpush1.msra.mxu0 %v9084
        %9118 = vmatprep.subr.mxu0 0.0
        %9119 = vmatpush1.msra.mxu0 %v9085
        %9120 = vmatprep.subr.mxu0 0.0
        %9121 = vmatpush1.msra.mxu0 %v9086
        %9122 = vmatprep.subr.mxu0 0.0
        %9123 = vmatpush1.msra.mxu0 %v9087
        %9124 = vmatprep.subr.mxu0 0.0
        %9125 = vmatpush1.msra.mxu0 %v9088
        %9126 = vmatprep.subr.mxu0 0.0
        %9127 = vmatpush1.msra.mxu0 %v9089
        %9128 = vmatprep.subr.mxu0 0.0
        %9129 = vmatpush1.msra.mxu0 %v9090
        %9130 = vmatprep.subr.mxu0 0.0
        %9131 = vmatpush1.msra.mxu0 %v9091
        %9132 = vmatprep.subr.mxu0 0.0
        %9133 = vmatpush1.msra.mxu0 %v9092
        %9134 = vmatprep.subr.mxu0 0.0
        %9135 = vmatpush1.msra.mxu0 %v9093
        %9136 = vmatprep.subr.mxu0 0.0
        %9137 = vmatpush1.msra.mxu0 %v9094
        %9138 = vmatprep.subr.mxu0 0.0
        %9139 = vmatpush1.msra.mxu0 %v9095
        %9140 = vmatprep.subr.mxu0 0.0
        %9141 = vmatpush1.msra.mxu0 %v9096
        %9142 = vmatprep.subr.mxu0 0.0
        %9143 = vmatpush1.msra.mxu0 %v9097
        %9144 = vmatprep.subr.mxu0 0.0
        %9145 = vmatpush1.msra.mxu0 %v9098
        %9146 = vmatprep.subr.mxu0 0.0
        %9147 = vmatpush1.msra.mxu0 %v9099
        %9148 = vmatprep.subr.mxu0 0.0
        %9149 = vmatpush1.msra.mxu0 0.0
        %9150 = vmatprep.subr.mxu0 0.0
        %9151 = vmatpush1.msra.mxu0 0.0
        %9152 = vmatprep.subr.mxu0 0.0
        %9153 = vmatpush1.msra.mxu0 0.0
        %9154 = vmatprep.subr.mxu0 0.0
        %9155 = vmatpush1.msra.mxu0 0.0
        %9156 = vmatprep.subr.mxu0 0.0
        %9157 = vmatpush1.msra.mxu0 0.0
        %9158 = vmatprep.subr.mxu0 0.0
        %9159 = vmatpush1.msra.mxu0 0.0
        %9160 = vmatprep.subr.mxu0 0.0
        %9161 = vmatpush1.msra.mxu0 0.0
        %9162 = vmatprep.subr.mxu0 0.0
        %9163 = vmatpush1.msra.mxu0 0.0
        %9164 = vmatprep.subr.mxu0 0.0
        %9165 = vmatpush1.msra.mxu0 0.0
        %9166 = vmatprep.subr.mxu0 0.0
        %9167 = vmatpush1.msra.mxu0 0.0
        %9168 = vmatprep.subr.mxu0 0.0
        %9169 = vmatpush1.msra.mxu0 0.0
        %9170 = vmatprep.subr.mxu0 0.0
        %9171 = vmatpush1.msra.mxu0 0.0
        %9172 = vmatprep.subr.mxu0 0.0
        %9173 = vmatpush1.msra.mxu0 0.0
        %9174 = vmatprep.subr.mxu0 0.0
        %9175 = vmatpush1.msra.mxu0 0.0
        %9176 = vmatprep.subr.mxu0 0.0
        %9177 = vmatpush1.msra.mxu0 0.0
        %9178 = vmatprep.subr.mxu0 0.0
        %9179 = vmatpush1.msra.mxu0 0.0
        %9180 = vmatprep.mubr.f32.mxu0 0.0
        %9181 = vmatmul.mubr.f32.gmra.mrb[0].mxu0 %v8984
        %v9182 = vpop.f32.mrb[0].mxu0
        %v9183 = vadd.f32 0.0, %v9182
        %v9184 = vpop.f32.mrb[0].mxu0
        %9185 = vmatprep.mubr.f32.mxu0 0.0
        %9186 = vmatmul.mubr.f32.gmra.mrb[0].mxu0 %v8985
        %v9187 = vpop.f32.mrb[0].mxu0
        %v9188 = vadd.f32 0.0, %v9187
        %v9189 = vpop.f32.mrb[0].mxu0
        %9190 = vmatprep.mubr.f32.mxu0 0.0
        %9191 = vmatmul.mubr.f32.gmra.mrb[0].mxu0 %v8986
        %v9192 = vpop.f32.mrb[0].mxu0
        %v9193 = vadd.f32 0.0, %v9192
        %v9194 = vpop.f32.mrb[0].mxu0
        %9195 = vmatprep.mubr.f32.mxu0 0.0
        %9196 = vmatmul.mubr.f32.gmra.mrb[0].mxu0 %v8987
        %v9197 = vpop.f32.mrb[0].mxu0
        %v9198 = vadd.f32 0.0, %v9197
        %v9199 = vpop.f32.mrb[0].mxu0
        %9200 = vdwg.mxu0
        %v9201 = vadd.f32 %v6304, %v9183
        %v9202 = vadd.f32 %v6305, %v9188
        %v9203 = vadd.f32 %v6306, %v9193
        %v9204 = vadd.f32 %v6307, %v9198
        %9205 = vset.pattern.permute.xlu0 41
        %9206 = vperm.xlu0 %9205, %v372
        %v9207 = vpop.permute.xlu0 %9206
        %9209 = vset.pattern.permute.xlu0 41
        %9210 = vperm.xlu0 %9209, %v377
        %v9211 = vpop.permute.xlu0 %9210
        %9213 = vset.pattern.permute.xlu0 41
        %9214 = vperm.xlu0 %9213, %v382
        %v9215 = vpop.permute.xlu0 %9214
        %9217 = vset.pattern.permute.xlu0 41
        %9218 = vperm.xlu0 %9217, %v387
        %v9219 = vpop.permute.xlu0 %9218
        %v9221 = vadd.f32 %v9201, %v9207
        %v9222 = vadd.f32 %v9202, %v9211
        %v9223 = vadd.f32 %v9203, %v9215
        %v9224 = vadd.f32 %v9204, %v9219
        %s9225 = scalar_lea.vmem %s1, 384
        %v9226 = vld [vmem:[%s9225] sm:$0xff]
        %v9227 = vld [vmem:[%s9225 + $0x8] sm:$0xff]
        %v9228 = vld [vmem:[%s9225 + $0x10] sm:$0xff]
        %v9229 = vld [vmem:[%s9225 + $0x18] sm:$0xff]
        %v9230 = vld [vmem:[%s9225 + $0x20] sm:$0xff]
        %v9231 = vld [vmem:[%s9225 + $0x28] sm:$0xff]
        %v9232 = vld [vmem:[%s9225 + $0x30] sm:$0xff]
        %v9233 = vld [vmem:[%s9225 + $0x38] sm:$0xff]
        %v9234 = vld [vmem:[%s9225 + $0x40] sm:$0xff]
        %v9235 = vld [vmem:[%s9225 + $0x48] sm:$0xff]
        %v9236 = vld [vmem:[%s9225 + $0x50] sm:$0xff]
        %v9237 = vld [vmem:[%s9225 + $0x58] sm:$0xff]
        %v9238 = vld [vmem:[%s9225 + $0x60] sm:$0xff]
        %v9239 = vld [vmem:[%s9225 + $0x68] sm:$0xff]
        %v9240 = vld [vmem:[%s9225 + $0x70] sm:$0xff]
        %v9241 = vld [vmem:[%s9225 + $0x78] sm:$0xff]
        %9242 = vset.pattern.permute.xlu0 48
        %9243 = vperm.xlu0 %9242, %v372
        %v9244 = vpop.permute.xlu0 %9243
        %9246 = vset.pattern.permute.xlu0 48
        %9247 = vperm.xlu0 %9246, %v377
        %v9248 = vpop.permute.xlu0 %9247
        %9250 = vset.pattern.permute.xlu0 48
        %9251 = vperm.xlu0 %9250, %v382
        %v9252 = vpop.permute.xlu0 %9251
        %9254 = vset.pattern.permute.xlu0 48
        %9255 = vperm.xlu0 %9254, %v387
        %v9256 = vpop.permute.xlu0 %9255
        %9258 = vset.pattern.permute.xlu0 48
        %9259 = vperm.xlu0 %9258, %v392
        %v9260 = vpop.permute.xlu0 %9259
        %9262 = vset.pattern.permute.xlu0 48
        %9263 = vperm.xlu0 %9262, %v397
        %v9264 = vpop.permute.xlu0 %9263
        %9266 = vset.pattern.permute.xlu0 48
        %9267 = vperm.xlu0 %9266, %v402
        %v9268 = vpop.permute.xlu0 %9267
        %9270 = vset.pattern.permute.xlu0 48
        %9271 = vperm.xlu0 %9270, %v407
        %v9272 = vpop.permute.xlu0 %9271
        %9274 = vset.pattern.permute.xlu0 48
        %9275 = vperm.xlu0 %9274, %v412
        %v9276 = vpop.permute.xlu0 %9275
        %9278 = vset.pattern.permute.xlu0 48
        %9279 = vperm.xlu0 %9278, %v417
        %v9280 = vpop.permute.xlu0 %9279
        %9282 = vset.pattern.permute.xlu0 48
        %9283 = vperm.xlu0 %9282, %v422
        %v9284 = vpop.permute.xlu0 %9283
        %9286 = vset.pattern.permute.xlu0 48
        %9287 = vperm.xlu0 %9286, %v427
        %v9288 = vpop.permute.xlu0 %9287
        %9290 = vset.pattern.permute.xlu0 48
        %9291 = vperm.xlu0 %9290, %v432
        %v9292 = vpop.permute.xlu0 %9291
        %9294 = vset.pattern.permute.xlu0 48
        %9295 = vperm.xlu0 %9294, %v437
        %v9296 = vpop.permute.xlu0 %9295
        %9298 = vset.pattern.permute.xlu0 48
        %9299 = vperm.xlu0 %9298, %v442
        %v9300 = vpop.permute.xlu0 %9299
        %9302 = vset.pattern.permute.xlu0 48
        %9303 = vperm.xlu0 %9302, %v447
        %v9304 = vpop.permute.xlu0 %9303
        %v9307 = vsel %vm550, %v9226, 0
        %v9310 = vsel %vm550, %v9227, 0
        %v9313 = vsel %vm550, %v9228, 0
        %v9316 = vsel %vm550, %v9229, 0
        %v9319 = vsel %vm550, %v9230, 0
        %v9322 = vsel %vm550, %v9231, 0
        %v9325 = vsel %vm550, %v9232, 0
        %v9328 = vsel %vm550, %v9233, 0
        %v9331 = vsel %vm550, %v9234, 0
        %v9334 = vsel %vm550, %v9235, 0
        %v9337 = vsel %vm550, %v9236, 0
        %v9340 = vsel %vm550, %v9237, 0
        %v9343 = vsel %vm550, %v9238, 0
        %v9346 = vsel %vm550, %v9239, 0
        %v9349 = vsel %vm550, %v9240, 0
        %v9352 = vsel %vm550, %v9241, 0
        %9354 = vmatprep.subr.mxu0 0.0
        %9355 = vmatpush1.msra.mxu0 %v9221
        %9356 = vmatprep.subr.mxu0 0.0
        %9357 = vmatpush1.msra.mxu0 %v9222
        %9358 = vmatprep.subr.mxu0 0.0
        %9359 = vmatpush1.msra.mxu0 %v9223
        %9360 = vmatprep.subr.mxu0 0.0
        %9361 = vmatpush1.msra.mxu0 %v9224
        %9362 = vmatprep.subr.mxu0 0.0
        %9363 = vmatpush1.msra.mxu0 0.0
        %9364 = vmatprep.subr.mxu0 0.0
        %9365 = vmatpush1.msra.mxu0 0.0
        %9366 = vmatprep.subr.mxu0 0.0
        %9367 = vmatpush1.msra.mxu0 0.0
        %9368 = vmatprep.subr.mxu0 0.0
        %9369 = vmatpush1.msra.mxu0 0.0
        %9370 = vmatprep.subr.mxu0 0.0
        %9371 = vmatpush1.msra.mxu0 0.0
        %9372 = vmatprep.subr.mxu0 0.0
        %9373 = vmatpush1.msra.mxu0 0.0
        %9374 = vmatprep.subr.mxu0 0.0
        %9375 = vmatpush1.msra.mxu0 0.0
        %9376 = vmatprep.subr.mxu0 0.0
        %9377 = vmatpush1.msra.mxu0 0.0
        %9378 = vmatprep.subr.mxu0 0.0
        %9379 = vmatpush1.msra.mxu0 0.0
        %9380 = vmatprep.subr.mxu0 0.0
        %9381 = vmatpush1.msra.mxu0 0.0
        %9382 = vmatprep.subr.mxu0 0.0
        %9383 = vmatpush1.msra.mxu0 0.0
        %9384 = vmatprep.subr.mxu0 0.0
        %9385 = vmatpush1.msra.mxu0 0.0
        %9386 = vmatprep.subr.mxu0 0.0
        %9387 = vmatpush1.msra.mxu0 0.0
        %9388 = vmatprep.subr.mxu0 0.0
        %9389 = vmatpush1.msra.mxu0 0.0
        %9390 = vmatprep.subr.mxu0 0.0
        %9391 = vmatpush1.msra.mxu0 0.0
        %9392 = vmatprep.subr.mxu0 0.0
        %9393 = vmatpush1.msra.mxu0 0.0
        %9394 = vmatprep.subr.mxu0 0.0
        %9395 = vmatpush1.msra.mxu0 0.0
        %9396 = vmatprep.subr.mxu0 0.0
        %9397 = vmatpush1.msra.mxu0 0.0
        %9398 = vmatprep.subr.mxu0 0.0
        %9399 = vmatpush1.msra.mxu0 0.0
        %9400 = vmatprep.subr.mxu0 0.0
        %9401 = vmatpush1.msra.mxu0 0.0
        %9402 = vmatprep.subr.mxu0 0.0
        %9403 = vmatpush1.msra.mxu0 0.0
        %9404 = vmatprep.subr.mxu0 0.0
        %9405 = vmatpush1.msra.mxu0 0.0
        %9406 = vmatprep.subr.mxu0 0.0
        %9407 = vmatpush1.msra.mxu0 0.0
        %9408 = vmatprep.subr.mxu0 0.0
        %9409 = vmatpush1.msra.mxu0 0.0
        %9410 = vmatprep.subr.mxu0 0.0
        %9411 = vmatpush1.msra.mxu0 0.0
        %9412 = vmatprep.subr.mxu0 0.0
        %9413 = vmatpush1.msra.mxu0 0.0
        %9414 = vmatprep.subr.mxu0 0.0
        %9415 = vmatpush1.msra.mxu0 0.0
        %9416 = vmatprep.subr.mxu0 0.0
        %9417 = vmatpush1.msra.mxu0 0.0
        %9418 = vmatprep.mubr.f32.mxu0 0.0
        %9419 = vmatmul.mubr.f32.gmra.mrb[0].mxu0 %v9307
        %v9420 = vpop.f32.mrb[0].mxu0
        %v9421 = vadd.f32 %v9244, %v9420
        %v9422 = vpop.f32.mrb[0].mxu0
        %9423 = vmatprep.mubr.f32.mxu0 0.0
        %9424 = vmatmul.mubr.f32.gmra.mrb[0].mxu0 %v9310
        %v9425 = vpop.f32.mrb[0].mxu0
        %v9426 = vadd.f32 %v9248, %v9425
        %v9427 = vpop.f32.mrb[0].mxu0
        %9428 = vmatprep.mubr.f32.mxu0 0.0
        %9429 = vmatmul.mubr.f32.gmra.mrb[0].mxu0 %v9313
        %v9430 = vpop.f32.mrb[0].mxu0
        %v9431 = vadd.f32 %v9252, %v9430
        %v9432 = vpop.f32.mrb[0].mxu0
        %9433 = vmatprep.mubr.f32.mxu0 0.0
        %9434 = vmatmul.mubr.f32.gmra.mrb[0].mxu0 %v9316
        %v9435 = vpop.f32.mrb[0].mxu0
        %v9436 = vadd.f32 %v9256, %v9435
        %v9437 = vpop.f32.mrb[0].mxu0
        %9438 = vmatprep.mubr.f32.mxu0 0.0
        %9439 = vmatmul.mubr.f32.gmra.mrb[0].mxu0 %v9319
        %v9440 = vpop.f32.mrb[0].mxu0
        %v9441 = vadd.f32 %v9260, %v9440
        %v9442 = vpop.f32.mrb[0].mxu0
        %9443 = vmatprep.mubr.f32.mxu0 0.0
        %9444 = vmatmul.mubr.f32.gmra.mrb[0].mxu0 %v9322
        %v9445 = vpop.f32.mrb[0].mxu0
        %v9446 = vadd.f32 %v9264, %v9445
        %v9447 = vpop.f32.mrb[0].mxu0
        %9448 = vmatprep.mubr.f32.mxu0 0.0
        %9449 = vmatmul.mubr.f32.gmra.mrb[0].mxu0 %v9325
        %v9450 = vpop.f32.mrb[0].mxu0
        %v9451 = vadd.f32 %v9268, %v9450
        %v9452 = vpop.f32.mrb[0].mxu0
        %9453 = vmatprep.mubr.f32.mxu0 0.0
        %9454 = vmatmul.mubr.f32.gmra.mrb[0].mxu0 %v9328
        %v9455 = vpop.f32.mrb[0].mxu0
        %v9456 = vadd.f32 %v9272, %v9455
        %v9457 = vpop.f32.mrb[0].mxu0
        %9458 = vmatprep.mubr.f32.mxu0 0.0
        %9459 = vmatmul.mubr.f32.gmra.mrb[0].mxu0 %v9331
        %v9460 = vpop.f32.mrb[0].mxu0
        %v9461 = vadd.f32 %v9276, %v9460
        %v9462 = vpop.f32.mrb[0].mxu0
        %9463 = vmatprep.mubr.f32.mxu0 0.0
        %9464 = vmatmul.mubr.f32.gmra.mrb[0].mxu0 %v9334
        %v9465 = vpop.f32.mrb[0].mxu0
        %v9466 = vadd.f32 %v9280, %v9465
        %v9467 = vpop.f32.mrb[0].mxu0
        %9468 = vmatprep.mubr.f32.mxu0 0.0
        %9469 = vmatmul.mubr.f32.gmra.mrb[0].mxu0 %v9337
        %v9470 = vpop.f32.mrb[0].mxu0
        %v9471 = vadd.f32 %v9284, %v9470
        %v9472 = vpop.f32.mrb[0].mxu0
        %9473 = vmatprep.mubr.f32.mxu0 0.0
        %9474 = vmatmul.mubr.f32.gmra.mrb[0].mxu0 %v9340
        %v9475 = vpop.f32.mrb[0].mxu0
        %v9476 = vadd.f32 %v9288, %v9475
        %v9477 = vpop.f32.mrb[0].mxu0
        %9478 = vmatprep.mubr.f32.mxu0 0.0
        %9479 = vmatmul.mubr.f32.gmra.mrb[0].mxu0 %v9343
        %v9480 = vpop.f32.mrb[0].mxu0
        %v9481 = vadd.f32 %v9292, %v9480
        %v9482 = vpop.f32.mrb[0].mxu0
        %9483 = vmatprep.mubr.f32.mxu0 0.0
        %9484 = vmatmul.mubr.f32.gmra.mrb[0].mxu0 %v9346
        %v9485 = vpop.f32.mrb[0].mxu0
        %v9486 = vadd.f32 %v9296, %v9485
        %v9487 = vpop.f32.mrb[0].mxu0
        %9488 = vmatprep.mubr.f32.mxu0 0.0
        %9489 = vmatmul.mubr.f32.gmra.mrb[0].mxu0 %v9349
        %v9490 = vpop.f32.mrb[0].mxu0
        %v9491 = vadd.f32 %v9300, %v9490
        %v9492 = vpop.f32.mrb[0].mxu0
        %9493 = vmatprep.mubr.f32.mxu0 0.0
        %9494 = vmatmul.mubr.f32.gmra.mrb[0].mxu0 %v9352
        %v9495 = vpop.f32.mrb[0].mxu0
        %v9496 = vadd.f32 %v9304, %v9495
        %v9497 = vpop.f32.mrb[0].mxu0
        %9498 = vdwg.mxu0
        %vm9499 = vcmp.ge.f32.partialorder %v9421, 0.0
        %vm9500 = vcmp.ge.f32.partialorder %v9426, 0.0
        %vm9501 = vcmp.ge.f32.partialorder %v9431, 0.0
        %vm9502 = vcmp.ge.f32.partialorder %v9436, 0.0
        %vm9503 = vcmp.ge.f32.partialorder %v9441, 0.0
        %vm9504 = vcmp.ge.f32.partialorder %v9446, 0.0
        %vm9505 = vcmp.ge.f32.partialorder %v9451, 0.0
        %vm9506 = vcmp.ge.f32.partialorder %v9456, 0.0
        %vm9507 = vcmp.ge.f32.partialorder %v9461, 0.0
        %vm9508 = vcmp.ge.f32.partialorder %v9466, 0.0
        %vm9509 = vcmp.ge.f32.partialorder %v9471, 0.0
        %vm9510 = vcmp.ge.f32.partialorder %v9476, 0.0
        %vm9511 = vcmp.ge.f32.partialorder %v9481, 0.0
        %vm9512 = vcmp.ge.f32.partialorder %v9486, 0.0
        %vm9513 = vcmp.ge.f32.partialorder %v9491, 0.0
        %vm9514 = vcmp.ge.f32.partialorder %v9496, 0.0
        %9515 = vset.pattern.permute.xlu0 58
        %9516 = vperm.xlu0 %9515, %v372
        %v9517 = vpop.permute.xlu0 %9516
        %9519 = vset.pattern.permute.xlu0 58
        %9520 = vperm.xlu0 %9519, %v377
        %v9521 = vpop.permute.xlu0 %9520
        %9523 = vset.pattern.permute.xlu0 58
        %9524 = vperm.xlu0 %9523, %v382
        %v9525 = vpop.permute.xlu0 %9524
        %9527 = vset.pattern.permute.xlu0 58
        %9528 = vperm.xlu0 %9527, %v387
        %v9529 = vpop.permute.xlu0 %9528
        %9531 = vset.pattern.permute.xlu0 58
        %9532 = vperm.xlu0 %9531, %v392
        %v9533 = vpop.permute.xlu0 %9532
        %9535 = vset.pattern.permute.xlu0 58
        %9536 = vperm.xlu0 %9535, %v397
        %v9537 = vpop.permute.xlu0 %9536
        %9539 = vset.pattern.permute.xlu0 58
        %9540 = vperm.xlu0 %9539, %v402
        %v9541 = vpop.permute.xlu0 %9540
        %9543 = vset.pattern.permute.xlu0 58
        %9544 = vperm.xlu0 %9543, %v407
        %v9545 = vpop.permute.xlu0 %9544
        %9547 = vset.pattern.permute.xlu0 58
        %9548 = vperm.xlu0 %9547, %v412
        %v9549 = vpop.permute.xlu0 %9548
        %9551 = vset.pattern.permute.xlu0 58
        %9552 = vperm.xlu0 %9551, %v417
        %v9553 = vpop.permute.xlu0 %9552
        %9555 = vset.pattern.permute.xlu0 58
        %9556 = vperm.xlu0 %9555, %v422
        %v9557 = vpop.permute.xlu0 %9556
        %9559 = vset.pattern.permute.xlu0 58
        %9560 = vperm.xlu0 %9559, %v427
        %v9561 = vpop.permute.xlu0 %9560
        %9563 = vset.pattern.permute.xlu0 58
        %9564 = vperm.xlu0 %9563, %v432
        %v9565 = vpop.permute.xlu0 %9564
        %9567 = vset.pattern.permute.xlu0 58
        %9568 = vperm.xlu0 %9567, %v437
        %v9569 = vpop.permute.xlu0 %9568
        %9571 = vset.pattern.permute.xlu0 58
        %9572 = vperm.xlu0 %9571, %v442
        %v9573 = vpop.permute.xlu0 %9572
        %9575 = vset.pattern.permute.xlu0 58
        %9576 = vperm.xlu0 %9575, %v447
        %v9577 = vpop.permute.xlu0 %9576
        %v9579 = vmul.f32 %v9517, %v9421
        %v9580 = vmul.f32 %v9521, %v9426
        %v9581 = vmul.f32 %v9525, %v9431
        %v9582 = vmul.f32 %v9529, %v9436
        %v9583 = vmul.f32 %v9533, %v9441
        %v9584 = vmul.f32 %v9537, %v9446
        %v9585 = vmul.f32 %v9541, %v9451
        %v9586 = vmul.f32 %v9545, %v9456
        %v9587 = vmul.f32 %v9549, %v9461
        %v9588 = vmul.f32 %v9553, %v9466
        %v9589 = vmul.f32 %v9557, %v9471
        %v9590 = vmul.f32 %v9561, %v9476
        %v9591 = vmul.f32 %v9565, %v9481
        %v9592 = vmul.f32 %v9569, %v9486
        %v9593 = vmul.f32 %v9573, %v9491
        %v9594 = vmul.f32 %v9577, %v9496
        %v9595 = vsel %vm9499, %v9421, %v9579
        %v9596 = vsel %vm9500, %v9426, %v9580
        %v9597 = vsel %vm9501, %v9431, %v9581
        %v9598 = vsel %vm9502, %v9436, %v9582
        %v9599 = vsel %vm9503, %v9441, %v9583
        %v9600 = vsel %vm9504, %v9446, %v9584
        %v9601 = vsel %vm9505, %v9451, %v9585
        %v9602 = vsel %vm9506, %v9456, %v9586
        %v9603 = vsel %vm9507, %v9461, %v9587
        %v9604 = vsel %vm9508, %v9466, %v9588
        %v9605 = vsel %vm9509, %v9471, %v9589
        %v9606 = vsel %vm9510, %v9476, %v9590
        %v9607 = vsel %vm9511, %v9481, %v9591
        %v9608 = vsel %vm9512, %v9486, %v9592
        %v9609 = vsel %vm9513, %v9491, %v9593
        %v9610 = vsel %vm9514, %v9496, %v9594
        %9611 = vmatprep.subr.mxu0 0.0
        %9612 = vmatpush1.msra.mxu0 %v9595
        %9613 = vmatprep.subr.mxu0 0.0
        %9614 = vmatpush1.msra.mxu0 %v9596
        %9615 = vmatprep.subr.mxu0 0.0
        %9616 = vmatpush1.msra.mxu0 %v9597
        %9617 = vmatprep.subr.mxu0 0.0
        %9618 = vmatpush1.msra.mxu0 %v9598
        %9619 = vmatprep.subr.mxu0 0.0
        %9620 = vmatpush1.msra.mxu0 %v9599
        %9621 = vmatprep.subr.mxu0 0.0
        %9622 = vmatpush1.msra.mxu0 %v9600
        %9623 = vmatprep.subr.mxu0 0.0
        %9624 = vmatpush1.msra.mxu0 %v9601
        %9625 = vmatprep.subr.mxu0 0.0
        %9626 = vmatpush1.msra.mxu0 %v9602
        %9627 = vmatprep.subr.mxu0 0.0
        %9628 = vmatpush1.msra.mxu0 %v9603
        %9629 = vmatprep.subr.mxu0 0.0
        %9630 = vmatpush1.msra.mxu0 %v9604
        %9631 = vmatprep.subr.mxu0 0.0
        %9632 = vmatpush1.msra.mxu0 %v9605
        %9633 = vmatprep.subr.mxu0 0.0
        %9634 = vmatpush1.msra.mxu0 %v9606
        %9635 = vmatprep.subr.mxu0 0.0
        %9636 = vmatpush1.msra.mxu0 %v9607
        %9637 = vmatprep.subr.mxu0 0.0
        %9638 = vmatpush1.msra.mxu0 %v9608
        %9639 = vmatprep.subr.mxu0 0.0
        %9640 = vmatpush1.msra.mxu0 %v9609
        %9641 = vmatprep.subr.mxu0 0.0
        %9642 = vmatpush1.msra.mxu0 %v9610
        %9643 = vmatprep.subr.mxu0 0.0
        %9644 = vmatpush1.msra.mxu0 0.0
        %9645 = vmatprep.subr.mxu0 0.0
        %9646 = vmatpush1.msra.mxu0 0.0
        %9647 = vmatprep.subr.mxu0 0.0
        %9648 = vmatpush1.msra.mxu0 0.0
        %9649 = vmatprep.subr.mxu0 0.0
        %9650 = vmatpush1.msra.mxu0 0.0
        %9651 = vmatprep.subr.mxu0 0.0
        %9652 = vmatpush1.msra.mxu0 0.0
        %9653 = vmatprep.subr.mxu0 0.0
        %9654 = vmatpush1.msra.mxu0 0.0
        %9655 = vmatprep.subr.mxu0 0.0
        %9656 = vmatpush1.msra.mxu0 0.0
        %9657 = vmatprep.subr.mxu0 0.0
        %9658 = vmatpush1.msra.mxu0 0.0
        %9659 = vmatprep.subr.mxu0 0.0
        %9660 = vmatpush1.msra.mxu0 0.0
        %9661 = vmatprep.subr.mxu0 0.0
        %9662 = vmatpush1.msra.mxu0 0.0
        %9663 = vmatprep.subr.mxu0 0.0
        %9664 = vmatpush1.msra.mxu0 0.0
        %9665 = vmatprep.subr.mxu0 0.0
        %9666 = vmatpush1.msra.mxu0 0.0
        %9667 = vmatprep.subr.mxu0 0.0
        %9668 = vmatpush1.msra.mxu0 0.0
        %9669 = vmatprep.subr.mxu0 0.0
        %9670 = vmatpush1.msra.mxu0 0.0
        %9671 = vmatprep.subr.mxu0 0.0
        %9672 = vmatpush1.msra.mxu0 0.0
        %9673 = vmatprep.subr.mxu0 0.0
        %9674 = vmatpush1.msra.mxu0 0.0
        %9675 = vmatprep.mubr.f32.mxu0 0.0
        %9676 = vmatmul.mubr.f32.gmra.mrb[0].mxu0 1.0
        %v9677 = vpop.f32.mrb[0].mxu0
        %v9678 = vadd.f32 0.0, %v9677
        %v9679 = vpop.f32.mrb[0].mxu0
        %9680 = vdwg.mxu0
        %v9681 = vmul.f32 %v9595, %v9595
        %v9682 = vmul.f32 %v9596, %v9596
        %v9683 = vmul.f32 %v9597, %v9597
        %v9684 = vmul.f32 %v9598, %v9598
        %v9685 = vmul.f32 %v9599, %v9599
        %v9686 = vmul.f32 %v9600, %v9600
        %v9687 = vmul.f32 %v9601, %v9601
        %v9688 = vmul.f32 %v9602, %v9602
        %v9689 = vmul.f32 %v9603, %v9603
        %v9690 = vmul.f32 %v9604, %v9604
        %v9691 = vmul.f32 %v9605, %v9605
        %v9692 = vmul.f32 %v9606, %v9606
        %v9693 = vmul.f32 %v9607, %v9607
        %v9694 = vmul.f32 %v9608, %v9608
        %v9695 = vmul.f32 %v9609, %v9609
        %v9696 = vmul.f32 %v9610, %v9610
        %9697 = vmatprep.subr.mxu0 0.0
        %9698 = vmatpush1.msra.mxu0 %v9681
        %9699 = vmatprep.subr.mxu0 0.0
        %9700 = vmatpush1.msra.mxu0 %v9682
        %9701 = vmatprep.subr.mxu0 0.0
        %9702 = vmatpush1.msra.mxu0 %v9683
        %9703 = vmatprep.subr.mxu0 0.0
        %9704 = vmatpush1.msra.mxu0 %v9684
        %9705 = vmatprep.subr.mxu0 0.0
        %9706 = vmatpush1.msra.mxu0 %v9685
        %9707 = vmatprep.subr.mxu0 0.0
        %9708 = vmatpush1.msra.mxu0 %v9686
        %9709 = vmatprep.subr.mxu0 0.0
        %9710 = vmatpush1.msra.mxu0 %v9687
        %9711 = vmatprep.subr.mxu0 0.0
        %9712 = vmatpush1.msra.mxu0 %v9688
        %9713 = vmatprep.subr.mxu0 0.0
        %9714 = vmatpush1.msra.mxu0 %v9689
        %9715 = vmatprep.subr.mxu0 0.0
        %9716 = vmatpush1.msra.mxu0 %v9690
        %9717 = vmatprep.subr.mxu0 0.0
        %9718 = vmatpush1.msra.mxu0 %v9691
        %9719 = vmatprep.subr.mxu0 0.0
        %9720 = vmatpush1.msra.mxu0 %v9692
        %9721 = vmatprep.subr.mxu0 0.0
        %9722 = vmatpush1.msra.mxu0 %v9693
        %9723 = vmatprep.subr.mxu0 0.0
        %9724 = vmatpush1.msra.mxu0 %v9694
        %9725 = vmatprep.subr.mxu0 0.0
        %9726 = vmatpush1.msra.mxu0 %v9695
        %9727 = vmatprep.subr.mxu0 0.0
        %9728 = vmatpush1.msra.mxu0 %v9696
        %9729 = vmatprep.subr.mxu0 0.0
        %9730 = vmatpush1.msra.mxu0 0.0
        %9731 = vmatprep.subr.mxu0 0.0
        %9732 = vmatpush1.msra.mxu0 0.0
        %9733 = vmatprep.subr.mxu0 0.0
        %9734 = vmatpush1.msra.mxu0 0.0
        %9735 = vmatprep.subr.mxu0 0.0
        %9736 = vmatpush1.msra.mxu0 0.0
        %9737 = vmatprep.subr.mxu0 0.0
        %9738 = vmatpush1.msra.mxu0 0.0
        %9739 = vmatprep.subr.mxu0 0.0
        %9740 = vmatpush1.msra.mxu0 0.0
        %9741 = vmatprep.subr.mxu0 0.0
        %9742 = vmatpush1.msra.mxu0 0.0
        %9743 = vmatprep.subr.mxu0 0.0
        %9744 = vmatpush1.msra.mxu0 0.0
        %9745 = vmatprep.subr.mxu0 0.0
        %9746 = vmatpush1.msra.mxu0 0.0
        %9747 = vmatprep.subr.mxu0 0.0
        %9748 = vmatpush1.msra.mxu0 0.0
        %9749 = vmatprep.subr.mxu0 0.0
        %9750 = vmatpush1.msra.mxu0 0.0
        %9751 = vmatprep.subr.mxu0 0.0
        %9752 = vmatpush1.msra.mxu0 0.0
        %9753 = vmatprep.subr.mxu0 0.0
        %9754 = vmatpush1.msra.mxu0 0.0
        %9755 = vmatprep.subr.mxu0 0.0
        %9756 = vmatpush1.msra.mxu0 0.0
        %9757 = vmatprep.subr.mxu0 0.0
        %9758 = vmatpush1.msra.mxu0 0.0
        %9759 = vmatprep.subr.mxu0 0.0
        %9760 = vmatpush1.msra.mxu0 0.0
        %9761 = vmatprep.mubr.f32.mxu0 0.0
        %9762 = vmatmul.mubr.f32.gmra.mrb[0].mxu0 1.0
        %v9763 = vpop.f32.mrb[0].mxu0
        %v9764 = vadd.f32 0.0, %v9763
        %v9765 = vpop.f32.mrb[0].mxu0
        %9766 = vdwg.mxu0
        %v9767 = vsel %vm1012, %v9678, 0.0
        %9768 = vadd.xlane.f32.xlu0 %v9767
        %v9769 = vpop.xlane.xlu0 %9768
        %v9770 = vmul.f32 %v9769, 6.1035156e-05
        %v9771 = vsel %vm1012, %v9764, 0.0
        %9772 = vadd.xlane.f32.xlu0 %v9771
        %v9773 = vpop.xlane.xlu0 %9772
        %v9774 = vmul.f32 %v9773, 6.1035156e-05
        %v9775 = vmul.f32 %v9770, %v9770
        %v9776 = vsub.f32 %v9774, %v9775
        %v9777 = vadd.f32 %v9776, 1e-05
        %v9778 = vrsqrt.pop %v9777
        %v9779 = vlaneseq
        %v9780 = vshrl.u32 %v9779, 7
        %v9781 = vsub.s32 0, %v9780
        %v9782 = vrot.slane %v9778, %v9781
        %v9783 = vmul.f32 %v372, %v9782
        %v9784 = vmul.f32 %v377, %v9782
        %v9785 = vmul.f32 %v382, %v9782
        %v9786 = vmul.f32 %v387, %v9782
        %v9787 = vmul.f32 %v392, %v9782
        %v9788 = vmul.f32 %v397, %v9782
        %v9789 = vmul.f32 %v402, %v9782
        %v9790 = vmul.f32 %v407, %v9782
        %v9791 = vmul.f32 %v412, %v9782
        %v9792 = vmul.f32 %v417, %v9782
        %v9793 = vmul.f32 %v422, %v9782
        %v9794 = vmul.f32 %v427, %v9782
        %v9795 = vmul.f32 %v432, %v9782
        %v9796 = vmul.f32 %v437, %v9782
        %v9797 = vmul.f32 %v442, %v9782
        %v9798 = vmul.f32 %v447, %v9782
        %v9799 = vlaneseq
        %v9800 = vshrl.u32 %v9799, 7
        %v9801 = vsub.s32 0, %v9800
        %v9802 = vrot.slane %v9770, %v9801
        %v9803 = vmul.f32 %v9802, %v9783
        %v9804 = vmul.f32 %v9802, %v9784
        %v9805 = vmul.f32 %v9802, %v9785
        %v9806 = vmul.f32 %v9802, %v9786
        %v9807 = vmul.f32 %v9802, %v9787
        %v9808 = vmul.f32 %v9802, %v9788
        %v9809 = vmul.f32 %v9802, %v9789
        %v9810 = vmul.f32 %v9802, %v9790
        %v9811 = vmul.f32 %v9802, %v9791
        %v9812 = vmul.f32 %v9802, %v9792
        %v9813 = vmul.f32 %v9802, %v9793
        %v9814 = vmul.f32 %v9802, %v9794
        %v9815 = vmul.f32 %v9802, %v9795
        %v9816 = vmul.f32 %v9802, %v9796
        %v9817 = vmul.f32 %v9802, %v9797
        %v9818 = vmul.f32 %v9802, %v9798
        %9835 = vrot.lane.b32.xlu0 %v9803, 1
        %v9836 = vpop.permute.xlu0 %9835
        %9837 = vrot.lane.b32.xlu0 %v9804, 1
        %v9838 = vpop.permute.xlu0 %9837
        %9839 = vrot.lane.b32.xlu0 %v9805, 1
        %v9840 = vpop.permute.xlu0 %9839
        %9841 = vrot.lane.b32.xlu0 %v9806, 1
        %v9842 = vpop.permute.xlu0 %9841
        %9843 = vrot.lane.b32.xlu0 %v9807, 1
        %v9844 = vpop.permute.xlu0 %9843
        %9845 = vrot.lane.b32.xlu0 %v9808, 1
        %v9846 = vpop.permute.xlu0 %9845
        %9847 = vrot.lane.b32.xlu0 %v9809, 1
        %v9848 = vpop.permute.xlu0 %9847
        %9849 = vrot.lane.b32.xlu0 %v9810, 1
        %v9850 = vpop.permute.xlu0 %9849
        %9851 = vrot.lane.b32.xlu0 %v9811, 1
        %v9852 = vpop.permute.xlu0 %9851
        %9853 = vrot.lane.b32.xlu0 %v9812, 1
        %v9854 = vpop.permute.xlu0 %9853
        %9855 = vrot.lane.b32.xlu0 %v9813, 1
        %v9856 = vpop.permute.xlu0 %9855
        %9857 = vrot.lane.b32.xlu0 %v9814, 1
        %v9858 = vpop.permute.xlu0 %9857
        %9859 = vrot.lane.b32.xlu0 %v9815, 1
        %v9860 = vpop.permute.xlu0 %9859
        %9861 = vrot.lane.b32.xlu0 %v9816, 1
        %v9862 = vpop.permute.xlu0 %9861
        %9863 = vrot.lane.b32.xlu0 %v9817, 1
        %v9864 = vpop.permute.xlu0 %9863
        %9865 = vrot.lane.b32.xlu0 %v9818, 1
        %v9866 = vpop.permute.xlu0 %9865
        %v9883 = vsub.f32 %v372, %v9836
        %v9884 = vsub.f32 %v377, %v9838
        %v9885 = vsub.f32 %v382, %v9840
        %v9886 = vsub.f32 %v387, %v9842
        %v9887 = vsub.f32 %v392, %v9844
        %v9888 = vsub.f32 %v397, %v9846
        %v9889 = vsub.f32 %v402, %v9848
        %v9890 = vsub.f32 %v407, %v9850
        %v9891 = vsub.f32 %v412, %v9852
        %v9892 = vsub.f32 %v417, %v9854
        %v9893 = vsub.f32 %v422, %v9856
        %v9894 = vsub.f32 %v427, %v9858
        %v9895 = vsub.f32 %v432, %v9860
        %v9896 = vsub.f32 %v437, %v9862
        %v9897 = vsub.f32 %v442, %v9864
        %v9898 = vsub.f32 %v447, %v9866
        %9900 = vset.pattern.permute.xlu0 49
        %9901 = vperm.xlu0 %9900, %v9783
        %v9902 = vpop.permute.xlu0 %9901
        %9905 = vset.pattern.permute.xlu0 49
        %9906 = vperm.xlu0 %9905, %v9784
        %v9907 = vpop.permute.xlu0 %9906
        %9910 = vset.pattern.permute.xlu0 49
        %9911 = vperm.xlu0 %9910, %v9785
        %v9912 = vpop.permute.xlu0 %9911
        %9915 = vset.pattern.permute.xlu0 49
        %9916 = vperm.xlu0 %9915, %v9786
        %v9917 = vpop.permute.xlu0 %9916
        %9920 = vset.pattern.permute.xlu0 49
        %9921 = vperm.xlu0 %9920, %v9787
        %v9922 = vpop.permute.xlu0 %9921
        %9925 = vset.pattern.permute.xlu0 49
        %9926 = vperm.xlu0 %9925, %v9788
        %v9927 = vpop.permute.xlu0 %9926
        %9930 = vset.pattern.permute.xlu0 49
        %9931 = vperm.xlu0 %9930, %v9789
        %v9932 = vpop.permute.xlu0 %9931
        %9935 = vset.pattern.permute.xlu0 49
        %9936 = vperm.xlu0 %9935, %v9790
        %v9937 = vpop.permute.xlu0 %9936
        %9940 = vset.pattern.permute.xlu0 49
        %9941 = vperm.xlu0 %9940, %v9791
        %v9942 = vpop.permute.xlu0 %9941
        %9945 = vset.pattern.permute.xlu0 49
        %9946 = vperm.xlu0 %9945, %v9792
        %v9947 = vpop.permute.xlu0 %9946
        %9950 = vset.pattern.permute.xlu0 49
        %9951 = vperm.xlu0 %9950, %v9793
        %v9952 = vpop.permute.xlu0 %9951
        %9955 = vset.pattern.permute.xlu0 49
        %9956 = vperm.xlu0 %9955, %v9794
        %v9957 = vpop.permute.xlu0 %9956
        %9960 = vset.pattern.permute.xlu0 49
        %9961 = vperm.xlu0 %9960, %v9795
        %v9962 = vpop.permute.xlu0 %9961
        %9965 = vset.pattern.permute.xlu0 49
        %9966 = vperm.xlu0 %9965, %v9796
        %v9967 = vpop.permute.xlu0 %9966
        %9970 = vset.pattern.permute.xlu0 49
        %9971 = vperm.xlu0 %9970, %v9797
        %v9972 = vpop.permute.xlu0 %9971
        %9975 = vset.pattern.permute.xlu0 49
        %9976 = vperm.xlu0 %9975, %v9798
        %v9977 = vpop.permute.xlu0 %9976
        %v9979 = vmul.f32 %v9595, %v9902
        %v9980 = vmul.f32 %v9596, %v9907
        %v9981 = vmul.f32 %v9597, %v9912
        %v9982 = vmul.f32 %v9598, %v9917
        %v9983 = vmul.f32 %v9599, %v9922
        %v9984 = vmul.f32 %v9600, %v9927
        %v9985 = vmul.f32 %v9601, %v9932
        %v9986 = vmul.f32 %v9602, %v9937
        %v9987 = vmul.f32 %v9603, %v9942
        %v9988 = vmul.f32 %v9604, %v9947
        %v9989 = vmul.f32 %v9605, %v9952
        %v9990 = vmul.f32 %v9606, %v9957
        %v9991 = vmul.f32 %v9607, %v9962
        %v9992 = vmul.f32 %v9608, %v9967
        %v9993 = vmul.f32 %v9609, %v9972
        %v9994 = vmul.f32 %v9610, %v9977
        %9996 = vset.pattern.permute.xlu0 50
        %9997 = vperm.xlu0 %9996, %v9883
        %v9998 = vpop.permute.xlu0 %9997
        %10001 = vset.pattern.permute.xlu0 50
        %10002 = vperm.xlu0 %10001, %v9884
        %v10003 = vpop.permute.xlu0 %10002
        %10006 = vset.pattern.permute.xlu0 50
        %10007 = vperm.xlu0 %10006, %v9885
        %v10008 = vpop.permute.xlu0 %10007
        %10011 = vset.pattern.permute.xlu0 50
        %10012 = vperm.xlu0 %10011, %v9886
        %v10013 = vpop.permute.xlu0 %10012
        %10016 = vset.pattern.permute.xlu0 50
        %10017 = vperm.xlu0 %10016, %v9887
        %v10018 = vpop.permute.xlu0 %10017
        %10021 = vset.pattern.permute.xlu0 50
        %10022 = vperm.xlu0 %10021, %v9888
        %v10023 = vpop.permute.xlu0 %10022
        %10026 = vset.pattern.permute.xlu0 50
        %10027 = vperm.xlu0 %10026, %v9889
        %v10028 = vpop.permute.xlu0 %10027
        %10031 = vset.pattern.permute.xlu0 50
        %10032 = vperm.xlu0 %10031, %v9890
        %v10033 = vpop.permute.xlu0 %10032
        %10036 = vset.pattern.permute.xlu0 50
        %10037 = vperm.xlu0 %10036, %v9891
        %v10038 = vpop.permute.xlu0 %10037
        %10041 = vset.pattern.permute.xlu0 50
        %10042 = vperm.xlu0 %10041, %v9892
        %v10043 = vpop.permute.xlu0 %10042
        %10046 = vset.pattern.permute.xlu0 50
        %10047 = vperm.xlu0 %10046, %v9893
        %v10048 = vpop.permute.xlu0 %10047
        %10051 = vset.pattern.permute.xlu0 50
        %10052 = vperm.xlu0 %10051, %v9894
        %v10053 = vpop.permute.xlu0 %10052
        %10056 = vset.pattern.permute.xlu0 50
        %10057 = vperm.xlu0 %10056, %v9895
        %v10058 = vpop.permute.xlu0 %10057
        %10061 = vset.pattern.permute.xlu0 50
        %10062 = vperm.xlu0 %10061, %v9896
        %v10063 = vpop.permute.xlu0 %10062
        %10066 = vset.pattern.permute.xlu0 50
        %10067 = vperm.xlu0 %10066, %v9897
        %v10068 = vpop.permute.xlu0 %10067
        %10071 = vset.pattern.permute.xlu0 50
        %10072 = vperm.xlu0 %10071, %v9898
        %v10073 = vpop.permute.xlu0 %10072
        %v10075 = vadd.f32 %v9979, %v9998
        %v10076 = vadd.f32 %v9980, %v10003
        %v10077 = vadd.f32 %v9981, %v10008
        %v10078 = vadd.f32 %v9982, %v10013
        %v10079 = vadd.f32 %v9983, %v10018
        %v10080 = vadd.f32 %v9984, %v10023
        %v10081 = vadd.f32 %v9985, %v10028
        %v10082 = vadd.f32 %v9986, %v10033
        %v10083 = vadd.f32 %v9987, %v10038
        %v10084 = vadd.f32 %v9988, %v10043
        %v10085 = vadd.f32 %v9989, %v10048
        %v10086 = vadd.f32 %v9990, %v10053
        %v10087 = vadd.f32 %v9991, %v10058
        %v10088 = vadd.f32 %v9992, %v10063
        %v10089 = vadd.f32 %v9993, %v10068
        %v10090 = vadd.f32 %v9994, %v10073
        %10107 = vrot.lane.b32.xlu0 %v10075, 8
        %v10108 = vpop.permute.xlu0 %10107
        %10109 = vrot.lane.b32.xlu0 %v10076, 8
        %v10110 = vpop.permute.xlu0 %10109
        %10111 = vrot.lane.b32.xlu0 %v10077, 8
        %v10112 = vpop.permute.xlu0 %10111
        %10113 = vrot.lane.b32.xlu0 %v10078, 8
        %v10114 = vpop.permute.xlu0 %10113
        %10115 = vrot.lane.b32.xlu0 %v10079, 8
        %v10116 = vpop.permute.xlu0 %10115
        %10117 = vrot.lane.b32.xlu0 %v10080, 8
        %v10118 = vpop.permute.xlu0 %10117
        %10119 = vrot.lane.b32.xlu0 %v10081, 8
        %v10120 = vpop.permute.xlu0 %10119
        %10121 = vrot.lane.b32.xlu0 %v10082, 8
        %v10122 = vpop.permute.xlu0 %10121
        %10123 = vrot.lane.b32.xlu0 %v10083, 8
        %v10124 = vpop.permute.xlu0 %10123
        %10125 = vrot.lane.b32.xlu0 %v10084, 8
        %v10126 = vpop.permute.xlu0 %10125
        %10127 = vrot.lane.b32.xlu0 %v10085, 8
        %v10128 = vpop.permute.xlu0 %10127
        %10129 = vrot.lane.b32.xlu0 %v10086, 8
        %v10130 = vpop.permute.xlu0 %10129
        %10131 = vrot.lane.b32.xlu0 %v10087, 8
        %v10132 = vpop.permute.xlu0 %10131
        %10133 = vrot.lane.b32.xlu0 %v10088, 8
        %v10134 = vpop.permute.xlu0 %10133
        %10135 = vrot.lane.b32.xlu0 %v10089, 8
        %v10136 = vpop.permute.xlu0 %10135
        %10137 = vrot.lane.b32.xlu0 %v10090, 8
        %v10138 = vpop.permute.xlu0 %10137
        %10155 = vst.msk [vmem:[#allocation2] sm:$0xff] %vm1401, %v10108
        %10156 = vst.msk [vmem:[#allocation2 + $0x8] sm:$0xff] %vm196, %v10108
        %10157 = vst.msk [vmem:[#allocation2 + $0x10] sm:$0xff] %vm1401, %v10110
        %10158 = vst.msk [vmem:[#allocation2 + $0x18] sm:$0xff] %vm196, %v10110
        %10159 = vst.msk [vmem:[#allocation2 + $0x20] sm:$0xff] %vm1401, %v10112
        %10160 = vst.msk [vmem:[#allocation2 + $0x28] sm:$0xff] %vm196, %v10112
        %10161 = vst.msk [vmem:[#allocation2 + $0x30] sm:$0xff] %vm1401, %v10114
        %10162 = vst.msk [vmem:[#allocation2 + $0x38] sm:$0xff] %vm196, %v10114
        %10163 = vst.msk [vmem:[#allocation2 + $0x40] sm:$0xff] %vm1401, %v10116
        %10164 = vst.msk [vmem:[#allocation2 + $0x48] sm:$0xff] %vm196, %v10116
        %10165 = vst.msk [vmem:[#allocation2 + $0x50] sm:$0xff] %vm1401, %v10118
        %10166 = vst.msk [vmem:[#allocation2 + $0x58] sm:$0xff] %vm196, %v10118
        %10167 = vst.msk [vmem:[#allocation2 + $0x60] sm:$0xff] %vm1401, %v10120
        %10168 = vst.msk [vmem:[#allocation2 + $0x68] sm:$0xff] %vm196, %v10120
        %10169 = vst.msk [vmem:[#allocation2 + $0x70] sm:$0xff] %vm1401, %v10122
        %10170 = vst.msk [vmem:[#allocation2 + $0x78] sm:$0xff] %vm196, %v10122
        %10171 = vst.msk [vmem:[#allocation2 + $0x80] sm:$0xff] %vm1401, %v10124
        %10172 = vst.msk [vmem:[#allocation2 + $0x88] sm:$0xff] %vm196, %v10124
        %10173 = vst.msk [vmem:[#allocation2 + $0x90] sm:$0xff] %vm1401, %v10126
        %10174 = vst.msk [vmem:[#allocation2 + $0x98] sm:$0xff] %vm196, %v10126
        %10175 = vst.msk [vmem:[#allocation2 + $0xa0] sm:$0xff] %vm1401, %v10128
        %10176 = vst.msk [vmem:[#allocation2 + $0xa8] sm:$0xff] %vm196, %v10128
        %10177 = vst.msk [vmem:[#allocation2 + $0xb0] sm:$0xff] %vm1401, %v10130
        %10178 = vst.msk [vmem:[#allocation2 + $0xb8] sm:$0xff] %vm196, %v10130
        %10179 = vst.msk [vmem:[#allocation2 + $0xc0] sm:$0xff] %vm1401, %v10132
        %10180 = vst.msk [vmem:[#allocation2 + $0xc8] sm:$0xff] %vm196, %v10132
        %10181 = vst.msk [vmem:[#allocation2 + $0xd0] sm:$0xff] %vm1401, %v10134
        %10182 = vst.msk [vmem:[#allocation2 + $0xd8] sm:$0xff] %vm196, %v10134
        %10183 = vst.msk [vmem:[#allocation2 + $0xe0] sm:$0xff] %vm1401, %v10136
        %10184 = vst.msk [vmem:[#allocation2 + $0xe8] sm:$0xff] %vm196, %v10136
        %10185 = vst.msk [vmem:[#allocation2 + $0xf0] sm:$0xff] %vm1401, %v10138
        %10186 = vst.msk [vmem:[#allocation2 + $0xf8] sm:$0xff] %vm196, %v10138
        %v10187 = vld [vmem:[#allocation2] sm:$0xff]
        %v10188 = vld [vmem:[#allocation2 + $0x10] sm:$0xff]
        %v10189 = vld [vmem:[#allocation2 + $0x20] sm:$0xff]
        %v10190 = vld [vmem:[#allocation2 + $0x30] sm:$0xff]
        %v10191 = vld [vmem:[#allocation2 + $0x40] sm:$0xff]
        %v10192 = vld [vmem:[#allocation2 + $0x50] sm:$0xff]
        %v10193 = vld [vmem:[#allocation2 + $0x60] sm:$0xff]
        %v10194 = vld [vmem:[#allocation2 + $0x70] sm:$0xff]
        %v10195 = vld [vmem:[#allocation2 + $0x80] sm:$0xff]
        %v10196 = vld [vmem:[#allocation2 + $0x90] sm:$0xff]
        %v10197 = vld [vmem:[#allocation2 + $0xa0] sm:$0xff]
        %v10198 = vld [vmem:[#allocation2 + $0xb0] sm:$0xff]
        %v10199 = vld [vmem:[#allocation2 + $0xc0] sm:$0xff]
        %v10200 = vld [vmem:[#allocation2 + $0xd0] sm:$0xff]
        %v10201 = vld [vmem:[#allocation2 + $0xe0] sm:$0xff]
        %v10202 = vld [vmem:[#allocation2 + $0xf0] sm:$0xff]
        %10203 = vset.pattern.permute.xlu0 54
        %10204 = vperm.xlu0 %10203, %v372
        %v10205 = vpop.permute.xlu0 %10204
        %10207 = vset.pattern.permute.xlu0 54
        %10208 = vperm.xlu0 %10207, %v377
        %v10209 = vpop.permute.xlu0 %10208
        %10211 = vset.pattern.permute.xlu0 54
        %10212 = vperm.xlu0 %10211, %v382
        %v10213 = vpop.permute.xlu0 %10212
        %10215 = vset.pattern.permute.xlu0 54
        %10216 = vperm.xlu0 %10215, %v387
        %v10217 = vpop.permute.xlu0 %10216
        %10219 = vset.pattern.permute.xlu0 54
        %10220 = vperm.xlu0 %10219, %v392
        %v10221 = vpop.permute.xlu0 %10220
        %10223 = vset.pattern.permute.xlu0 54
        %10224 = vperm.xlu0 %10223, %v397
        %v10225 = vpop.permute.xlu0 %10224
        %10227 = vset.pattern.permute.xlu0 54
        %10228 = vperm.xlu0 %10227, %v402
        %v10229 = vpop.permute.xlu0 %10228
        %10231 = vset.pattern.permute.xlu0 54
        %10232 = vperm.xlu0 %10231, %v407
        %v10233 = vpop.permute.xlu0 %10232
        %10235 = vset.pattern.permute.xlu0 54
        %10236 = vperm.xlu0 %10235, %v412
        %v10237 = vpop.permute.xlu0 %10236
        %10239 = vset.pattern.permute.xlu0 54
        %10240 = vperm.xlu0 %10239, %v417
        %v10241 = vpop.permute.xlu0 %10240
        %10243 = vset.pattern.permute.xlu0 54
        %10244 = vperm.xlu0 %10243, %v422
        %v10245 = vpop.permute.xlu0 %10244
        %10247 = vset.pattern.permute.xlu0 54
        %10248 = vperm.xlu0 %10247, %v427
        %v10249 = vpop.permute.xlu0 %10248
        %10251 = vset.pattern.permute.xlu0 54
        %10252 = vperm.xlu0 %10251, %v432
        %v10253 = vpop.permute.xlu0 %10252
        %10255 = vset.pattern.permute.xlu0 54
        %10256 = vperm.xlu0 %10255, %v437
        %v10257 = vpop.permute.xlu0 %10256
        %10259 = vset.pattern.permute.xlu0 54
        %10260 = vperm.xlu0 %10259, %v442
        %v10261 = vpop.permute.xlu0 %10260
        %10263 = vset.pattern.permute.xlu0 54
        %10264 = vperm.xlu0 %10263, %v447
        %v10265 = vpop.permute.xlu0 %10264
        %v10267 = vmul.f32 %v10205, %v10187
        %v10268 = vmul.f32 %v10209, %v10188
        %v10269 = vmul.f32 %v10213, %v10189
        %v10270 = vmul.f32 %v10217, %v10190
        %v10271 = vmul.f32 %v10221, %v10191
        %v10272 = vmul.f32 %v10225, %v10192
        %v10273 = vmul.f32 %v10229, %v10193
        %v10274 = vmul.f32 %v10233, %v10194
        %v10275 = vmul.f32 %v10237, %v10195
        %v10276 = vmul.f32 %v10241, %v10196
        %v10277 = vmul.f32 %v10245, %v10197
        %v10278 = vmul.f32 %v10249, %v10198
        %v10279 = vmul.f32 %v10253, %v10199
        %v10280 = vmul.f32 %v10257, %v10200
        %v10281 = vmul.f32 %v10261, %v10201
        %v10282 = vmul.f32 %v10265, %v10202
        %10283 = vset.pattern.permute.xlu0 51
        %10284 = vperm.xlu0 %10283, %v372
        %v10285 = vpop.permute.xlu0 %10284
        %10287 = vset.pattern.permute.xlu0 51
        %10288 = vperm.xlu0 %10287, %v377
        %v10289 = vpop.permute.xlu0 %10288
        %10291 = vset.pattern.permute.xlu0 51
        %10292 = vperm.xlu0 %10291, %v382
        %v10293 = vpop.permute.xlu0 %10292
        %10295 = vset.pattern.permute.xlu0 51
        %10296 = vperm.xlu0 %10295, %v387
        %v10297 = vpop.permute.xlu0 %10296
        %10299 = vset.pattern.permute.xlu0 51
        %10300 = vperm.xlu0 %10299, %v392
        %v10301 = vpop.permute.xlu0 %10300
        %10303 = vset.pattern.permute.xlu0 51
        %10304 = vperm.xlu0 %10303, %v397
        %v10305 = vpop.permute.xlu0 %10304
        %10307 = vset.pattern.permute.xlu0 51
        %10308 = vperm.xlu0 %10307, %v402
        %v10309 = vpop.permute.xlu0 %10308
        %10311 = vset.pattern.permute.xlu0 51
        %10312 = vperm.xlu0 %10311, %v407
        %v10313 = vpop.permute.xlu0 %10312
        %10315 = vset.pattern.permute.xlu0 51
        %10316 = vperm.xlu0 %10315, %v412
        %v10317 = vpop.permute.xlu0 %10316
        %10319 = vset.pattern.permute.xlu0 51
        %10320 = vperm.xlu0 %10319, %v417
        %v10321 = vpop.permute.xlu0 %10320
        %10323 = vset.pattern.permute.xlu0 51
        %10324 = vperm.xlu0 %10323, %v422
        %v10325 = vpop.permute.xlu0 %10324
        %10327 = vset.pattern.permute.xlu0 51
        %10328 = vperm.xlu0 %10327, %v427
        %v10329 = vpop.permute.xlu0 %10328
        %10331 = vset.pattern.permute.xlu0 51
        %10332 = vperm.xlu0 %10331, %v432
        %v10333 = vpop.permute.xlu0 %10332
        %10335 = vset.pattern.permute.xlu0 51
        %10336 = vperm.xlu0 %10335, %v437
        %v10337 = vpop.permute.xlu0 %10336
        %10339 = vset.pattern.permute.xlu0 51
        %10340 = vperm.xlu0 %10339, %v442
        %v10341 = vpop.permute.xlu0 %10340
        %10343 = vset.pattern.permute.xlu0 51
        %10344 = vperm.xlu0 %10343, %v447
        %v10345 = vpop.permute.xlu0 %10344
        %v10347 = vadd.f32 %v10285, %v10267
        %v10348 = vadd.f32 %v10289, %v10268
        %v10349 = vadd.f32 %v10293, %v10269
        %v10350 = vadd.f32 %v10297, %v10270
        %v10351 = vadd.f32 %v10301, %v10271
        %v10352 = vadd.f32 %v10305, %v10272
        %v10353 = vadd.f32 %v10309, %v10273
        %v10354 = vadd.f32 %v10313, %v10274
        %v10355 = vadd.f32 %v10317, %v10275
        %v10356 = vadd.f32 %v10321, %v10276
        %v10357 = vadd.f32 %v10325, %v10277
        %v10358 = vadd.f32 %v10329, %v10278
        %v10359 = vadd.f32 %v10333, %v10279
        %v10360 = vadd.f32 %v10337, %v10280
        %v10361 = vadd.f32 %v10341, %v10281
        %v10362 = vadd.f32 %v10345, %v10282
        %v10363 = vld [vmem:[#allocation2] sm:$0xff]
        %v10364 = vld [vmem:[#allocation2 + $0x8] sm:$0xff]
        %v10365 = vld [vmem:[#allocation2 + $0x10] sm:$0xff]
        %v10366 = vld [vmem:[#allocation2 + $0x18] sm:$0xff]
        %v10367 = vld [vmem:[#allocation2 + $0x20] sm:$0xff]
        %v10368 = vld [vmem:[#allocation2 + $0x28] sm:$0xff]
        %v10369 = vld [vmem:[#allocation2 + $0x30] sm:$0xff]
        %v10370 = vld [vmem:[#allocation2 + $0x38] sm:$0xff]
        %v10371 = vld [vmem:[#allocation2 + $0x40] sm:$0xff]
        %v10372 = vld [vmem:[#allocation2 + $0x48] sm:$0xff]
        %v10373 = vld [vmem:[#allocation2 + $0x50] sm:$0xff]
        %v10374 = vld [vmem:[#allocation2 + $0x58] sm:$0xff]
        %v10375 = vld [vmem:[#allocation2 + $0x60] sm:$0xff]
        %v10376 = vld [vmem:[#allocation2 + $0x68] sm:$0xff]
        %v10377 = vld [vmem:[#allocation2 + $0x70] sm:$0xff]
        %v10378 = vld [vmem:[#allocation2 + $0x78] sm:$0xff]
        %v10379 = vld [vmem:[#allocation2 + $0x80] sm:$0xff]
        %v10380 = vld [vmem:[#allocation2 + $0x88] sm:$0xff]
        %v10381 = vld [vmem:[#allocation2 + $0x90] sm:$0xff]
        %v10382 = vld [vmem:[#allocation2 + $0x98] sm:$0xff]
        %v10383 = vld [vmem:[#allocation2 + $0xa0] sm:$0xff]
        %v10384 = vld [vmem:[#allocation2 + $0xa8] sm:$0xff]
        %v10385 = vld [vmem:[#allocation2 + $0xb0] sm:$0xff]
        %v10386 = vld [vmem:[#allocation2 + $0xb8] sm:$0xff]
        %v10387 = vld [vmem:[#allocation2 + $0xc0] sm:$0xff]
        %v10388 = vld [vmem:[#allocation2 + $0xc8] sm:$0xff]
        %v10389 = vld [vmem:[#allocation2 + $0xd0] sm:$0xff]
        %v10390 = vld [vmem:[#allocation2 + $0xd8] sm:$0xff]
        %v10391 = vld [vmem:[#allocation2 + $0xe0] sm:$0xff]
        %v10392 = vld [vmem:[#allocation2 + $0xe8] sm:$0xff]
        %v10393 = vld [vmem:[#allocation2 + $0xf0] sm:$0xff]
        %v10394 = vld [vmem:[#allocation2 + $0xf8] sm:$0xff]
        %10395 = vset.pattern.permute.xlu0 55
        %10396 = vperm.xlu0 %10395, %v372
        %v10397 = vpop.permute.xlu0 %10396
        %10399 = vset.pattern.permute.xlu0 55
        %10400 = vperm.xlu0 %10399, %v377
        %v10401 = vpop.permute.xlu0 %10400
        %10403 = vset.pattern.permute.xlu0 55
        %10404 = vperm.xlu0 %10403, %v382
        %v10405 = vpop.permute.xlu0 %10404
        %10407 = vset.pattern.permute.xlu0 55
        %10408 = vperm.xlu0 %10407, %v387
        %v10409 = vpop.permute.xlu0 %10408
        %10411 = vset.pattern.permute.xlu0 55
        %10412 = vperm.xlu0 %10411, %v392
        %v10413 = vpop.permute.xlu0 %10412
        %10415 = vset.pattern.permute.xlu0 55
        %10416 = vperm.xlu0 %10415, %v397
        %v10417 = vpop.permute.xlu0 %10416
        %10419 = vset.pattern.permute.xlu0 55
        %10420 = vperm.xlu0 %10419, %v402
        %v10421 = vpop.permute.xlu0 %10420
        %10423 = vset.pattern.permute.xlu0 55
        %10424 = vperm.xlu0 %10423, %v407
        %v10425 = vpop.permute.xlu0 %10424
        %10427 = vset.pattern.permute.xlu0 55
        %10428 = vperm.xlu0 %10427, %v412
        %v10429 = vpop.permute.xlu0 %10428
        %10431 = vset.pattern.permute.xlu0 55
        %10432 = vperm.xlu0 %10431, %v417
        %v10433 = vpop.permute.xlu0 %10432
        %10435 = vset.pattern.permute.xlu0 55
        %10436 = vperm.xlu0 %10435, %v422
        %v10437 = vpop.permute.xlu0 %10436
        %10439 = vset.pattern.permute.xlu0 55
        %10440 = vperm.xlu0 %10439, %v427
        %v10441 = vpop.permute.xlu0 %10440
        %10443 = vset.pattern.permute.xlu0 55
        %10444 = vperm.xlu0 %10443, %v432
        %v10445 = vpop.permute.xlu0 %10444
        %10447 = vset.pattern.permute.xlu0 55
        %10448 = vperm.xlu0 %10447, %v437
        %v10449 = vpop.permute.xlu0 %10448
        %10451 = vset.pattern.permute.xlu0 55
        %10452 = vperm.xlu0 %10451, %v442
        %v10453 = vpop.permute.xlu0 %10452
        %10455 = vset.pattern.permute.xlu0 55
        %10456 = vperm.xlu0 %10455, %v447
        %v10457 = vpop.permute.xlu0 %10456
        %v10459 = vmul.f32 %v10397, %v10363
        %v10460 = vmul.f32 %v10397, %v10364
        %v10461 = vmul.f32 %v10401, %v10365
        %v10462 = vmul.f32 %v10401, %v10366
        %v10463 = vmul.f32 %v10405, %v10367
        %v10464 = vmul.f32 %v10405, %v10368
        %v10465 = vmul.f32 %v10409, %v10369
        %v10466 = vmul.f32 %v10409, %v10370
        %v10467 = vmul.f32 %v10413, %v10371
        %v10468 = vmul.f32 %v10413, %v10372
        %v10469 = vmul.f32 %v10417, %v10373
        %v10470 = vmul.f32 %v10417, %v10374
        %v10471 = vmul.f32 %v10421, %v10375
        %v10472 = vmul.f32 %v10421, %v10376
        %v10473 = vmul.f32 %v10425, %v10377
        %v10474 = vmul.f32 %v10425, %v10378
        %v10475 = vmul.f32 %v10429, %v10379
        %v10476 = vmul.f32 %v10429, %v10380
        %v10477 = vmul.f32 %v10433, %v10381
        %v10478 = vmul.f32 %v10433, %v10382
        %v10479 = vmul.f32 %v10437, %v10383
        %v10480 = vmul.f32 %v10437, %v10384
        %v10481 = vmul.f32 %v10441, %v10385
        %v10482 = vmul.f32 %v10441, %v10386
        %v10483 = vmul.f32 %v10445, %v10387
        %v10484 = vmul.f32 %v10445, %v10388
        %v10485 = vmul.f32 %v10449, %v10389
        %v10486 = vmul.f32 %v10449, %v10390
        %v10487 = vmul.f32 %v10453, %v10391
        %v10488 = vmul.f32 %v10453, %v10392
        %v10489 = vmul.f32 %v10457, %v10393
        %v10490 = vmul.f32 %v10457, %v10394
        %10523 = vrot.lane.b32.xlu0 %v10459, 120
        %v10524 = vpop.permute.xlu0 %10523
        %10525 = vrot.lane.b32.xlu0 %v10460, 120
        %v10526 = vpop.permute.xlu0 %10525
        %10527 = vrot.lane.b32.xlu0 %v10461, 120
        %v10528 = vpop.permute.xlu0 %10527
        %10529 = vrot.lane.b32.xlu0 %v10462, 120
        %v10530 = vpop.permute.xlu0 %10529
        %10531 = vrot.lane.b32.xlu0 %v10463, 120
        %v10532 = vpop.permute.xlu0 %10531
        %10533 = vrot.lane.b32.xlu0 %v10464, 120
        %v10534 = vpop.permute.xlu0 %10533
        %10535 = vrot.lane.b32.xlu0 %v10465, 120
        %v10536 = vpop.permute.xlu0 %10535
        %10537 = vrot.lane.b32.xlu0 %v10466, 120
        %v10538 = vpop.permute.xlu0 %10537
        %10539 = vrot.lane.b32.xlu0 %v10467, 120
        %v10540 = vpop.permute.xlu0 %10539
        %10541 = vrot.lane.b32.xlu0 %v10468, 120
        %v10542 = vpop.permute.xlu0 %10541
        %10543 = vrot.lane.b32.xlu0 %v10469, 120
        %v10544 = vpop.permute.xlu0 %10543
        %10545 = vrot.lane.b32.xlu0 %v10470, 120
        %v10546 = vpop.permute.xlu0 %10545
        %10547 = vrot.lane.b32.xlu0 %v10471, 120
        %v10548 = vpop.permute.xlu0 %10547
        %10549 = vrot.lane.b32.xlu0 %v10472, 120
        %v10550 = vpop.permute.xlu0 %10549
        %10551 = vrot.lane.b32.xlu0 %v10473, 120
        %v10552 = vpop.permute.xlu0 %10551
        %10553 = vrot.lane.b32.xlu0 %v10474, 120
        %v10554 = vpop.permute.xlu0 %10553
        %10555 = vrot.lane.b32.xlu0 %v10475, 120
        %v10556 = vpop.permute.xlu0 %10555
        %10557 = vrot.lane.b32.xlu0 %v10476, 120
        %v10558 = vpop.permute.xlu0 %10557
        %10559 = vrot.lane.b32.xlu0 %v10477, 120
        %v10560 = vpop.permute.xlu0 %10559
        %10561 = vrot.lane.b32.xlu0 %v10478, 120
        %v10562 = vpop.permute.xlu0 %10561
        %10563 = vrot.lane.b32.xlu0 %v10479, 120
        %v10564 = vpop.permute.xlu0 %10563
        %10565 = vrot.lane.b32.xlu0 %v10480, 120
        %v10566 = vpop.permute.xlu0 %10565
        %10567 = vrot.lane.b32.xlu0 %v10481, 120
        %v10568 = vpop.permute.xlu0 %10567
        %10569 = vrot.lane.b32.xlu0 %v10482, 120
        %v10570 = vpop.permute.xlu0 %10569
        %10571 = vrot.lane.b32.xlu0 %v10483, 120
        %v10572 = vpop.permute.xlu0 %10571
        %10573 = vrot.lane.b32.xlu0 %v10484, 120
        %v10574 = vpop.permute.xlu0 %10573
        %10575 = vrot.lane.b32.xlu0 %v10485, 120
        %v10576 = vpop.permute.xlu0 %10575
        %10577 = vrot.lane.b32.xlu0 %v10486, 120
        %v10578 = vpop.permute.xlu0 %10577
        %10579 = vrot.lane.b32.xlu0 %v10487, 120
        %v10580 = vpop.permute.xlu0 %10579
        %10581 = vrot.lane.b32.xlu0 %v10488, 120
        %v10582 = vpop.permute.xlu0 %10581
        %10583 = vrot.lane.b32.xlu0 %v10489, 120
        %v10584 = vpop.permute.xlu0 %10583
        %10585 = vrot.lane.b32.xlu0 %v10490, 120
        %v10586 = vpop.permute.xlu0 %10585
        %v10587 = vsel %vm7958, %v10524, %v10526
        %v10588 = vsel %vm7958, %v10528, %v10530
        %v10589 = vsel %vm7958, %v10532, %v10534
        %v10590 = vsel %vm7958, %v10536, %v10538
        %v10591 = vsel %vm7958, %v10540, %v10542
        %v10592 = vsel %vm7958, %v10544, %v10546
        %v10593 = vsel %vm7958, %v10548, %v10550
        %v10594 = vsel %vm7958, %v10552, %v10554
        %v10595 = vsel %vm7958, %v10556, %v10558
        %v10596 = vsel %vm7958, %v10560, %v10562
        %v10597 = vsel %vm7958, %v10564, %v10566
        %v10598 = vsel %vm7958, %v10568, %v10570
        %v10599 = vsel %vm7958, %v10572, %v10574
        %v10600 = vsel %vm7958, %v10576, %v10578
        %v10601 = vsel %vm7958, %v10580, %v10582
        %v10602 = vsel %vm7958, %v10584, %v10586
        %v10619 = vadd.f32 %v10347, %v10587
        %v10620 = vadd.f32 %v10348, %v10588
        %v10621 = vadd.f32 %v10349, %v10589
        %v10622 = vadd.f32 %v10350, %v10590
        %v10623 = vadd.f32 %v10351, %v10591
        %v10624 = vadd.f32 %v10352, %v10592
        %v10625 = vadd.f32 %v10353, %v10593
        %v10626 = vadd.f32 %v10354, %v10594
        %v10627 = vadd.f32 %v10355, %v10595
        %v10628 = vadd.f32 %v10356, %v10596
        %v10629 = vadd.f32 %v10357, %v10597
        %v10630 = vadd.f32 %v10358, %v10598
        %v10631 = vadd.f32 %v10359, %v10599
        %v10632 = vadd.f32 %v10360, %v10600
        %v10633 = vadd.f32 %v10361, %v10601
        %v10634 = vadd.f32 %v10362, %v10602
        %10635 = vset.pattern.permute.xlu0 56
        %10636 = vperm.xlu0 %10635, %v372
        %v10637 = vpop.permute.xlu0 %10636
        %10639 = vset.pattern.permute.xlu0 56
        %10640 = vperm.xlu0 %10639, %v377
        %v10641 = vpop.permute.xlu0 %10640
        %10643 = vset.pattern.permute.xlu0 56
        %10644 = vperm.xlu0 %10643, %v382
        %v10645 = vpop.permute.xlu0 %10644
        %10647 = vset.pattern.permute.xlu0 56
        %10648 = vperm.xlu0 %10647, %v387
        %v10649 = vpop.permute.xlu0 %10648
        %10651 = vset.pattern.permute.xlu0 56
        %10652 = vperm.xlu0 %10651, %v392
        %v10653 = vpop.permute.xlu0 %10652
        %10655 = vset.pattern.permute.xlu0 56
        %10656 = vperm.xlu0 %10655, %v397
        %v10657 = vpop.permute.xlu0 %10656
        %10659 = vset.pattern.permute.xlu0 56
        %10660 = vperm.xlu0 %10659, %v402
        %v10661 = vpop.permute.xlu0 %10660
        %10663 = vset.pattern.permute.xlu0 56
        %10664 = vperm.xlu0 %10663, %v407
        %v10665 = vpop.permute.xlu0 %10664
        %10667 = vset.pattern.permute.xlu0 56
        %10668 = vperm.xlu0 %10667, %v412
        %v10669 = vpop.permute.xlu0 %10668
        %10671 = vset.pattern.permute.xlu0 56
        %10672 = vperm.xlu0 %10671, %v417
        %v10673 = vpop.permute.xlu0 %10672
        %10675 = vset.pattern.permute.xlu0 56
        %10676 = vperm.xlu0 %10675, %v422
        %v10677 = vpop.permute.xlu0 %10676
        %10679 = vset.pattern.permute.xlu0 56
        %10680 = vperm.xlu0 %10679, %v427
        %v10681 = vpop.permute.xlu0 %10680
        %10683 = vset.pattern.permute.xlu0 56
        %10684 = vperm.xlu0 %10683, %v432
        %v10685 = vpop.permute.xlu0 %10684
        %10687 = vset.pattern.permute.xlu0 56
        %10688 = vperm.xlu0 %10687, %v437
        %v10689 = vpop.permute.xlu0 %10688
        %10691 = vset.pattern.permute.xlu0 56
        %10692 = vperm.xlu0 %10691, %v442
        %v10693 = vpop.permute.xlu0 %10692
        %10695 = vset.pattern.permute.xlu0 56
        %10696 = vperm.xlu0 %10695, %v447
        %v10697 = vpop.permute.xlu0 %10696
        %v10699 = vmul.f32 %v10637, %v10363
        %v10700 = vmul.f32 %v10637, %v10364
        %v10701 = vmul.f32 %v10641, %v10365
        %v10702 = vmul.f32 %v10641, %v10366
        %v10703 = vmul.f32 %v10645, %v10367
        %v10704 = vmul.f32 %v10645, %v10368
        %v10705 = vmul.f32 %v10649, %v10369
        %v10706 = vmul.f32 %v10649, %v10370
        %v10707 = vmul.f32 %v10653, %v10371
        %v10708 = vmul.f32 %v10653, %v10372
        %v10709 = vmul.f32 %v10657, %v10373
        %v10710 = vmul.f32 %v10657, %v10374
        %v10711 = vmul.f32 %v10661, %v10375
        %v10712 = vmul.f32 %v10661, %v10376
        %v10713 = vmul.f32 %v10665, %v10377
        %v10714 = vmul.f32 %v10665, %v10378
        %v10715 = vmul.f32 %v10669, %v10379
        %v10716 = vmul.f32 %v10669, %v10380
        %v10717 = vmul.f32 %v10673, %v10381
        %v10718 = vmul.f32 %v10673, %v10382
        %v10719 = vmul.f32 %v10677, %v10383
        %v10720 = vmul.f32 %v10677, %v10384
        %v10721 = vmul.f32 %v10681, %v10385
        %v10722 = vmul.f32 %v10681, %v10386
        %v10723 = vmul.f32 %v10685, %v10387
        %v10724 = vmul.f32 %v10685, %v10388
        %v10725 = vmul.f32 %v10689, %v10389
        %v10726 = vmul.f32 %v10689, %v10390
        %v10727 = vmul.f32 %v10693, %v10391
        %v10728 = vmul.f32 %v10693, %v10392
        %v10729 = vmul.f32 %v10697, %v10393
        %v10730 = vmul.f32 %v10697, %v10394
        %10763 = vrot.lane.b32.xlu0 %v10699, 112
        %v10764 = vpop.permute.xlu0 %10763
        %10765 = vrot.lane.b32.xlu0 %v10700, 112
        %v10766 = vpop.permute.xlu0 %10765
        %10767 = vrot.lane.b32.xlu0 %v10701, 112
        %v10768 = vpop.permute.xlu0 %10767
        %10769 = vrot.lane.b32.xlu0 %v10702, 112
        %v10770 = vpop.permute.xlu0 %10769
        %10771 = vrot.lane.b32.xlu0 %v10703, 112
        %v10772 = vpop.permute.xlu0 %10771
        %10773 = vrot.lane.b32.xlu0 %v10704, 112
        %v10774 = vpop.permute.xlu0 %10773
        %10775 = vrot.lane.b32.xlu0 %v10705, 112
        %v10776 = vpop.permute.xlu0 %10775
        %10777 = vrot.lane.b32.xlu0 %v10706, 112
        %v10778 = vpop.permute.xlu0 %10777
        %10779 = vrot.lane.b32.xlu0 %v10707, 112
        %v10780 = vpop.permute.xlu0 %10779
        %10781 = vrot.lane.b32.xlu0 %v10708, 112
        %v10782 = vpop.permute.xlu0 %10781
        %10783 = vrot.lane.b32.xlu0 %v10709, 112
        %v10784 = vpop.permute.xlu0 %10783
        %10785 = vrot.lane.b32.xlu0 %v10710, 112
        %v10786 = vpop.permute.xlu0 %10785
        %10787 = vrot.lane.b32.xlu0 %v10711, 112
        %v10788 = vpop.permute.xlu0 %10787
        %10789 = vrot.lane.b32.xlu0 %v10712, 112
        %v10790 = vpop.permute.xlu0 %10789
        %10791 = vrot.lane.b32.xlu0 %v10713, 112
        %v10792 = vpop.permute.xlu0 %10791
        %10793 = vrot.lane.b32.xlu0 %v10714, 112
        %v10794 = vpop.permute.xlu0 %10793
        %10795 = vrot.lane.b32.xlu0 %v10715, 112
        %v10796 = vpop.permute.xlu0 %10795
        %10797 = vrot.lane.b32.xlu0 %v10716, 112
        %v10798 = vpop.permute.xlu0 %10797
        %10799 = vrot.lane.b32.xlu0 %v10717, 112
        %v10800 = vpop.permute.xlu0 %10799
        %10801 = vrot.lane.b32.xlu0 %v10718, 112
        %v10802 = vpop.permute.xlu0 %10801
        %10803 = vrot.lane.b32.xlu0 %v10719, 112
        %v10804 = vpop.permute.xlu0 %10803
        %10805 = vrot.lane.b32.xlu0 %v10720, 112
        %v10806 = vpop.permute.xlu0 %10805
        %10807 = vrot.lane.b32.xlu0 %v10721, 112
        %v10808 = vpop.permute.xlu0 %10807
        %10809 = vrot.lane.b32.xlu0 %v10722, 112
        %v10810 = vpop.permute.xlu0 %10809
        %10811 = vrot.lane.b32.xlu0 %v10723, 112
        %v10812 = vpop.permute.xlu0 %10811
        %10813 = vrot.lane.b32.xlu0 %v10724, 112
        %v10814 = vpop.permute.xlu0 %10813
        %10815 = vrot.lane.b32.xlu0 %v10725, 112
        %v10816 = vpop.permute.xlu0 %10815
        %10817 = vrot.lane.b32.xlu0 %v10726, 112
        %v10818 = vpop.permute.xlu0 %10817
        %10819 = vrot.lane.b32.xlu0 %v10727, 112
        %v10820 = vpop.permute.xlu0 %10819
        %10821 = vrot.lane.b32.xlu0 %v10728, 112
        %v10822 = vpop.permute.xlu0 %10821
        %10823 = vrot.lane.b32.xlu0 %v10729, 112
        %v10824 = vpop.permute.xlu0 %10823
        %10825 = vrot.lane.b32.xlu0 %v10730, 112
        %v10826 = vpop.permute.xlu0 %10825
        %vm10827 = vcmask 916480
        %v10828 = vsel %vm10827, %v10764, %v10766
        %v10829 = vsel %vm10827, %v10768, %v10770
        %v10830 = vsel %vm10827, %v10772, %v10774
        %v10831 = vsel %vm10827, %v10776, %v10778
        %v10832 = vsel %vm10827, %v10780, %v10782
        %v10833 = vsel %vm10827, %v10784, %v10786
        %v10834 = vsel %vm10827, %v10788, %v10790
        %v10835 = vsel %vm10827, %v10792, %v10794
        %v10836 = vsel %vm10827, %v10796, %v10798
        %v10837 = vsel %vm10827, %v10800, %v10802
        %v10838 = vsel %vm10827, %v10804, %v10806
        %v10839 = vsel %vm10827, %v10808, %v10810
        %v10840 = vsel %vm10827, %v10812, %v10814
        %v10841 = vsel %vm10827, %v10816, %v10818
        %v10842 = vsel %vm10827, %v10820, %v10822
        %v10843 = vsel %vm10827, %v10824, %v10826
        %v10860 = vadd.f32 %v10619, %v10828
        %v10861 = vadd.f32 %v10620, %v10829
        %v10862 = vadd.f32 %v10621, %v10830
        %v10863 = vadd.f32 %v10622, %v10831
        %v10864 = vadd.f32 %v10623, %v10832
        %v10865 = vadd.f32 %v10624, %v10833
        %v10866 = vadd.f32 %v10625, %v10834
        %v10867 = vadd.f32 %v10626, %v10835
        %v10868 = vadd.f32 %v10627, %v10836
        %v10869 = vadd.f32 %v10628, %v10837
        %v10870 = vadd.f32 %v10629, %v10838
        %v10871 = vadd.f32 %v10630, %v10839
        %v10872 = vadd.f32 %v10631, %v10840
        %v10873 = vadd.f32 %v10632, %v10841
        %v10874 = vadd.f32 %v10633, %v10842
        %v10875 = vadd.f32 %v10634, %v10843
        %vm10876 = vcmp.ge.f32.partialorder %v10860, 0.0
        %vm10877 = vcmp.ge.f32.partialorder %v10861, 0.0
        %vm10878 = vcmp.ge.f32.partialorder %v10862, 0.0
        %vm10879 = vcmp.ge.f32.partialorder %v10863, 0.0
        %vm10880 = vcmp.ge.f32.partialorder %v10864, 0.0
        %vm10881 = vcmp.ge.f32.partialorder %v10865, 0.0
        %vm10882 = vcmp.ge.f32.partialorder %v10866, 0.0
        %vm10883 = vcmp.ge.f32.partialorder %v10867, 0.0
        %vm10884 = vcmp.ge.f32.partialorder %v10868, 0.0
        %vm10885 = vcmp.ge.f32.partialorder %v10869, 0.0
        %vm10886 = vcmp.ge.f32.partialorder %v10870, 0.0
        %vm10887 = vcmp.ge.f32.partialorder %v10871, 0.0
        %vm10888 = vcmp.ge.f32.partialorder %v10872, 0.0
        %vm10889 = vcmp.ge.f32.partialorder %v10873, 0.0
        %vm10890 = vcmp.ge.f32.partialorder %v10874, 0.0
        %vm10891 = vcmp.ge.f32.partialorder %v10875, 0.0
        %10892 = vset.pattern.permute.xlu0 59
        %10893 = vperm.xlu0 %10892, %v372
        %v10894 = vpop.permute.xlu0 %10893
        %10896 = vset.pattern.permute.xlu0 59
        %10897 = vperm.xlu0 %10896, %v377
        %v10898 = vpop.permute.xlu0 %10897
        %10900 = vset.pattern.permute.xlu0 59
        %10901 = vperm.xlu0 %10900, %v382
        %v10902 = vpop.permute.xlu0 %10901
        %10904 = vset.pattern.permute.xlu0 59
        %10905 = vperm.xlu0 %10904, %v387
        %v10906 = vpop.permute.xlu0 %10905
        %10908 = vset.pattern.permute.xlu0 59
        %10909 = vperm.xlu0 %10908, %v392
        %v10910 = vpop.permute.xlu0 %10909
        %10912 = vset.pattern.permute.xlu0 59
        %10913 = vperm.xlu0 %10912, %v397
        %v10914 = vpop.permute.xlu0 %10913
        %10916 = vset.pattern.permute.xlu0 59
        %10917 = vperm.xlu0 %10916, %v402
        %v10918 = vpop.permute.xlu0 %10917
        %10920 = vset.pattern.permute.xlu0 59
        %10921 = vperm.xlu0 %10920, %v407
        %v10922 = vpop.permute.xlu0 %10921
        %10924 = vset.pattern.permute.xlu0 59
        %10925 = vperm.xlu0 %10924, %v412
        %v10926 = vpop.permute.xlu0 %10925
        %10928 = vset.pattern.permute.xlu0 59
        %10929 = vperm.xlu0 %10928, %v417
        %v10930 = vpop.permute.xlu0 %10929
        %10932 = vset.pattern.permute.xlu0 59
        %10933 = vperm.xlu0 %10932, %v422
        %v10934 = vpop.permute.xlu0 %10933
        %10936 = vset.pattern.permute.xlu0 59
        %10937 = vperm.xlu0 %10936, %v427
        %v10938 = vpop.permute.xlu0 %10937
        %10940 = vset.pattern.permute.xlu0 59
        %10941 = vperm.xlu0 %10940, %v432
        %v10942 = vpop.permute.xlu0 %10941
        %10944 = vset.pattern.permute.xlu0 59
        %10945 = vperm.xlu0 %10944, %v437
        %v10946 = vpop.permute.xlu0 %10945
        %10948 = vset.pattern.permute.xlu0 59
        %10949 = vperm.xlu0 %10948, %v442
        %v10950 = vpop.permute.xlu0 %10949
        %10952 = vset.pattern.permute.xlu0 59
        %10953 = vperm.xlu0 %10952, %v447
        %v10954 = vpop.permute.xlu0 %10953
        %v10956 = vmul.f32 %v10894, %v10860
        %v10957 = vmul.f32 %v10898, %v10861
        %v10958 = vmul.f32 %v10902, %v10862
        %v10959 = vmul.f32 %v10906, %v10863
        %v10960 = vmul.f32 %v10910, %v10864
        %v10961 = vmul.f32 %v10914, %v10865
        %v10962 = vmul.f32 %v10918, %v10866
        %v10963 = vmul.f32 %v10922, %v10867
        %v10964 = vmul.f32 %v10926, %v10868
        %v10965 = vmul.f32 %v10930, %v10869
        %v10966 = vmul.f32 %v10934, %v10870
        %v10967 = vmul.f32 %v10938, %v10871
        %v10968 = vmul.f32 %v10942, %v10872
        %v10969 = vmul.f32 %v10946, %v10873
        %v10970 = vmul.f32 %v10950, %v10874
        %v10971 = vmul.f32 %v10954, %v10875
        %v10972 = vsel %vm10876, %v10860, %v10956
        %v10973 = vsel %vm10877, %v10861, %v10957
        %v10974 = vsel %vm10878, %v10862, %v10958
        %v10975 = vsel %vm10879, %v10863, %v10959
        %v10976 = vsel %vm10880, %v10864, %v10960
        %v10977 = vsel %vm10881, %v10865, %v10961
        %v10978 = vsel %vm10882, %v10866, %v10962
        %v10979 = vsel %vm10883, %v10867, %v10963
        %v10980 = vsel %vm10884, %v10868, %v10964
        %v10981 = vsel %vm10885, %v10869, %v10965
        %v10982 = vsel %vm10886, %v10870, %v10966
        %v10983 = vsel %vm10887, %v10871, %v10967
        %v10984 = vsel %vm10888, %v10872, %v10968
        %v10985 = vsel %vm10889, %v10873, %v10969
        %v10986 = vsel %vm10890, %v10874, %v10970
        %v10987 = vsel %vm10891, %v10875, %v10971
        %10988 = vmatprep.subr.mxu0 0.0
        %10989 = vmatpush1.msra.mxu0 %v10972
        %10990 = vmatprep.subr.mxu0 0.0
        %10991 = vmatpush1.msra.mxu0 %v10973
        %10992 = vmatprep.subr.mxu0 0.0
        %10993 = vmatpush1.msra.mxu0 %v10974
        %10994 = vmatprep.subr.mxu0 0.0
        %10995 = vmatpush1.msra.mxu0 %v10975
        %10996 = vmatprep.subr.mxu0 0.0
        %10997 = vmatpush1.msra.mxu0 %v10976
        %10998 = vmatprep.subr.mxu0 0.0
        %10999 = vmatpush1.msra.mxu0 %v10977
        %11000 = vmatprep.subr.mxu0 0.0
        %11001 = vmatpush1.msra.mxu0 %v10978
        %11002 = vmatprep.subr.mxu0 0.0
        %11003 = vmatpush1.msra.mxu0 %v10979
        %11004 = vmatprep.subr.mxu0 0.0
        %11005 = vmatpush1.msra.mxu0 %v10980
        %11006 = vmatprep.subr.mxu0 0.0
        %11007 = vmatpush1.msra.mxu0 %v10981
        %11008 = vmatprep.subr.mxu0 0.0
        %11009 = vmatpush1.msra.mxu0 %v10982
        %11010 = vmatprep.subr.mxu0 0.0
        %11011 = vmatpush1.msra.mxu0 %v10983
        %11012 = vmatprep.subr.mxu0 0.0
        %11013 = vmatpush1.msra.mxu0 %v10984
        %11014 = vmatprep.subr.mxu0 0.0
        %11015 = vmatpush1.msra.mxu0 %v10985
        %11016 = vmatprep.subr.mxu0 0.0
        %11017 = vmatpush1.msra.mxu0 %v10986
        %11018 = vmatprep.subr.mxu0 0.0
        %11019 = vmatpush1.msra.mxu0 %v10987
        %11020 = vmatprep.subr.mxu0 0.0
        %11021 = vmatpush1.msra.mxu0 0.0
        %11022 = vmatprep.subr.mxu0 0.0
        %11023 = vmatpush1.msra.mxu0 0.0
        %11024 = vmatprep.subr.mxu0 0.0
        %11025 = vmatpush1.msra.mxu0 0.0
        %11026 = vmatprep.subr.mxu0 0.0
        %11027 = vmatpush1.msra.mxu0 0.0
        %11028 = vmatprep.subr.mxu0 0.0
        %11029 = vmatpush1.msra.mxu0 0.0
        %11030 = vmatprep.subr.mxu0 0.0
        %11031 = vmatpush1.msra.mxu0 0.0
        %11032 = vmatprep.subr.mxu0 0.0
        %11033 = vmatpush1.msra.mxu0 0.0
        %11034 = vmatprep.subr.mxu0 0.0
        %11035 = vmatpush1.msra.mxu0 0.0
        %11036 = vmatprep.subr.mxu0 0.0
        %11037 = vmatpush1.msra.mxu0 0.0
        %11038 = vmatprep.subr.mxu0 0.0
        %11039 = vmatpush1.msra.mxu0 0.0
        %11040 = vmatprep.subr.mxu0 0.0
        %11041 = vmatpush1.msra.mxu0 0.0
        %11042 = vmatprep.subr.mxu0 0.0
        %11043 = vmatpush1.msra.mxu0 0.0
        %11044 = vmatprep.subr.mxu0 0.0
        %11045 = vmatpush1.msra.mxu0 0.0
        %11046 = vmatprep.subr.mxu0 0.0
        %11047 = vmatpush1.msra.mxu0 0.0
        %11048 = vmatprep.subr.mxu0 0.0
        %11049 = vmatpush1.msra.mxu0 0.0
        %11050 = vmatprep.subr.mxu0 0.0
        %11051 = vmatpush1.msra.mxu0 0.0
        %11052 = vmatprep.mubr.f32.mxu0 0.0
        %11053 = vmatmul.mubr.f32.gmra.mrb[0].mxu0 1.0
        %v11054 = vpop.f32.mrb[0].mxu0
        %v11055 = vadd.f32 0.0, %v11054
        %v11056 = vpop.f32.mrb[0].mxu0
        %11057 = vdwg.mxu0
        %v11058 = vmul.f32 %v10972, %v10972
        %v11059 = vmul.f32 %v10973, %v10973
        %v11060 = vmul.f32 %v10974, %v10974
        %v11061 = vmul.f32 %v10975, %v10975
        %v11062 = vmul.f32 %v10976, %v10976
        %v11063 = vmul.f32 %v10977, %v10977
        %v11064 = vmul.f32 %v10978, %v10978
        %v11065 = vmul.f32 %v10979, %v10979
        %v11066 = vmul.f32 %v10980, %v10980
        %v11067 = vmul.f32 %v10981, %v10981
        %v11068 = vmul.f32 %v10982, %v10982
        %v11069 = vmul.f32 %v10983, %v10983
        %v11070 = vmul.f32 %v10984, %v10984
        %v11071 = vmul.f32 %v10985, %v10985
        %v11072 = vmul.f32 %v10986, %v10986
        %v11073 = vmul.f32 %v10987, %v10987
        %11074 = vmatprep.subr.mxu0 0.0
        %11075 = vmatpush1.msra.mxu0 %v11058
        %11076 = vmatprep.subr.mxu0 0.0
        %11077 = vmatpush1.msra.mxu0 %v11059
        %11078 = vmatprep.subr.mxu0 0.0
        %11079 = vmatpush1.msra.mxu0 %v11060
        %11080 = vmatprep.subr.mxu0 0.0
        %11081 = vmatpush1.msra.mxu0 %v11061
        %11082 = vmatprep.subr.mxu0 0.0
        %11083 = vmatpush1.msra.mxu0 %v11062
        %11084 = vmatprep.subr.mxu0 0.0
        %11085 = vmatpush1.msra.mxu0 %v11063
        %11086 = vmatprep.subr.mxu0 0.0
        %11087 = vmatpush1.msra.mxu0 %v11064
        %11088 = vmatprep.subr.mxu0 0.0
        %11089 = vmatpush1.msra.mxu0 %v11065
        %11090 = vmatprep.subr.mxu0 0.0
        %11091 = vmatpush1.msra.mxu0 %v11066
        %11092 = vmatprep.subr.mxu0 0.0
        %11093 = vmatpush1.msra.mxu0 %v11067
        %11094 = vmatprep.subr.mxu0 0.0
        %11095 = vmatpush1.msra.mxu0 %v11068
        %11096 = vmatprep.subr.mxu0 0.0
        %11097 = vmatpush1.msra.mxu0 %v11069
        %11098 = vmatprep.subr.mxu0 0.0
        %11099 = vmatpush1.msra.mxu0 %v11070
        %11100 = vmatprep.subr.mxu0 0.0
        %11101 = vmatpush1.msra.mxu0 %v11071
        %11102 = vmatprep.subr.mxu0 0.0
        %11103 = vmatpush1.msra.mxu0 %v11072
        %11104 = vmatprep.subr.mxu0 0.0
        %11105 = vmatpush1.msra.mxu0 %v11073
        %11106 = vmatprep.subr.mxu0 0.0
        %11107 = vmatpush1.msra.mxu0 0.0
        %11108 = vmatprep.subr.mxu0 0.0
        %11109 = vmatpush1.msra.mxu0 0.0
        %11110 = vmatprep.subr.mxu0 0.0
        %11111 = vmatpush1.msra.mxu0 0.0
        %11112 = vmatprep.subr.mxu0 0.0
        %11113 = vmatpush1.msra.mxu0 0.0
        %11114 = vmatprep.subr.mxu0 0.0
        %11115 = vmatpush1.msra.mxu0 0.0
        %11116 = vmatprep.subr.mxu0 0.0
        %11117 = vmatpush1.msra.mxu0 0.0
        %11118 = vmatprep.subr.mxu0 0.0
        %11119 = vmatpush1.msra.mxu0 0.0
        %11120 = vmatprep.subr.mxu0 0.0
        %11121 = vmatpush1.msra.mxu0 0.0
        %11122 = vmatprep.subr.mxu0 0.0
        %11123 = vmatpush1.msra.mxu0 0.0
        %11124 = vmatprep.subr.mxu0 0.0
        %11125 = vmatpush1.msra.mxu0 0.0
        %11126 = vmatprep.subr.mxu0 0.0
        %11127 = vmatpush1.msra.mxu0 0.0
        %11128 = vmatprep.subr.mxu0 0.0
        %11129 = vmatpush1.msra.mxu0 0.0
        %11130 = vmatprep.subr.mxu0 0.0
        %11131 = vmatpush1.msra.mxu0 0.0
        %11132 = vmatprep.subr.mxu0 0.0
        %11133 = vmatpush1.msra.mxu0 0.0
        %11134 = vmatprep.subr.mxu0 0.0
        %11135 = vmatpush1.msra.mxu0 0.0
        %11136 = vmatprep.subr.mxu0 0.0
        %11137 = vmatpush1.msra.mxu0 0.0
        %11138 = vmatprep.mubr.f32.mxu0 0.0
        %11139 = vmatmul.mubr.f32.gmra.mrb[0].mxu0 1.0
        %v11140 = vpop.f32.mrb[0].mxu0
        %v11141 = vadd.f32 0.0, %v11140
        %v11142 = vpop.f32.mrb[0].mxu0
        %11143 = vdwg.mxu0
        %v11144 = vsel %vm1012, %v11055, 0.0
        %11145 = vadd.xlane.f32.xlu0 %v11144
        %v11146 = vpop.xlane.xlu0 %11145
        %v11147 = vmul.f32 %v11146, 6.1035156e-05
        %v11148 = vsel %vm1012, %v11141, 0.0
        %11149 = vadd.xlane.f32.xlu0 %v11148
        %v11150 = vpop.xlane.xlu0 %11149
        %v11151 = vmul.f32 %v11150, 6.1035156e-05
        %v11152 = vmul.f32 %v11147, %v11147
        %v11153 = vsub.f32 %v11151, %v11152
        %v11154 = vadd.f32 %v11153, 1e-05
        %v11155 = vrsqrt.pop %v11154
        %v11156 = vlaneseq
        %v11157 = vshrl.u32 %v11156, 7
        %v11158 = vsub.s32 0, %v11157
        %v11159 = vrot.slane %v11155, %v11158
        %v11160 = vmul.f32 %v372, %v11159
        %v11161 = vmul.f32 %v377, %v11159
        %v11162 = vmul.f32 %v382, %v11159
        %v11163 = vmul.f32 %v387, %v11159
        %v11164 = vmul.f32 %v392, %v11159
        %v11165 = vmul.f32 %v397, %v11159
        %v11166 = vmul.f32 %v402, %v11159
        %v11167 = vmul.f32 %v407, %v11159
        %v11168 = vmul.f32 %v412, %v11159
        %v11169 = vmul.f32 %v417, %v11159
        %v11170 = vmul.f32 %v422, %v11159
        %v11171 = vmul.f32 %v427, %v11159
        %v11172 = vmul.f32 %v432, %v11159
        %v11173 = vmul.f32 %v437, %v11159
        %v11174 = vmul.f32 %v442, %v11159
        %v11175 = vmul.f32 %v447, %v11159
        %v11176 = vlaneseq
        %v11177 = vshrl.u32 %v11176, 7
        %v11178 = vsub.s32 0, %v11177
        %v11179 = vrot.slane %v11147, %v11178
        %v11180 = vmul.f32 %v11179, %v11160
        %v11181 = vmul.f32 %v11179, %v11161
        %v11182 = vmul.f32 %v11179, %v11162
        %v11183 = vmul.f32 %v11179, %v11163
        %v11184 = vmul.f32 %v11179, %v11164
        %v11185 = vmul.f32 %v11179, %v11165
        %v11186 = vmul.f32 %v11179, %v11166
        %v11187 = vmul.f32 %v11179, %v11167
        %v11188 = vmul.f32 %v11179, %v11168
        %v11189 = vmul.f32 %v11179, %v11169
        %v11190 = vmul.f32 %v11179, %v11170
        %v11191 = vmul.f32 %v11179, %v11171
        %v11192 = vmul.f32 %v11179, %v11172
        %v11193 = vmul.f32 %v11179, %v11173
        %v11194 = vmul.f32 %v11179, %v11174
        %v11195 = vmul.f32 %v11179, %v11175
        %11212 = vrot.lane.b32.xlu0 %v11180, 1
        %v11213 = vpop.permute.xlu0 %11212
        %11214 = vrot.lane.b32.xlu0 %v11181, 1
        %v11215 = vpop.permute.xlu0 %11214
        %11216 = vrot.lane.b32.xlu0 %v11182, 1
        %v11217 = vpop.permute.xlu0 %11216
        %11218 = vrot.lane.b32.xlu0 %v11183, 1
        %v11219 = vpop.permute.xlu0 %11218
        %11220 = vrot.lane.b32.xlu0 %v11184, 1
        %v11221 = vpop.permute.xlu0 %11220
        %11222 = vrot.lane.b32.xlu0 %v11185, 1
        %v11223 = vpop.permute.xlu0 %11222
        %11224 = vrot.lane.b32.xlu0 %v11186, 1
        %v11225 = vpop.permute.xlu0 %11224
        %11226 = vrot.lane.b32.xlu0 %v11187, 1
        %v11227 = vpop.permute.xlu0 %11226
        %11228 = vrot.lane.b32.xlu0 %v11188, 1
        %v11229 = vpop.permute.xlu0 %11228
        %11230 = vrot.lane.b32.xlu0 %v11189, 1
        %v11231 = vpop.permute.xlu0 %11230
        %11232 = vrot.lane.b32.xlu0 %v11190, 1
        %v11233 = vpop.permute.xlu0 %11232
        %11234 = vrot.lane.b32.xlu0 %v11191, 1
        %v11235 = vpop.permute.xlu0 %11234
        %11236 = vrot.lane.b32.xlu0 %v11192, 1
        %v11237 = vpop.permute.xlu0 %11236
        %11238 = vrot.lane.b32.xlu0 %v11193, 1
        %v11239 = vpop.permute.xlu0 %11238
        %11240 = vrot.lane.b32.xlu0 %v11194, 1
        %v11241 = vpop.permute.xlu0 %11240
        %11242 = vrot.lane.b32.xlu0 %v11195, 1
        %v11243 = vpop.permute.xlu0 %11242
        %v11260 = vsub.f32 %v372, %v11213
        %v11261 = vsub.f32 %v377, %v11215
        %v11262 = vsub.f32 %v382, %v11217
        %v11263 = vsub.f32 %v387, %v11219
        %v11264 = vsub.f32 %v392, %v11221
        %v11265 = vsub.f32 %v397, %v11223
        %v11266 = vsub.f32 %v402, %v11225
        %v11267 = vsub.f32 %v407, %v11227
        %v11268 = vsub.f32 %v412, %v11229
        %v11269 = vsub.f32 %v417, %v11231
        %v11270 = vsub.f32 %v422, %v11233
        %v11271 = vsub.f32 %v427, %v11235
        %v11272 = vsub.f32 %v432, %v11237
        %v11273 = vsub.f32 %v437, %v11239
        %v11274 = vsub.f32 %v442, %v11241
        %v11275 = vsub.f32 %v447, %v11243
        %11277 = vset.pattern.permute.xlu0 52
        %11278 = vperm.xlu0 %11277, %v11160
        %v11279 = vpop.permute.xlu0 %11278
        %11282 = vset.pattern.permute.xlu0 52
        %11283 = vperm.xlu0 %11282, %v11161
        %v11284 = vpop.permute.xlu0 %11283
        %11287 = vset.pattern.permute.xlu0 52
        %11288 = vperm.xlu0 %11287, %v11162
        %v11289 = vpop.permute.xlu0 %11288
        %11292 = vset.pattern.permute.xlu0 52
        %11293 = vperm.xlu0 %11292, %v11163
        %v11294 = vpop.permute.xlu0 %11293
        %11297 = vset.pattern.permute.xlu0 52
        %11298 = vperm.xlu0 %11297, %v11164
        %v11299 = vpop.permute.xlu0 %11298
        %11302 = vset.pattern.permute.xlu0 52
        %11303 = vperm.xlu0 %11302, %v11165
        %v11304 = vpop.permute.xlu0 %11303
        %11307 = vset.pattern.permute.xlu0 52
        %11308 = vperm.xlu0 %11307, %v11166
        %v11309 = vpop.permute.xlu0 %11308
        %11312 = vset.pattern.permute.xlu0 52
        %11313 = vperm.xlu0 %11312, %v11167
        %v11314 = vpop.permute.xlu0 %11313
        %11317 = vset.pattern.permute.xlu0 52
        %11318 = vperm.xlu0 %11317, %v11168
        %v11319 = vpop.permute.xlu0 %11318
        %11322 = vset.pattern.permute.xlu0 52
        %11323 = vperm.xlu0 %11322, %v11169
        %v11324 = vpop.permute.xlu0 %11323
        %11327 = vset.pattern.permute.xlu0 52
        %11328 = vperm.xlu0 %11327, %v11170
        %v11329 = vpop.permute.xlu0 %11328
        %11332 = vset.pattern.permute.xlu0 52
        %11333 = vperm.xlu0 %11332, %v11171
        %v11334 = vpop.permute.xlu0 %11333
        %11337 = vset.pattern.permute.xlu0 52
        %11338 = vperm.xlu0 %11337, %v11172
        %v11339 = vpop.permute.xlu0 %11338
        %11342 = vset.pattern.permute.xlu0 52
        %11343 = vperm.xlu0 %11342, %v11173
        %v11344 = vpop.permute.xlu0 %11343
        %11347 = vset.pattern.permute.xlu0 52
        %11348 = vperm.xlu0 %11347, %v11174
        %v11349 = vpop.permute.xlu0 %11348
        %11352 = vset.pattern.permute.xlu0 52
        %11353 = vperm.xlu0 %11352, %v11175
        %v11354 = vpop.permute.xlu0 %11353
        %v11356 = vmul.f32 %v10972, %v11279
        %v11357 = vmul.f32 %v10973, %v11284
        %v11358 = vmul.f32 %v10974, %v11289
        %v11359 = vmul.f32 %v10975, %v11294
        %v11360 = vmul.f32 %v10976, %v11299
        %v11361 = vmul.f32 %v10977, %v11304
        %v11362 = vmul.f32 %v10978, %v11309
        %v11363 = vmul.f32 %v10979, %v11314
        %v11364 = vmul.f32 %v10980, %v11319
        %v11365 = vmul.f32 %v10981, %v11324
        %v11366 = vmul.f32 %v10982, %v11329
        %v11367 = vmul.f32 %v10983, %v11334
        %v11368 = vmul.f32 %v10984, %v11339
        %v11369 = vmul.f32 %v10985, %v11344
        %v11370 = vmul.f32 %v10986, %v11349
        %v11371 = vmul.f32 %v10987, %v11354
        %11373 = vset.pattern.permute.xlu0 53
        %11374 = vperm.xlu0 %11373, %v11260
        %v11375 = vpop.permute.xlu0 %11374
        %11378 = vset.pattern.permute.xlu0 53
        %11379 = vperm.xlu0 %11378, %v11261
        %v11380 = vpop.permute.xlu0 %11379
        %11383 = vset.pattern.permute.xlu0 53
        %11384 = vperm.xlu0 %11383, %v11262
        %v11385 = vpop.permute.xlu0 %11384
        %11388 = vset.pattern.permute.xlu0 53
        %11389 = vperm.xlu0 %11388, %v11263
        %v11390 = vpop.permute.xlu0 %11389
        %11393 = vset.pattern.permute.xlu0 53
        %11394 = vperm.xlu0 %11393, %v11264
        %v11395 = vpop.permute.xlu0 %11394
        %11398 = vset.pattern.permute.xlu0 53
        %11399 = vperm.xlu0 %11398, %v11265
        %v11400 = vpop.permute.xlu0 %11399
        %11403 = vset.pattern.permute.xlu0 53
        %11404 = vperm.xlu0 %11403, %v11266
        %v11405 = vpop.permute.xlu0 %11404
        %11408 = vset.pattern.permute.xlu0 53
        %11409 = vperm.xlu0 %11408, %v11267
        %v11410 = vpop.permute.xlu0 %11409
        %11413 = vset.pattern.permute.xlu0 53
        %11414 = vperm.xlu0 %11413, %v11268
        %v11415 = vpop.permute.xlu0 %11414
        %11418 = vset.pattern.permute.xlu0 53
        %11419 = vperm.xlu0 %11418, %v11269
        %v11420 = vpop.permute.xlu0 %11419
        %11423 = vset.pattern.permute.xlu0 53
        %11424 = vperm.xlu0 %11423, %v11270
        %v11425 = vpop.permute.xlu0 %11424
        %11428 = vset.pattern.permute.xlu0 53
        %11429 = vperm.xlu0 %11428, %v11271
        %v11430 = vpop.permute.xlu0 %11429
        %11433 = vset.pattern.permute.xlu0 53
        %11434 = vperm.xlu0 %11433, %v11272
        %v11435 = vpop.permute.xlu0 %11434
        %11438 = vset.pattern.permute.xlu0 53
        %11439 = vperm.xlu0 %11438, %v11273
        %v11440 = vpop.permute.xlu0 %11439
        %11443 = vset.pattern.permute.xlu0 53
        %11444 = vperm.xlu0 %11443, %v11274
        %v11445 = vpop.permute.xlu0 %11444
        %11448 = vset.pattern.permute.xlu0 53
        %11449 = vperm.xlu0 %11448, %v11275
        %v11450 = vpop.permute.xlu0 %11449
        %v11452 = vadd.f32 %v11356, %v11375
        %v11453 = vadd.f32 %v11357, %v11380
        %v11454 = vadd.f32 %v11358, %v11385
        %v11455 = vadd.f32 %v11359, %v11390
        %v11456 = vadd.f32 %v11360, %v11395
        %v11457 = vadd.f32 %v11361, %v11400
        %v11458 = vadd.f32 %v11362, %v11405
        %v11459 = vadd.f32 %v11363, %v11410
        %v11460 = vadd.f32 %v11364, %v11415
        %v11461 = vadd.f32 %v11365, %v11420
        %v11462 = vadd.f32 %v11366, %v11425
        %v11463 = vadd.f32 %v11367, %v11430
        %v11464 = vadd.f32 %v11368, %v11435
        %v11465 = vadd.f32 %v11369, %v11440
        %v11466 = vadd.f32 %v11370, %v11445
        %v11467 = vadd.f32 %v11371, %v11450
        %s11468 = scalar_lea.vmem %s2, 96
        %v11469 = vld [vmem:[%s11468] sm:$0xff]
        %v11470 = vld [vmem:[%s11468 + $0x8] sm:$0xff]
        %v11471 = vld [vmem:[%s11468 + $0x10] sm:$0xff]
        %v11472 = vld [vmem:[%s11468 + $0x18] sm:$0xff]
        %11473 = vmatprep.subr.mxu0 0.0
        %11474 = vmatpush1.msra.mxu0 %v11452
        %11475 = vmatprep.subr.mxu0 0.0
        %11476 = vmatpush1.msra.mxu0 %v11453
        %11477 = vmatprep.subr.mxu0 0.0
        %11478 = vmatpush1.msra.mxu0 %v11454
        %11479 = vmatprep.subr.mxu0 0.0
        %11480 = vmatpush1.msra.mxu0 %v11455
        %11481 = vmatprep.subr.mxu0 0.0
        %11482 = vmatpush1.msra.mxu0 %v11456
        %11483 = vmatprep.subr.mxu0 0.0
        %11484 = vmatpush1.msra.mxu0 %v11457
        %11485 = vmatprep.subr.mxu0 0.0
        %11486 = vmatpush1.msra.mxu0 %v11458
        %11487 = vmatprep.subr.mxu0 0.0
        %11488 = vmatpush1.msra.mxu0 %v11459
        %11489 = vmatprep.subr.mxu0 0.0
        %11490 = vmatpush1.msra.mxu0 %v11460
        %11491 = vmatprep.subr.mxu0 0.0
        %11492 = vmatpush1.msra.mxu0 %v11461
        %11493 = vmatprep.subr.mxu0 0.0
        %11494 = vmatpush1.msra.mxu0 %v11462
        %11495 = vmatprep.subr.mxu0 0.0
        %11496 = vmatpush1.msra.mxu0 %v11463
        %11497 = vmatprep.subr.mxu0 0.0
        %11498 = vmatpush1.msra.mxu0 %v11464
        %11499 = vmatprep.subr.mxu0 0.0
        %11500 = vmatpush1.msra.mxu0 %v11465
        %11501 = vmatprep.subr.mxu0 0.0
        %11502 = vmatpush1.msra.mxu0 %v11466
        %11503 = vmatprep.subr.mxu0 0.0
        %11504 = vmatpush1.msra.mxu0 %v11467
        %11505 = vmatprep.subr.mxu0 0.0
        %11506 = vmatpush1.msra.mxu0 0.0
        %11507 = vmatprep.subr.mxu0 0.0
        %11508 = vmatpush1.msra.mxu0 0.0
        %11509 = vmatprep.subr.mxu0 0.0
        %11510 = vmatpush1.msra.mxu0 0.0
        %11511 = vmatprep.subr.mxu0 0.0
        %11512 = vmatpush1.msra.mxu0 0.0
        %11513 = vmatprep.subr.mxu0 0.0
        %11514 = vmatpush1.msra.mxu0 0.0
        %11515 = vmatprep.subr.mxu0 0.0
        %11516 = vmatpush1.msra.mxu0 0.0
        %11517 = vmatprep.subr.mxu0 0.0
        %11518 = vmatpush1.msra.mxu0 0.0
        %11519 = vmatprep.subr.mxu0 0.0
        %11520 = vmatpush1.msra.mxu0 0.0
        %11521 = vmatprep.subr.mxu0 0.0
        %11522 = vmatpush1.msra.mxu0 0.0
        %11523 = vmatprep.subr.mxu0 0.0
        %11524 = vmatpush1.msra.mxu0 0.0
        %11525 = vmatprep.subr.mxu0 0.0
        %11526 = vmatpush1.msra.mxu0 0.0
        %11527 = vmatprep.subr.mxu0 0.0
        %11528 = vmatpush1.msra.mxu0 0.0
        %11529 = vmatprep.subr.mxu0 0.0
        %11530 = vmatpush1.msra.mxu0 0.0
        %11531 = vmatprep.subr.mxu0 0.0
        %11532 = vmatpush1.msra.mxu0 0.0
        %11533 = vmatprep.subr.mxu0 0.0
        %11534 = vmatpush1.msra.mxu0 0.0
        %11535 = vmatprep.subr.mxu0 0.0
        %11536 = vmatpush1.msra.mxu0 0.0
        %11537 = vmatprep.mubr.f32.mxu0 0.0
        %11538 = vmatmul.mubr.f32.gmra.mrb[0].mxu0 %v11469
        %v11539 = vpop.f32.mrb[0].mxu0
        %v11540 = vadd.f32 0.0, %v11539
        %v11541 = vpop.f32.mrb[0].mxu0
        %11542 = vmatprep.mubr.f32.mxu0 0.0
        %11543 = vmatmul.mubr.f32.gmra.mrb[0].mxu0 %v11470
        %v11544 = vpop.f32.mrb[0].mxu0
        %v11545 = vadd.f32 0.0, %v11544
        %v11546 = vpop.f32.mrb[0].mxu0
        %11547 = vmatprep.mubr.f32.mxu0 0.0
        %11548 = vmatmul.mubr.f32.gmra.mrb[0].mxu0 %v11471
        %v11549 = vpop.f32.mrb[0].mxu0
        %v11550 = vadd.f32 0.0, %v11549
        %v11551 = vpop.f32.mrb[0].mxu0
        %11552 = vmatprep.mubr.f32.mxu0 0.0
        %11553 = vmatmul.mubr.f32.gmra.mrb[0].mxu0 %v11472
        %v11554 = vpop.f32.mrb[0].mxu0
        %v11555 = vadd.f32 0.0, %v11554
        %v11556 = vpop.f32.mrb[0].mxu0
        %11557 = vdwg.mxu0
        %v11558 = vadd.f32 %v9221, %v11540
        %v11559 = vadd.f32 %v9222, %v11545
        %v11560 = vadd.f32 %v9223, %v11550
        %v11561 = vadd.f32 %v9224, %v11555
        %11562 = vset.pattern.permute.xlu0 57
        %11563 = vperm.xlu0 %11562, %v372
        %v11564 = vpop.permute.xlu0 %11563
        %11566 = vset.pattern.permute.xlu0 57
        %11567 = vperm.xlu0 %11566, %v377
        %v11568 = vpop.permute.xlu0 %11567
        %11570 = vset.pattern.permute.xlu0 57
        %11571 = vperm.xlu0 %11570, %v382
        %v11572 = vpop.permute.xlu0 %11571
        %11574 = vset.pattern.permute.xlu0 57
        %11575 = vperm.xlu0 %11574, %v387
        %v11576 = vpop.permute.xlu0 %11575
        %v11578 = vadd.f32 %v11558, %v11564
        %v11579 = vadd.f32 %v11559, %v11568
        %v11580 = vadd.f32 %v11560, %v11572
        %v11581 = vadd.f32 %v11561, %v11576
        %11582 = vst [vmem:[%s190] sm:$0xff] %v11578
        %11583 = vst [vmem:[%s190 + $0x8] sm:$0xff] %v11579
        %11584 = vst [vmem:[%s190 + $0x10] sm:$0xff] %v11580
        %11585 = vst [vmem:[%s190 + $0x18] sm:$0xff] %v11581
        %s11586 = sand.u32 %s115, 1
        %s11587 = scalar_lea.sflag [#allocation4], %s11586
        %s11588 = sand.u32 %s115, 1
        %s11589 = smul.addr %s11588, 32
        %s11590 = scalar_lea.vmem [#allocation3], %s11589
        // Predicated region
        $region37: #{conv1d_block_stack.1} parent=35 // pred_check
          %p11591 = pneg %p125
        $region38: #{conv1d_block_stack.1} parent=35 // pred_check_branch
          %11593 = sbr.rel (%p11591) target = $region40
        $region39: #{conv1d_block_stack.1} parent=35 // pred_region
          %s11595 = ssub.s32 512, 512
          %11596 = vsyncadd %s11587, %s11595
          %s11597 = smul.addr %s18, 4
          %s11598 = smul.addr %s11597, 128
          %s11599 = scalar_lea.hbm %s4, %s11598
          %s11600 = sshll.u32 %s11590, 4
          %s11601 = int_to_ptr.vmem [resolvable:$true] %s11600
          %11606 = dma.vmem_to_hbm [thread:$0]  %s11601, 512, %s11599, %s11587, 128, 128, 8
        $region40: #{conv1d_block_stack.1} parent=35 // pred_fallthru
          _
      $region36: #{conv1d_block_stack.1} parent=5 // pred_fallthru
        _
      %p11607 = scmp.le.s32.totalorder 2, %s13
      // Predicated region
      $region41: #{conv1d_block_stack.1} parent=5 // pred_check
        %p11608 = pneg %p11607
      $region42: #{conv1d_block_stack.1} parent=5 // pred_check_branch
        %11610 = sbr.rel (%p11608) target = $region44
      $region43: #{conv1d_block_stack.1} parent=5 // pred_region
        %s11611 = ssub.s32 %s13, 2
        // Predicated region
        $region45: #{conv1d_block_stack.1} parent=43 // pred_check
          %p11612 = pneg %p131
        $region46: #{conv1d_block_stack.1} parent=43 // pred_check_branch
          %11614 = sbr.rel (%p11612) target = $region48
        $region47: #{conv1d_block_stack.1} parent=43 // pred_region
          %s11615 = sand.u32 %s116, 1
          %s11616 = scalar_lea.sflag [#allocation4], %s11615
          %s11617 = sand.u32 %s116, 1
          %s11618 = smul.addr %s11617, 32
          %s11619 = scalar_lea.vmem [#allocation3], %s11618
          %11620 = dma.done %s11616, 512
        $region48: #{conv1d_block_stack.1} parent=43 // pred_fallthru
          _
      $region44: #{conv1d_block_stack.1} parent=5 // pred_fallthru
        _
    $region6: #{conv1d_block_stack.1} parent=1 // loop_footer
      %s17 = sadd.s32 1, %s13
    $region7: #{conv1d_block_stack.1} parent=1 // loop_footer_branch
      %12 = sbr.rel target = $region3
    $region8: #{conv1d_block_stack.1} parent=1 // loop_exit
      _
    %11621 = vsyncpa [#allocation4], 1
    %s11622 = scalar_lea.sflag [#allocation4], 1
    %11623 = vsyncpa %s11622, 1

</llo_original>
